<compile_context>
chip_gen: v7x
topology: tpu7x:2x2x1
jax: 0.10.0
libtpu: 0.0.40
codegen_flags: <defaults>
</compile_context>

<pallas_src>
import functools
import jax
import jax.numpy as jnp
from jax.experimental import pallas as pl
from jax.experimental.pallas import tpu as pltpu


# -----------------------------------------------------------------------------
# Fused BasicBlock kernel (one image per grid step).
# -----------------------------------------------------------------------------
def _basic_block_kernel(x_ref, w1_ref, s1_ref, b1_ref, w2_ref, s2_ref, b2_ref,
                        o_ref, xf_ref, yf_ref, acc_ref, *, H, W, OFF):
    L = H * W

    # Column masks: in the flattened-pixel layout a dw=0 tap at image column 0
    # (and dw=2 at column W-1) would read the neighbouring row; zero those
    # contributions.  Row halos read from the zero-padded scratch instead.
    col = jax.lax.broadcasted_iota(jnp.int32, (L, 1), 0) % W
    m_left = jnp.where(col == 0, 0.0, 1.0)        # for dw == 0 taps
    m_right = jnp.where(col == W - 1, 0.0, 1.0)   # for dw == 2 taps

    # Zero the padded flat buffers (halo regions must read as 0 every step;
    # cheap, and safe under megacore grid sharding).
    xf_ref[...] = jnp.zeros_like(xf_ref)
    yf_ref[...] = jnp.zeros_like(yf_ref)

    # Stage input (bf16) into the padded flat buffer at an aligned offset.
    xf_ref[pl.ds(OFF, L), :] = x_ref[0]

    def conv3x3_flat(src_ref, w_ref):
        """3x3 SAME conv over flattened pixels; accumulates into acc_ref."""
        acc_ref[...] = jnp.zeros_like(acc_ref)
        for dh in range(3):
            for dw in range(3):
                start = OFF + (dh - 1) * W + (dw - 1)      # static offset
                patch = src_ref[pl.ds(start, L), :]        # (L, C) bf16, contiguous
                contrib = jnp.dot(patch, w_ref[dh, dw],
                                  preferred_element_type=jnp.float32)
                if dw == 0:
                    contrib = contrib * m_left
                elif dw == 2:
                    contrib = contrib * m_right
                acc_ref[...] += contrib
        return acc_ref[...]

    # conv1 -> bn1 (+ relu activation)
    y1 = conv3x3_flat(xf_ref, w1_ref)
    a1 = jnp.maximum(y1 * s1_ref[...] + b1_ref[...], 0.0)
    yf_ref[pl.ds(OFF, L), :] = a1.astype(yf_ref.dtype)

    # conv2 -> bn2 (identity activation) -> + residual -> final relu
    y2 = conv3x3_flat(yf_ref, w2_ref)
    out = y2 * s2_ref[...] + b2_ref[...] + x_ref[0].astype(jnp.float32)
    o_ref[0] = jnp.maximum(out, 0.0).astype(o_ref.dtype)


# -----------------------------------------------------------------------------
# Wrapper: NHWC in, NHWC out (the (N,H,W,C) <-> (N,H*W,C) reshapes are free).
# -----------------------------------------------------------------------------
def basic_block_forward(x_nhwc, params):
    N, H, W, C = x_nhwc.shape
    planes = params["w1"].shape[-1]
    assert params["w1"].shape == (3, 3, C, planes)
    assert params["w2"].shape == (3, 3, planes, C), \
        "residual add requires out_chs == in_chs (downsample not implemented)"
    assert planes == C, "BasicBlock with no downsample: inplanes == planes"

    L = H * W
    OFF = ((W + 1 + 7) // 8) * 8                 # aligned offset >= W + 1
    LP = ((OFF + L + W + 1 + 7) // 8) * 8        # padded flat length

    x2 = x_nhwc.reshape(N, L, C).astype(jnp.bfloat16)
    w1 = params["w1"].astype(jnp.bfloat16)
    w2 = params["w2"].astype(jnp.bfloat16)
    s1 = params["s1"].reshape(1, planes).astype(jnp.float32)
    b1 = params["b1"].reshape(1, planes).astype(jnp.float32)
    s2 = params["s2"].reshape(1, C).astype(jnp.float32)
    b2 = params["b2"].reshape(1, C).astype(jnp.float32)

    kern = functools.partial(_basic_block_kernel, H=H, W=W, OFF=OFF)
    out = pl.pallas_call(
        kern,
        out_shape=jax.ShapeDtypeStruct((N, L, C), jnp.float32),
        grid=(N,),
        in_specs=[
            pl.BlockSpec((1, L, C), lambda n: (n, 0, 0)),             # x
            pl.BlockSpec((3, 3, C, planes), lambda n: (0, 0, 0, 0)),  # w1 (resident)
            pl.BlockSpec((1, planes), lambda n: (0, 0)),              # s1
            pl.BlockSpec((1, planes), lambda n: (0, 0)),              # b1
            pl.BlockSpec((3, 3, planes, C), lambda n: (0, 0, 0, 0)),  # w2 (resident)
            pl.BlockSpec((1, C), lambda n: (0, 0)),                   # s2
            pl.BlockSpec((1, C), lambda n: (0, 0)),                   # b2
        ],
        out_specs=pl.BlockSpec((1, L, C), lambda n: (n, 0, 0)),
        scratch_shapes=[
            pltpu.VMEM((LP, C), jnp.bfloat16),       # zero-padded flat input
            pltpu.VMEM((LP, planes), jnp.bfloat16),  # zero-padded flat conv1 act
            pltpu.VMEM((L, planes), jnp.float32),    # f32 tap accumulator
        ],
        compiler_params=pltpu.CompilerParams(
            dimension_semantics=("parallel",)),
    )(x2, w1, s1, b1, w2, s2, b2)

    return out.reshape(N, H, W, C)


# -----------------------------------------------------------------------------
# Pure-JAX reference (mirrors the kernel's bf16 casts so tolerances stay tight).
# -----------------------------------------------------------------------------
def reference(x_nhwc, p):
    xb = x_nhwc.astype(jnp.bfloat16).astype(jnp.float32)
    w1 = p["w1"].astype(jnp.bfloat16).astype(jnp.float32)
    w2 = p["w2"].astype(jnp.bfloat16).astype(jnp.float32)
    y = jax.lax.conv_general_dilated(
        xb, w1, window_strides=(1, 1), padding="SAME",
        dimension_numbers=("NHWC", "HWIO", "NHWC"))
    y = jnp.maximum(y * p["s1"] + p["b1"], 0.0)                 # bn1 + relu
    y = y.astype(jnp.bfloat16).astype(jnp.float32)              # kernel stores a1 in bf16
    y = jax.lax.conv_general_dilated(
        y, w2, window_strides=(1, 1), padding="SAME",
        dimension_numbers=("NHWC", "HWIO", "NHWC"))
    y = y * p["s2"] + p["b2"]                                   # bn2 (identity act)
    return jnp.maximum(y + xb, 0.0)                             # + residual, final relu


def make_params(key, in_chs, planes, eps=1e-5):
    ks = jax.random.split(key, 10)

    def fold(gamma, beta, mean, var):
        scale = gamma / jnp.sqrt(var + eps)
        return scale, beta - mean * scale

    g1 = jax.random.uniform(ks[0], (planes,), minval=0.5, maxval=1.5)
    be1 = jax.random.normal(ks[1], (planes,)) * 0.1
    m1 = jax.random.normal(ks[2], (planes,)) * 0.1
    v1 = jax.random.uniform(ks[3], (planes,), minval=0.5, maxval=1.5)
    s1, b1 = fold(g1, be1, m1, v1)

    g2 = jax.random.uniform(ks[4], (planes,), minval=0.5, maxval=1.5)
    be2 = jax.random.normal(ks[5], (planes,)) * 0.1
    m2 = jax.random.normal(ks[6], (planes,)) * 0.1
    v2 = jax.random.uniform(ks[7], (planes,), minval=0.5, maxval=1.5)
    s2, b2 = fold(g2, be2, m2, v2)

    w1 = jax.random.normal(ks[8], (3, 3, in_chs, planes)) * 0.1   # conv3x3 HWIO
    w2 = jax.random.normal(ks[9], (3, 3, planes, planes)) * 0.1   # conv3x3 HWIO
    return dict(s1=s1, b1=b1, s2=s2, b2=b2, w1=w1, w2=w2)


if __name__ == "__main__":
    N, H, W, C = 2, 16, 16, 32        # inplanes == planes (no downsample), stride=1

    key = jax.random.PRNGKey(0)
    kx, kp = jax.random.split(key)
    x = jax.random.normal(kx, (N, H, W, C), dtype=jnp.float32)   # NHWC
    params = make_params(kp, C, C)

    out = basic_block_forward(x, params)
    out = jax.block_until_ready(out)

    ref = reference(x, params)
    assert out.shape == (N, H, W, C)
    err = jnp.max(jnp.abs(out - ref))
    assert jnp.allclose(out, ref, atol=5e-3, rtol=5e-3), f"max abs err {err}"
    print("KERNEL_OK")
</pallas_src>

<mosaic_0001>
module attributes {stable_mosaic.version = 11 : i64} {
  func.func @_basic_block_kernel(%arg0: i32, %arg1: memref<1x256x32xbf16, #tpu.memory_space<vmem>>, %arg2: memref<3x3x32x32xbf16, #tpu.memory_space<vmem>>, %arg3: memref<1x32xf32, #tpu.memory_space<vmem>>, %arg4: memref<1x32xf32, #tpu.memory_space<vmem>>, %arg5: memref<3x3x32x32xbf16, #tpu.memory_space<vmem>>, %arg6: memref<1x32xf32, #tpu.memory_space<vmem>>, %arg7: memref<1x32xf32, #tpu.memory_space<vmem>>, %arg8: memref<1x256x32xf32, #tpu.memory_space<vmem>>, %arg9: memref<304x32xbf16, #tpu.memory_space<vmem>>, %arg10: memref<304x32xbf16, #tpu.memory_space<vmem>>, %arg11: memref<256x32xf32, #tpu.memory_space<vmem>>) attributes {dimension_semantics = [#tpu.dimension_semantics<parallel>], iteration_bounds = array<i64: 2>, scalar_prefetch = 0 : i64, scratch_operands = 3 : i64, tpu.core_type = #tpu.core_type<tc>, window_params = [{transform_indices = @transform_0, window_bounds = array<i64: 1, 256, 32>}, {pipeline_mode = #tpu.pipeline_mode<synchronous>, transform_indices = @transform_1, window_bounds = array<i64: 3, 3, 32, 32>}, {pipeline_mode = #tpu.pipeline_mode<synchronous>, transform_indices = @transform_2, window_bounds = array<i64: 1, 32>}, {pipeline_mode = #tpu.pipeline_mode<synchronous>, transform_indices = @transform_3, window_bounds = array<i64: 1, 32>}, {pipeline_mode = #tpu.pipeline_mode<synchronous>, transform_indices = @transform_4, window_bounds = array<i64: 3, 3, 32, 32>}, {pipeline_mode = #tpu.pipeline_mode<synchronous>, transform_indices = @transform_5, window_bounds = array<i64: 1, 32>}, {pipeline_mode = #tpu.pipeline_mode<synchronous>, transform_indices = @transform_6, window_bounds = array<i64: 1, 32>}, {transform_indices = @transform_7, window_bounds = array<i64: 1, 256, 32>}]} {
    %0 = tpu.iota {dimensions = array<i32: 0>} : vector<256x1xi32>
    %c16_i32 = arith.constant 16 : i32
    %c0_i32 = arith.constant 0 : i32
    %1 = arith.cmpi eq, %c16_i32, %c0_i32 : i32
    %c1_i32 = arith.constant 1 : i32
    %2 = arith.select %1, %c1_i32, %c16_i32 : i32
    %3 = vector.broadcast %2 : i32 to vector<256x1xi32>
    %4 = arith.remsi %0, %3 : vector<256x1xi32>
    %c0_i32_0 = arith.constant 0 : i32
    %5 = vector.broadcast %c0_i32_0 : i32 to vector<256x1xi32>
    %6 = arith.cmpi ne, %4, %5 : vector<256x1xi32>
    %c0_i32_1 = arith.constant 0 : i32
    %7 = vector.broadcast %c0_i32_1 : i32 to vector<256x1xi32>
    %8 = arith.cmpi slt, %4, %7 : vector<256x1xi32>
    %c0_i32_2 = arith.constant 0 : i32
    %9 = arith.cmpi slt, %2, %c0_i32_2 : i32
    %10 = vector.broadcast %9 : i1 to vector<256x1xi1>
    %11 = vector.broadcast %10 : vector<256x1xi1> to vector<256x1xi1>
    %12 = arith.xori %8, %11 : vector<256x1xi1>
    %13 = arith.andi %12, %6 : vector<256x1xi1>
    %14 = vector.broadcast %2 : i32 to vector<256x1xi32>
    %15 = arith.addi %4, %14 : vector<256x1xi32>
    %16 = arith.select %13, %15, %4 : vector<256x1xi1>, vector<256x1xi32>
    %c0_i32_3 = arith.constant 0 : i32
    %17 = vector.broadcast %c0_i32_3 : i32 to vector<256x1xi32>
    %18 = arith.cmpi eq, %16, %17 : vector<256x1xi32>
    %cst = arith.constant 0.000000e+00 : f32
    %cst_4 = arith.constant 1.000000e+00 : f32
    %19 = vector.broadcast %cst : f32 to vector<256x1xf32>
    %20 = vector.broadcast %cst_4 : f32 to vector<256x1xf32>
    %21 = arith.select %18, %19, %20 : vector<256x1xi1>, vector<256x1xf32>
    %c15_i32 = arith.constant 15 : i32
    %22 = vector.broadcast %c15_i32 : i32 to vector<256x1xi32>
    %23 = arith.cmpi eq, %16, %22 : vector<256x1xi32>
    %cst_5 = arith.constant 0.000000e+00 : f32
    %cst_6 = arith.constant 1.000000e+00 : f32
    %24 = vector.broadcast %cst_5 : f32 to vector<256x1xf32>
    %25 = vector.broadcast %cst_6 : f32 to vector<256x1xf32>
    %26 = arith.select %23, %24, %25 : vector<256x1xi1>, vector<256x1xf32>
    %cst_7 = arith.constant 0.000000e+00 : bf16
    %27 = vector.broadcast %cst_7 : bf16 to vector<304x32xbf16>
    %c0 = arith.constant 0 : index
    %c0_8 = arith.constant 0 : index
    %28 = vector.load %arg9[%c0, %c0_8] : memref<304x32xbf16, #tpu.memory_space<vmem>>, vector<304x32xbf16>
    tpu.vector_store %arg9[%c0, %c0_8], %27 {strides = array<i32>} : memref<304x32xbf16, #tpu.memory_space<vmem>>, vector<304x32xbf16>,
    %cst_9 = arith.constant 0.000000e+00 : bf16
    %29 = vector.broadcast %cst_9 : bf16 to vector<304x32xbf16>
    %c0_10 = arith.constant 0 : index
    %c0_11 = arith.constant 0 : index
    %30 = vector.load %arg10[%c0_10, %c0_11] : memref<304x32xbf16, #tpu.memory_space<vmem>>, vector<304x32xbf16>
    tpu.vector_store %arg10[%c0_10, %c0_11], %29 {strides = array<i32>} : memref<304x32xbf16, #tpu.memory_space<vmem>>, vector<304x32xbf16>,
    %c0_12 = arith.constant 0 : index
    %c0_13 = arith.constant 0 : index
    %c0_14 = arith.constant 0 : index
    %31 = vector.load %arg1[%c0_12, %c0_13, %c0_14] : memref<1x256x32xbf16, #tpu.memory_space<vmem>>, vector<1x256x32xbf16>
    %32 = vector.shape_cast %31 : vector<1x256x32xbf16> to vector<256x32xbf16>
    %c24 = arith.constant 24 : index
    %c0_15 = arith.constant 0 : index
    %33 = vector.load %arg9[%c24, %c0_15] : memref<304x32xbf16, #tpu.memory_space<vmem>>, vector<256x32xbf16>
    tpu.vector_store %arg9[%c24, %c0_15], %32 {strides = array<i32>} : memref<304x32xbf16, #tpu.memory_space<vmem>>, vector<256x32xbf16>,
    %cst_16 = arith.constant 0.000000e+00 : f32
    %34 = vector.broadcast %cst_16 : f32 to vector<256x32xf32>
    %c0_17 = arith.constant 0 : index
    %c0_18 = arith.constant 0 : index
    %35 = vector.load %arg11[%c0_17, %c0_18] : memref<256x32xf32, #tpu.memory_space<vmem>>, vector<256x32xf32>
    tpu.vector_store %arg11[%c0_17, %c0_18], %34 {strides = array<i32>} : memref<256x32xf32, #tpu.memory_space<vmem>>, vector<256x32xf32>,
    %c7 = arith.constant 7 : index
    %c0_19 = arith.constant 0 : index
    %36 = vector.load %arg9[%c7, %c0_19] : memref<304x32xbf16, #tpu.memory_space<vmem>>, vector<256x32xbf16>
    %c0_20 = arith.constant 0 : index
    %c0_21 = arith.constant 0 : index
    %c0_22 = arith.constant 0 : index
    %c0_23 = arith.constant 0 : index
    %37 = vector.load %arg2[%c0_20, %c0_21, %c0_22, %c0_23] : memref<3x3x32x32xbf16, #tpu.memory_space<vmem>>, vector<1x1x32x32xbf16>
    %38 = vector.shape_cast %37 : vector<1x1x32x32xbf16> to vector<32x32xbf16>
    %cst_24 = arith.constant dense<0.000000e+00> : vector<256x32xf32>
    %39 = tpu.matmul %36, %38, %cst_24 {dimension_numbers = #tpu.dot_dimension_numbers<[1], [0], [0], [1], [0, 0, 1, 1], [], []>} : vector<256x32xbf16>, vector<32x32xbf16>, vector<256x32xf32> -> vector<256x32xf32>
    %40 = vector.broadcast %21 : vector<256x1xf32> to vector<256x32xf32>
    %41 = arith.mulf %39, %40 : vector<256x32xf32>
    %c0_25 = arith.constant 0 : index
    %c0_26 = arith.constant 0 : index
    %42 = vector.load %arg11[%c0_25, %c0_26] : memref<256x32xf32, #tpu.memory_space<vmem>>, vector<256x32xf32>
    %43 = arith.addf %42, %41 : vector<256x32xf32>
    %c0_27 = arith.constant 0 : index
    %c0_28 = arith.constant 0 : index
    %44 = vector.load %arg11[%c0_27, %c0_28] : memref<256x32xf32, #tpu.memory_space<vmem>>, vector<256x32xf32>
    tpu.vector_store %arg11[%c0_27, %c0_28], %43 {strides = array<i32>} : memref<256x32xf32, #tpu.memory_space<vmem>>, vector<256x32xf32>,
    %c8 = arith.constant 8 : index
    %c0_29 = arith.constant 0 : index
    %45 = vector.load %arg9[%c8, %c0_29] : memref<304x32xbf16, #tpu.memory_space<vmem>>, vector<256x32xbf16>
    %c0_30 = arith.constant 0 : index
    %c1 = arith.constant 1 : index
    %c0_31 = arith.constant 0 : index
    %c0_32 = arith.constant 0 : index
    %46 = vector.load %arg2[%c0_30, %c1, %c0_31, %c0_32] : memref<3x3x32x32xbf16, #tpu.memory_space<vmem>>, vector<1x1x32x32xbf16>
    %47 = vector.shape_cast %46 : vector<1x1x32x32xbf16> to vector<32x32xbf16>
    %cst_33 = arith.constant dense<0.000000e+00> : vector<256x32xf32>
    %48 = tpu.matmul %45, %47, %cst_33 {dimension_numbers = #tpu.dot_dimension_numbers<[1], [0], [0], [1], [0, 0, 1, 1], [], []>} : vector<256x32xbf16>, vector<32x32xbf16>, vector<256x32xf32> -> vector<256x32xf32>
    %c0_34 = arith.constant 0 : index
    %c0_35 = arith.constant 0 : index
    %49 = vector.load %arg11[%c0_34, %c0_35] : memref<256x32xf32, #tpu.memory_space<vmem>>, vector<256x32xf32>
    %50 = arith.addf %49, %48 : vector<256x32xf32>
    %c0_36 = arith.constant 0 : index
    %c0_37 = arith.constant 0 : index
    %51 = vector.load %arg11[%c0_36, %c0_37] : memref<256x32xf32, #tpu.memory_space<vmem>>, vector<256x32xf32>
    tpu.vector_store %arg11[%c0_36, %c0_37], %50 {strides = array<i32>} : memref<256x32xf32, #tpu.memory_space<vmem>>, vector<256x32xf32>,
    %c9 = arith.constant 9 : index
    %c0_38 = arith.constant 0 : index
    %52 = vector.load %arg9[%c9, %c0_38] : memref<304x32xbf16, #tpu.memory_space<vmem>>, vector<256x32xbf16>
    %c0_39 = arith.constant 0 : index
    %c2 = arith.constant 2 : index
    %c0_40 = arith.constant 0 : index
    %c0_41 = arith.constant 0 : index
    %53 = vector.load %arg2[%c0_39, %c2, %c0_40, %c0_41] : memref<3x3x32x32xbf16, #tpu.memory_space<vmem>>, vector<1x1x32x32xbf16>
    %54 = vector.shape_cast %53 : vector<1x1x32x32xbf16> to vector<32x32xbf16>
    %cst_42 = arith.constant dense<0.000000e+00> : vector<256x32xf32>
    %55 = tpu.matmul %52, %54, %cst_42 {dimension_numbers = #tpu.dot_dimension_numbers<[1], [0], [0], [1], [0, 0, 1, 1], [], []>} : vector<256x32xbf16>, vector<32x32xbf16>, vector<256x32xf32> -> vector<256x32xf32>
    %56 = vector.broadcast %26 : vector<256x1xf32> to vector<256x32xf32>
    %57 = arith.mulf %55, %56 : vector<256x32xf32>
    %c0_43 = arith.constant 0 : index
    %c0_44 = arith.constant 0 : index
    %58 = vector.load %arg11[%c0_43, %c0_44] : memref<256x32xf32, #tpu.memory_space<vmem>>, vector<256x32xf32>
    %59 = arith.addf %58, %57 : vector<256x32xf32>
    %c0_45 = arith.constant 0 : index
    %c0_46 = arith.constant 0 : index
    %60 = vector.load %arg11[%c0_45, %c0_46] : memref<256x32xf32, #tpu.memory_space<vmem>>, vector<256x32xf32>
    tpu.vector_store %arg11[%c0_45, %c0_46], %59 {strides = array<i32>} : memref<256x32xf32, #tpu.memory_space<vmem>>, vector<256x32xf32>,
    %c23 = arith.constant 23 : index
    %c0_47 = arith.constant 0 : index
    %61 = vector.load %arg9[%c23, %c0_47] : memref<304x32xbf16, #tpu.memory_space<vmem>>, vector<256x32xbf16>
    %c1_48 = arith.constant 1 : index
    %c0_49 = arith.constant 0 : index
    %c0_50 = arith.constant 0 : index
    %c0_51 = arith.constant 0 : index
    %62 = vector.load %arg2[%c1_48, %c0_49, %c0_50, %c0_51] : memref<3x3x32x32xbf16, #tpu.memory_space<vmem>>, vector<1x1x32x32xbf16>
    %63 = vector.shape_cast %62 : vector<1x1x32x32xbf16> to vector<32x32xbf16>
    %cst_52 = arith.constant dense<0.000000e+00> : vector<256x32xf32>
    %64 = tpu.matmul %61, %63, %cst_52 {dimension_numbers = #tpu.dot_dimension_numbers<[1], [0], [0], [1], [0, 0, 1, 1], [], []>} : vector<256x32xbf16>, vector<32x32xbf16>, vector<256x32xf32> -> vector<256x32xf32>
    %65 = vector.broadcast %21 : vector<256x1xf32> to vector<256x32xf32>
    %66 = arith.mulf %64, %65 : vector<256x32xf32>
    %c0_53 = arith.constant 0 : index
    %c0_54 = arith.constant 0 : index
    %67 = vector.load %arg11[%c0_53, %c0_54] : memref<256x32xf32, #tpu.memory_space<vmem>>, vector<256x32xf32>
    %68 = arith.addf %67, %66 : vector<256x32xf32>
    %c0_55 = arith.constant 0 : index
    %c0_56 = arith.constant 0 : index
    %69 = vector.load %arg11[%c0_55, %c0_56] : memref<256x32xf32, #tpu.memory_space<vmem>>, vector<256x32xf32>
    tpu.vector_store %arg11[%c0_55, %c0_56], %68 {strides = array<i32>} : memref<256x32xf32, #tpu.memory_space<vmem>>, vector<256x32xf32>,
    %c24_57 = arith.constant 24 : index
    %c0_58 = arith.constant 0 : index
    %70 = vector.load %arg9[%c24_57, %c0_58] : memref<304x32xbf16, #tpu.memory_space<vmem>>, vector<256x32xbf16>
    %c1_59 = arith.constant 1 : index
    %c1_60 = arith.constant 1 : index
    %c0_61 = arith.constant 0 : index
    %c0_62 = arith.constant 0 : index
    %71 = vector.load %arg2[%c1_59, %c1_60, %c0_61, %c0_62] : memref<3x3x32x32xbf16, #tpu.memory_space<vmem>>, vector<1x1x32x32xbf16>
    %72 = vector.shape_cast %71 : vector<1x1x32x32xbf16> to vector<32x32xbf16>
    %cst_63 = arith.constant dense<0.000000e+00> : vector<256x32xf32>
    %73 = tpu.matmul %70, %72, %cst_63 {dimension_numbers = #tpu.dot_dimension_numbers<[1], [0], [0], [1], [0, 0, 1, 1], [], []>} : vector<256x32xbf16>, vector<32x32xbf16>, vector<256x32xf32> -> vector<256x32xf32>
    %c0_64 = arith.constant 0 : index
    %c0_65 = arith.constant 0 : index
    %74 = vector.load %arg11[%c0_64, %c0_65] : memref<256x32xf32, #tpu.memory_space<vmem>>, vector<256x32xf32>
    %75 = arith.addf %74, %73 : vector<256x32xf32>
    %c0_66 = arith.constant 0 : index
    %c0_67 = arith.constant 0 : index
    %76 = vector.load %arg11[%c0_66, %c0_67] : memref<256x32xf32, #tpu.memory_space<vmem>>, vector<256x32xf32>
    tpu.vector_store %arg11[%c0_66, %c0_67], %75 {strides = array<i32>} : memref<256x32xf32, #tpu.memory_space<vmem>>, vector<256x32xf32>,
    %c25 = arith.constant 25 : index
    %c0_68 = arith.constant 0 : index
    %77 = vector.load %arg9[%c25, %c0_68] : memref<304x32xbf16, #tpu.memory_space<vmem>>, vector<256x32xbf16>
    %c1_69 = arith.constant 1 : index
    %c2_70 = arith.constant 2 : index
    %c0_71 = arith.constant 0 : index
    %c0_72 = arith.constant 0 : index
    %78 = vector.load %arg2[%c1_69, %c2_70, %c0_71, %c0_72] : memref<3x3x32x32xbf16, #tpu.memory_space<vmem>>, vector<1x1x32x32xbf16>
    %79 = vector.shape_cast %78 : vector<1x1x32x32xbf16> to vector<32x32xbf16>
    %cst_73 = arith.constant dense<0.000000e+00> : vector<256x32xf32>
    %80 = tpu.matmul %77, %79, %cst_73 {dimension_numbers = #tpu.dot_dimension_numbers<[1], [0], [0], [1], [0, 0, 1, 1], [], []>} : vector<256x32xbf16>, vector<32x32xbf16>, vector<256x32xf32> -> vector<256x32xf32>
    %81 = vector.broadcast %26 : vector<256x1xf32> to vector<256x32xf32>
    %82 = arith.mulf %80, %81 : vector<256x32xf32>
    %c0_74 = arith.constant 0 : index
    %c0_75 = arith.constant 0 : index
    %83 = vector.load %arg11[%c0_74, %c0_75] : memref<256x32xf32, #tpu.memory_space<vmem>>, vector<256x32xf32>
    %84 = arith.addf %83, %82 : vector<256x32xf32>
    %c0_76 = arith.constant 0 : index
    %c0_77 = arith.constant 0 : index
    %85 = vector.load %arg11[%c0_76, %c0_77] : memref<256x32xf32, #tpu.memory_space<vmem>>, vector<256x32xf32>
    tpu.vector_store %arg11[%c0_76, %c0_77], %84 {strides = array<i32>} : memref<256x32xf32, #tpu.memory_space<vmem>>, vector<256x32xf32>,
    %c39 = arith.constant 39 : index
    %c0_78 = arith.constant 0 : index
    %86 = vector.load %arg9[%c39, %c0_78] : memref<304x32xbf16, #tpu.memory_space<vmem>>, vector<256x32xbf16>
    %c2_79 = arith.constant 2 : index
    %c0_80 = arith.constant 0 : index
    %c0_81 = arith.constant 0 : index
    %c0_82 = arith.constant 0 : index
    %87 = vector.load %arg2[%c2_79, %c0_80, %c0_81, %c0_82] : memref<3x3x32x32xbf16, #tpu.memory_space<vmem>>, vector<1x1x32x32xbf16>
    %88 = vector.shape_cast %87 : vector<1x1x32x32xbf16> to vector<32x32xbf16>
    %cst_83 = arith.constant dense<0.000000e+00> : vector<256x32xf32>
    %89 = tpu.matmul %86, %88, %cst_83 {dimension_numbers = #tpu.dot_dimension_numbers<[1], [0], [0], [1], [0, 0, 1, 1], [], []>} : vector<256x32xbf16>, vector<32x32xbf16>, vector<256x32xf32> -> vector<256x32xf32>
    %90 = vector.broadcast %21 : vector<256x1xf32> to vector<256x32xf32>
    %91 = arith.mulf %89, %90 : vector<256x32xf32>
    %c0_84 = arith.constant 0 : index
    %c0_85 = arith.constant 0 : index
    %92 = vector.load %arg11[%c0_84, %c0_85] : memref<256x32xf32, #tpu.memory_space<vmem>>, vector<256x32xf32>
    %93 = arith.addf %92, %91 : vector<256x32xf32>
    %c0_86 = arith.constant 0 : index
    %c0_87 = arith.constant 0 : index
    %94 = vector.load %arg11[%c0_86, %c0_87] : memref<256x32xf32, #tpu.memory_space<vmem>>, vector<256x32xf32>
    tpu.vector_store %arg11[%c0_86, %c0_87], %93 {strides = array<i32>} : memref<256x32xf32, #tpu.memory_space<vmem>>, vector<256x32xf32>,
    %c40 = arith.constant 40 : index
    %c0_88 = arith.constant 0 : index
    %95 = vector.load %arg9[%c40, %c0_88] : memref<304x32xbf16, #tpu.memory_space<vmem>>, vector<256x32xbf16>
    %c2_89 = arith.constant 2 : index
    %c1_90 = arith.constant 1 : index
    %c0_91 = arith.constant 0 : index
    %c0_92 = arith.constant 0 : index
    %96 = vector.load %arg2[%c2_89, %c1_90, %c0_91, %c0_92] : memref<3x3x32x32xbf16, #tpu.memory_space<vmem>>, vector<1x1x32x32xbf16>
    %97 = vector.shape_cast %96 : vector<1x1x32x32xbf16> to vector<32x32xbf16>
    %cst_93 = arith.constant dense<0.000000e+00> : vector<256x32xf32>
    %98 = tpu.matmul %95, %97, %cst_93 {dimension_numbers = #tpu.dot_dimension_numbers<[1], [0], [0], [1], [0, 0, 1, 1], [], []>} : vector<256x32xbf16>, vector<32x32xbf16>, vector<256x32xf32> -> vector<256x32xf32>
    %c0_94 = arith.constant 0 : index
    %c0_95 = arith.constant 0 : index
    %99 = vector.load %arg11[%c0_94, %c0_95] : memref<256x32xf32, #tpu.memory_space<vmem>>, vector<256x32xf32>
    %100 = arith.addf %99, %98 : vector<256x32xf32>
    %c0_96 = arith.constant 0 : index
    %c0_97 = arith.constant 0 : index
    %101 = vector.load %arg11[%c0_96, %c0_97] : memref<256x32xf32, #tpu.memory_space<vmem>>, vector<256x32xf32>
    tpu.vector_store %arg11[%c0_96, %c0_97], %100 {strides = array<i32>} : memref<256x32xf32, #tpu.memory_space<vmem>>, vector<256x32xf32>,
    %c41 = arith.constant 41 : index
    %c0_98 = arith.constant 0 : index
    %102 = vector.load %arg9[%c41, %c0_98] : memref<304x32xbf16, #tpu.memory_space<vmem>>, vector<256x32xbf16>
    %c2_99 = arith.constant 2 : index
    %c2_100 = arith.constant 2 : index
    %c0_101 = arith.constant 0 : index
    %c0_102 = arith.constant 0 : index
    %103 = vector.load %arg2[%c2_99, %c2_100, %c0_101, %c0_102] : memref<3x3x32x32xbf16, #tpu.memory_space<vmem>>, vector<1x1x32x32xbf16>
    %104 = vector.shape_cast %103 : vector<1x1x32x32xbf16> to vector<32x32xbf16>
    %cst_103 = arith.constant dense<0.000000e+00> : vector<256x32xf32>
    %105 = tpu.matmul %102, %104, %cst_103 {dimension_numbers = #tpu.dot_dimension_numbers<[1], [0], [0], [1], [0, 0, 1, 1], [], []>} : vector<256x32xbf16>, vector<32x32xbf16>, vector<256x32xf32> -> vector<256x32xf32>
    %106 = vector.broadcast %26 : vector<256x1xf32> to vector<256x32xf32>
    %107 = arith.mulf %105, %106 : vector<256x32xf32>
    %c0_104 = arith.constant 0 : index
    %c0_105 = arith.constant 0 : index
    %108 = vector.load %arg11[%c0_104, %c0_105] : memref<256x32xf32, #tpu.memory_space<vmem>>, vector<256x32xf32>
    %109 = arith.addf %108, %107 : vector<256x32xf32>
    %c0_106 = arith.constant 0 : index
    %c0_107 = arith.constant 0 : index
    %110 = vector.load %arg11[%c0_106, %c0_107] : memref<256x32xf32, #tpu.memory_space<vmem>>, vector<256x32xf32>
    tpu.vector_store %arg11[%c0_106, %c0_107], %109 {strides = array<i32>} : memref<256x32xf32, #tpu.memory_space<vmem>>, vector<256x32xf32>,
    %c0_108 = arith.constant 0 : index
    %c0_109 = arith.constant 0 : index
    %111 = vector.load %arg11[%c0_108, %c0_109] : memref<256x32xf32, #tpu.memory_space<vmem>>, vector<256x32xf32>
    %c0_110 = arith.constant 0 : index
    %c0_111 = arith.constant 0 : index
    %112 = vector.load %arg3[%c0_110, %c0_111] : memref<1x32xf32, #tpu.memory_space<vmem>>, vector<1x32xf32>
    %113 = vector.broadcast %112 : vector<1x32xf32> to vector<256x32xf32>
    %114 = arith.mulf %111, %113 : vector<256x32xf32>
    %c0_112 = arith.constant 0 : index
    %c0_113 = arith.constant 0 : index
    %115 = vector.load %arg4[%c0_112, %c0_113] : memref<1x32xf32, #tpu.memory_space<vmem>>, vector<1x32xf32>
    %116 = vector.broadcast %115 : vector<1x32xf32> to vector<256x32xf32>
    %117 = arith.addf %114, %116 : vector<256x32xf32>
    %cst_114 = arith.constant 0.000000e+00 : f32
    %118 = vector.broadcast %cst_114 : f32 to vector<256x32xf32>
    %119 = arith.maximumf %117, %118 : vector<256x32xf32>
    %120 = arith.truncf %119 : vector<256x32xf32> to vector<256x32xbf16>
    %c24_115 = arith.constant 24 : index
    %c0_116 = arith.constant 0 : index
    %121 = vector.load %arg10[%c24_115, %c0_116] : memref<304x32xbf16, #tpu.memory_space<vmem>>, vector<256x32xbf16>
    tpu.vector_store %arg10[%c24_115, %c0_116], %120 {strides = array<i32>} : memref<304x32xbf16, #tpu.memory_space<vmem>>, vector<256x32xbf16>,
    %cst_117 = arith.constant 0.000000e+00 : f32
    %122 = vector.broadcast %cst_117 : f32 to vector<256x32xf32>
    %c0_118 = arith.constant 0 : index
    %c0_119 = arith.constant 0 : index
    %123 = vector.load %arg11[%c0_118, %c0_119] : memref<256x32xf32, #tpu.memory_space<vmem>>, vector<256x32xf32>
    tpu.vector_store %arg11[%c0_118, %c0_119], %122 {strides = array<i32>} : memref<256x32xf32, #tpu.memory_space<vmem>>, vector<256x32xf32>,
    %c7_120 = arith.constant 7 : index
    %c0_121 = arith.constant 0 : index
    %124 = vector.load %arg10[%c7_120, %c0_121] : memref<304x32xbf16, #tpu.memory_space<vmem>>, vector<256x32xbf16>
    %c0_122 = arith.constant 0 : index
    %c0_123 = arith.constant 0 : index
    %c0_124 = arith.constant 0 : index
    %c0_125 = arith.constant 0 : index
    %125 = vector.load %arg5[%c0_122, %c0_123, %c0_124, %c0_125] : memref<3x3x32x32xbf16, #tpu.memory_space<vmem>>, vector<1x1x32x32xbf16>
    %126 = vector.shape_cast %125 : vector<1x1x32x32xbf16> to vector<32x32xbf16>
    %cst_126 = arith.constant dense<0.000000e+00> : vector<256x32xf32>
    %127 = tpu.matmul %124, %126, %cst_126 {dimension_numbers = #tpu.dot_dimension_numbers<[1], [0], [0], [1], [0, 0, 1, 1], [], []>} : vector<256x32xbf16>, vector<32x32xbf16>, vector<256x32xf32> -> vector<256x32xf32>
    %128 = vector.broadcast %21 : vector<256x1xf32> to vector<256x32xf32>
    %129 = arith.mulf %127, %128 : vector<256x32xf32>
    %c0_127 = arith.constant 0 : index
    %c0_128 = arith.constant 0 : index
    %130 = vector.load %arg11[%c0_127, %c0_128] : memref<256x32xf32, #tpu.memory_space<vmem>>, vector<256x32xf32>
    %131 = arith.addf %130, %129 : vector<256x32xf32>
    %c0_129 = arith.constant 0 : index
    %c0_130 = arith.constant 0 : index
    %132 = vector.load %arg11[%c0_129, %c0_130] : memref<256x32xf32, #tpu.memory_space<vmem>>, vector<256x32xf32>
    tpu.vector_store %arg11[%c0_129, %c0_130], %131 {strides = array<i32>} : memref<256x32xf32, #tpu.memory_space<vmem>>, vector<256x32xf32>,
    %c8_131 = arith.constant 8 : index
    %c0_132 = arith.constant 0 : index
    %133 = vector.load %arg10[%c8_131, %c0_132] : memref<304x32xbf16, #tpu.memory_space<vmem>>, vector<256x32xbf16>
    %c0_133 = arith.constant 0 : index
    %c1_134 = arith.constant 1 : index
    %c0_135 = arith.constant 0 : index
    %c0_136 = arith.constant 0 : index
    %134 = vector.load %arg5[%c0_133, %c1_134, %c0_135, %c0_136] : memref<3x3x32x32xbf16, #tpu.memory_space<vmem>>, vector<1x1x32x32xbf16>
    %135 = vector.shape_cast %134 : vector<1x1x32x32xbf16> to vector<32x32xbf16>
    %cst_137 = arith.constant dense<0.000000e+00> : vector<256x32xf32>
    %136 = tpu.matmul %133, %135, %cst_137 {dimension_numbers = #tpu.dot_dimension_numbers<[1], [0], [0], [1], [0, 0, 1, 1], [], []>} : vector<256x32xbf16>, vector<32x32xbf16>, vector<256x32xf32> -> vector<256x32xf32>
    %c0_138 = arith.constant 0 : index
    %c0_139 = arith.constant 0 : index
    %137 = vector.load %arg11[%c0_138, %c0_139] : memref<256x32xf32, #tpu.memory_space<vmem>>, vector<256x32xf32>
    %138 = arith.addf %137, %136 : vector<256x32xf32>
    %c0_140 = arith.constant 0 : index
    %c0_141 = arith.constant 0 : index
    %139 = vector.load %arg11[%c0_140, %c0_141] : memref<256x32xf32, #tpu.memory_space<vmem>>, vector<256x32xf32>
    tpu.vector_store %arg11[%c0_140, %c0_141], %138 {strides = array<i32>} : memref<256x32xf32, #tpu.memory_space<vmem>>, vector<256x32xf32>,
    %c9_142 = arith.constant 9 : index
    %c0_143 = arith.constant 0 : index
    %140 = vector.load %arg10[%c9_142, %c0_143] : memref<304x32xbf16, #tpu.memory_space<vmem>>, vector<256x32xbf16>
    %c0_144 = arith.constant 0 : index
    %c2_145 = arith.constant 2 : index
    %c0_146 = arith.constant 0 : index
    %c0_147 = arith.constant 0 : index
    %141 = vector.load %arg5[%c0_144, %c2_145, %c0_146, %c0_147] : memref<3x3x32x32xbf16, #tpu.memory_space<vmem>>, vector<1x1x32x32xbf16>
    %142 = vector.shape_cast %141 : vector<1x1x32x32xbf16> to vector<32x32xbf16>
    %cst_148 = arith.constant dense<0.000000e+00> : vector<256x32xf32>
    %143 = tpu.matmul %140, %142, %cst_148 {dimension_numbers = #tpu.dot_dimension_numbers<[1], [0], [0], [1], [0, 0, 1, 1], [], []>} : vector<256x32xbf16>, vector<32x32xbf16>, vector<256x32xf32> -> vector<256x32xf32>
    %144 = vector.broadcast %26 : vector<256x1xf32> to vector<256x32xf32>
    %145 = arith.mulf %143, %144 : vector<256x32xf32>
    %c0_149 = arith.constant 0 : index
    %c0_150 = arith.constant 0 : index
    %146 = vector.load %arg11[%c0_149, %c0_150] : memref<256x32xf32, #tpu.memory_space<vmem>>, vector<256x32xf32>
    %147 = arith.addf %146, %145 : vector<256x32xf32>
    %c0_151 = arith.constant 0 : index
    %c0_152 = arith.constant 0 : index
    %148 = vector.load %arg11[%c0_151, %c0_152] : memref<256x32xf32, #tpu.memory_space<vmem>>, vector<256x32xf32>
    tpu.vector_store %arg11[%c0_151, %c0_152], %147 {strides = array<i32>} : memref<256x32xf32, #tpu.memory_space<vmem>>, vector<256x32xf32>,
    %c23_153 = arith.constant 23 : index
    %c0_154 = arith.constant 0 : index
    %149 = vector.load %arg10[%c23_153, %c0_154] : memref<304x32xbf16, #tpu.memory_space<vmem>>, vector<256x32xbf16>
    %c1_155 = arith.constant 1 : index
    %c0_156 = arith.constant 0 : index
    %c0_157 = arith.constant 0 : index
    %c0_158 = arith.constant 0 : index
    %150 = vector.load %arg5[%c1_155, %c0_156, %c0_157, %c0_158] : memref<3x3x32x32xbf16, #tpu.memory_space<vmem>>, vector<1x1x32x32xbf16>
    %151 = vector.shape_cast %150 : vector<1x1x32x32xbf16> to vector<32x32xbf16>
    %cst_159 = arith.constant dense<0.000000e+00> : vector<256x32xf32>
    %152 = tpu.matmul %149, %151, %cst_159 {dimension_numbers = #tpu.dot_dimension_numbers<[1], [0], [0], [1], [0, 0, 1, 1], [], []>} : vector<256x32xbf16>, vector<32x32xbf16>, vector<256x32xf32> -> vector<256x32xf32>
    %153 = vector.broadcast %21 : vector<256x1xf32> to vector<256x32xf32>
    %154 = arith.mulf %152, %153 : vector<256x32xf32>
    %c0_160 = arith.constant 0 : index
    %c0_161 = arith.constant 0 : index
    %155 = vector.load %arg11[%c0_160, %c0_161] : memref<256x32xf32, #tpu.memory_space<vmem>>, vector<256x32xf32>
    %156 = arith.addf %155, %154 : vector<256x32xf32>
    %c0_162 = arith.constant 0 : index
    %c0_163 = arith.constant 0 : index
    %157 = vector.load %arg11[%c0_162, %c0_163] : memref<256x32xf32, #tpu.memory_space<vmem>>, vector<256x32xf32>
    tpu.vector_store %arg11[%c0_162, %c0_163], %156 {strides = array<i32>} : memref<256x32xf32, #tpu.memory_space<vmem>>, vector<256x32xf32>,
    %c24_164 = arith.constant 24 : index
    %c0_165 = arith.constant 0 : index
    %158 = vector.load %arg10[%c24_164, %c0_165] : memref<304x32xbf16, #tpu.memory_space<vmem>>, vector<256x32xbf16>
    %c1_166 = arith.constant 1 : index
    %c1_167 = arith.constant 1 : index
    %c0_168 = arith.constant 0 : index
    %c0_169 = arith.constant 0 : index
    %159 = vector.load %arg5[%c1_166, %c1_167, %c0_168, %c0_169] : memref<3x3x32x32xbf16, #tpu.memory_space<vmem>>, vector<1x1x32x32xbf16>
    %160 = vector.shape_cast %159 : vector<1x1x32x32xbf16> to vector<32x32xbf16>
    %cst_170 = arith.constant dense<0.000000e+00> : vector<256x32xf32>
    %161 = tpu.matmul %158, %160, %cst_170 {dimension_numbers = #tpu.dot_dimension_numbers<[1], [0], [0], [1], [0, 0, 1, 1], [], []>} : vector<256x32xbf16>, vector<32x32xbf16>, vector<256x32xf32> -> vector<256x32xf32>
    %c0_171 = arith.constant 0 : index
    %c0_172 = arith.constant 0 : index
    %162 = vector.load %arg11[%c0_171, %c0_172] : memref<256x32xf32, #tpu.memory_space<vmem>>, vector<256x32xf32>
    %163 = arith.addf %162, %161 : vector<256x32xf32>
    %c0_173 = arith.constant 0 : index
    %c0_174 = arith.constant 0 : index
    %164 = vector.load %arg11[%c0_173, %c0_174] : memref<256x32xf32, #tpu.memory_space<vmem>>, vector<256x32xf32>
    tpu.vector_store %arg11[%c0_173, %c0_174], %163 {strides = array<i32>} : memref<256x32xf32, #tpu.memory_space<vmem>>, vector<256x32xf32>,
    %c25_175 = arith.constant 25 : index
    %c0_176 = arith.constant 0 : index
    %165 = vector.load %arg10[%c25_175, %c0_176] : memref<304x32xbf16, #tpu.memory_space<vmem>>, vector<256x32xbf16>
    %c1_177 = arith.constant 1 : index
    %c2_178 = arith.constant 2 : index
    %c0_179 = arith.constant 0 : index
    %c0_180 = arith.constant 0 : index
    %166 = vector.load %arg5[%c1_177, %c2_178, %c0_179, %c0_180] : memref<3x3x32x32xbf16, #tpu.memory_space<vmem>>, vector<1x1x32x32xbf16>
    %167 = vector.shape_cast %166 : vector<1x1x32x32xbf16> to vector<32x32xbf16>
    %cst_181 = arith.constant dense<0.000000e+00> : vector<256x32xf32>
    %168 = tpu.matmul %165, %167, %cst_181 {dimension_numbers = #tpu.dot_dimension_numbers<[1], [0], [0], [1], [0, 0, 1, 1], [], []>} : vector<256x32xbf16>, vector<32x32xbf16>, vector<256x32xf32> -> vector<256x32xf32>
    %169 = vector.broadcast %26 : vector<256x1xf32> to vector<256x32xf32>
    %170 = arith.mulf %168, %169 : vector<256x32xf32>
    %c0_182 = arith.constant 0 : index
    %c0_183 = arith.constant 0 : index
    %171 = vector.load %arg11[%c0_182, %c0_183] : memref<256x32xf32, #tpu.memory_space<vmem>>, vector<256x32xf32>
    %172 = arith.addf %171, %170 : vector<256x32xf32>
    %c0_184 = arith.constant 0 : index
    %c0_185 = arith.constant 0 : index
    %173 = vector.load %arg11[%c0_184, %c0_185] : memref<256x32xf32, #tpu.memory_space<vmem>>, vector<256x32xf32>
    tpu.vector_store %arg11[%c0_184, %c0_185], %172 {strides = array<i32>} : memref<256x32xf32, #tpu.memory_space<vmem>>, vector<256x32xf32>,
    %c39_186 = arith.constant 39 : index
    %c0_187 = arith.constant 0 : index
    %174 = vector.load %arg10[%c39_186, %c0_187] : memref<304x32xbf16, #tpu.memory_space<vmem>>, vector<256x32xbf16>
    %c2_188 = arith.constant 2 : index
    %c0_189 = arith.constant 0 : index
    %c0_190 = arith.constant 0 : index
    %c0_191 = arith.constant 0 : index
    %175 = vector.load %arg5[%c2_188, %c0_189, %c0_190, %c0_191] : memref<3x3x32x32xbf16, #tpu.memory_space<vmem>>, vector<1x1x32x32xbf16>
    %176 = vector.shape_cast %175 : vector<1x1x32x32xbf16> to vector<32x32xbf16>
    %cst_192 = arith.constant dense<0.000000e+00> : vector<256x32xf32>
    %177 = tpu.matmul %174, %176, %cst_192 {dimension_numbers = #tpu.dot_dimension_numbers<[1], [0], [0], [1], [0, 0, 1, 1], [], []>} : vector<256x32xbf16>, vector<32x32xbf16>, vector<256x32xf32> -> vector<256x32xf32>
    %178 = vector.broadcast %21 : vector<256x1xf32> to vector<256x32xf32>
    %179 = arith.mulf %177, %178 : vector<256x32xf32>
    %c0_193 = arith.constant 0 : index
    %c0_194 = arith.constant 0 : index
    %180 = vector.load %arg11[%c0_193, %c0_194] : memref<256x32xf32, #tpu.memory_space<vmem>>, vector<256x32xf32>
    %181 = arith.addf %180, %179 : vector<256x32xf32>
    %c0_195 = arith.constant 0 : index
    %c0_196 = arith.constant 0 : index
    %182 = vector.load %arg11[%c0_195, %c0_196] : memref<256x32xf32, #tpu.memory_space<vmem>>, vector<256x32xf32>
    tpu.vector_store %arg11[%c0_195, %c0_196], %181 {strides = array<i32>} : memref<256x32xf32, #tpu.memory_space<vmem>>, vector<256x32xf32>,
    %c40_197 = arith.constant 40 : index
    %c0_198 = arith.constant 0 : index
    %183 = vector.load %arg10[%c40_197, %c0_198] : memref<304x32xbf16, #tpu.memory_space<vmem>>, vector<256x32xbf16>
    %c2_199 = arith.constant 2 : index
    %c1_200 = arith.constant 1 : index
    %c0_201 = arith.constant 0 : index
    %c0_202 = arith.constant 0 : index
    %184 = vector.load %arg5[%c2_199, %c1_200, %c0_201, %c0_202] : memref<3x3x32x32xbf16, #tpu.memory_space<vmem>>, vector<1x1x32x32xbf16>
    %185 = vector.shape_cast %184 : vector<1x1x32x32xbf16> to vector<32x32xbf16>
    %cst_203 = arith.constant dense<0.000000e+00> : vector<256x32xf32>
    %186 = tpu.matmul %183, %185, %cst_203 {dimension_numbers = #tpu.dot_dimension_numbers<[1], [0], [0], [1], [0, 0, 1, 1], [], []>} : vector<256x32xbf16>, vector<32x32xbf16>, vector<256x32xf32> -> vector<256x32xf32>
    %c0_204 = arith.constant 0 : index
    %c0_205 = arith.constant 0 : index
    %187 = vector.load %arg11[%c0_204, %c0_205] : memref<256x32xf32, #tpu.memory_space<vmem>>, vector<256x32xf32>
    %188 = arith.addf %187, %186 : vector<256x32xf32>
    %c0_206 = arith.constant 0 : index
    %c0_207 = arith.constant 0 : index
    %189 = vector.load %arg11[%c0_206, %c0_207] : memref<256x32xf32, #tpu.memory_space<vmem>>, vector<256x32xf32>
    tpu.vector_store %arg11[%c0_206, %c0_207], %188 {strides = array<i32>} : memref<256x32xf32, #tpu.memory_space<vmem>>, vector<256x32xf32>,
    %c41_208 = arith.constant 41 : index
    %c0_209 = arith.constant 0 : index
    %190 = vector.load %arg10[%c41_208, %c0_209] : memref<304x32xbf16, #tpu.memory_space<vmem>>, vector<256x32xbf16>
    %c2_210 = arith.constant 2 : index
    %c2_211 = arith.constant 2 : index
    %c0_212 = arith.constant 0 : index
    %c0_213 = arith.constant 0 : index
    %191 = vector.load %arg5[%c2_210, %c2_211, %c0_212, %c0_213] : memref<3x3x32x32xbf16, #tpu.memory_space<vmem>>, vector<1x1x32x32xbf16>
    %192 = vector.shape_cast %191 : vector<1x1x32x32xbf16> to vector<32x32xbf16>
    %cst_214 = arith.constant dense<0.000000e+00> : vector<256x32xf32>
    %193 = tpu.matmul %190, %192, %cst_214 {dimension_numbers = #tpu.dot_dimension_numbers<[1], [0], [0], [1], [0, 0, 1, 1], [], []>} : vector<256x32xbf16>, vector<32x32xbf16>, vector<256x32xf32> -> vector<256x32xf32>
    %194 = vector.broadcast %26 : vector<256x1xf32> to vector<256x32xf32>
    %195 = arith.mulf %193, %194 : vector<256x32xf32>
    %c0_215 = arith.constant 0 : index
    %c0_216 = arith.constant 0 : index
    %196 = vector.load %arg11[%c0_215, %c0_216] : memref<256x32xf32, #tpu.memory_space<vmem>>, vector<256x32xf32>
    %197 = arith.addf %196, %195 : vector<256x32xf32>
    %c0_217 = arith.constant 0 : index
    %c0_218 = arith.constant 0 : index
    %198 = vector.load %arg11[%c0_217, %c0_218] : memref<256x32xf32, #tpu.memory_space<vmem>>, vector<256x32xf32>
    tpu.vector_store %arg11[%c0_217, %c0_218], %197 {strides = array<i32>} : memref<256x32xf32, #tpu.memory_space<vmem>>, vector<256x32xf32>,
    %c0_219 = arith.constant 0 : index
    %c0_220 = arith.constant 0 : index
    %199 = vector.load %arg11[%c0_219, %c0_220] : memref<256x32xf32, #tpu.memory_space<vmem>>, vector<256x32xf32>
    %c0_221 = arith.constant 0 : index
    %c0_222 = arith.constant 0 : index
    %200 = vector.load %arg6[%c0_221, %c0_222] : memref<1x32xf32, #tpu.memory_space<vmem>>, vector<1x32xf32>
    %201 = vector.broadcast %200 : vector<1x32xf32> to vector<256x32xf32>
    %202 = arith.mulf %199, %201 : vector<256x32xf32>
    %c0_223 = arith.constant 0 : index
    %c0_224 = arith.constant 0 : index
    %203 = vector.load %arg7[%c0_223, %c0_224] : memref<1x32xf32, #tpu.memory_space<vmem>>, vector<1x32xf32>
    %204 = vector.broadcast %203 : vector<1x32xf32> to vector<256x32xf32>
    %205 = arith.addf %202, %204 : vector<256x32xf32>
    %c0_225 = arith.constant 0 : index
    %c0_226 = arith.constant 0 : index
    %c0_227 = arith.constant 0 : index
    %206 = vector.load %arg1[%c0_225, %c0_226, %c0_227] : memref<1x256x32xbf16, #tpu.memory_space<vmem>>, vector<1x256x32xbf16>
    %207 = vector.shape_cast %206 : vector<1x256x32xbf16> to vector<256x32xbf16>
    %208 = arith.extf %207 : vector<256x32xbf16> to vector<256x32xf32>
    %209 = arith.addf %205, %208 : vector<256x32xf32>
    %cst_228 = arith.constant 0.000000e+00 : f32
    %210 = vector.broadcast %cst_228 : f32 to vector<256x32xf32>
    %211 = arith.maximumf %209, %210 : vector<256x32xf32>
    %c0_229 = arith.constant 0 : index
    %c0_230 = arith.constant 0 : index
    %c0_231 = arith.constant 0 : index
    %212 = vector.load %arg8[%c0_229, %c0_230, %c0_231] : memref<1x256x32xf32, #tpu.memory_space<vmem>>, vector<1x256x32xf32>
    %213 = vector.shape_cast %212 : vector<1x256x32xf32> to vector<256x32xf32>
    %214 = vector.shape_cast %211 : vector<256x32xf32> to vector<1x256x32xf32>
    tpu.vector_store %arg8[%c0_229, %c0_230, %c0_231], %214 {strides = array<i32>} : memref<1x256x32xf32, #tpu.memory_space<vmem>>, vector<1x256x32xf32>,
    return
  }
  func.func @transform_0(%arg0: i32) -> (i32, i32, i32) {
    %c0_i32 = arith.constant 0 : i32
    %c0_i32_0 = arith.constant 0 : i32
    %c0_i32_1 = arith.constant 0 : i32
    return %arg0, %c0_i32, %c0_i32_0 : i32, i32, i32
  }
  func.func @transform_1(%arg0: i32) -> (i32, i32, i32, i32) {
    %c0_i32 = arith.constant 0 : i32
    %c0_i32_0 = arith.constant 0 : i32
    %c0_i32_1 = arith.constant 0 : i32
    %c0_i32_2 = arith.constant 0 : i32
    %c0_i32_3 = arith.constant 0 : i32
    return %c0_i32, %c0_i32_0, %c0_i32_1, %c0_i32_2 : i32, i32, i32, i32
  }
  func.func @transform_2(%arg0: i32) -> (i32, i32) {
    %c0_i32 = arith.constant 0 : i32
    %c0_i32_0 = arith.constant 0 : i32
    %c0_i32_1 = arith.constant 0 : i32
    return %c0_i32, %c0_i32_0 : i32, i32
  }
  func.func @transform_3(%arg0: i32) -> (i32, i32) {
    %c0_i32 = arith.constant 0 : i32
    %c0_i32_0 = arith.constant 0 : i32
    %c0_i32_1 = arith.constant 0 : i32
    return %c0_i32, %c0_i32_0 : i32, i32
  }
  func.func @transform_4(%arg0: i32) -> (i32, i32, i32, i32) {
    %c0_i32 = arith.constant 0 : i32
    %c0_i32_0 = arith.constant 0 : i32
    %c0_i32_1 = arith.constant 0 : i32
    %c0_i32_2 = arith.constant 0 : i32
    %c0_i32_3 = arith.constant 0 : i32
    return %c0_i32, %c0_i32_0, %c0_i32_1, %c0_i32_2 : i32, i32, i32, i32
  }
  func.func @transform_5(%arg0: i32) -> (i32, i32) {
    %c0_i32 = arith.constant 0 : i32
    %c0_i32_0 = arith.constant 0 : i32
    %c0_i32_1 = arith.constant 0 : i32
    return %c0_i32, %c0_i32_0 : i32, i32
  }
  func.func @transform_6(%arg0: i32) -> (i32, i32) {
    %c0_i32 = arith.constant 0 : i32
    %c0_i32_0 = arith.constant 0 : i32
    %c0_i32_1 = arith.constant 0 : i32
    return %c0_i32, %c0_i32_0 : i32, i32
  }
  func.func @transform_7(%arg0: i32) -> (i32, i32, i32) {
    %c0_i32 = arith.constant 0 : i32
    %c0_i32_0 = arith.constant 0 : i32
    %c0_i32_1 = arith.constant 0 : i32
    return %arg0, %c0_i32, %c0_i32_0 : i32, i32, i32
  }
}

</mosaic_0001>

<llo_original>
// kernel: tpu_custom_call.1
$region0: #{tpu_custom_call.1}
  #allocation0 [shape = 'u32[]', space=smem, size = 0x4, offset = 0x4, fixed_abs, tag = 'smem constant byte address 0x4 - core index']
  #allocation1 [shape = 'u32[144,128]{1,0:T(1,128)}', space=vmem, size = 0x12000, scoped, tag = 'internal scratch']
  #allocation2 [shape = 'bf16[304,32]{1,0:T(16,128)(2,1)}', space=vmem, size = 0x13000, scoped, tag = 'scratch operand']
  #allocation3 [shape = 'bf16[304,32]{1,0:T(16,128)(2,1)}', space=vmem, size = 0x13000, scoped, tag = 'scratch operand']
  #allocation4 [shape = 'f32[256,32]{1,0:T(8,128)}', space=vmem, size = 0x20000, scoped, tag = 'scratch operand']
  %s0 = inlined_call_operand.vmem [shape: bf16[2,256,32], index: 0, kind: input, shape index: {}]
  %s1 = inlined_call_operand.vmem [shape: bf16[3,3,32,32], index: 1, kind: input, shape index: {}]
  %s2 = inlined_call_operand.vmem [shape: f32[1,32], index: 2, kind: input, shape index: {}]
  %s3 = inlined_call_operand.vmem [shape: f32[1,32], index: 3, kind: input, shape index: {}]
  %s4 = inlined_call_operand.vmem [shape: bf16[3,3,32,32], index: 4, kind: input, shape index: {}]
  %s5 = inlined_call_operand.vmem [shape: f32[1,32], index: 5, kind: input, shape index: {}]
  %s6 = inlined_call_operand.vmem [shape: f32[1,32], index: 6, kind: input, shape index: {}]
  %s7 = inlined_call_operand.vmem [shape: f32[2,256,32], index: 7, kind: output, shape index: {}]
  %s8 = sld [smem:[#allocation0]]
  $region61: #{tpu_custom_call.1} parent=0
    _
  %s10 = ssub.s32 1, %s8
  %s11 = scalar_select 0, %s10, %s8
  loop: start=0, step=1, limit=4
  $region2: #{tpu_custom_call.1} parent=0 // loop_pre_header
    _
  $region3: #{tpu_custom_call.1} parent=0 // loop_header
    %s13 = sphi 0, %s17
    %p14 = scmp.ge.s32.totalorder %s13, 4
    %s23 = sphi 0, %s25
    %s26 = sphi 0, %s23
    %s27 = sphi 0, %s26
    %s43 = sphi 0, %s27
    %s47 = sphi 0, %s47
    %s49 = sphi 0, %s47
    %s50 = sphi 0, %s49
    %s64 = sphi 0, %s50
    %s68 = sphi 0, %s68
    %s70 = sphi 0, %s68
    %s71 = sphi 0, %s70
    %s85 = sphi 0, %s71
    %s89 = sphi 0, %s89
    %s91 = sphi 0, %s89
    %s92 = sphi 0, %s91
    %s106 = sphi 0, %s92
    %s110 = sphi 0, %s110
    %s112 = sphi 0, %s110
    %s113 = sphi 0, %s112
    %s127 = sphi 0, %s113
    %s131 = sphi 0, %s131
    %s133 = sphi 0, %s131
    %s134 = sphi 0, %s133
    %s148 = sphi 0, %s134
    %s152 = sphi 0, %s152
    %s154 = sphi 0, %s152
    %s155 = sphi 0, %s154
    %s169 = sphi 0, %s155
    %s175 = sphi 0, %s177
    %s178 = sphi 0, %s175
    %s179 = sphi 0, %s178
    %s195 = sphi 0, %s179
  $region4: #{tpu_custom_call.1} parent=0 // loop_header_branch
    %16 = sbr.rel (%p14) target = $region8
  $region5: #{tpu_custom_call.1} parent=0 // loop_body
    %s18 = ssub.s32 %s13, 1
    %s19 = ssub.s32 %s13, 2
    %s20 = sadd.s32 %s13, 1
    %s21 = ssub.s32 %s13, %s20
    %p22 = scmp.eq.s32.totalorder %s21, 0
    %s24 = sadd.s32 %s23, 1
    %s25 = scalar_select %p22, %s23, %s24
    %p28 = pneg %p22
    %p29 = scmp.eq.s32.totalorder %s13, 1
    %p30 = por %p28, %p29
    %p31 = scmp.ne.s32.totalorder %s23, %s26
    %p32 = scmp.eq.s32.totalorder %s13, 0
    %p33 = por %p31, %p32
    %p34 = scmp.ne.s32.totalorder %s23, %s26
    %p35 = scmp.eq.s32.totalorder %s18, 1
    %p36 = por %p34, %p35
    %p37 = scmp.ne.s32.totalorder %s26, %s27
    %p38 = scmp.eq.s32.totalorder %s18, 0
    %p39 = por %p37, %p38
    %p40 = scmp.ne.s32.totalorder %s26, %s27
    %p41 = scmp.eq.s32.totalorder %s19, 1
    %p42 = por %p40, %p41
    %p44 = scmp.ne.s32.totalorder %s27, %s43
    %p45 = scmp.eq.s32.totalorder %s19, 0
    %p46 = por %p44, %p45
    %s48 = sadd.s32 %s47, 1
    %p51 = scmp.eq.s32.totalorder %s13, 1
    %p52 = scmp.ne.s32.totalorder %s47, %s49
    %p53 = scmp.eq.s32.totalorder %s13, 0
    %p54 = por %p52, %p53
    %p55 = scmp.ne.s32.totalorder %s47, %s49
    %p56 = scmp.eq.s32.totalorder %s18, 1
    %p57 = por %p55, %p56
    %p58 = scmp.ne.s32.totalorder %s49, %s50
    %p59 = scmp.eq.s32.totalorder %s18, 0
    %p60 = por %p58, %p59
    %p61 = scmp.ne.s32.totalorder %s49, %s50
    %p62 = scmp.eq.s32.totalorder %s19, 1
    %p63 = por %p61, %p62
    %p65 = scmp.ne.s32.totalorder %s50, %s64
    %p66 = scmp.eq.s32.totalorder %s19, 0
    %p67 = por %p65, %p66
    %s69 = sadd.s32 %s68, 1
    %p72 = scmp.eq.s32.totalorder %s13, 1
    %p73 = scmp.ne.s32.totalorder %s68, %s70
    %p74 = scmp.eq.s32.totalorder %s13, 0
    %p75 = por %p73, %p74
    %p76 = scmp.ne.s32.totalorder %s68, %s70
    %p77 = scmp.eq.s32.totalorder %s18, 1
    %p78 = por %p76, %p77
    %p79 = scmp.ne.s32.totalorder %s70, %s71
    %p80 = scmp.eq.s32.totalorder %s18, 0
    %p81 = por %p79, %p80
    %p82 = scmp.ne.s32.totalorder %s70, %s71
    %p83 = scmp.eq.s32.totalorder %s19, 1
    %p84 = por %p82, %p83
    %p86 = scmp.ne.s32.totalorder %s71, %s85
    %p87 = scmp.eq.s32.totalorder %s19, 0
    %p88 = por %p86, %p87
    %s90 = sadd.s32 %s89, 1
    %p93 = scmp.eq.s32.totalorder %s13, 1
    %p94 = scmp.ne.s32.totalorder %s89, %s91
    %p95 = scmp.eq.s32.totalorder %s13, 0
    %p96 = por %p94, %p95
    %p97 = scmp.ne.s32.totalorder %s89, %s91
    %p98 = scmp.eq.s32.totalorder %s18, 1
    %p99 = por %p97, %p98
    %p100 = scmp.ne.s32.totalorder %s91, %s92
    %p101 = scmp.eq.s32.totalorder %s18, 0
    %p102 = por %p100, %p101
    %p103 = scmp.ne.s32.totalorder %s91, %s92
    %p104 = scmp.eq.s32.totalorder %s19, 1
    %p105 = por %p103, %p104
    %p107 = scmp.ne.s32.totalorder %s92, %s106
    %p108 = scmp.eq.s32.totalorder %s19, 0
    %p109 = por %p107, %p108
    %s111 = sadd.s32 %s110, 1
    %p114 = scmp.eq.s32.totalorder %s13, 1
    %p115 = scmp.ne.s32.totalorder %s110, %s112
    %p116 = scmp.eq.s32.totalorder %s13, 0
    %p117 = por %p115, %p116
    %p118 = scmp.ne.s32.totalorder %s110, %s112
    %p119 = scmp.eq.s32.totalorder %s18, 1
    %p120 = por %p118, %p119
    %p121 = scmp.ne.s32.totalorder %s112, %s113
    %p122 = scmp.eq.s32.totalorder %s18, 0
    %p123 = por %p121, %p122
    %p124 = scmp.ne.s32.totalorder %s112, %s113
    %p125 = scmp.eq.s32.totalorder %s19, 1
    %p126 = por %p124, %p125
    %p128 = scmp.ne.s32.totalorder %s113, %s127
    %p129 = scmp.eq.s32.totalorder %s19, 0
    %p130 = por %p128, %p129
    %s132 = sadd.s32 %s131, 1
    %p135 = scmp.eq.s32.totalorder %s13, 1
    %p136 = scmp.ne.s32.totalorder %s131, %s133
    %p137 = scmp.eq.s32.totalorder %s13, 0
    %p138 = por %p136, %p137
    %p139 = scmp.ne.s32.totalorder %s131, %s133
    %p140 = scmp.eq.s32.totalorder %s18, 1
    %p141 = por %p139, %p140
    %p142 = scmp.ne.s32.totalorder %s133, %s134
    %p143 = scmp.eq.s32.totalorder %s18, 0
    %p144 = por %p142, %p143
    %p145 = scmp.ne.s32.totalorder %s133, %s134
    %p146 = scmp.eq.s32.totalorder %s19, 1
    %p147 = por %p145, %p146
    %p149 = scmp.ne.s32.totalorder %s134, %s148
    %p150 = scmp.eq.s32.totalorder %s19, 0
    %p151 = por %p149, %p150
    %s153 = sadd.s32 %s152, 1
    %p156 = scmp.eq.s32.totalorder %s13, 1
    %p157 = scmp.ne.s32.totalorder %s152, %s154
    %p158 = scmp.eq.s32.totalorder %s13, 0
    %p159 = por %p157, %p158
    %p160 = scmp.ne.s32.totalorder %s152, %s154
    %p161 = scmp.eq.s32.totalorder %s18, 1
    %p162 = por %p160, %p161
    %p163 = scmp.ne.s32.totalorder %s154, %s155
    %p164 = scmp.eq.s32.totalorder %s18, 0
    %p165 = por %p163, %p164
    %p166 = scmp.ne.s32.totalorder %s154, %s155
    %p167 = scmp.eq.s32.totalorder %s19, 1
    %p168 = por %p166, %p167
    %p170 = scmp.ne.s32.totalorder %s155, %s169
    %p171 = scmp.eq.s32.totalorder %s19, 0
    %p172 = por %p170, %p171
    %s173 = ssub.s32 %s13, %s20
    %p174 = scmp.eq.s32.totalorder %s173, 0
    %s176 = sadd.s32 %s175, 1
    %s177 = scalar_select %p174, %s175, %s176
    %p180 = pneg %p174
    %p181 = scmp.eq.s32.totalorder %s13, 1
    %p182 = por %p180, %p181
    %p183 = scmp.ne.s32.totalorder %s175, %s178
    %p184 = scmp.eq.s32.totalorder %s13, 0
    %p185 = por %p183, %p184
    %p186 = scmp.ne.s32.totalorder %s175, %s178
    %p187 = scmp.eq.s32.totalorder %s18, 1
    %p188 = por %p186, %p187
    %p189 = scmp.ne.s32.totalorder %s178, %s179
    %p190 = scmp.eq.s32.totalorder %s18, 0
    %p191 = por %p189, %p190
    %p192 = scmp.ne.s32.totalorder %s178, %s179
    %p193 = scmp.eq.s32.totalorder %s19, 1
    %p194 = por %p192, %p193
    %p196 = scmp.ne.s32.totalorder %s179, %s195
    %p197 = scmp.eq.s32.totalorder %s19, 0
    %p198 = por %p196, %p197
    %p199 = scmp.le.s32.totalorder 1, %s13
    %p200 = scmp.lt.s32.totalorder %s13, 3
    %p201 = pnand %p199, %p200
    %p202 = pneg %p201
    // Predicated region
    $region9: #{tpu_custom_call.1} parent=5 // pred_check
      _
    $region10: #{tpu_custom_call.1} parent=5 // pred_check_branch
      %204 = sbr.rel (%p201) target = $region12
    $region11: #{tpu_custom_call.1} parent=5 // pred_region
      %s205 = ssub.s32 %s13, 1
      // Predicated region
      $region13: #{tpu_custom_call.1} parent=11 // pred_check
        %p206 = pneg %p60
      $region14: #{tpu_custom_call.1} parent=11 // pred_check_branch
        %208 = sbr.rel (%p206) target = $region16
      $region15: #{tpu_custom_call.1} parent=11 // pred_region
        _
      $region16: #{tpu_custom_call.1} parent=11 // pred_fallthru
        _
      // Predicated region
      $region17: #{tpu_custom_call.1} parent=11 // pred_check
        %p209 = pneg %p81
      $region18: #{tpu_custom_call.1} parent=11 // pred_check_branch
        %211 = sbr.rel (%p209) target = $region20
      $region19: #{tpu_custom_call.1} parent=11 // pred_region
        _
      $region20: #{tpu_custom_call.1} parent=11 // pred_fallthru
        _
      // Predicated region
      $region21: #{tpu_custom_call.1} parent=11 // pred_check
        %p212 = pneg %p102
      $region22: #{tpu_custom_call.1} parent=11 // pred_check_branch
        %214 = sbr.rel (%p212) target = $region24
      $region23: #{tpu_custom_call.1} parent=11 // pred_region
        _
      $region24: #{tpu_custom_call.1} parent=11 // pred_fallthru
        _
      // Predicated region
      $region25: #{tpu_custom_call.1} parent=11 // pred_check
        %p215 = pneg %p123
      $region26: #{tpu_custom_call.1} parent=11 // pred_check_branch
        %217 = sbr.rel (%p215) target = $region28
      $region27: #{tpu_custom_call.1} parent=11 // pred_region
        _
      $region28: #{tpu_custom_call.1} parent=11 // pred_fallthru
        _
      // Predicated region
      $region29: #{tpu_custom_call.1} parent=11 // pred_check
        %p218 = pneg %p144
      $region30: #{tpu_custom_call.1} parent=11 // pred_check_branch
        %220 = sbr.rel (%p218) target = $region32
      $region31: #{tpu_custom_call.1} parent=11 // pred_region
        _
      $region32: #{tpu_custom_call.1} parent=11 // pred_fallthru
        _
      // Predicated region
      $region33: #{tpu_custom_call.1} parent=11 // pred_check
        %p221 = pneg %p165
      $region34: #{tpu_custom_call.1} parent=11 // pred_check_branch
        %223 = sbr.rel (%p221) target = $region36
      $region35: #{tpu_custom_call.1} parent=11 // pred_region
        _
      $region36: #{tpu_custom_call.1} parent=11 // pred_fallthru
        _
    $region12: #{tpu_custom_call.1} parent=5 // pred_fallthru
      _
    %p224 = scmp.lt.s32.totalorder %s13, 2
    // Predicated region
    $region37: #{tpu_custom_call.1} parent=5 // pred_check
      %p225 = pneg %p224
    $region38: #{tpu_custom_call.1} parent=5 // pred_check_branch
      %227 = sbr.rel (%p225) target = $region40
    $region39: #{tpu_custom_call.1} parent=5 // pred_region
      // Predicated region
      $region41: #{tpu_custom_call.1} parent=39 // pred_check
        %p228 = pneg %p33
      $region42: #{tpu_custom_call.1} parent=39 // pred_check_branch
        %230 = sbr.rel (%p228) target = $region44
      $region43: #{tpu_custom_call.1} parent=39 // pred_region
        %p231 = scmp.lt.s32.totalorder %s13, 1
        %s232 = scalar_select %p231, %s13, 1
        %s233 = smul.addr %s232, 32
        %s234 = smul.addr %s233, 4
        %s235 = scalar_lea.vmem %s0, %s234
      $region44: #{tpu_custom_call.1} parent=39 // pred_fallthru
        _
    $region40: #{tpu_custom_call.1} parent=5 // pred_fallthru
      _
    %p236 = scmp.le.s32.totalorder 1, %s13
    %p237 = scmp.lt.s32.totalorder %s13, 3
    %p238 = pnand %p236, %p237
    %p239 = pneg %p238
    // Predicated region
    $region45: #{tpu_custom_call.1} parent=5 // pred_check
      _
    $region46: #{tpu_custom_call.1} parent=5 // pred_check_branch
      %241 = sbr.rel (%p238) target = $region48
    $region47: #{tpu_custom_call.1} parent=5 // pred_region
      %s242 = ssub.s32 %s13, 1
      %p243 = scmp.lt.s32.totalorder %s18, 1
      %s244 = scalar_select %p243, %s18, 1
      %s245 = smul.addr %s244, 32
      %s246 = smul.addr %s245, 4
      %s247 = scalar_lea.vmem %s0, %s246
      %p248 = pneg %p39
      %p249 = pneg %p36
      %p250 = pneg %p60
      %p251 = pneg %p57
      %p252 = pneg %p81
      %p253 = pneg %p78
      %p254 = pneg %p102
      %p255 = pneg %p99
      %p256 = pneg %p123
      %p257 = pneg %p120
      %p258 = pneg %p144
      %p259 = pneg %p141
      %p260 = pneg %p165
      %p261 = pneg %p162
      %p262 = pneg %p191
      %p263 = pneg %p188
      %p264 = scmp.lt.s32.totalorder %s18, 1
      %s265 = scalar_select %p264, %s18, 1
      %s266 = smul.addr %s265, 32
      %s267 = smul.addr %s266, 8
      %s268 = scalar_lea.vmem %s7, %s267
      %p269 = scmp.lt.s32.totalorder %s18, 1
      %s270 = scalar_select %p269, %s18, 1
      %s271 = smul.addr %s270, 32
      %s272 = smul.addr %s271, 4
      %s273 = scalar_lea.vmem %s0, %s272
      %p274 = scmp.lt.s32.totalorder %s18, 1
      %s275 = scalar_select %p274, %s18, 1
      %s276 = smul.addr %s275, 32
      %s277 = smul.addr %s276, 8
      %s278 = scalar_lea.vmem %s7, %s277
      %v280 = vlaneseq
      %v281 = vshrl.u32 %v280, 7
      %v282 = vadd.s32 %v281, 8
      %v283 = vadd.s32 %v281, 16
      %v284 = vadd.s32 %v281, 24
      %v285 = vadd.s32 %v281, 32
      %v286 = vadd.s32 %v281, 40
      %v287 = vadd.s32 %v281, 48
      %v288 = vadd.s32 %v281, 56
      %v289 = vadd.s32 %v281, 64
      %v290 = vadd.s32 %v281, 72
      %v291 = vadd.s32 %v281, 80
      %v292 = vadd.s32 %v281, 88
      %v293 = vadd.s32 %v281, 96
      %v294 = vadd.s32 %v281, 104
      %v295 = vadd.s32 %v281, 112
      %v296 = vadd.s32 %v281, 120
      %v297 = vadd.s32 %v281, 128
      %v298 = vadd.s32 %v281, 136
      %v299 = vadd.s32 %v281, 144
      %v300 = vadd.s32 %v281, 152
      %v301 = vadd.s32 %v281, 160
      %v302 = vadd.s32 %v281, 168
      %v303 = vadd.s32 %v281, 176
      %v304 = vadd.s32 %v281, 184
      %v305 = vadd.s32 %v281, 192
      %v306 = vadd.s32 %v281, 200
      %v307 = vadd.s32 %v281, 208
      %v308 = vadd.s32 %v281, 216
      %v309 = vadd.s32 %v281, 224
      %v310 = vadd.s32 %v281, 232
      %v311 = vadd.s32 %v281, 240
      %v312 = vadd.s32 %v281, 248
      %vm313 = vcmp.lt.s32.totalorder %v281, 0
      %v314 = vsub.s32 0, %v281
      %v315 = vsel %vm313, %v314, %v281
      %v316 = vshrl.u32 %v315, 4
      %v317 = vand.u32 %v315, 15
      %v318 = vsub.s32 0, %v317
      %v319 = vsel %vm313, %v318, %v317
      %vm320 = vcmp.lt.s32.totalorder %v282, 0
      %v321 = vsub.s32 0, %v282
      %v322 = vsel %vm320, %v321, %v282
      %v323 = vshrl.u32 %v322, 4
      %v324 = vand.u32 %v322, 15
      %v325 = vsub.s32 0, %v324
      %v326 = vsel %vm320, %v325, %v324
      %vm327 = vcmp.lt.s32.totalorder %v283, 0
      %v328 = vsub.s32 0, %v283
      %v329 = vsel %vm327, %v328, %v283
      %v330 = vshrl.u32 %v329, 4
      %v331 = vand.u32 %v329, 15
      %v332 = vsub.s32 0, %v331
      %v333 = vsel %vm327, %v332, %v331
      %vm334 = vcmp.lt.s32.totalorder %v284, 0
      %v335 = vsub.s32 0, %v284
      %v336 = vsel %vm334, %v335, %v284
      %v337 = vshrl.u32 %v336, 4
      %v338 = vand.u32 %v336, 15
      %v339 = vsub.s32 0, %v338
      %v340 = vsel %vm334, %v339, %v338
      %vm341 = vcmp.lt.s32.totalorder %v285, 0
      %v342 = vsub.s32 0, %v285
      %v343 = vsel %vm341, %v342, %v285
      %v344 = vshrl.u32 %v343, 4
      %v345 = vand.u32 %v343, 15
      %v346 = vsub.s32 0, %v345
      %v347 = vsel %vm341, %v346, %v345
      %vm348 = vcmp.lt.s32.totalorder %v286, 0
      %v349 = vsub.s32 0, %v286
      %v350 = vsel %vm348, %v349, %v286
      %v351 = vshrl.u32 %v350, 4
      %v352 = vand.u32 %v350, 15
      %v353 = vsub.s32 0, %v352
      %v354 = vsel %vm348, %v353, %v352
      %vm355 = vcmp.lt.s32.totalorder %v287, 0
      %v356 = vsub.s32 0, %v287
      %v357 = vsel %vm355, %v356, %v287
      %v358 = vshrl.u32 %v357, 4
      %v359 = vand.u32 %v357, 15
      %v360 = vsub.s32 0, %v359
      %v361 = vsel %vm355, %v360, %v359
      %vm362 = vcmp.lt.s32.totalorder %v288, 0
      %v363 = vsub.s32 0, %v288
      %v364 = vsel %vm362, %v363, %v288
      %v365 = vshrl.u32 %v364, 4
      %v366 = vand.u32 %v364, 15
      %v367 = vsub.s32 0, %v366
      %v368 = vsel %vm362, %v367, %v366
      %vm369 = vcmp.lt.s32.totalorder %v289, 0
      %v370 = vsub.s32 0, %v289
      %v371 = vsel %vm369, %v370, %v289
      %v372 = vshrl.u32 %v371, 4
      %v373 = vand.u32 %v371, 15
      %v374 = vsub.s32 0, %v373
      %v375 = vsel %vm369, %v374, %v373
      %vm376 = vcmp.lt.s32.totalorder %v290, 0
      %v377 = vsub.s32 0, %v290
      %v378 = vsel %vm376, %v377, %v290
      %v379 = vshrl.u32 %v378, 4
      %v380 = vand.u32 %v378, 15
      %v381 = vsub.s32 0, %v380
      %v382 = vsel %vm376, %v381, %v380
      %vm383 = vcmp.lt.s32.totalorder %v291, 0
      %v384 = vsub.s32 0, %v291
      %v385 = vsel %vm383, %v384, %v291
      %v386 = vshrl.u32 %v385, 4
      %v387 = vand.u32 %v385, 15
      %v388 = vsub.s32 0, %v387
      %v389 = vsel %vm383, %v388, %v387
      %vm390 = vcmp.lt.s32.totalorder %v292, 0
      %v391 = vsub.s32 0, %v292
      %v392 = vsel %vm390, %v391, %v292
      %v393 = vshrl.u32 %v392, 4
      %v394 = vand.u32 %v392, 15
      %v395 = vsub.s32 0, %v394
      %v396 = vsel %vm390, %v395, %v394
      %vm397 = vcmp.lt.s32.totalorder %v293, 0
      %v398 = vsub.s32 0, %v293
      %v399 = vsel %vm397, %v398, %v293
      %v400 = vshrl.u32 %v399, 4
      %v401 = vand.u32 %v399, 15
      %v402 = vsub.s32 0, %v401
      %v403 = vsel %vm397, %v402, %v401
      %vm404 = vcmp.lt.s32.totalorder %v294, 0
      %v405 = vsub.s32 0, %v294
      %v406 = vsel %vm404, %v405, %v294
      %v407 = vshrl.u32 %v406, 4
      %v408 = vand.u32 %v406, 15
      %v409 = vsub.s32 0, %v408
      %v410 = vsel %vm404, %v409, %v408
      %vm411 = vcmp.lt.s32.totalorder %v295, 0
      %v412 = vsub.s32 0, %v295
      %v413 = vsel %vm411, %v412, %v295
      %v414 = vshrl.u32 %v413, 4
      %v415 = vand.u32 %v413, 15
      %v416 = vsub.s32 0, %v415
      %v417 = vsel %vm411, %v416, %v415
      %vm418 = vcmp.lt.s32.totalorder %v296, 0
      %v419 = vsub.s32 0, %v296
      %v420 = vsel %vm418, %v419, %v296
      %v421 = vshrl.u32 %v420, 4
      %v422 = vand.u32 %v420, 15
      %v423 = vsub.s32 0, %v422
      %v424 = vsel %vm418, %v423, %v422
      %vm425 = vcmp.lt.s32.totalorder %v297, 0
      %v426 = vsub.s32 0, %v297
      %v427 = vsel %vm425, %v426, %v297
      %v428 = vshrl.u32 %v427, 4
      %v429 = vand.u32 %v427, 15
      %v430 = vsub.s32 0, %v429
      %v431 = vsel %vm425, %v430, %v429
      %vm432 = vcmp.lt.s32.totalorder %v298, 0
      %v433 = vsub.s32 0, %v298
      %v434 = vsel %vm432, %v433, %v298
      %v435 = vshrl.u32 %v434, 4
      %v436 = vand.u32 %v434, 15
      %v437 = vsub.s32 0, %v436
      %v438 = vsel %vm432, %v437, %v436
      %vm439 = vcmp.lt.s32.totalorder %v299, 0
      %v440 = vsub.s32 0, %v299
      %v441 = vsel %vm439, %v440, %v299
      %v442 = vshrl.u32 %v441, 4
      %v443 = vand.u32 %v441, 15
      %v444 = vsub.s32 0, %v443
      %v445 = vsel %vm439, %v444, %v443
      %vm446 = vcmp.lt.s32.totalorder %v300, 0
      %v447 = vsub.s32 0, %v300
      %v448 = vsel %vm446, %v447, %v300
      %v449 = vshrl.u32 %v448, 4
      %v450 = vand.u32 %v448, 15
      %v451 = vsub.s32 0, %v450
      %v452 = vsel %vm446, %v451, %v450
      %vm453 = vcmp.lt.s32.totalorder %v301, 0
      %v454 = vsub.s32 0, %v301
      %v455 = vsel %vm453, %v454, %v301
      %v456 = vshrl.u32 %v455, 4
      %v457 = vand.u32 %v455, 15
      %v458 = vsub.s32 0, %v457
      %v459 = vsel %vm453, %v458, %v457
      %vm460 = vcmp.lt.s32.totalorder %v302, 0
      %v461 = vsub.s32 0, %v302
      %v462 = vsel %vm460, %v461, %v302
      %v463 = vshrl.u32 %v462, 4
      %v464 = vand.u32 %v462, 15
      %v465 = vsub.s32 0, %v464
      %v466 = vsel %vm460, %v465, %v464
      %vm467 = vcmp.lt.s32.totalorder %v303, 0
      %v468 = vsub.s32 0, %v303
      %v469 = vsel %vm467, %v468, %v303
      %v470 = vshrl.u32 %v469, 4
      %v471 = vand.u32 %v469, 15
      %v472 = vsub.s32 0, %v471
      %v473 = vsel %vm467, %v472, %v471
      %vm474 = vcmp.lt.s32.totalorder %v304, 0
      %v475 = vsub.s32 0, %v304
      %v476 = vsel %vm474, %v475, %v304
      %v477 = vshrl.u32 %v476, 4
      %v478 = vand.u32 %v476, 15
      %v479 = vsub.s32 0, %v478
      %v480 = vsel %vm474, %v479, %v478
      %vm481 = vcmp.lt.s32.totalorder %v305, 0
      %v482 = vsub.s32 0, %v305
      %v483 = vsel %vm481, %v482, %v305
      %v484 = vshrl.u32 %v483, 4
      %v485 = vand.u32 %v483, 15
      %v486 = vsub.s32 0, %v485
      %v487 = vsel %vm481, %v486, %v485
      %vm488 = vcmp.lt.s32.totalorder %v306, 0
      %v489 = vsub.s32 0, %v306
      %v490 = vsel %vm488, %v489, %v306
      %v491 = vshrl.u32 %v490, 4
      %v492 = vand.u32 %v490, 15
      %v493 = vsub.s32 0, %v492
      %v494 = vsel %vm488, %v493, %v492
      %vm495 = vcmp.lt.s32.totalorder %v307, 0
      %v496 = vsub.s32 0, %v307
      %v497 = vsel %vm495, %v496, %v307
      %v498 = vshrl.u32 %v497, 4
      %v499 = vand.u32 %v497, 15
      %v500 = vsub.s32 0, %v499
      %v501 = vsel %vm495, %v500, %v499
      %vm502 = vcmp.lt.s32.totalorder %v308, 0
      %v503 = vsub.s32 0, %v308
      %v504 = vsel %vm502, %v503, %v308
      %v505 = vshrl.u32 %v504, 4
      %v506 = vand.u32 %v504, 15
      %v507 = vsub.s32 0, %v506
      %v508 = vsel %vm502, %v507, %v506
      %vm509 = vcmp.lt.s32.totalorder %v309, 0
      %v510 = vsub.s32 0, %v309
      %v511 = vsel %vm509, %v510, %v309
      %v512 = vshrl.u32 %v511, 4
      %v513 = vand.u32 %v511, 15
      %v514 = vsub.s32 0, %v513
      %v515 = vsel %vm509, %v514, %v513
      %vm516 = vcmp.lt.s32.totalorder %v310, 0
      %v517 = vsub.s32 0, %v310
      %v518 = vsel %vm516, %v517, %v310
      %v519 = vshrl.u32 %v518, 4
      %v520 = vand.u32 %v518, 15
      %v521 = vsub.s32 0, %v520
      %v522 = vsel %vm516, %v521, %v520
      %vm523 = vcmp.lt.s32.totalorder %v311, 0
      %v524 = vsub.s32 0, %v311
      %v525 = vsel %vm523, %v524, %v311
      %v526 = vshrl.u32 %v525, 4
      %v527 = vand.u32 %v525, 15
      %v528 = vsub.s32 0, %v527
      %v529 = vsel %vm523, %v528, %v527
      %vm530 = vcmp.lt.s32.totalorder %v312, 0
      %v531 = vsub.s32 0, %v312
      %v532 = vsel %vm530, %v531, %v312
      %v533 = vshrl.u32 %v532, 4
      %v534 = vand.u32 %v532, 15
      %v535 = vsub.s32 0, %v534
      %v536 = vsel %vm530, %v535, %v534
      %vm537 = vcmp.ne.s32.totalorder %v319, 0
      %vm538 = vcmp.ne.s32.totalorder %v326, 0
      %vm539 = vcmp.ne.s32.totalorder %v333, 0
      %vm540 = vcmp.ne.s32.totalorder %v340, 0
      %vm541 = vcmp.ne.s32.totalorder %v347, 0
      %vm542 = vcmp.ne.s32.totalorder %v354, 0
      %vm543 = vcmp.ne.s32.totalorder %v361, 0
      %vm544 = vcmp.ne.s32.totalorder %v368, 0
      %vm545 = vcmp.ne.s32.totalorder %v375, 0
      %vm546 = vcmp.ne.s32.totalorder %v382, 0
      %vm547 = vcmp.ne.s32.totalorder %v389, 0
      %vm548 = vcmp.ne.s32.totalorder %v396, 0
      %vm549 = vcmp.ne.s32.totalorder %v403, 0
      %vm550 = vcmp.ne.s32.totalorder %v410, 0
      %vm551 = vcmp.ne.s32.totalorder %v417, 0
      %vm552 = vcmp.ne.s32.totalorder %v424, 0
      %vm553 = vcmp.ne.s32.totalorder %v431, 0
      %vm554 = vcmp.ne.s32.totalorder %v438, 0
      %vm555 = vcmp.ne.s32.totalorder %v445, 0
      %vm556 = vcmp.ne.s32.totalorder %v452, 0
      %vm557 = vcmp.ne.s32.totalorder %v459, 0
      %vm558 = vcmp.ne.s32.totalorder %v466, 0
      %vm559 = vcmp.ne.s32.totalorder %v473, 0
      %vm560 = vcmp.ne.s32.totalorder %v480, 0
      %vm561 = vcmp.ne.s32.totalorder %v487, 0
      %vm562 = vcmp.ne.s32.totalorder %v494, 0
      %vm563 = vcmp.ne.s32.totalorder %v501, 0
      %vm564 = vcmp.ne.s32.totalorder %v508, 0
      %vm565 = vcmp.ne.s32.totalorder %v515, 0
      %vm566 = vcmp.ne.s32.totalorder %v522, 0
      %vm567 = vcmp.ne.s32.totalorder %v529, 0
      %vm568 = vcmp.ne.s32.totalorder %v536, 0
      %vm569 = vcmp.lt.s32.totalorder %v319, 0
      %vm570 = vcmp.lt.s32.totalorder %v326, 0
      %vm571 = vcmp.lt.s32.totalorder %v333, 0
      %vm572 = vcmp.lt.s32.totalorder %v340, 0
      %vm573 = vcmp.lt.s32.totalorder %v347, 0
      %vm574 = vcmp.lt.s32.totalorder %v354, 0
      %vm575 = vcmp.lt.s32.totalorder %v361, 0
      %vm576 = vcmp.lt.s32.totalorder %v368, 0
      %vm577 = vcmp.lt.s32.totalorder %v375, 0
      %vm578 = vcmp.lt.s32.totalorder %v382, 0
      %vm579 = vcmp.lt.s32.totalorder %v389, 0
      %vm580 = vcmp.lt.s32.totalorder %v396, 0
      %vm581 = vcmp.lt.s32.totalorder %v403, 0
      %vm582 = vcmp.lt.s32.totalorder %v410, 0
      %vm583 = vcmp.lt.s32.totalorder %v417, 0
      %vm584 = vcmp.lt.s32.totalorder %v424, 0
      %vm585 = vcmp.lt.s32.totalorder %v431, 0
      %vm586 = vcmp.lt.s32.totalorder %v438, 0
      %vm587 = vcmp.lt.s32.totalorder %v445, 0
      %vm588 = vcmp.lt.s32.totalorder %v452, 0
      %vm589 = vcmp.lt.s32.totalorder %v459, 0
      %vm590 = vcmp.lt.s32.totalorder %v466, 0
      %vm591 = vcmp.lt.s32.totalorder %v473, 0
      %vm592 = vcmp.lt.s32.totalorder %v480, 0
      %vm593 = vcmp.lt.s32.totalorder %v487, 0
      %vm594 = vcmp.lt.s32.totalorder %v494, 0
      %vm595 = vcmp.lt.s32.totalorder %v501, 0
      %vm596 = vcmp.lt.s32.totalorder %v508, 0
      %vm597 = vcmp.lt.s32.totalorder %v515, 0
      %vm598 = vcmp.lt.s32.totalorder %v522, 0
      %vm599 = vcmp.lt.s32.totalorder %v529, 0
      %vm600 = vcmp.lt.s32.totalorder %v536, 0
      %vm601 = vmand %vm569, %vm537
      %vm602 = vmand %vm570, %vm538
      %vm603 = vmand %vm571, %vm539
      %vm604 = vmand %vm572, %vm540
      %vm605 = vmand %vm573, %vm541
      %vm606 = vmand %vm574, %vm542
      %vm607 = vmand %vm575, %vm543
      %vm608 = vmand %vm576, %vm544
      %vm609 = vmand %vm577, %vm545
      %vm610 = vmand %vm578, %vm546
      %vm611 = vmand %vm579, %vm547
      %vm612 = vmand %vm580, %vm548
      %vm613 = vmand %vm581, %vm549
      %vm614 = vmand %vm582, %vm550
      %vm615 = vmand %vm583, %vm551
      %vm616 = vmand %vm584, %vm552
      %vm617 = vmand %vm585, %vm553
      %vm618 = vmand %vm586, %vm554
      %vm619 = vmand %vm587, %vm555
      %vm620 = vmand %vm588, %vm556
      %vm621 = vmand %vm589, %vm557
      %vm622 = vmand %vm590, %vm558
      %vm623 = vmand %vm591, %vm559
      %vm624 = vmand %vm592, %vm560
      %vm625 = vmand %vm593, %vm561
      %vm626 = vmand %vm594, %vm562
      %vm627 = vmand %vm595, %vm563
      %vm628 = vmand %vm596, %vm564
      %vm629 = vmand %vm597, %vm565
      %vm630 = vmand %vm598, %vm566
      %vm631 = vmand %vm599, %vm567
      %vm632 = vmand %vm600, %vm568
      %v633 = vadd.s32 %v319, 16
      %v634 = vadd.s32 %v326, 16
      %v635 = vadd.s32 %v333, 16
      %v636 = vadd.s32 %v340, 16
      %v637 = vadd.s32 %v347, 16
      %v638 = vadd.s32 %v354, 16
      %v639 = vadd.s32 %v361, 16
      %v640 = vadd.s32 %v368, 16
      %v641 = vadd.s32 %v375, 16
      %v642 = vadd.s32 %v382, 16
      %v643 = vadd.s32 %v389, 16
      %v644 = vadd.s32 %v396, 16
      %v645 = vadd.s32 %v403, 16
      %v646 = vadd.s32 %v410, 16
      %v647 = vadd.s32 %v417, 16
      %v648 = vadd.s32 %v424, 16
      %v649 = vadd.s32 %v431, 16
      %v650 = vadd.s32 %v438, 16
      %v651 = vadd.s32 %v445, 16
      %v652 = vadd.s32 %v452, 16
      %v653 = vadd.s32 %v459, 16
      %v654 = vadd.s32 %v466, 16
      %v655 = vadd.s32 %v473, 16
      %v656 = vadd.s32 %v480, 16
      %v657 = vadd.s32 %v487, 16
      %v658 = vadd.s32 %v494, 16
      %v659 = vadd.s32 %v501, 16
      %v660 = vadd.s32 %v508, 16
      %v661 = vadd.s32 %v515, 16
      %v662 = vadd.s32 %v522, 16
      %v663 = vadd.s32 %v529, 16
      %v664 = vadd.s32 %v536, 16
      %v665 = vsel %vm601, %v633, %v319
      %v666 = vsel %vm602, %v634, %v326
      %v667 = vsel %vm603, %v635, %v333
      %v668 = vsel %vm604, %v636, %v340
      %v669 = vsel %vm605, %v637, %v347
      %v670 = vsel %vm606, %v638, %v354
      %v671 = vsel %vm607, %v639, %v361
      %v672 = vsel %vm608, %v640, %v368
      %v673 = vsel %vm609, %v641, %v375
      %v674 = vsel %vm610, %v642, %v382
      %v675 = vsel %vm611, %v643, %v389
      %v676 = vsel %vm612, %v644, %v396
      %v677 = vsel %vm613, %v645, %v403
      %v678 = vsel %vm614, %v646, %v410
      %v679 = vsel %vm615, %v647, %v417
      %v680 = vsel %vm616, %v648, %v424
      %v681 = vsel %vm617, %v649, %v431
      %v682 = vsel %vm618, %v650, %v438
      %v683 = vsel %vm619, %v651, %v445
      %v684 = vsel %vm620, %v652, %v452
      %v685 = vsel %vm621, %v653, %v459
      %v686 = vsel %vm622, %v654, %v466
      %v687 = vsel %vm623, %v655, %v473
      %v688 = vsel %vm624, %v656, %v480
      %v689 = vsel %vm625, %v657, %v487
      %v690 = vsel %vm626, %v658, %v494
      %v691 = vsel %vm627, %v659, %v501
      %v692 = vsel %vm628, %v660, %v508
      %v693 = vsel %vm629, %v661, %v515
      %v694 = vsel %vm630, %v662, %v522
      %v695 = vsel %vm631, %v663, %v529
      %v696 = vsel %vm632, %v664, %v536
      %vm697 = vcmp.eq.s32.totalorder %v665, 0
      %vm698 = vcmp.eq.s32.totalorder %v666, 0
      %vm699 = vcmp.eq.s32.totalorder %v667, 0
      %vm700 = vcmp.eq.s32.totalorder %v668, 0
      %vm701 = vcmp.eq.s32.totalorder %v669, 0
      %vm702 = vcmp.eq.s32.totalorder %v670, 0
      %vm703 = vcmp.eq.s32.totalorder %v671, 0
      %vm704 = vcmp.eq.s32.totalorder %v672, 0
      %vm705 = vcmp.eq.s32.totalorder %v673, 0
      %vm706 = vcmp.eq.s32.totalorder %v674, 0
      %vm707 = vcmp.eq.s32.totalorder %v675, 0
      %vm708 = vcmp.eq.s32.totalorder %v676, 0
      %vm709 = vcmp.eq.s32.totalorder %v677, 0
      %vm710 = vcmp.eq.s32.totalorder %v678, 0
      %vm711 = vcmp.eq.s32.totalorder %v679, 0
      %vm712 = vcmp.eq.s32.totalorder %v680, 0
      %vm713 = vcmp.eq.s32.totalorder %v681, 0
      %vm714 = vcmp.eq.s32.totalorder %v682, 0
      %vm715 = vcmp.eq.s32.totalorder %v683, 0
      %vm716 = vcmp.eq.s32.totalorder %v684, 0
      %vm717 = vcmp.eq.s32.totalorder %v685, 0
      %vm718 = vcmp.eq.s32.totalorder %v686, 0
      %vm719 = vcmp.eq.s32.totalorder %v687, 0
      %vm720 = vcmp.eq.s32.totalorder %v688, 0
      %vm721 = vcmp.eq.s32.totalorder %v689, 0
      %vm722 = vcmp.eq.s32.totalorder %v690, 0
      %vm723 = vcmp.eq.s32.totalorder %v691, 0
      %vm724 = vcmp.eq.s32.totalorder %v692, 0
      %vm725 = vcmp.eq.s32.totalorder %v693, 0
      %vm726 = vcmp.eq.s32.totalorder %v694, 0
      %vm727 = vcmp.eq.s32.totalorder %v695, 0
      %vm728 = vcmp.eq.s32.totalorder %v696, 0
      %v729 = vsel %vm697, 0.0, 1.0
      %v730 = vsel %vm698, 0.0, 1.0
      %v731 = vsel %vm699, 0.0, 1.0
      %v732 = vsel %vm700, 0.0, 1.0
      %v733 = vsel %vm701, 0.0, 1.0
      %v734 = vsel %vm702, 0.0, 1.0
      %v735 = vsel %vm703, 0.0, 1.0
      %v736 = vsel %vm704, 0.0, 1.0
      %v737 = vsel %vm705, 0.0, 1.0
      %v738 = vsel %vm706, 0.0, 1.0
      %v739 = vsel %vm707, 0.0, 1.0
      %v740 = vsel %vm708, 0.0, 1.0
      %v741 = vsel %vm709, 0.0, 1.0
      %v742 = vsel %vm710, 0.0, 1.0
      %v743 = vsel %vm711, 0.0, 1.0
      %v744 = vsel %vm712, 0.0, 1.0
      %v745 = vsel %vm713, 0.0, 1.0
      %v746 = vsel %vm714, 0.0, 1.0
      %v747 = vsel %vm715, 0.0, 1.0
      %v748 = vsel %vm716, 0.0, 1.0
      %v749 = vsel %vm717, 0.0, 1.0
      %v750 = vsel %vm718, 0.0, 1.0
      %v751 = vsel %vm719, 0.0, 1.0
      %v752 = vsel %vm720, 0.0, 1.0
      %v753 = vsel %vm721, 0.0, 1.0
      %v754 = vsel %vm722, 0.0, 1.0
      %v755 = vsel %vm723, 0.0, 1.0
      %v756 = vsel %vm724, 0.0, 1.0
      %v757 = vsel %vm725, 0.0, 1.0
      %v758 = vsel %vm726, 0.0, 1.0
      %v759 = vsel %vm727, 0.0, 1.0
      %v760 = vsel %vm728, 0.0, 1.0
      %vm761 = vcmp.eq.s32.totalorder %v665, 15
      %vm762 = vcmp.eq.s32.totalorder %v666, 15
      %vm763 = vcmp.eq.s32.totalorder %v667, 15
      %vm764 = vcmp.eq.s32.totalorder %v668, 15
      %vm765 = vcmp.eq.s32.totalorder %v669, 15
      %vm766 = vcmp.eq.s32.totalorder %v670, 15
      %vm767 = vcmp.eq.s32.totalorder %v671, 15
      %vm768 = vcmp.eq.s32.totalorder %v672, 15
      %vm769 = vcmp.eq.s32.totalorder %v673, 15
      %vm770 = vcmp.eq.s32.totalorder %v674, 15
      %vm771 = vcmp.eq.s32.totalorder %v675, 15
      %vm772 = vcmp.eq.s32.totalorder %v676, 15
      %vm773 = vcmp.eq.s32.totalorder %v677, 15
      %vm774 = vcmp.eq.s32.totalorder %v678, 15
      %vm775 = vcmp.eq.s32.totalorder %v679, 15
      %vm776 = vcmp.eq.s32.totalorder %v680, 15
      %vm777 = vcmp.eq.s32.totalorder %v681, 15
      %vm778 = vcmp.eq.s32.totalorder %v682, 15
      %vm779 = vcmp.eq.s32.totalorder %v683, 15
      %vm780 = vcmp.eq.s32.totalorder %v684, 15
      %vm781 = vcmp.eq.s32.totalorder %v685, 15
      %vm782 = vcmp.eq.s32.totalorder %v686, 15
      %vm783 = vcmp.eq.s32.totalorder %v687, 15
      %vm784 = vcmp.eq.s32.totalorder %v688, 15
      %vm785 = vcmp.eq.s32.totalorder %v689, 15
      %vm786 = vcmp.eq.s32.totalorder %v690, 15
      %vm787 = vcmp.eq.s32.totalorder %v691, 15
      %vm788 = vcmp.eq.s32.totalorder %v692, 15
      %vm789 = vcmp.eq.s32.totalorder %v693, 15
      %vm790 = vcmp.eq.s32.totalorder %v694, 15
      %vm791 = vcmp.eq.s32.totalorder %v695, 15
      %vm792 = vcmp.eq.s32.totalorder %v696, 15
      %v793 = vsel %vm761, 0.0, 1.0
      %v794 = vsel %vm762, 0.0, 1.0
      %v795 = vsel %vm763, 0.0, 1.0
      %v796 = vsel %vm764, 0.0, 1.0
      %v797 = vsel %vm765, 0.0, 1.0
      %v798 = vsel %vm766, 0.0, 1.0
      %v799 = vsel %vm767, 0.0, 1.0
      %v800 = vsel %vm768, 0.0, 1.0
      %v801 = vsel %vm769, 0.0, 1.0
      %v802 = vsel %vm770, 0.0, 1.0
      %v803 = vsel %vm771, 0.0, 1.0
      %v804 = vsel %vm772, 0.0, 1.0
      %v805 = vsel %vm773, 0.0, 1.0
      %v806 = vsel %vm774, 0.0, 1.0
      %v807 = vsel %vm775, 0.0, 1.0
      %v808 = vsel %vm776, 0.0, 1.0
      %v809 = vsel %vm777, 0.0, 1.0
      %v810 = vsel %vm778, 0.0, 1.0
      %v811 = vsel %vm779, 0.0, 1.0
      %v812 = vsel %vm780, 0.0, 1.0
      %v813 = vsel %vm781, 0.0, 1.0
      %v814 = vsel %vm782, 0.0, 1.0
      %v815 = vsel %vm783, 0.0, 1.0
      %v816 = vsel %vm784, 0.0, 1.0
      %v817 = vsel %vm785, 0.0, 1.0
      %v818 = vsel %vm786, 0.0, 1.0
      %v819 = vsel %vm787, 0.0, 1.0
      %v820 = vsel %vm788, 0.0, 1.0
      %v821 = vsel %vm789, 0.0, 1.0
      %v822 = vsel %vm790, 0.0, 1.0
      %v823 = vsel %vm791, 0.0, 1.0
      %v824 = vsel %vm792, 0.0, 1.0
      %vm825 = vcmask 261120
      %826 = vst.msk [vmem:[#allocation2] sm:$0xff] %vm825, 0
      %827 = vst.msk [vmem:[#allocation2 + $0x8] sm:$0xff] %vm825, 0
      %828 = vst.msk [vmem:[#allocation2 + $0x10] sm:$0xff] %vm825, 0
      %829 = vst.msk [vmem:[#allocation2 + $0x18] sm:$0xff] %vm825, 0
      %830 = vst.msk [vmem:[#allocation2 + $0x20] sm:$0xff] %vm825, 0
      %831 = vst.msk [vmem:[#allocation2 + $0x28] sm:$0xff] %vm825, 0
      %832 = vst.msk [vmem:[#allocation2 + $0x30] sm:$0xff] %vm825, 0
      %833 = vst.msk [vmem:[#allocation2 + $0x38] sm:$0xff] %vm825, 0
      %834 = vst.msk [vmem:[#allocation2 + $0x40] sm:$0xff] %vm825, 0
      %835 = vst.msk [vmem:[#allocation2 + $0x48] sm:$0xff] %vm825, 0
      %836 = vst.msk [vmem:[#allocation2 + $0x50] sm:$0xff] %vm825, 0
      %837 = vst.msk [vmem:[#allocation2 + $0x58] sm:$0xff] %vm825, 0
      %838 = vst.msk [vmem:[#allocation2 + $0x60] sm:$0xff] %vm825, 0
      %839 = vst.msk [vmem:[#allocation2 + $0x68] sm:$0xff] %vm825, 0
      %840 = vst.msk [vmem:[#allocation2 + $0x70] sm:$0xff] %vm825, 0
      %841 = vst.msk [vmem:[#allocation2 + $0x78] sm:$0xff] %vm825, 0
      %842 = vst.msk [vmem:[#allocation2 + $0x80] sm:$0xff] %vm825, 0
      %843 = vst.msk [vmem:[#allocation2 + $0x88] sm:$0xff] %vm825, 0
      %844 = vst.msk [vmem:[#allocation2 + $0x90] sm:$0xff] %vm825, 0
      %845 = vst.msk [vmem:[#allocation3] sm:$0xff] %vm825, 0
      %846 = vst.msk [vmem:[#allocation3 + $0x8] sm:$0xff] %vm825, 0
      %847 = vst.msk [vmem:[#allocation3 + $0x10] sm:$0xff] %vm825, 0
      %848 = vst.msk [vmem:[#allocation3 + $0x18] sm:$0xff] %vm825, 0
      %849 = vst.msk [vmem:[#allocation3 + $0x20] sm:$0xff] %vm825, 0
      %850 = vst.msk [vmem:[#allocation3 + $0x28] sm:$0xff] %vm825, 0
      %851 = vst.msk [vmem:[#allocation3 + $0x30] sm:$0xff] %vm825, 0
      %852 = vst.msk [vmem:[#allocation3 + $0x38] sm:$0xff] %vm825, 0
      %853 = vst.msk [vmem:[#allocation3 + $0x40] sm:$0xff] %vm825, 0
      %854 = vst.msk [vmem:[#allocation3 + $0x48] sm:$0xff] %vm825, 0
      %855 = vst.msk [vmem:[#allocation3 + $0x50] sm:$0xff] %vm825, 0
      %856 = vst.msk [vmem:[#allocation3 + $0x58] sm:$0xff] %vm825, 0
      %857 = vst.msk [vmem:[#allocation3 + $0x60] sm:$0xff] %vm825, 0
      %858 = vst.msk [vmem:[#allocation3 + $0x68] sm:$0xff] %vm825, 0
      %859 = vst.msk [vmem:[#allocation3 + $0x70] sm:$0xff] %vm825, 0
      %860 = vst.msk [vmem:[#allocation3 + $0x78] sm:$0xff] %vm825, 0
      %861 = vst.msk [vmem:[#allocation3 + $0x80] sm:$0xff] %vm825, 0
      %862 = vst.msk [vmem:[#allocation3 + $0x88] sm:$0xff] %vm825, 0
      %863 = vst.msk [vmem:[#allocation3 + $0x90] sm:$0xff] %vm825, 0
      %v864 = vld [vmem:[%s273] sm:$0xf]
      %v865 = vld [vmem:[%s273 + $0x4] sm:$0xf]
      %v866 = vld [vmem:[%s273 + $0x8] sm:$0xf]
      %v867 = vld [vmem:[%s273 + $0xc] sm:$0xf]
      %v868 = vld [vmem:[%s273 + $0x10] sm:$0xf]
      %v869 = vld [vmem:[%s273 + $0x14] sm:$0xf]
      %v870 = vld [vmem:[%s273 + $0x18] sm:$0xf]
      %v871 = vld [vmem:[%s273 + $0x1c] sm:$0xf]
      %v872 = vld [vmem:[%s273 + $0x20] sm:$0xf]
      %v873 = vld [vmem:[%s273 + $0x24] sm:$0xf]
      %v874 = vld [vmem:[%s273 + $0x28] sm:$0xf]
      %v875 = vld [vmem:[%s273 + $0x2c] sm:$0xf]
      %v876 = vld [vmem:[%s273 + $0x30] sm:$0xf]
      %v877 = vld [vmem:[%s273 + $0x34] sm:$0xf]
      %v878 = vld [vmem:[%s273 + $0x38] sm:$0xf]
      %v879 = vld [vmem:[%s273 + $0x3c] sm:$0xf]
      %v880 = vld [vmem:[%s273 + $0x40] sm:$0xf]
      %v881 = vld [vmem:[%s273 + $0x44] sm:$0xf]
      %v882 = vld [vmem:[%s273 + $0x48] sm:$0xf]
      %v883 = vld [vmem:[%s273 + $0x4c] sm:$0xf]
      %v884 = vld [vmem:[%s273 + $0x50] sm:$0xf]
      %v885 = vld [vmem:[%s273 + $0x54] sm:$0xf]
      %v886 = vld [vmem:[%s273 + $0x58] sm:$0xf]
      %v887 = vld [vmem:[%s273 + $0x5c] sm:$0xf]
      %v888 = vld [vmem:[%s273 + $0x60] sm:$0xf]
      %v889 = vld [vmem:[%s273 + $0x64] sm:$0xf]
      %v890 = vld [vmem:[%s273 + $0x68] sm:$0xf]
      %v891 = vld [vmem:[%s273 + $0x6c] sm:$0xf]
      %v892 = vld [vmem:[%s273 + $0x70] sm:$0xf]
      %v893 = vld [vmem:[%s273 + $0x74] sm:$0xf]
      %v894 = vld [vmem:[%s273 + $0x78] sm:$0xf]
      %v895 = vld [vmem:[%s273 + $0x7c] sm:$0xf]
      %v928 = vunpack.c.l.b16 %v864
      %v929 = vunpack.c.l.b16 %v865
      %v930 = vunpack.c.l.b16 %v866
      %v931 = vunpack.c.l.b16 %v867
      %v932 = vunpack.c.l.b16 %v868
      %v933 = vunpack.c.l.b16 %v869
      %v934 = vunpack.c.l.b16 %v870
      %v935 = vunpack.c.l.b16 %v871
      %v936 = vunpack.c.l.b16 %v872
      %v937 = vunpack.c.l.b16 %v873
      %v938 = vunpack.c.l.b16 %v874
      %v939 = vunpack.c.l.b16 %v875
      %v940 = vunpack.c.l.b16 %v876
      %v941 = vunpack.c.l.b16 %v877
      %v942 = vunpack.c.l.b16 %v878
      %v943 = vunpack.c.l.b16 %v879
      %v944 = vunpack.c.l.b16 %v880
      %v945 = vunpack.c.l.b16 %v881
      %v946 = vunpack.c.l.b16 %v882
      %v947 = vunpack.c.l.b16 %v883
      %v948 = vunpack.c.l.b16 %v884
      %v949 = vunpack.c.l.b16 %v885
      %v950 = vunpack.c.l.b16 %v886
      %v951 = vunpack.c.l.b16 %v887
      %v952 = vunpack.c.l.b16 %v888
      %v953 = vunpack.c.l.b16 %v889
      %v954 = vunpack.c.l.b16 %v890
      %v955 = vunpack.c.l.b16 %v891
      %v956 = vunpack.c.l.b16 %v892
      %v957 = vunpack.c.l.b16 %v893
      %v958 = vunpack.c.l.b16 %v894
      %v959 = vunpack.c.l.b16 %v895
      %v960 = vpack.c.b16 %v928, %v928
      %v961 = vpack.c.b16 %v930, %v929
      %v962 = vpack.c.b16 %v932, %v931
      %v963 = vpack.c.b16 %v934, %v933
      %v964 = vpack.c.b16 %v936, %v935
      %v965 = vpack.c.b16 %v938, %v937
      %v966 = vpack.c.b16 %v940, %v939
      %v967 = vpack.c.b16 %v942, %v941
      %v968 = vpack.c.b16 %v944, %v943
      %v969 = vpack.c.b16 %v946, %v945
      %v970 = vpack.c.b16 %v948, %v947
      %v971 = vpack.c.b16 %v950, %v949
      %v972 = vpack.c.b16 %v952, %v951
      %v973 = vpack.c.b16 %v954, %v953
      %v974 = vpack.c.b16 %v956, %v955
      %v975 = vpack.c.b16 %v958, %v957
      %v976 = vpack.c.b16 %v959, %v959
      %vm994 = vcmask 261124
      %995 = vst.msk [vmem:[#allocation2 + $0x8] sm:$0xf0] %vm994, %v960
      %996 = vst.msk [vmem:[#allocation2 + $0x10] sm:$0xff] %vm825, %v961
      %997 = vst.msk [vmem:[#allocation2 + $0x18] sm:$0xff] %vm825, %v962
      %998 = vst.msk [vmem:[#allocation2 + $0x20] sm:$0xff] %vm825, %v963
      %999 = vst.msk [vmem:[#allocation2 + $0x28] sm:$0xff] %vm825, %v964
      %1000 = vst.msk [vmem:[#allocation2 + $0x30] sm:$0xff] %vm825, %v965
      %1001 = vst.msk [vmem:[#allocation2 + $0x38] sm:$0xff] %vm825, %v966
      %1002 = vst.msk [vmem:[#allocation2 + $0x40] sm:$0xff] %vm825, %v967
      %1003 = vst.msk [vmem:[#allocation2 + $0x48] sm:$0xff] %vm825, %v968
      %1004 = vst.msk [vmem:[#allocation2 + $0x50] sm:$0xff] %vm825, %v969
      %1005 = vst.msk [vmem:[#allocation2 + $0x58] sm:$0xff] %vm825, %v970
      %1006 = vst.msk [vmem:[#allocation2 + $0x60] sm:$0xff] %vm825, %v971
      %1007 = vst.msk [vmem:[#allocation2 + $0x68] sm:$0xff] %vm825, %v972
      %1008 = vst.msk [vmem:[#allocation2 + $0x70] sm:$0xff] %vm825, %v973
      %1009 = vst.msk [vmem:[#allocation2 + $0x78] sm:$0xff] %vm825, %v974
      %1010 = vst.msk [vmem:[#allocation2 + $0x80] sm:$0xff] %vm825, %v975
      %vm1011 = vcmask 257024
      %1012 = vst.msk [vmem:[#allocation2 + $0x88] sm:$0xf] %vm1011, %v976
      %1013 = vst.msk [vmem:[#allocation4] sm:$0xff] %vm825, 0.0
      %1014 = vst.msk [vmem:[#allocation4 + $0x8] sm:$0xff] %vm825, 0.0
      %1015 = vst.msk [vmem:[#allocation4 + $0x10] sm:$0xff] %vm825, 0.0
      %1016 = vst.msk [vmem:[#allocation4 + $0x18] sm:$0xff] %vm825, 0.0
      %1017 = vst.msk [vmem:[#allocation4 + $0x20] sm:$0xff] %vm825, 0.0
      %1018 = vst.msk [vmem:[#allocation4 + $0x28] sm:$0xff] %vm825, 0.0
      %1019 = vst.msk [vmem:[#allocation4 + $0x30] sm:$0xff] %vm825, 0.0
      %1020 = vst.msk [vmem:[#allocation4 + $0x38] sm:$0xff] %vm825, 0.0
      %1021 = vst.msk [vmem:[#allocation4 + $0x40] sm:$0xff] %vm825, 0.0
      %1022 = vst.msk [vmem:[#allocation4 + $0x48] sm:$0xff] %vm825, 0.0
      %1023 = vst.msk [vmem:[#allocation4 + $0x50] sm:$0xff] %vm825, 0.0
      %1024 = vst.msk [vmem:[#allocation4 + $0x58] sm:$0xff] %vm825, 0.0
      %1025 = vst.msk [vmem:[#allocation4 + $0x60] sm:$0xff] %vm825, 0.0
      %1026 = vst.msk [vmem:[#allocation4 + $0x68] sm:$0xff] %vm825, 0.0
      %1027 = vst.msk [vmem:[#allocation4 + $0x70] sm:$0xff] %vm825, 0.0
      %1028 = vst.msk [vmem:[#allocation4 + $0x78] sm:$0xff] %vm825, 0.0
      %1029 = vst.msk [vmem:[#allocation4 + $0x80] sm:$0xff] %vm825, 0.0
      %1030 = vst.msk [vmem:[#allocation4 + $0x88] sm:$0xff] %vm825, 0.0
      %1031 = vst.msk [vmem:[#allocation4 + $0x90] sm:$0xff] %vm825, 0.0
      %1032 = vst.msk [vmem:[#allocation4 + $0x98] sm:$0xff] %vm825, 0.0
      %1033 = vst.msk [vmem:[#allocation4 + $0xa0] sm:$0xff] %vm825, 0.0
      %1034 = vst.msk [vmem:[#allocation4 + $0xa8] sm:$0xff] %vm825, 0.0
      %1035 = vst.msk [vmem:[#allocation4 + $0xb0] sm:$0xff] %vm825, 0.0
      %1036 = vst.msk [vmem:[#allocation4 + $0xb8] sm:$0xff] %vm825, 0.0
      %1037 = vst.msk [vmem:[#allocation4 + $0xc0] sm:$0xff] %vm825, 0.0
      %1038 = vst.msk [vmem:[#allocation4 + $0xc8] sm:$0xff] %vm825, 0.0
      %1039 = vst.msk [vmem:[#allocation4 + $0xd0] sm:$0xff] %vm825, 0.0
      %1040 = vst.msk [vmem:[#allocation4 + $0xd8] sm:$0xff] %vm825, 0.0
      %1041 = vst.msk [vmem:[#allocation4 + $0xe0] sm:$0xff] %vm825, 0.0
      %1042 = vst.msk [vmem:[#allocation4 + $0xe8] sm:$0xff] %vm825, 0.0
      %1043 = vst.msk [vmem:[#allocation4 + $0xf0] sm:$0xff] %vm825, 0.0
      %1044 = vst.msk [vmem:[#allocation4 + $0xf8] sm:$0xff] %vm825, 0.0
      %v1045 = vld [vmem:[#allocation2] sm:$0xf8]
      %v1046 = vld [vmem:[#allocation2 + $0x8] sm:$0xff]
      %v1047 = vld [vmem:[#allocation2 + $0x10] sm:$0xff]
      %v1048 = vld [vmem:[#allocation2 + $0x18] sm:$0xff]
      %v1049 = vld [vmem:[#allocation2 + $0x20] sm:$0xff]
      %v1050 = vld [vmem:[#allocation2 + $0x28] sm:$0xff]
      %v1051 = vld [vmem:[#allocation2 + $0x30] sm:$0xff]
      %v1052 = vld [vmem:[#allocation2 + $0x38] sm:$0xff]
      %v1053 = vld [vmem:[#allocation2 + $0x40] sm:$0xff]
      %v1054 = vld [vmem:[#allocation2 + $0x48] sm:$0xff]
      %v1055 = vld [vmem:[#allocation2 + $0x50] sm:$0xff]
      %v1056 = vld [vmem:[#allocation2 + $0x58] sm:$0xff]
      %v1057 = vld [vmem:[#allocation2 + $0x60] sm:$0xff]
      %v1058 = vld [vmem:[#allocation2 + $0x68] sm:$0xff]
      %v1059 = vld [vmem:[#allocation2 + $0x70] sm:$0xff]
      %v1060 = vld [vmem:[#allocation2 + $0x78] sm:$0xff]
      %v1061 = vld [vmem:[#allocation2 + $0x80] sm:$0xf]
      %v1062 = vld [vmem:[%s1] sm:$0xf]
      %v1063 = vld [vmem:[%s1 + $0x4] sm:$0xf]
      %v1064 = vld [vmem:[%s1 + $0x8] sm:$0xf]
      %v1065 = vld [vmem:[%s1 + $0xc] sm:$0xf]
      %vm1066 = vsmask.f32 4352
      %v1068 = vshrl.u32 %v1045, 16
      %v1070 = vrot.slane %v1068, 3
      %v1071 = vshll.u32 %v1045, 16
      %v1073 = vrot.slane %v1071, 4
      %v1074 = vor.u32 %v1070, %v1073
      %v1076 = vshrl.u32 %v1046, 16
      %v1078 = vrot.slane %v1076, 3
      %v1079 = vshll.u32 %v1046, 16
      %v1081 = vrot.slane %v1079, 4
      %v1082 = vor.u32 %v1078, %v1081
      %v1083 = vsel %vm1066, %v1074, %v1082
      %v1085 = vshrl.u32 %v1047, 16
      %v1087 = vrot.slane %v1085, 3
      %v1088 = vshll.u32 %v1047, 16
      %v1090 = vrot.slane %v1088, 4
      %v1091 = vor.u32 %v1087, %v1090
      %v1092 = vsel %vm1066, %v1082, %v1091
      %v1094 = vshrl.u32 %v1048, 16
      %v1096 = vrot.slane %v1094, 3
      %v1097 = vshll.u32 %v1048, 16
      %v1099 = vrot.slane %v1097, 4
      %v1100 = vor.u32 %v1096, %v1099
      %v1101 = vsel %vm1066, %v1091, %v1100
      %v1103 = vshrl.u32 %v1049, 16
      %v1105 = vrot.slane %v1103, 3
      %v1106 = vshll.u32 %v1049, 16
      %v1108 = vrot.slane %v1106, 4
      %v1109 = vor.u32 %v1105, %v1108
      %v1110 = vsel %vm1066, %v1100, %v1109
      %v1112 = vshrl.u32 %v1050, 16
      %v1114 = vrot.slane %v1112, 3
      %v1115 = vshll.u32 %v1050, 16
      %v1117 = vrot.slane %v1115, 4
      %v1118 = vor.u32 %v1114, %v1117
      %v1119 = vsel %vm1066, %v1109, %v1118
      %v1121 = vshrl.u32 %v1051, 16
      %v1123 = vrot.slane %v1121, 3
      %v1124 = vshll.u32 %v1051, 16
      %v1126 = vrot.slane %v1124, 4
      %v1127 = vor.u32 %v1123, %v1126
      %v1128 = vsel %vm1066, %v1118, %v1127
      %v1130 = vshrl.u32 %v1052, 16
      %v1132 = vrot.slane %v1130, 3
      %v1133 = vshll.u32 %v1052, 16
      %v1135 = vrot.slane %v1133, 4
      %v1136 = vor.u32 %v1132, %v1135
      %v1137 = vsel %vm1066, %v1127, %v1136
      %v1139 = vshrl.u32 %v1053, 16
      %v1141 = vrot.slane %v1139, 3
      %v1142 = vshll.u32 %v1053, 16
      %v1144 = vrot.slane %v1142, 4
      %v1145 = vor.u32 %v1141, %v1144
      %v1146 = vsel %vm1066, %v1136, %v1145
      %v1148 = vshrl.u32 %v1054, 16
      %v1150 = vrot.slane %v1148, 3
      %v1151 = vshll.u32 %v1054, 16
      %v1153 = vrot.slane %v1151, 4
      %v1154 = vor.u32 %v1150, %v1153
      %v1155 = vsel %vm1066, %v1145, %v1154
      %v1157 = vshrl.u32 %v1055, 16
      %v1159 = vrot.slane %v1157, 3
      %v1160 = vshll.u32 %v1055, 16
      %v1162 = vrot.slane %v1160, 4
      %v1163 = vor.u32 %v1159, %v1162
      %v1164 = vsel %vm1066, %v1154, %v1163
      %v1166 = vshrl.u32 %v1056, 16
      %v1168 = vrot.slane %v1166, 3
      %v1169 = vshll.u32 %v1056, 16
      %v1171 = vrot.slane %v1169, 4
      %v1172 = vor.u32 %v1168, %v1171
      %v1173 = vsel %vm1066, %v1163, %v1172
      %v1175 = vshrl.u32 %v1057, 16
      %v1177 = vrot.slane %v1175, 3
      %v1178 = vshll.u32 %v1057, 16
      %v1180 = vrot.slane %v1178, 4
      %v1181 = vor.u32 %v1177, %v1180
      %v1182 = vsel %vm1066, %v1172, %v1181
      %v1184 = vshrl.u32 %v1058, 16
      %v1186 = vrot.slane %v1184, 3
      %v1187 = vshll.u32 %v1058, 16
      %v1189 = vrot.slane %v1187, 4
      %v1190 = vor.u32 %v1186, %v1189
      %v1191 = vsel %vm1066, %v1181, %v1190
      %v1193 = vshrl.u32 %v1059, 16
      %v1195 = vrot.slane %v1193, 3
      %v1196 = vshll.u32 %v1059, 16
      %v1198 = vrot.slane %v1196, 4
      %v1199 = vor.u32 %v1195, %v1198
      %v1200 = vsel %vm1066, %v1190, %v1199
      %v1202 = vshrl.u32 %v1060, 16
      %v1204 = vrot.slane %v1202, 3
      %v1205 = vshll.u32 %v1060, 16
      %v1207 = vrot.slane %v1205, 4
      %v1208 = vor.u32 %v1204, %v1207
      %v1209 = vsel %vm1066, %v1199, %v1208
      %v1211 = vshrl.u32 %v1061, 16
      %v1213 = vrot.slane %v1211, 3
      %v1214 = vshll.u32 %v1061, 16
      %v1216 = vrot.slane %v1214, 4
      %v1217 = vor.u32 %v1213, %v1216
      %v1218 = vsel %vm1066, %v1208, %v1217
      %v1223 = vunpack.c.l.b16 %v1062
      %v1224 = vunpack.c.l.b16 %v1063
      %v1225 = vunpack.c.l.b16 %v1064
      %v1226 = vunpack.c.l.b16 %v1065
      %v1227 = vpack.c.b16 %v1224, %v1223
      %v1228 = vpack.c.b16 %v1226, %v1225
      %v1232 = vsel %vm825, %v1083, 0
      %v1235 = vsel %vm825, %v1092, 0
      %v1238 = vsel %vm825, %v1101, 0
      %v1241 = vsel %vm825, %v1110, 0
      %v1244 = vsel %vm825, %v1119, 0
      %v1247 = vsel %vm825, %v1128, 0
      %v1250 = vsel %vm825, %v1137, 0
      %v1253 = vsel %vm825, %v1146, 0
      %v1256 = vsel %vm825, %v1155, 0
      %v1259 = vsel %vm825, %v1164, 0
      %v1262 = vsel %vm825, %v1173, 0
      %v1265 = vsel %vm825, %v1182, 0
      %v1268 = vsel %vm825, %v1191, 0
      %v1271 = vsel %vm825, %v1200, 0
      %v1274 = vsel %vm825, %v1209, 0
      %v1277 = vsel %vm825, %v1218, 0
      %1279 = vmatprep.subr.bf16.mxu0 0
      %1280 = vmatpush1.bf16.msra.mxu0 %v1227
      %1281 = vmatprep.subr.bf16.mxu0 0
      %1282 = vmatpush1.bf16.msra.mxu0 %v1228
      %1283 = vmatprep.subr.bf16.mxu0 0
      %1284 = vmatpush1.bf16.msra.mxu0 0
      %1285 = vmatprep.subr.bf16.mxu0 0
      %1286 = vmatpush1.bf16.msra.mxu0 0
      %1287 = vmatprep.subr.bf16.mxu0 0
      %1288 = vmatpush1.bf16.msra.mxu0 0
      %1289 = vmatprep.subr.bf16.mxu0 0
      %1290 = vmatpush1.bf16.msra.mxu0 0
      %1291 = vmatprep.subr.bf16.mxu0 0
      %1292 = vmatpush1.bf16.msra.mxu0 0
      %1293 = vmatprep.subr.bf16.mxu0 0
      %1294 = vmatpush1.bf16.msra.mxu0 0
      %1295 = vmatprep.subr.bf16.mxu0 0
      %1296 = vmatpush1.bf16.msra.mxu0 0
      %1297 = vmatprep.subr.bf16.mxu0 0
      %1298 = vmatpush1.bf16.msra.mxu0 0
      %1299 = vmatprep.subr.bf16.mxu0 0
      %1300 = vmatpush1.bf16.msra.mxu0 0
      %1301 = vmatprep.subr.bf16.mxu0 0
      %1302 = vmatpush1.bf16.msra.mxu0 0
      %1303 = vmatprep.subr.bf16.mxu0 0
      %1304 = vmatpush1.bf16.msra.mxu0 0
      %1305 = vmatprep.subr.bf16.mxu0 0
      %1306 = vmatpush1.bf16.msra.mxu0 0
      %1307 = vmatprep.subr.bf16.mxu0 0
      %1308 = vmatpush1.bf16.msra.mxu0 0
      %1309 = vmatprep.subr.bf16.mxu0 0
      %1310 = vmatpush1.bf16.msra.mxu0 0
      %1311 = vmatprep.mubr.bf16.mxu0 0
      %1312 = vmatmul.mubr.bf16.gmra.mrb[0].mxu0 %v1232
      %v1313 = vpop.f32.mrb[0].mxu0
      %v1314 = vadd.f32 0.0, %v1313
      %v1315 = vpop.f32.mrb[0].mxu0
      %v1316 = vpop.f32.mrb[0].mxu0
      %v1317 = vadd.f32 0.0, %v1316
      %v1318 = vpop.f32.mrb[0].mxu0
      %1319 = vmatprep.mubr.bf16.mxu0 0
      %1320 = vmatmul.mubr.bf16.gmra.mrb[0].mxu0 %v1235
      %v1321 = vpop.f32.mrb[0].mxu0
      %v1322 = vadd.f32 0.0, %v1321
      %v1323 = vpop.f32.mrb[0].mxu0
      %v1324 = vpop.f32.mrb[0].mxu0
      %v1325 = vadd.f32 0.0, %v1324
      %v1326 = vpop.f32.mrb[0].mxu0
      %1327 = vmatprep.mubr.bf16.mxu0 0
      %1328 = vmatmul.mubr.bf16.gmra.mrb[0].mxu0 %v1238
      %v1329 = vpop.f32.mrb[0].mxu0
      %v1330 = vadd.f32 0.0, %v1329
      %v1331 = vpop.f32.mrb[0].mxu0
      %v1332 = vpop.f32.mrb[0].mxu0
      %v1333 = vadd.f32 0.0, %v1332
      %v1334 = vpop.f32.mrb[0].mxu0
      %1335 = vmatprep.mubr.bf16.mxu0 0
      %1336 = vmatmul.mubr.bf16.gmra.mrb[0].mxu0 %v1241
      %v1337 = vpop.f32.mrb[0].mxu0
      %v1338 = vadd.f32 0.0, %v1337
      %v1339 = vpop.f32.mrb[0].mxu0
      %v1340 = vpop.f32.mrb[0].mxu0
      %v1341 = vadd.f32 0.0, %v1340
      %v1342 = vpop.f32.mrb[0].mxu0
      %1343 = vmatprep.mubr.bf16.mxu0 0
      %1344 = vmatmul.mubr.bf16.gmra.mrb[0].mxu0 %v1244
      %v1345 = vpop.f32.mrb[0].mxu0
      %v1346 = vadd.f32 0.0, %v1345
      %v1347 = vpop.f32.mrb[0].mxu0
      %v1348 = vpop.f32.mrb[0].mxu0
      %v1349 = vadd.f32 0.0, %v1348
      %v1350 = vpop.f32.mrb[0].mxu0
      %1351 = vmatprep.mubr.bf16.mxu0 0
      %1352 = vmatmul.mubr.bf16.gmra.mrb[0].mxu0 %v1247
      %v1353 = vpop.f32.mrb[0].mxu0
      %v1354 = vadd.f32 0.0, %v1353
      %v1355 = vpop.f32.mrb[0].mxu0
      %v1356 = vpop.f32.mrb[0].mxu0
      %v1357 = vadd.f32 0.0, %v1356
      %v1358 = vpop.f32.mrb[0].mxu0
      %1359 = vmatprep.mubr.bf16.mxu0 0
      %1360 = vmatmul.mubr.bf16.gmra.mrb[0].mxu0 %v1250
      %v1361 = vpop.f32.mrb[0].mxu0
      %v1362 = vadd.f32 0.0, %v1361
      %v1363 = vpop.f32.mrb[0].mxu0
      %v1364 = vpop.f32.mrb[0].mxu0
      %v1365 = vadd.f32 0.0, %v1364
      %v1366 = vpop.f32.mrb[0].mxu0
      %1367 = vmatprep.mubr.bf16.mxu0 0
      %1368 = vmatmul.mubr.bf16.gmra.mrb[0].mxu0 %v1253
      %v1369 = vpop.f32.mrb[0].mxu0
      %v1370 = vadd.f32 0.0, %v1369
      %v1371 = vpop.f32.mrb[0].mxu0
      %v1372 = vpop.f32.mrb[0].mxu0
      %v1373 = vadd.f32 0.0, %v1372
      %v1374 = vpop.f32.mrb[0].mxu0
      %1375 = vmatprep.mubr.bf16.mxu0 0
      %1376 = vmatmul.mubr.bf16.gmra.mrb[0].mxu0 %v1256
      %v1377 = vpop.f32.mrb[0].mxu0
      %v1378 = vadd.f32 0.0, %v1377
      %v1379 = vpop.f32.mrb[0].mxu0
      %v1380 = vpop.f32.mrb[0].mxu0
      %v1381 = vadd.f32 0.0, %v1380
      %v1382 = vpop.f32.mrb[0].mxu0
      %1383 = vmatprep.mubr.bf16.mxu0 0
      %1384 = vmatmul.mubr.bf16.gmra.mrb[0].mxu0 %v1259
      %v1385 = vpop.f32.mrb[0].mxu0
      %v1386 = vadd.f32 0.0, %v1385
      %v1387 = vpop.f32.mrb[0].mxu0
      %v1388 = vpop.f32.mrb[0].mxu0
      %v1389 = vadd.f32 0.0, %v1388
      %v1390 = vpop.f32.mrb[0].mxu0
      %1391 = vmatprep.mubr.bf16.mxu0 0
      %1392 = vmatmul.mubr.bf16.gmra.mrb[0].mxu0 %v1262
      %v1393 = vpop.f32.mrb[0].mxu0
      %v1394 = vadd.f32 0.0, %v1393
      %v1395 = vpop.f32.mrb[0].mxu0
      %v1396 = vpop.f32.mrb[0].mxu0
      %v1397 = vadd.f32 0.0, %v1396
      %v1398 = vpop.f32.mrb[0].mxu0
      %1399 = vmatprep.mubr.bf16.mxu0 0
      %1400 = vmatmul.mubr.bf16.gmra.mrb[0].mxu0 %v1265
      %v1401 = vpop.f32.mrb[0].mxu0
      %v1402 = vadd.f32 0.0, %v1401
      %v1403 = vpop.f32.mrb[0].mxu0
      %v1404 = vpop.f32.mrb[0].mxu0
      %v1405 = vadd.f32 0.0, %v1404
      %v1406 = vpop.f32.mrb[0].mxu0
      %1407 = vmatprep.mubr.bf16.mxu0 0
      %1408 = vmatmul.mubr.bf16.gmra.mrb[0].mxu0 %v1268
      %v1409 = vpop.f32.mrb[0].mxu0
      %v1410 = vadd.f32 0.0, %v1409
      %v1411 = vpop.f32.mrb[0].mxu0
      %v1412 = vpop.f32.mrb[0].mxu0
      %v1413 = vadd.f32 0.0, %v1412
      %v1414 = vpop.f32.mrb[0].mxu0
      %1415 = vmatprep.mubr.bf16.mxu0 0
      %1416 = vmatmul.mubr.bf16.gmra.mrb[0].mxu0 %v1271
      %v1417 = vpop.f32.mrb[0].mxu0
      %v1418 = vadd.f32 0.0, %v1417
      %v1419 = vpop.f32.mrb[0].mxu0
      %v1420 = vpop.f32.mrb[0].mxu0
      %v1421 = vadd.f32 0.0, %v1420
      %v1422 = vpop.f32.mrb[0].mxu0
      %1423 = vmatprep.mubr.bf16.mxu0 0
      %1424 = vmatmul.mubr.bf16.gmra.mrb[0].mxu0 %v1274
      %v1425 = vpop.f32.mrb[0].mxu0
      %v1426 = vadd.f32 0.0, %v1425
      %v1427 = vpop.f32.mrb[0].mxu0
      %v1428 = vpop.f32.mrb[0].mxu0
      %v1429 = vadd.f32 0.0, %v1428
      %v1430 = vpop.f32.mrb[0].mxu0
      %1431 = vmatprep.mubr.bf16.mxu0 0
      %1432 = vmatmul.mubr.bf16.gmra.mrb[0].mxu0 %v1277
      %v1433 = vpop.f32.mrb[0].mxu0
      %v1434 = vadd.f32 0.0, %v1433
      %v1435 = vpop.f32.mrb[0].mxu0
      %v1436 = vpop.f32.mrb[0].mxu0
      %v1437 = vadd.f32 0.0, %v1436
      %v1438 = vpop.f32.mrb[0].mxu0
      %1439 = vdwg.mxu0
      %v1440 = vmul.f32 %v1314, %v729
      %v1441 = vmul.f32 %v1317, %v730
      %v1442 = vmul.f32 %v1322, %v731
      %v1443 = vmul.f32 %v1325, %v732
      %v1444 = vmul.f32 %v1330, %v733
      %v1445 = vmul.f32 %v1333, %v734
      %v1446 = vmul.f32 %v1338, %v735
      %v1447 = vmul.f32 %v1341, %v736
      %v1448 = vmul.f32 %v1346, %v737
      %v1449 = vmul.f32 %v1349, %v738
      %v1450 = vmul.f32 %v1354, %v739
      %v1451 = vmul.f32 %v1357, %v740
      %v1452 = vmul.f32 %v1362, %v741
      %v1453 = vmul.f32 %v1365, %v742
      %v1454 = vmul.f32 %v1370, %v743
      %v1455 = vmul.f32 %v1373, %v744
      %v1456 = vmul.f32 %v1378, %v745
      %v1457 = vmul.f32 %v1381, %v746
      %v1458 = vmul.f32 %v1386, %v747
      %v1459 = vmul.f32 %v1389, %v748
      %v1460 = vmul.f32 %v1394, %v749
      %v1461 = vmul.f32 %v1397, %v750
      %v1462 = vmul.f32 %v1402, %v751
      %v1463 = vmul.f32 %v1405, %v752
      %v1464 = vmul.f32 %v1410, %v753
      %v1465 = vmul.f32 %v1413, %v754
      %v1466 = vmul.f32 %v1418, %v755
      %v1467 = vmul.f32 %v1421, %v756
      %v1468 = vmul.f32 %v1426, %v757
      %v1469 = vmul.f32 %v1429, %v758
      %v1470 = vmul.f32 %v1434, %v759
      %v1471 = vmul.f32 %v1437, %v760
      %v1472 = vld [vmem:[#allocation4] sm:$0xff]
      %v1473 = vld [vmem:[#allocation4 + $0x8] sm:$0xff]
      %v1474 = vld [vmem:[#allocation4 + $0x10] sm:$0xff]
      %v1475 = vld [vmem:[#allocation4 + $0x18] sm:$0xff]
      %v1476 = vld [vmem:[#allocation4 + $0x20] sm:$0xff]
      %v1477 = vld [vmem:[#allocation4 + $0x28] sm:$0xff]
      %v1478 = vld [vmem:[#allocation4 + $0x30] sm:$0xff]
      %v1479 = vld [vmem:[#allocation4 + $0x38] sm:$0xff]
      %v1480 = vld [vmem:[#allocation4 + $0x40] sm:$0xff]
      %v1481 = vld [vmem:[#allocation4 + $0x48] sm:$0xff]
      %v1482 = vld [vmem:[#allocation4 + $0x50] sm:$0xff]
      %v1483 = vld [vmem:[#allocation4 + $0x58] sm:$0xff]
      %v1484 = vld [vmem:[#allocation4 + $0x60] sm:$0xff]
      %v1485 = vld [vmem:[#allocation4 + $0x68] sm:$0xff]
      %v1486 = vld [vmem:[#allocation4 + $0x70] sm:$0xff]
      %v1487 = vld [vmem:[#allocation4 + $0x78] sm:$0xff]
      %v1488 = vld [vmem:[#allocation4 + $0x80] sm:$0xff]
      %v1489 = vld [vmem:[#allocation4 + $0x88] sm:$0xff]
      %v1490 = vld [vmem:[#allocation4 + $0x90] sm:$0xff]
      %v1491 = vld [vmem:[#allocation4 + $0x98] sm:$0xff]
      %v1492 = vld [vmem:[#allocation4 + $0xa0] sm:$0xff]
      %v1493 = vld [vmem:[#allocation4 + $0xa8] sm:$0xff]
      %v1494 = vld [vmem:[#allocation4 + $0xb0] sm:$0xff]
      %v1495 = vld [vmem:[#allocation4 + $0xb8] sm:$0xff]
      %v1496 = vld [vmem:[#allocation4 + $0xc0] sm:$0xff]
      %v1497 = vld [vmem:[#allocation4 + $0xc8] sm:$0xff]
      %v1498 = vld [vmem:[#allocation4 + $0xd0] sm:$0xff]
      %v1499 = vld [vmem:[#allocation4 + $0xd8] sm:$0xff]
      %v1500 = vld [vmem:[#allocation4 + $0xe0] sm:$0xff]
      %v1501 = vld [vmem:[#allocation4 + $0xe8] sm:$0xff]
      %v1502 = vld [vmem:[#allocation4 + $0xf0] sm:$0xff]
      %v1503 = vld [vmem:[#allocation4 + $0xf8] sm:$0xff]
      %v1504 = vadd.f32 %v1472, %v1440
      %v1505 = vadd.f32 %v1473, %v1441
      %v1506 = vadd.f32 %v1474, %v1442
      %v1507 = vadd.f32 %v1475, %v1443
      %v1508 = vadd.f32 %v1476, %v1444
      %v1509 = vadd.f32 %v1477, %v1445
      %v1510 = vadd.f32 %v1478, %v1446
      %v1511 = vadd.f32 %v1479, %v1447
      %v1512 = vadd.f32 %v1480, %v1448
      %v1513 = vadd.f32 %v1481, %v1449
      %v1514 = vadd.f32 %v1482, %v1450
      %v1515 = vadd.f32 %v1483, %v1451
      %v1516 = vadd.f32 %v1484, %v1452
      %v1517 = vadd.f32 %v1485, %v1453
      %v1518 = vadd.f32 %v1486, %v1454
      %v1519 = vadd.f32 %v1487, %v1455
      %v1520 = vadd.f32 %v1488, %v1456
      %v1521 = vadd.f32 %v1489, %v1457
      %v1522 = vadd.f32 %v1490, %v1458
      %v1523 = vadd.f32 %v1491, %v1459
      %v1524 = vadd.f32 %v1492, %v1460
      %v1525 = vadd.f32 %v1493, %v1461
      %v1526 = vadd.f32 %v1494, %v1462
      %v1527 = vadd.f32 %v1495, %v1463
      %v1528 = vadd.f32 %v1496, %v1464
      %v1529 = vadd.f32 %v1497, %v1465
      %v1530 = vadd.f32 %v1498, %v1466
      %v1531 = vadd.f32 %v1499, %v1467
      %v1532 = vadd.f32 %v1500, %v1468
      %v1533 = vadd.f32 %v1501, %v1469
      %v1534 = vadd.f32 %v1502, %v1470
      %v1535 = vadd.f32 %v1503, %v1471
      %1536 = vst.msk [vmem:[#allocation4] sm:$0xff] %vm825, %v1504
      %1537 = vst.msk [vmem:[#allocation4 + $0x8] sm:$0xff] %vm825, %v1505
      %1538 = vst.msk [vmem:[#allocation4 + $0x10] sm:$0xff] %vm825, %v1506
      %1539 = vst.msk [vmem:[#allocation4 + $0x18] sm:$0xff] %vm825, %v1507
      %1540 = vst.msk [vmem:[#allocation4 + $0x20] sm:$0xff] %vm825, %v1508
      %1541 = vst.msk [vmem:[#allocation4 + $0x28] sm:$0xff] %vm825, %v1509
      %1542 = vst.msk [vmem:[#allocation4 + $0x30] sm:$0xff] %vm825, %v1510
      %1543 = vst.msk [vmem:[#allocation4 + $0x38] sm:$0xff] %vm825, %v1511
      %1544 = vst.msk [vmem:[#allocation4 + $0x40] sm:$0xff] %vm825, %v1512
      %1545 = vst.msk [vmem:[#allocation4 + $0x48] sm:$0xff] %vm825, %v1513
      %1546 = vst.msk [vmem:[#allocation4 + $0x50] sm:$0xff] %vm825, %v1514
      %1547 = vst.msk [vmem:[#allocation4 + $0x58] sm:$0xff] %vm825, %v1515
      %1548 = vst.msk [vmem:[#allocation4 + $0x60] sm:$0xff] %vm825, %v1516
      %1549 = vst.msk [vmem:[#allocation4 + $0x68] sm:$0xff] %vm825, %v1517
      %1550 = vst.msk [vmem:[#allocation4 + $0x70] sm:$0xff] %vm825, %v1518
      %1551 = vst.msk [vmem:[#allocation4 + $0x78] sm:$0xff] %vm825, %v1519
      %1552 = vst.msk [vmem:[#allocation4 + $0x80] sm:$0xff] %vm825, %v1520
      %1553 = vst.msk [vmem:[#allocation4 + $0x88] sm:$0xff] %vm825, %v1521
      %1554 = vst.msk [vmem:[#allocation4 + $0x90] sm:$0xff] %vm825, %v1522
      %1555 = vst.msk [vmem:[#allocation4 + $0x98] sm:$0xff] %vm825, %v1523
      %1556 = vst.msk [vmem:[#allocation4 + $0xa0] sm:$0xff] %vm825, %v1524
      %1557 = vst.msk [vmem:[#allocation4 + $0xa8] sm:$0xff] %vm825, %v1525
      %1558 = vst.msk [vmem:[#allocation4 + $0xb0] sm:$0xff] %vm825, %v1526
      %1559 = vst.msk [vmem:[#allocation4 + $0xb8] sm:$0xff] %vm825, %v1527
      %1560 = vst.msk [vmem:[#allocation4 + $0xc0] sm:$0xff] %vm825, %v1528
      %1561 = vst.msk [vmem:[#allocation4 + $0xc8] sm:$0xff] %vm825, %v1529
      %1562 = vst.msk [vmem:[#allocation4 + $0xd0] sm:$0xff] %vm825, %v1530
      %1563 = vst.msk [vmem:[#allocation4 + $0xd8] sm:$0xff] %vm825, %v1531
      %1564 = vst.msk [vmem:[#allocation4 + $0xe0] sm:$0xff] %vm825, %v1532
      %1565 = vst.msk [vmem:[#allocation4 + $0xe8] sm:$0xff] %vm825, %v1533
      %1566 = vst.msk [vmem:[#allocation4 + $0xf0] sm:$0xff] %vm825, %v1534
      %1567 = vst.msk [vmem:[#allocation4 + $0xf8] sm:$0xff] %vm825, %v1535
      %v1568 = vld [vmem:[#allocation2] sm:$0xf0]
      %v1569 = vld [vmem:[#allocation2 + $0x8] sm:$0xff]
      %v1570 = vld [vmem:[#allocation2 + $0x10] sm:$0xff]
      %v1571 = vld [vmem:[#allocation2 + $0x18] sm:$0xff]
      %v1572 = vld [vmem:[#allocation2 + $0x20] sm:$0xff]
      %v1573 = vld [vmem:[#allocation2 + $0x28] sm:$0xff]
      %v1574 = vld [vmem:[#allocation2 + $0x30] sm:$0xff]
      %v1575 = vld [vmem:[#allocation2 + $0x38] sm:$0xff]
      %v1576 = vld [vmem:[#allocation2 + $0x40] sm:$0xff]
      %v1577 = vld [vmem:[#allocation2 + $0x48] sm:$0xff]
      %v1578 = vld [vmem:[#allocation2 + $0x50] sm:$0xff]
      %v1579 = vld [vmem:[#allocation2 + $0x58] sm:$0xff]
      %v1580 = vld [vmem:[#allocation2 + $0x60] sm:$0xff]
      %v1581 = vld [vmem:[#allocation2 + $0x68] sm:$0xff]
      %v1582 = vld [vmem:[#allocation2 + $0x70] sm:$0xff]
      %v1583 = vld [vmem:[#allocation2 + $0x78] sm:$0xff]
      %v1584 = vld [vmem:[#allocation2 + $0x80] sm:$0xf]
      %s1585 = scalar_lea.vmem %s1, 16
      %v1586 = vld [vmem:[%s1585] sm:$0xf]
      %v1587 = vld [vmem:[%s1585 + $0x4] sm:$0xf]
      %v1588 = vld [vmem:[%s1585 + $0x8] sm:$0xf]
      %v1589 = vld [vmem:[%s1585 + $0xc] sm:$0xf]
      %vm1607 = vcmask 1043456
      %v1608 = vrot.slane %v1568, 4
      %v1609 = vrot.slane %v1569, 4
      %v1610 = vsel %vm1607, %v1608, %v1609
      %v1611 = vrot.slane %v1570, 4
      %v1612 = vsel %vm1607, %v1609, %v1611
      %v1613 = vrot.slane %v1571, 4
      %v1614 = vsel %vm1607, %v1611, %v1613
      %v1615 = vrot.slane %v1572, 4
      %v1616 = vsel %vm1607, %v1613, %v1615
      %v1617 = vrot.slane %v1573, 4
      %v1618 = vsel %vm1607, %v1615, %v1617
      %v1619 = vrot.slane %v1574, 4
      %v1620 = vsel %vm1607, %v1617, %v1619
      %v1621 = vrot.slane %v1575, 4
      %v1622 = vsel %vm1607, %v1619, %v1621
      %v1623 = vrot.slane %v1576, 4
      %v1624 = vsel %vm1607, %v1621, %v1623
      %v1625 = vrot.slane %v1577, 4
      %v1626 = vsel %vm1607, %v1623, %v1625
      %v1627 = vrot.slane %v1578, 4
      %v1628 = vsel %vm1607, %v1625, %v1627
      %v1629 = vrot.slane %v1579, 4
      %v1630 = vsel %vm1607, %v1627, %v1629
      %v1631 = vrot.slane %v1580, 4
      %v1632 = vsel %vm1607, %v1629, %v1631
      %v1633 = vrot.slane %v1581, 4
      %v1634 = vsel %vm1607, %v1631, %v1633
      %v1635 = vrot.slane %v1582, 4
      %v1636 = vsel %vm1607, %v1633, %v1635
      %v1637 = vrot.slane %v1583, 4
      %v1638 = vsel %vm1607, %v1635, %v1637
      %v1639 = vrot.slane %v1584, 4
      %v1640 = vsel %vm1607, %v1637, %v1639
      %v1645 = vunpack.c.l.b16 %v1586
      %v1646 = vunpack.c.l.b16 %v1587
      %v1647 = vunpack.c.l.b16 %v1588
      %v1648 = vunpack.c.l.b16 %v1589
      %v1649 = vpack.c.b16 %v1646, %v1645
      %v1650 = vpack.c.b16 %v1648, %v1647
      %v1654 = vsel %vm825, %v1610, 0
      %v1657 = vsel %vm825, %v1612, 0
      %v1660 = vsel %vm825, %v1614, 0
      %v1663 = vsel %vm825, %v1616, 0
      %v1666 = vsel %vm825, %v1618, 0
      %v1669 = vsel %vm825, %v1620, 0
      %v1672 = vsel %vm825, %v1622, 0
      %v1675 = vsel %vm825, %v1624, 0
      %v1678 = vsel %vm825, %v1626, 0
      %v1681 = vsel %vm825, %v1628, 0
      %v1684 = vsel %vm825, %v1630, 0
      %v1687 = vsel %vm825, %v1632, 0
      %v1690 = vsel %vm825, %v1634, 0
      %v1693 = vsel %vm825, %v1636, 0
      %v1696 = vsel %vm825, %v1638, 0
      %v1699 = vsel %vm825, %v1640, 0
      %1701 = vmatprep.subr.bf16.mxu0 0
      %1702 = vmatpush1.bf16.msra.mxu0 %v1649
      %1703 = vmatprep.subr.bf16.mxu0 0
      %1704 = vmatpush1.bf16.msra.mxu0 %v1650
      %1705 = vmatprep.subr.bf16.mxu0 0
      %1706 = vmatpush1.bf16.msra.mxu0 0
      %1707 = vmatprep.subr.bf16.mxu0 0
      %1708 = vmatpush1.bf16.msra.mxu0 0
      %1709 = vmatprep.subr.bf16.mxu0 0
      %1710 = vmatpush1.bf16.msra.mxu0 0
      %1711 = vmatprep.subr.bf16.mxu0 0
      %1712 = vmatpush1.bf16.msra.mxu0 0
      %1713 = vmatprep.subr.bf16.mxu0 0
      %1714 = vmatpush1.bf16.msra.mxu0 0
      %1715 = vmatprep.subr.bf16.mxu0 0
      %1716 = vmatpush1.bf16.msra.mxu0 0
      %1717 = vmatprep.subr.bf16.mxu0 0
      %1718 = vmatpush1.bf16.msra.mxu0 0
      %1719 = vmatprep.subr.bf16.mxu0 0
      %1720 = vmatpush1.bf16.msra.mxu0 0
      %1721 = vmatprep.subr.bf16.mxu0 0
      %1722 = vmatpush1.bf16.msra.mxu0 0
      %1723 = vmatprep.subr.bf16.mxu0 0
      %1724 = vmatpush1.bf16.msra.mxu0 0
      %1725 = vmatprep.subr.bf16.mxu0 0
      %1726 = vmatpush1.bf16.msra.mxu0 0
      %1727 = vmatprep.subr.bf16.mxu0 0
      %1728 = vmatpush1.bf16.msra.mxu0 0
      %1729 = vmatprep.subr.bf16.mxu0 0
      %1730 = vmatpush1.bf16.msra.mxu0 0
      %1731 = vmatprep.subr.bf16.mxu0 0
      %1732 = vmatpush1.bf16.msra.mxu0 0
      %1733 = vmatprep.mubr.bf16.mxu0 0
      %1734 = vmatmul.mubr.bf16.gmra.mrb[0].mxu0 %v1654
      %v1735 = vpop.f32.mrb[0].mxu0
      %v1736 = vadd.f32 0.0, %v1735
      %v1737 = vpop.f32.mrb[0].mxu0
      %v1738 = vpop.f32.mrb[0].mxu0
      %v1739 = vadd.f32 0.0, %v1738
      %v1740 = vpop.f32.mrb[0].mxu0
      %1741 = vmatprep.mubr.bf16.mxu0 0
      %1742 = vmatmul.mubr.bf16.gmra.mrb[0].mxu0 %v1657
      %v1743 = vpop.f32.mrb[0].mxu0
      %v1744 = vadd.f32 0.0, %v1743
      %v1745 = vpop.f32.mrb[0].mxu0
      %v1746 = vpop.f32.mrb[0].mxu0
      %v1747 = vadd.f32 0.0, %v1746
      %v1748 = vpop.f32.mrb[0].mxu0
      %1749 = vmatprep.mubr.bf16.mxu0 0
      %1750 = vmatmul.mubr.bf16.gmra.mrb[0].mxu0 %v1660
      %v1751 = vpop.f32.mrb[0].mxu0
      %v1752 = vadd.f32 0.0, %v1751
      %v1753 = vpop.f32.mrb[0].mxu0
      %v1754 = vpop.f32.mrb[0].mxu0
      %v1755 = vadd.f32 0.0, %v1754
      %v1756 = vpop.f32.mrb[0].mxu0
      %1757 = vmatprep.mubr.bf16.mxu0 0
      %1758 = vmatmul.mubr.bf16.gmra.mrb[0].mxu0 %v1663
      %v1759 = vpop.f32.mrb[0].mxu0
      %v1760 = vadd.f32 0.0, %v1759
      %v1761 = vpop.f32.mrb[0].mxu0
      %v1762 = vpop.f32.mrb[0].mxu0
      %v1763 = vadd.f32 0.0, %v1762
      %v1764 = vpop.f32.mrb[0].mxu0
      %1765 = vmatprep.mubr.bf16.mxu0 0
      %1766 = vmatmul.mubr.bf16.gmra.mrb[0].mxu0 %v1666
      %v1767 = vpop.f32.mrb[0].mxu0
      %v1768 = vadd.f32 0.0, %v1767
      %v1769 = vpop.f32.mrb[0].mxu0
      %v1770 = vpop.f32.mrb[0].mxu0
      %v1771 = vadd.f32 0.0, %v1770
      %v1772 = vpop.f32.mrb[0].mxu0
      %1773 = vmatprep.mubr.bf16.mxu0 0
      %1774 = vmatmul.mubr.bf16.gmra.mrb[0].mxu0 %v1669
      %v1775 = vpop.f32.mrb[0].mxu0
      %v1776 = vadd.f32 0.0, %v1775
      %v1777 = vpop.f32.mrb[0].mxu0
      %v1778 = vpop.f32.mrb[0].mxu0
      %v1779 = vadd.f32 0.0, %v1778
      %v1780 = vpop.f32.mrb[0].mxu0
      %1781 = vmatprep.mubr.bf16.mxu0 0
      %1782 = vmatmul.mubr.bf16.gmra.mrb[0].mxu0 %v1672
      %v1783 = vpop.f32.mrb[0].mxu0
      %v1784 = vadd.f32 0.0, %v1783
      %v1785 = vpop.f32.mrb[0].mxu0
      %v1786 = vpop.f32.mrb[0].mxu0
      %v1787 = vadd.f32 0.0, %v1786
      %v1788 = vpop.f32.mrb[0].mxu0
      %1789 = vmatprep.mubr.bf16.mxu0 0
      %1790 = vmatmul.mubr.bf16.gmra.mrb[0].mxu0 %v1675
      %v1791 = vpop.f32.mrb[0].mxu0
      %v1792 = vadd.f32 0.0, %v1791
      %v1793 = vpop.f32.mrb[0].mxu0
      %v1794 = vpop.f32.mrb[0].mxu0
      %v1795 = vadd.f32 0.0, %v1794
      %v1796 = vpop.f32.mrb[0].mxu0
      %1797 = vmatprep.mubr.bf16.mxu0 0
      %1798 = vmatmul.mubr.bf16.gmra.mrb[0].mxu0 %v1678
      %v1799 = vpop.f32.mrb[0].mxu0
      %v1800 = vadd.f32 0.0, %v1799
      %v1801 = vpop.f32.mrb[0].mxu0
      %v1802 = vpop.f32.mrb[0].mxu0
      %v1803 = vadd.f32 0.0, %v1802
      %v1804 = vpop.f32.mrb[0].mxu0
      %1805 = vmatprep.mubr.bf16.mxu0 0
      %1806 = vmatmul.mubr.bf16.gmra.mrb[0].mxu0 %v1681
      %v1807 = vpop.f32.mrb[0].mxu0
      %v1808 = vadd.f32 0.0, %v1807
      %v1809 = vpop.f32.mrb[0].mxu0
      %v1810 = vpop.f32.mrb[0].mxu0
      %v1811 = vadd.f32 0.0, %v1810
      %v1812 = vpop.f32.mrb[0].mxu0
      %1813 = vmatprep.mubr.bf16.mxu0 0
      %1814 = vmatmul.mubr.bf16.gmra.mrb[0].mxu0 %v1684
      %v1815 = vpop.f32.mrb[0].mxu0
      %v1816 = vadd.f32 0.0, %v1815
      %v1817 = vpop.f32.mrb[0].mxu0
      %v1818 = vpop.f32.mrb[0].mxu0
      %v1819 = vadd.f32 0.0, %v1818
      %v1820 = vpop.f32.mrb[0].mxu0
      %1821 = vmatprep.mubr.bf16.mxu0 0
      %1822 = vmatmul.mubr.bf16.gmra.mrb[0].mxu0 %v1687
      %v1823 = vpop.f32.mrb[0].mxu0
      %v1824 = vadd.f32 0.0, %v1823
      %v1825 = vpop.f32.mrb[0].mxu0
      %v1826 = vpop.f32.mrb[0].mxu0
      %v1827 = vadd.f32 0.0, %v1826
      %v1828 = vpop.f32.mrb[0].mxu0
      %1829 = vmatprep.mubr.bf16.mxu0 0
      %1830 = vmatmul.mubr.bf16.gmra.mrb[0].mxu0 %v1690
      %v1831 = vpop.f32.mrb[0].mxu0
      %v1832 = vadd.f32 0.0, %v1831
      %v1833 = vpop.f32.mrb[0].mxu0
      %v1834 = vpop.f32.mrb[0].mxu0
      %v1835 = vadd.f32 0.0, %v1834
      %v1836 = vpop.f32.mrb[0].mxu0
      %1837 = vmatprep.mubr.bf16.mxu0 0
      %1838 = vmatmul.mubr.bf16.gmra.mrb[0].mxu0 %v1693
      %v1839 = vpop.f32.mrb[0].mxu0
      %v1840 = vadd.f32 0.0, %v1839
      %v1841 = vpop.f32.mrb[0].mxu0
      %v1842 = vpop.f32.mrb[0].mxu0
      %v1843 = vadd.f32 0.0, %v1842
      %v1844 = vpop.f32.mrb[0].mxu0
      %1845 = vmatprep.mubr.bf16.mxu0 0
      %1846 = vmatmul.mubr.bf16.gmra.mrb[0].mxu0 %v1696
      %v1847 = vpop.f32.mrb[0].mxu0
      %v1848 = vadd.f32 0.0, %v1847
      %v1849 = vpop.f32.mrb[0].mxu0
      %v1850 = vpop.f32.mrb[0].mxu0
      %v1851 = vadd.f32 0.0, %v1850
      %v1852 = vpop.f32.mrb[0].mxu0
      %1853 = vmatprep.mubr.bf16.mxu0 0
      %1854 = vmatmul.mubr.bf16.gmra.mrb[0].mxu0 %v1699
      %v1855 = vpop.f32.mrb[0].mxu0
      %v1856 = vadd.f32 0.0, %v1855
      %v1857 = vpop.f32.mrb[0].mxu0
      %v1858 = vpop.f32.mrb[0].mxu0
      %v1859 = vadd.f32 0.0, %v1858
      %v1860 = vpop.f32.mrb[0].mxu0
      %1861 = vdwg.mxu0
      %v1862 = vld [vmem:[#allocation4] sm:$0xff]
      %v1863 = vld [vmem:[#allocation4 + $0x8] sm:$0xff]
      %v1864 = vld [vmem:[#allocation4 + $0x10] sm:$0xff]
      %v1865 = vld [vmem:[#allocation4 + $0x18] sm:$0xff]
      %v1866 = vld [vmem:[#allocation4 + $0x20] sm:$0xff]
      %v1867 = vld [vmem:[#allocation4 + $0x28] sm:$0xff]
      %v1868 = vld [vmem:[#allocation4 + $0x30] sm:$0xff]
      %v1869 = vld [vmem:[#allocation4 + $0x38] sm:$0xff]
      %v1870 = vld [vmem:[#allocation4 + $0x40] sm:$0xff]
      %v1871 = vld [vmem:[#allocation4 + $0x48] sm:$0xff]
      %v1872 = vld [vmem:[#allocation4 + $0x50] sm:$0xff]
      %v1873 = vld [vmem:[#allocation4 + $0x58] sm:$0xff]
      %v1874 = vld [vmem:[#allocation4 + $0x60] sm:$0xff]
      %v1875 = vld [vmem:[#allocation4 + $0x68] sm:$0xff]
      %v1876 = vld [vmem:[#allocation4 + $0x70] sm:$0xff]
      %v1877 = vld [vmem:[#allocation4 + $0x78] sm:$0xff]
      %v1878 = vld [vmem:[#allocation4 + $0x80] sm:$0xff]
      %v1879 = vld [vmem:[#allocation4 + $0x88] sm:$0xff]
      %v1880 = vld [vmem:[#allocation4 + $0x90] sm:$0xff]
      %v1881 = vld [vmem:[#allocation4 + $0x98] sm:$0xff]
      %v1882 = vld [vmem:[#allocation4 + $0xa0] sm:$0xff]
      %v1883 = vld [vmem:[#allocation4 + $0xa8] sm:$0xff]
      %v1884 = vld [vmem:[#allocation4 + $0xb0] sm:$0xff]
      %v1885 = vld [vmem:[#allocation4 + $0xb8] sm:$0xff]
      %v1886 = vld [vmem:[#allocation4 + $0xc0] sm:$0xff]
      %v1887 = vld [vmem:[#allocation4 + $0xc8] sm:$0xff]
      %v1888 = vld [vmem:[#allocation4 + $0xd0] sm:$0xff]
      %v1889 = vld [vmem:[#allocation4 + $0xd8] sm:$0xff]
      %v1890 = vld [vmem:[#allocation4 + $0xe0] sm:$0xff]
      %v1891 = vld [vmem:[#allocation4 + $0xe8] sm:$0xff]
      %v1892 = vld [vmem:[#allocation4 + $0xf0] sm:$0xff]
      %v1893 = vld [vmem:[#allocation4 + $0xf8] sm:$0xff]
      %v1894 = vadd.f32 %v1862, %v1736
      %v1895 = vadd.f32 %v1863, %v1739
      %v1896 = vadd.f32 %v1864, %v1744
      %v1897 = vadd.f32 %v1865, %v1747
      %v1898 = vadd.f32 %v1866, %v1752
      %v1899 = vadd.f32 %v1867, %v1755
      %v1900 = vadd.f32 %v1868, %v1760
      %v1901 = vadd.f32 %v1869, %v1763
      %v1902 = vadd.f32 %v1870, %v1768
      %v1903 = vadd.f32 %v1871, %v1771
      %v1904 = vadd.f32 %v1872, %v1776
      %v1905 = vadd.f32 %v1873, %v1779
      %v1906 = vadd.f32 %v1874, %v1784
      %v1907 = vadd.f32 %v1875, %v1787
      %v1908 = vadd.f32 %v1876, %v1792
      %v1909 = vadd.f32 %v1877, %v1795
      %v1910 = vadd.f32 %v1878, %v1800
      %v1911 = vadd.f32 %v1879, %v1803
      %v1912 = vadd.f32 %v1880, %v1808
      %v1913 = vadd.f32 %v1881, %v1811
      %v1914 = vadd.f32 %v1882, %v1816
      %v1915 = vadd.f32 %v1883, %v1819
      %v1916 = vadd.f32 %v1884, %v1824
      %v1917 = vadd.f32 %v1885, %v1827
      %v1918 = vadd.f32 %v1886, %v1832
      %v1919 = vadd.f32 %v1887, %v1835
      %v1920 = vadd.f32 %v1888, %v1840
      %v1921 = vadd.f32 %v1889, %v1843
      %v1922 = vadd.f32 %v1890, %v1848
      %v1923 = vadd.f32 %v1891, %v1851
      %v1924 = vadd.f32 %v1892, %v1856
      %v1925 = vadd.f32 %v1893, %v1859
      %1926 = vst.msk [vmem:[#allocation4] sm:$0xff] %vm825, %v1894
      %1927 = vst.msk [vmem:[#allocation4 + $0x8] sm:$0xff] %vm825, %v1895
      %1928 = vst.msk [vmem:[#allocation4 + $0x10] sm:$0xff] %vm825, %v1896
      %1929 = vst.msk [vmem:[#allocation4 + $0x18] sm:$0xff] %vm825, %v1897
      %1930 = vst.msk [vmem:[#allocation4 + $0x20] sm:$0xff] %vm825, %v1898
      %1931 = vst.msk [vmem:[#allocation4 + $0x28] sm:$0xff] %vm825, %v1899
      %1932 = vst.msk [vmem:[#allocation4 + $0x30] sm:$0xff] %vm825, %v1900
      %1933 = vst.msk [vmem:[#allocation4 + $0x38] sm:$0xff] %vm825, %v1901
      %1934 = vst.msk [vmem:[#allocation4 + $0x40] sm:$0xff] %vm825, %v1902
      %1935 = vst.msk [vmem:[#allocation4 + $0x48] sm:$0xff] %vm825, %v1903
      %1936 = vst.msk [vmem:[#allocation4 + $0x50] sm:$0xff] %vm825, %v1904
      %1937 = vst.msk [vmem:[#allocation4 + $0x58] sm:$0xff] %vm825, %v1905
      %1938 = vst.msk [vmem:[#allocation4 + $0x60] sm:$0xff] %vm825, %v1906
      %1939 = vst.msk [vmem:[#allocation4 + $0x68] sm:$0xff] %vm825, %v1907
      %1940 = vst.msk [vmem:[#allocation4 + $0x70] sm:$0xff] %vm825, %v1908
      %1941 = vst.msk [vmem:[#allocation4 + $0x78] sm:$0xff] %vm825, %v1909
      %1942 = vst.msk [vmem:[#allocation4 + $0x80] sm:$0xff] %vm825, %v1910
      %1943 = vst.msk [vmem:[#allocation4 + $0x88] sm:$0xff] %vm825, %v1911
      %1944 = vst.msk [vmem:[#allocation4 + $0x90] sm:$0xff] %vm825, %v1912
      %1945 = vst.msk [vmem:[#allocation4 + $0x98] sm:$0xff] %vm825, %v1913
      %1946 = vst.msk [vmem:[#allocation4 + $0xa0] sm:$0xff] %vm825, %v1914
      %1947 = vst.msk [vmem:[#allocation4 + $0xa8] sm:$0xff] %vm825, %v1915
      %1948 = vst.msk [vmem:[#allocation4 + $0xb0] sm:$0xff] %vm825, %v1916
      %1949 = vst.msk [vmem:[#allocation4 + $0xb8] sm:$0xff] %vm825, %v1917
      %1950 = vst.msk [vmem:[#allocation4 + $0xc0] sm:$0xff] %vm825, %v1918
      %1951 = vst.msk [vmem:[#allocation4 + $0xc8] sm:$0xff] %vm825, %v1919
      %1952 = vst.msk [vmem:[#allocation4 + $0xd0] sm:$0xff] %vm825, %v1920
      %1953 = vst.msk [vmem:[#allocation4 + $0xd8] sm:$0xff] %vm825, %v1921
      %1954 = vst.msk [vmem:[#allocation4 + $0xe0] sm:$0xff] %vm825, %v1922
      %1955 = vst.msk [vmem:[#allocation4 + $0xe8] sm:$0xff] %vm825, %v1923
      %1956 = vst.msk [vmem:[#allocation4 + $0xf0] sm:$0xff] %vm825, %v1924
      %1957 = vst.msk [vmem:[#allocation4 + $0xf8] sm:$0xff] %vm825, %v1925
      %v1958 = vld [vmem:[#allocation2] sm:$0xf0]
      %v1959 = vld [vmem:[#allocation2 + $0x8] sm:$0xff]
      %v1960 = vld [vmem:[#allocation2 + $0x10] sm:$0xff]
      %v1961 = vld [vmem:[#allocation2 + $0x18] sm:$0xff]
      %v1962 = vld [vmem:[#allocation2 + $0x20] sm:$0xff]
      %v1963 = vld [vmem:[#allocation2 + $0x28] sm:$0xff]
      %v1964 = vld [vmem:[#allocation2 + $0x30] sm:$0xff]
      %v1965 = vld [vmem:[#allocation2 + $0x38] sm:$0xff]
      %v1966 = vld [vmem:[#allocation2 + $0x40] sm:$0xff]
      %v1967 = vld [vmem:[#allocation2 + $0x48] sm:$0xff]
      %v1968 = vld [vmem:[#allocation2 + $0x50] sm:$0xff]
      %v1969 = vld [vmem:[#allocation2 + $0x58] sm:$0xff]
      %v1970 = vld [vmem:[#allocation2 + $0x60] sm:$0xff]
      %v1971 = vld [vmem:[#allocation2 + $0x68] sm:$0xff]
      %v1972 = vld [vmem:[#allocation2 + $0x70] sm:$0xff]
      %v1973 = vld [vmem:[#allocation2 + $0x78] sm:$0xff]
      %v1974 = vld [vmem:[#allocation2 + $0x80] sm:$0x1f]
      %s1975 = scalar_lea.vmem %s1, 32
      %v1976 = vld [vmem:[%s1975] sm:$0xf]
      %v1977 = vld [vmem:[%s1975 + $0x4] sm:$0xf]
      %v1978 = vld [vmem:[%s1975 + $0x8] sm:$0xf]
      %v1979 = vld [vmem:[%s1975 + $0xc] sm:$0xf]
      %vm1980 = vsmask.f32 3328
      %v1982 = vshrl.u32 %v1958, 16
      %v1984 = vrot.slane %v1982, 4
      %v1985 = vshll.u32 %v1958, 16
      %v1987 = vrot.slane %v1985, 5
      %v1988 = vor.u32 %v1984, %v1987
      %v1990 = vshrl.u32 %v1959, 16
      %v1992 = vrot.slane %v1990, 4
      %v1993 = vshll.u32 %v1959, 16
      %v1995 = vrot.slane %v1993, 5
      %v1996 = vor.u32 %v1992, %v1995
      %v1997 = vsel %vm1980, %v1988, %v1996
      %v1999 = vshrl.u32 %v1960, 16
      %v2001 = vrot.slane %v1999, 4
      %v2002 = vshll.u32 %v1960, 16
      %v2004 = vrot.slane %v2002, 5
      %v2005 = vor.u32 %v2001, %v2004
      %v2006 = vsel %vm1980, %v1996, %v2005
      %v2008 = vshrl.u32 %v1961, 16
      %v2010 = vrot.slane %v2008, 4
      %v2011 = vshll.u32 %v1961, 16
      %v2013 = vrot.slane %v2011, 5
      %v2014 = vor.u32 %v2010, %v2013
      %v2015 = vsel %vm1980, %v2005, %v2014
      %v2017 = vshrl.u32 %v1962, 16
      %v2019 = vrot.slane %v2017, 4
      %v2020 = vshll.u32 %v1962, 16
      %v2022 = vrot.slane %v2020, 5
      %v2023 = vor.u32 %v2019, %v2022
      %v2024 = vsel %vm1980, %v2014, %v2023
      %v2026 = vshrl.u32 %v1963, 16
      %v2028 = vrot.slane %v2026, 4
      %v2029 = vshll.u32 %v1963, 16
      %v2031 = vrot.slane %v2029, 5
      %v2032 = vor.u32 %v2028, %v2031
      %v2033 = vsel %vm1980, %v2023, %v2032
      %v2035 = vshrl.u32 %v1964, 16
      %v2037 = vrot.slane %v2035, 4
      %v2038 = vshll.u32 %v1964, 16
      %v2040 = vrot.slane %v2038, 5
      %v2041 = vor.u32 %v2037, %v2040
      %v2042 = vsel %vm1980, %v2032, %v2041
      %v2044 = vshrl.u32 %v1965, 16
      %v2046 = vrot.slane %v2044, 4
      %v2047 = vshll.u32 %v1965, 16
      %v2049 = vrot.slane %v2047, 5
      %v2050 = vor.u32 %v2046, %v2049
      %v2051 = vsel %vm1980, %v2041, %v2050
      %v2053 = vshrl.u32 %v1966, 16
      %v2055 = vrot.slane %v2053, 4
      %v2056 = vshll.u32 %v1966, 16
      %v2058 = vrot.slane %v2056, 5
      %v2059 = vor.u32 %v2055, %v2058
      %v2060 = vsel %vm1980, %v2050, %v2059
      %v2062 = vshrl.u32 %v1967, 16
      %v2064 = vrot.slane %v2062, 4
      %v2065 = vshll.u32 %v1967, 16
      %v2067 = vrot.slane %v2065, 5
      %v2068 = vor.u32 %v2064, %v2067
      %v2069 = vsel %vm1980, %v2059, %v2068
      %v2071 = vshrl.u32 %v1968, 16
      %v2073 = vrot.slane %v2071, 4
      %v2074 = vshll.u32 %v1968, 16
      %v2076 = vrot.slane %v2074, 5
      %v2077 = vor.u32 %v2073, %v2076
      %v2078 = vsel %vm1980, %v2068, %v2077
      %v2080 = vshrl.u32 %v1969, 16
      %v2082 = vrot.slane %v2080, 4
      %v2083 = vshll.u32 %v1969, 16
      %v2085 = vrot.slane %v2083, 5
      %v2086 = vor.u32 %v2082, %v2085
      %v2087 = vsel %vm1980, %v2077, %v2086
      %v2089 = vshrl.u32 %v1970, 16
      %v2091 = vrot.slane %v2089, 4
      %v2092 = vshll.u32 %v1970, 16
      %v2094 = vrot.slane %v2092, 5
      %v2095 = vor.u32 %v2091, %v2094
      %v2096 = vsel %vm1980, %v2086, %v2095
      %v2098 = vshrl.u32 %v1971, 16
      %v2100 = vrot.slane %v2098, 4
      %v2101 = vshll.u32 %v1971, 16
      %v2103 = vrot.slane %v2101, 5
      %v2104 = vor.u32 %v2100, %v2103
      %v2105 = vsel %vm1980, %v2095, %v2104
      %v2107 = vshrl.u32 %v1972, 16
      %v2109 = vrot.slane %v2107, 4
      %v2110 = vshll.u32 %v1972, 16
      %v2112 = vrot.slane %v2110, 5
      %v2113 = vor.u32 %v2109, %v2112
      %v2114 = vsel %vm1980, %v2104, %v2113
      %v2116 = vshrl.u32 %v1973, 16
      %v2118 = vrot.slane %v2116, 4
      %v2119 = vshll.u32 %v1973, 16
      %v2121 = vrot.slane %v2119, 5
      %v2122 = vor.u32 %v2118, %v2121
      %v2123 = vsel %vm1980, %v2113, %v2122
      %v2125 = vshrl.u32 %v1974, 16
      %v2127 = vrot.slane %v2125, 4
      %v2128 = vshll.u32 %v1974, 16
      %v2130 = vrot.slane %v2128, 5
      %v2131 = vor.u32 %v2127, %v2130
      %v2132 = vsel %vm1980, %v2122, %v2131
      %v2137 = vunpack.c.l.b16 %v1976
      %v2138 = vunpack.c.l.b16 %v1977
      %v2139 = vunpack.c.l.b16 %v1978
      %v2140 = vunpack.c.l.b16 %v1979
      %v2141 = vpack.c.b16 %v2138, %v2137
      %v2142 = vpack.c.b16 %v2140, %v2139
      %v2146 = vsel %vm825, %v1997, 0
      %v2149 = vsel %vm825, %v2006, 0
      %v2152 = vsel %vm825, %v2015, 0
      %v2155 = vsel %vm825, %v2024, 0
      %v2158 = vsel %vm825, %v2033, 0
      %v2161 = vsel %vm825, %v2042, 0
      %v2164 = vsel %vm825, %v2051, 0
      %v2167 = vsel %vm825, %v2060, 0
      %v2170 = vsel %vm825, %v2069, 0
      %v2173 = vsel %vm825, %v2078, 0
      %v2176 = vsel %vm825, %v2087, 0
      %v2179 = vsel %vm825, %v2096, 0
      %v2182 = vsel %vm825, %v2105, 0
      %v2185 = vsel %vm825, %v2114, 0
      %v2188 = vsel %vm825, %v2123, 0
      %v2191 = vsel %vm825, %v2132, 0
      %2193 = vmatprep.subr.bf16.mxu0 0
      %2194 = vmatpush1.bf16.msra.mxu0 %v2141
      %2195 = vmatprep.subr.bf16.mxu0 0
      %2196 = vmatpush1.bf16.msra.mxu0 %v2142
      %2197 = vmatprep.subr.bf16.mxu0 0
      %2198 = vmatpush1.bf16.msra.mxu0 0
      %2199 = vmatprep.subr.bf16.mxu0 0
      %2200 = vmatpush1.bf16.msra.mxu0 0
      %2201 = vmatprep.subr.bf16.mxu0 0
      %2202 = vmatpush1.bf16.msra.mxu0 0
      %2203 = vmatprep.subr.bf16.mxu0 0
      %2204 = vmatpush1.bf16.msra.mxu0 0
      %2205 = vmatprep.subr.bf16.mxu0 0
      %2206 = vmatpush1.bf16.msra.mxu0 0
      %2207 = vmatprep.subr.bf16.mxu0 0
      %2208 = vmatpush1.bf16.msra.mxu0 0
      %2209 = vmatprep.subr.bf16.mxu0 0
      %2210 = vmatpush1.bf16.msra.mxu0 0
      %2211 = vmatprep.subr.bf16.mxu0 0
      %2212 = vmatpush1.bf16.msra.mxu0 0
      %2213 = vmatprep.subr.bf16.mxu0 0
      %2214 = vmatpush1.bf16.msra.mxu0 0
      %2215 = vmatprep.subr.bf16.mxu0 0
      %2216 = vmatpush1.bf16.msra.mxu0 0
      %2217 = vmatprep.subr.bf16.mxu0 0
      %2218 = vmatpush1.bf16.msra.mxu0 0
      %2219 = vmatprep.subr.bf16.mxu0 0
      %2220 = vmatpush1.bf16.msra.mxu0 0
      %2221 = vmatprep.subr.bf16.mxu0 0
      %2222 = vmatpush1.bf16.msra.mxu0 0
      %2223 = vmatprep.subr.bf16.mxu0 0
      %2224 = vmatpush1.bf16.msra.mxu0 0
      %2225 = vmatprep.mubr.bf16.mxu0 0
      %2226 = vmatmul.mubr.bf16.gmra.mrb[0].mxu0 %v2146
      %v2227 = vpop.f32.mrb[0].mxu0
      %v2228 = vadd.f32 0.0, %v2227
      %v2229 = vpop.f32.mrb[0].mxu0
      %v2230 = vpop.f32.mrb[0].mxu0
      %v2231 = vadd.f32 0.0, %v2230
      %v2232 = vpop.f32.mrb[0].mxu0
      %2233 = vmatprep.mubr.bf16.mxu0 0
      %2234 = vmatmul.mubr.bf16.gmra.mrb[0].mxu0 %v2149
      %v2235 = vpop.f32.mrb[0].mxu0
      %v2236 = vadd.f32 0.0, %v2235
      %v2237 = vpop.f32.mrb[0].mxu0
      %v2238 = vpop.f32.mrb[0].mxu0
      %v2239 = vadd.f32 0.0, %v2238
      %v2240 = vpop.f32.mrb[0].mxu0
      %2241 = vmatprep.mubr.bf16.mxu0 0
      %2242 = vmatmul.mubr.bf16.gmra.mrb[0].mxu0 %v2152
      %v2243 = vpop.f32.mrb[0].mxu0
      %v2244 = vadd.f32 0.0, %v2243
      %v2245 = vpop.f32.mrb[0].mxu0
      %v2246 = vpop.f32.mrb[0].mxu0
      %v2247 = vadd.f32 0.0, %v2246
      %v2248 = vpop.f32.mrb[0].mxu0
      %2249 = vmatprep.mubr.bf16.mxu0 0
      %2250 = vmatmul.mubr.bf16.gmra.mrb[0].mxu0 %v2155
      %v2251 = vpop.f32.mrb[0].mxu0
      %v2252 = vadd.f32 0.0, %v2251
      %v2253 = vpop.f32.mrb[0].mxu0
      %v2254 = vpop.f32.mrb[0].mxu0
      %v2255 = vadd.f32 0.0, %v2254
      %v2256 = vpop.f32.mrb[0].mxu0
      %2257 = vmatprep.mubr.bf16.mxu0 0
      %2258 = vmatmul.mubr.bf16.gmra.mrb[0].mxu0 %v2158
      %v2259 = vpop.f32.mrb[0].mxu0
      %v2260 = vadd.f32 0.0, %v2259
      %v2261 = vpop.f32.mrb[0].mxu0
      %v2262 = vpop.f32.mrb[0].mxu0
      %v2263 = vadd.f32 0.0, %v2262
      %v2264 = vpop.f32.mrb[0].mxu0
      %2265 = vmatprep.mubr.bf16.mxu0 0
      %2266 = vmatmul.mubr.bf16.gmra.mrb[0].mxu0 %v2161
      %v2267 = vpop.f32.mrb[0].mxu0
      %v2268 = vadd.f32 0.0, %v2267
      %v2269 = vpop.f32.mrb[0].mxu0
      %v2270 = vpop.f32.mrb[0].mxu0
      %v2271 = vadd.f32 0.0, %v2270
      %v2272 = vpop.f32.mrb[0].mxu0
      %2273 = vmatprep.mubr.bf16.mxu0 0
      %2274 = vmatmul.mubr.bf16.gmra.mrb[0].mxu0 %v2164
      %v2275 = vpop.f32.mrb[0].mxu0
      %v2276 = vadd.f32 0.0, %v2275
      %v2277 = vpop.f32.mrb[0].mxu0
      %v2278 = vpop.f32.mrb[0].mxu0
      %v2279 = vadd.f32 0.0, %v2278
      %v2280 = vpop.f32.mrb[0].mxu0
      %2281 = vmatprep.mubr.bf16.mxu0 0
      %2282 = vmatmul.mubr.bf16.gmra.mrb[0].mxu0 %v2167
      %v2283 = vpop.f32.mrb[0].mxu0
      %v2284 = vadd.f32 0.0, %v2283
      %v2285 = vpop.f32.mrb[0].mxu0
      %v2286 = vpop.f32.mrb[0].mxu0
      %v2287 = vadd.f32 0.0, %v2286
      %v2288 = vpop.f32.mrb[0].mxu0
      %2289 = vmatprep.mubr.bf16.mxu0 0
      %2290 = vmatmul.mubr.bf16.gmra.mrb[0].mxu0 %v2170
      %v2291 = vpop.f32.mrb[0].mxu0
      %v2292 = vadd.f32 0.0, %v2291
      %v2293 = vpop.f32.mrb[0].mxu0
      %v2294 = vpop.f32.mrb[0].mxu0
      %v2295 = vadd.f32 0.0, %v2294
      %v2296 = vpop.f32.mrb[0].mxu0
      %2297 = vmatprep.mubr.bf16.mxu0 0
      %2298 = vmatmul.mubr.bf16.gmra.mrb[0].mxu0 %v2173
      %v2299 = vpop.f32.mrb[0].mxu0
      %v2300 = vadd.f32 0.0, %v2299
      %v2301 = vpop.f32.mrb[0].mxu0
      %v2302 = vpop.f32.mrb[0].mxu0
      %v2303 = vadd.f32 0.0, %v2302
      %v2304 = vpop.f32.mrb[0].mxu0
      %2305 = vmatprep.mubr.bf16.mxu0 0
      %2306 = vmatmul.mubr.bf16.gmra.mrb[0].mxu0 %v2176
      %v2307 = vpop.f32.mrb[0].mxu0
      %v2308 = vadd.f32 0.0, %v2307
      %v2309 = vpop.f32.mrb[0].mxu0
      %v2310 = vpop.f32.mrb[0].mxu0
      %v2311 = vadd.f32 0.0, %v2310
      %v2312 = vpop.f32.mrb[0].mxu0
      %2313 = vmatprep.mubr.bf16.mxu0 0
      %2314 = vmatmul.mubr.bf16.gmra.mrb[0].mxu0 %v2179
      %v2315 = vpop.f32.mrb[0].mxu0
      %v2316 = vadd.f32 0.0, %v2315
      %v2317 = vpop.f32.mrb[0].mxu0
      %v2318 = vpop.f32.mrb[0].mxu0
      %v2319 = vadd.f32 0.0, %v2318
      %v2320 = vpop.f32.mrb[0].mxu0
      %2321 = vmatprep.mubr.bf16.mxu0 0
      %2322 = vmatmul.mubr.bf16.gmra.mrb[0].mxu0 %v2182
      %v2323 = vpop.f32.mrb[0].mxu0
      %v2324 = vadd.f32 0.0, %v2323
      %v2325 = vpop.f32.mrb[0].mxu0
      %v2326 = vpop.f32.mrb[0].mxu0
      %v2327 = vadd.f32 0.0, %v2326
      %v2328 = vpop.f32.mrb[0].mxu0
      %2329 = vmatprep.mubr.bf16.mxu0 0
      %2330 = vmatmul.mubr.bf16.gmra.mrb[0].mxu0 %v2185
      %v2331 = vpop.f32.mrb[0].mxu0
      %v2332 = vadd.f32 0.0, %v2331
      %v2333 = vpop.f32.mrb[0].mxu0
      %v2334 = vpop.f32.mrb[0].mxu0
      %v2335 = vadd.f32 0.0, %v2334
      %v2336 = vpop.f32.mrb[0].mxu0
      %2337 = vmatprep.mubr.bf16.mxu0 0
      %2338 = vmatmul.mubr.bf16.gmra.mrb[0].mxu0 %v2188
      %v2339 = vpop.f32.mrb[0].mxu0
      %v2340 = vadd.f32 0.0, %v2339
      %v2341 = vpop.f32.mrb[0].mxu0
      %v2342 = vpop.f32.mrb[0].mxu0
      %v2343 = vadd.f32 0.0, %v2342
      %v2344 = vpop.f32.mrb[0].mxu0
      %2345 = vmatprep.mubr.bf16.mxu0 0
      %2346 = vmatmul.mubr.bf16.gmra.mrb[0].mxu0 %v2191
      %v2347 = vpop.f32.mrb[0].mxu0
      %v2348 = vadd.f32 0.0, %v2347
      %v2349 = vpop.f32.mrb[0].mxu0
      %v2350 = vpop.f32.mrb[0].mxu0
      %v2351 = vadd.f32 0.0, %v2350
      %v2352 = vpop.f32.mrb[0].mxu0
      %2353 = vdwg.mxu0
      %v2354 = vmul.f32 %v2228, %v793
      %v2355 = vmul.f32 %v2231, %v794
      %v2356 = vmul.f32 %v2236, %v795
      %v2357 = vmul.f32 %v2239, %v796
      %v2358 = vmul.f32 %v2244, %v797
      %v2359 = vmul.f32 %v2247, %v798
      %v2360 = vmul.f32 %v2252, %v799
      %v2361 = vmul.f32 %v2255, %v800
      %v2362 = vmul.f32 %v2260, %v801
      %v2363 = vmul.f32 %v2263, %v802
      %v2364 = vmul.f32 %v2268, %v803
      %v2365 = vmul.f32 %v2271, %v804
      %v2366 = vmul.f32 %v2276, %v805
      %v2367 = vmul.f32 %v2279, %v806
      %v2368 = vmul.f32 %v2284, %v807
      %v2369 = vmul.f32 %v2287, %v808
      %v2370 = vmul.f32 %v2292, %v809
      %v2371 = vmul.f32 %v2295, %v810
      %v2372 = vmul.f32 %v2300, %v811
      %v2373 = vmul.f32 %v2303, %v812
      %v2374 = vmul.f32 %v2308, %v813
      %v2375 = vmul.f32 %v2311, %v814
      %v2376 = vmul.f32 %v2316, %v815
      %v2377 = vmul.f32 %v2319, %v816
      %v2378 = vmul.f32 %v2324, %v817
      %v2379 = vmul.f32 %v2327, %v818
      %v2380 = vmul.f32 %v2332, %v819
      %v2381 = vmul.f32 %v2335, %v820
      %v2382 = vmul.f32 %v2340, %v821
      %v2383 = vmul.f32 %v2343, %v822
      %v2384 = vmul.f32 %v2348, %v823
      %v2385 = vmul.f32 %v2351, %v824
      %v2386 = vld [vmem:[#allocation4] sm:$0xff]
      %v2387 = vld [vmem:[#allocation4 + $0x8] sm:$0xff]
      %v2388 = vld [vmem:[#allocation4 + $0x10] sm:$0xff]
      %v2389 = vld [vmem:[#allocation4 + $0x18] sm:$0xff]
      %v2390 = vld [vmem:[#allocation4 + $0x20] sm:$0xff]
      %v2391 = vld [vmem:[#allocation4 + $0x28] sm:$0xff]
      %v2392 = vld [vmem:[#allocation4 + $0x30] sm:$0xff]
      %v2393 = vld [vmem:[#allocation4 + $0x38] sm:$0xff]
      %v2394 = vld [vmem:[#allocation4 + $0x40] sm:$0xff]
      %v2395 = vld [vmem:[#allocation4 + $0x48] sm:$0xff]
      %v2396 = vld [vmem:[#allocation4 + $0x50] sm:$0xff]
      %v2397 = vld [vmem:[#allocation4 + $0x58] sm:$0xff]
      %v2398 = vld [vmem:[#allocation4 + $0x60] sm:$0xff]
      %v2399 = vld [vmem:[#allocation4 + $0x68] sm:$0xff]
      %v2400 = vld [vmem:[#allocation4 + $0x70] sm:$0xff]
      %v2401 = vld [vmem:[#allocation4 + $0x78] sm:$0xff]
      %v2402 = vld [vmem:[#allocation4 + $0x80] sm:$0xff]
      %v2403 = vld [vmem:[#allocation4 + $0x88] sm:$0xff]
      %v2404 = vld [vmem:[#allocation4 + $0x90] sm:$0xff]
      %v2405 = vld [vmem:[#allocation4 + $0x98] sm:$0xff]
      %v2406 = vld [vmem:[#allocation4 + $0xa0] sm:$0xff]
      %v2407 = vld [vmem:[#allocation4 + $0xa8] sm:$0xff]
      %v2408 = vld [vmem:[#allocation4 + $0xb0] sm:$0xff]
      %v2409 = vld [vmem:[#allocation4 + $0xb8] sm:$0xff]
      %v2410 = vld [vmem:[#allocation4 + $0xc0] sm:$0xff]
      %v2411 = vld [vmem:[#allocation4 + $0xc8] sm:$0xff]
      %v2412 = vld [vmem:[#allocation4 + $0xd0] sm:$0xff]
      %v2413 = vld [vmem:[#allocation4 + $0xd8] sm:$0xff]
      %v2414 = vld [vmem:[#allocation4 + $0xe0] sm:$0xff]
      %v2415 = vld [vmem:[#allocation4 + $0xe8] sm:$0xff]
      %v2416 = vld [vmem:[#allocation4 + $0xf0] sm:$0xff]
      %v2417 = vld [vmem:[#allocation4 + $0xf8] sm:$0xff]
      %v2418 = vadd.f32 %v2386, %v2354
      %v2419 = vadd.f32 %v2387, %v2355
      %v2420 = vadd.f32 %v2388, %v2356
      %v2421 = vadd.f32 %v2389, %v2357
      %v2422 = vadd.f32 %v2390, %v2358
      %v2423 = vadd.f32 %v2391, %v2359
      %v2424 = vadd.f32 %v2392, %v2360
      %v2425 = vadd.f32 %v2393, %v2361
      %v2426 = vadd.f32 %v2394, %v2362
      %v2427 = vadd.f32 %v2395, %v2363
      %v2428 = vadd.f32 %v2396, %v2364
      %v2429 = vadd.f32 %v2397, %v2365
      %v2430 = vadd.f32 %v2398, %v2366
      %v2431 = vadd.f32 %v2399, %v2367
      %v2432 = vadd.f32 %v2400, %v2368
      %v2433 = vadd.f32 %v2401, %v2369
      %v2434 = vadd.f32 %v2402, %v2370
      %v2435 = vadd.f32 %v2403, %v2371
      %v2436 = vadd.f32 %v2404, %v2372
      %v2437 = vadd.f32 %v2405, %v2373
      %v2438 = vadd.f32 %v2406, %v2374
      %v2439 = vadd.f32 %v2407, %v2375
      %v2440 = vadd.f32 %v2408, %v2376
      %v2441 = vadd.f32 %v2409, %v2377
      %v2442 = vadd.f32 %v2410, %v2378
      %v2443 = vadd.f32 %v2411, %v2379
      %v2444 = vadd.f32 %v2412, %v2380
      %v2445 = vadd.f32 %v2413, %v2381
      %v2446 = vadd.f32 %v2414, %v2382
      %v2447 = vadd.f32 %v2415, %v2383
      %v2448 = vadd.f32 %v2416, %v2384
      %v2449 = vadd.f32 %v2417, %v2385
      %2450 = vst.msk [vmem:[#allocation4] sm:$0xff] %vm825, %v2418
      %2451 = vst.msk [vmem:[#allocation4 + $0x8] sm:$0xff] %vm825, %v2419
      %2452 = vst.msk [vmem:[#allocation4 + $0x10] sm:$0xff] %vm825, %v2420
      %2453 = vst.msk [vmem:[#allocation4 + $0x18] sm:$0xff] %vm825, %v2421
      %2454 = vst.msk [vmem:[#allocation4 + $0x20] sm:$0xff] %vm825, %v2422
      %2455 = vst.msk [vmem:[#allocation4 + $0x28] sm:$0xff] %vm825, %v2423
      %2456 = vst.msk [vmem:[#allocation4 + $0x30] sm:$0xff] %vm825, %v2424
      %2457 = vst.msk [vmem:[#allocation4 + $0x38] sm:$0xff] %vm825, %v2425
      %2458 = vst.msk [vmem:[#allocation4 + $0x40] sm:$0xff] %vm825, %v2426
      %2459 = vst.msk [vmem:[#allocation4 + $0x48] sm:$0xff] %vm825, %v2427
      %2460 = vst.msk [vmem:[#allocation4 + $0x50] sm:$0xff] %vm825, %v2428
      %2461 = vst.msk [vmem:[#allocation4 + $0x58] sm:$0xff] %vm825, %v2429
      %2462 = vst.msk [vmem:[#allocation4 + $0x60] sm:$0xff] %vm825, %v2430
      %2463 = vst.msk [vmem:[#allocation4 + $0x68] sm:$0xff] %vm825, %v2431
      %2464 = vst.msk [vmem:[#allocation4 + $0x70] sm:$0xff] %vm825, %v2432
      %2465 = vst.msk [vmem:[#allocation4 + $0x78] sm:$0xff] %vm825, %v2433
      %2466 = vst.msk [vmem:[#allocation4 + $0x80] sm:$0xff] %vm825, %v2434
      %2467 = vst.msk [vmem:[#allocation4 + $0x88] sm:$0xff] %vm825, %v2435
      %2468 = vst.msk [vmem:[#allocation4 + $0x90] sm:$0xff] %vm825, %v2436
      %2469 = vst.msk [vmem:[#allocation4 + $0x98] sm:$0xff] %vm825, %v2437
      %2470 = vst.msk [vmem:[#allocation4 + $0xa0] sm:$0xff] %vm825, %v2438
      %2471 = vst.msk [vmem:[#allocation4 + $0xa8] sm:$0xff] %vm825, %v2439
      %2472 = vst.msk [vmem:[#allocation4 + $0xb0] sm:$0xff] %vm825, %v2440
      %2473 = vst.msk [vmem:[#allocation4 + $0xb8] sm:$0xff] %vm825, %v2441
      %2474 = vst.msk [vmem:[#allocation4 + $0xc0] sm:$0xff] %vm825, %v2442
      %2475 = vst.msk [vmem:[#allocation4 + $0xc8] sm:$0xff] %vm825, %v2443
      %2476 = vst.msk [vmem:[#allocation4 + $0xd0] sm:$0xff] %vm825, %v2444
      %2477 = vst.msk [vmem:[#allocation4 + $0xd8] sm:$0xff] %vm825, %v2445
      %2478 = vst.msk [vmem:[#allocation4 + $0xe0] sm:$0xff] %vm825, %v2446
      %2479 = vst.msk [vmem:[#allocation4 + $0xe8] sm:$0xff] %vm825, %v2447
      %2480 = vst.msk [vmem:[#allocation4 + $0xf0] sm:$0xff] %vm825, %v2448
      %2481 = vst.msk [vmem:[#allocation4 + $0xf8] sm:$0xff] %vm825, %v2449
      %v2482 = vld [vmem:[#allocation2 + $0x8] sm:$0xf8]
      %v2483 = vld [vmem:[#allocation2 + $0x10] sm:$0xff]
      %v2484 = vld [vmem:[#allocation2 + $0x18] sm:$0xff]
      %v2485 = vld [vmem:[#allocation2 + $0x20] sm:$0xff]
      %v2486 = vld [vmem:[#allocation2 + $0x28] sm:$0xff]
      %v2487 = vld [vmem:[#allocation2 + $0x30] sm:$0xff]
      %v2488 = vld [vmem:[#allocation2 + $0x38] sm:$0xff]
      %v2489 = vld [vmem:[#allocation2 + $0x40] sm:$0xff]
      %v2490 = vld [vmem:[#allocation2 + $0x48] sm:$0xff]
      %v2491 = vld [vmem:[#allocation2 + $0x50] sm:$0xff]
      %v2492 = vld [vmem:[#allocation2 + $0x58] sm:$0xff]
      %v2493 = vld [vmem:[#allocation2 + $0x60] sm:$0xff]
      %v2494 = vld [vmem:[#allocation2 + $0x68] sm:$0xff]
      %v2495 = vld [vmem:[#allocation2 + $0x70] sm:$0xff]
      %v2496 = vld [vmem:[#allocation2 + $0x78] sm:$0xff]
      %v2497 = vld [vmem:[#allocation2 + $0x80] sm:$0xff]
      %v2498 = vld [vmem:[#allocation2 + $0x88] sm:$0xf]
      %s2499 = scalar_lea.vmem %s1, 48
      %v2500 = vld [vmem:[%s2499] sm:$0xf]
      %v2501 = vld [vmem:[%s2499 + $0x4] sm:$0xf]
      %v2502 = vld [vmem:[%s2499 + $0x8] sm:$0xf]
      %v2503 = vld [vmem:[%s2499 + $0xc] sm:$0xf]
      %v2505 = vshrl.u32 %v2482, 16
      %v2507 = vrot.slane %v2505, 3
      %v2508 = vshll.u32 %v2482, 16
      %v2510 = vrot.slane %v2508, 4
      %v2511 = vor.u32 %v2507, %v2510
      %v2513 = vshrl.u32 %v2483, 16
      %v2515 = vrot.slane %v2513, 3
      %v2516 = vshll.u32 %v2483, 16
      %v2518 = vrot.slane %v2516, 4
      %v2519 = vor.u32 %v2515, %v2518
      %v2520 = vsel %vm1066, %v2511, %v2519
      %v2522 = vshrl.u32 %v2484, 16
      %v2524 = vrot.slane %v2522, 3
      %v2525 = vshll.u32 %v2484, 16
      %v2527 = vrot.slane %v2525, 4
      %v2528 = vor.u32 %v2524, %v2527
      %v2529 = vsel %vm1066, %v2519, %v2528
      %v2531 = vshrl.u32 %v2485, 16
      %v2533 = vrot.slane %v2531, 3
      %v2534 = vshll.u32 %v2485, 16
      %v2536 = vrot.slane %v2534, 4
      %v2537 = vor.u32 %v2533, %v2536
      %v2538 = vsel %vm1066, %v2528, %v2537
      %v2540 = vshrl.u32 %v2486, 16
      %v2542 = vrot.slane %v2540, 3
      %v2543 = vshll.u32 %v2486, 16
      %v2545 = vrot.slane %v2543, 4
      %v2546 = vor.u32 %v2542, %v2545
      %v2547 = vsel %vm1066, %v2537, %v2546
      %v2549 = vshrl.u32 %v2487, 16
      %v2551 = vrot.slane %v2549, 3
      %v2552 = vshll.u32 %v2487, 16
      %v2554 = vrot.slane %v2552, 4
      %v2555 = vor.u32 %v2551, %v2554
      %v2556 = vsel %vm1066, %v2546, %v2555
      %v2558 = vshrl.u32 %v2488, 16
      %v2560 = vrot.slane %v2558, 3
      %v2561 = vshll.u32 %v2488, 16
      %v2563 = vrot.slane %v2561, 4
      %v2564 = vor.u32 %v2560, %v2563
      %v2565 = vsel %vm1066, %v2555, %v2564
      %v2567 = vshrl.u32 %v2489, 16
      %v2569 = vrot.slane %v2567, 3
      %v2570 = vshll.u32 %v2489, 16
      %v2572 = vrot.slane %v2570, 4
      %v2573 = vor.u32 %v2569, %v2572
      %v2574 = vsel %vm1066, %v2564, %v2573
      %v2576 = vshrl.u32 %v2490, 16
      %v2578 = vrot.slane %v2576, 3
      %v2579 = vshll.u32 %v2490, 16
      %v2581 = vrot.slane %v2579, 4
      %v2582 = vor.u32 %v2578, %v2581
      %v2583 = vsel %vm1066, %v2573, %v2582
      %v2585 = vshrl.u32 %v2491, 16
      %v2587 = vrot.slane %v2585, 3
      %v2588 = vshll.u32 %v2491, 16
      %v2590 = vrot.slane %v2588, 4
      %v2591 = vor.u32 %v2587, %v2590
      %v2592 = vsel %vm1066, %v2582, %v2591
      %v2594 = vshrl.u32 %v2492, 16
      %v2596 = vrot.slane %v2594, 3
      %v2597 = vshll.u32 %v2492, 16
      %v2599 = vrot.slane %v2597, 4
      %v2600 = vor.u32 %v2596, %v2599
      %v2601 = vsel %vm1066, %v2591, %v2600
      %v2603 = vshrl.u32 %v2493, 16
      %v2605 = vrot.slane %v2603, 3
      %v2606 = vshll.u32 %v2493, 16
      %v2608 = vrot.slane %v2606, 4
      %v2609 = vor.u32 %v2605, %v2608
      %v2610 = vsel %vm1066, %v2600, %v2609
      %v2612 = vshrl.u32 %v2494, 16
      %v2614 = vrot.slane %v2612, 3
      %v2615 = vshll.u32 %v2494, 16
      %v2617 = vrot.slane %v2615, 4
      %v2618 = vor.u32 %v2614, %v2617
      %v2619 = vsel %vm1066, %v2609, %v2618
      %v2621 = vshrl.u32 %v2495, 16
      %v2623 = vrot.slane %v2621, 3
      %v2624 = vshll.u32 %v2495, 16
      %v2626 = vrot.slane %v2624, 4
      %v2627 = vor.u32 %v2623, %v2626
      %v2628 = vsel %vm1066, %v2618, %v2627
      %v2630 = vshrl.u32 %v2496, 16
      %v2632 = vrot.slane %v2630, 3
      %v2633 = vshll.u32 %v2496, 16
      %v2635 = vrot.slane %v2633, 4
      %v2636 = vor.u32 %v2632, %v2635
      %v2637 = vsel %vm1066, %v2627, %v2636
      %v2639 = vshrl.u32 %v2497, 16
      %v2641 = vrot.slane %v2639, 3
      %v2642 = vshll.u32 %v2497, 16
      %v2644 = vrot.slane %v2642, 4
      %v2645 = vor.u32 %v2641, %v2644
      %v2646 = vsel %vm1066, %v2636, %v2645
      %v2648 = vshrl.u32 %v2498, 16
      %v2650 = vrot.slane %v2648, 3
      %v2651 = vshll.u32 %v2498, 16
      %v2653 = vrot.slane %v2651, 4
      %v2654 = vor.u32 %v2650, %v2653
      %v2655 = vsel %vm1066, %v2645, %v2654
      %v2660 = vunpack.c.l.b16 %v2500
      %v2661 = vunpack.c.l.b16 %v2501
      %v2662 = vunpack.c.l.b16 %v2502
      %v2663 = vunpack.c.l.b16 %v2503
      %v2664 = vpack.c.b16 %v2661, %v2660
      %v2665 = vpack.c.b16 %v2663, %v2662
      %v2669 = vsel %vm825, %v2520, 0
      %v2672 = vsel %vm825, %v2529, 0
      %v2675 = vsel %vm825, %v2538, 0
      %v2678 = vsel %vm825, %v2547, 0
      %v2681 = vsel %vm825, %v2556, 0
      %v2684 = vsel %vm825, %v2565, 0
      %v2687 = vsel %vm825, %v2574, 0
      %v2690 = vsel %vm825, %v2583, 0
      %v2693 = vsel %vm825, %v2592, 0
      %v2696 = vsel %vm825, %v2601, 0
      %v2699 = vsel %vm825, %v2610, 0
      %v2702 = vsel %vm825, %v2619, 0
      %v2705 = vsel %vm825, %v2628, 0
      %v2708 = vsel %vm825, %v2637, 0
      %v2711 = vsel %vm825, %v2646, 0
      %v2714 = vsel %vm825, %v2655, 0
      %2716 = vmatprep.subr.bf16.mxu0 0
      %2717 = vmatpush1.bf16.msra.mxu0 %v2664
      %2718 = vmatprep.subr.bf16.mxu0 0
      %2719 = vmatpush1.bf16.msra.mxu0 %v2665
      %2720 = vmatprep.subr.bf16.mxu0 0
      %2721 = vmatpush1.bf16.msra.mxu0 0
      %2722 = vmatprep.subr.bf16.mxu0 0
      %2723 = vmatpush1.bf16.msra.mxu0 0
      %2724 = vmatprep.subr.bf16.mxu0 0
      %2725 = vmatpush1.bf16.msra.mxu0 0
      %2726 = vmatprep.subr.bf16.mxu0 0
      %2727 = vmatpush1.bf16.msra.mxu0 0
      %2728 = vmatprep.subr.bf16.mxu0 0
      %2729 = vmatpush1.bf16.msra.mxu0 0
      %2730 = vmatprep.subr.bf16.mxu0 0
      %2731 = vmatpush1.bf16.msra.mxu0 0
      %2732 = vmatprep.subr.bf16.mxu0 0
      %2733 = vmatpush1.bf16.msra.mxu0 0
      %2734 = vmatprep.subr.bf16.mxu0 0
      %2735 = vmatpush1.bf16.msra.mxu0 0
      %2736 = vmatprep.subr.bf16.mxu0 0
      %2737 = vmatpush1.bf16.msra.mxu0 0
      %2738 = vmatprep.subr.bf16.mxu0 0
      %2739 = vmatpush1.bf16.msra.mxu0 0
      %2740 = vmatprep.subr.bf16.mxu0 0
      %2741 = vmatpush1.bf16.msra.mxu0 0
      %2742 = vmatprep.subr.bf16.mxu0 0
      %2743 = vmatpush1.bf16.msra.mxu0 0
      %2744 = vmatprep.subr.bf16.mxu0 0
      %2745 = vmatpush1.bf16.msra.mxu0 0
      %2746 = vmatprep.subr.bf16.mxu0 0
      %2747 = vmatpush1.bf16.msra.mxu0 0
      %2748 = vmatprep.mubr.bf16.mxu0 0
      %2749 = vmatmul.mubr.bf16.gmra.mrb[0].mxu0 %v2669
      %v2750 = vpop.f32.mrb[0].mxu0
      %v2751 = vadd.f32 0.0, %v2750
      %v2752 = vpop.f32.mrb[0].mxu0
      %v2753 = vpop.f32.mrb[0].mxu0
      %v2754 = vadd.f32 0.0, %v2753
      %v2755 = vpop.f32.mrb[0].mxu0
      %2756 = vmatprep.mubr.bf16.mxu0 0
      %2757 = vmatmul.mubr.bf16.gmra.mrb[0].mxu0 %v2672
      %v2758 = vpop.f32.mrb[0].mxu0
      %v2759 = vadd.f32 0.0, %v2758
      %v2760 = vpop.f32.mrb[0].mxu0
      %v2761 = vpop.f32.mrb[0].mxu0
      %v2762 = vadd.f32 0.0, %v2761
      %v2763 = vpop.f32.mrb[0].mxu0
      %2764 = vmatprep.mubr.bf16.mxu0 0
      %2765 = vmatmul.mubr.bf16.gmra.mrb[0].mxu0 %v2675
      %v2766 = vpop.f32.mrb[0].mxu0
      %v2767 = vadd.f32 0.0, %v2766
      %v2768 = vpop.f32.mrb[0].mxu0
      %v2769 = vpop.f32.mrb[0].mxu0
      %v2770 = vadd.f32 0.0, %v2769
      %v2771 = vpop.f32.mrb[0].mxu0
      %2772 = vmatprep.mubr.bf16.mxu0 0
      %2773 = vmatmul.mubr.bf16.gmra.mrb[0].mxu0 %v2678
      %v2774 = vpop.f32.mrb[0].mxu0
      %v2775 = vadd.f32 0.0, %v2774
      %v2776 = vpop.f32.mrb[0].mxu0
      %v2777 = vpop.f32.mrb[0].mxu0
      %v2778 = vadd.f32 0.0, %v2777
      %v2779 = vpop.f32.mrb[0].mxu0
      %2780 = vmatprep.mubr.bf16.mxu0 0
      %2781 = vmatmul.mubr.bf16.gmra.mrb[0].mxu0 %v2681
      %v2782 = vpop.f32.mrb[0].mxu0
      %v2783 = vadd.f32 0.0, %v2782
      %v2784 = vpop.f32.mrb[0].mxu0
      %v2785 = vpop.f32.mrb[0].mxu0
      %v2786 = vadd.f32 0.0, %v2785
      %v2787 = vpop.f32.mrb[0].mxu0
      %2788 = vmatprep.mubr.bf16.mxu0 0
      %2789 = vmatmul.mubr.bf16.gmra.mrb[0].mxu0 %v2684
      %v2790 = vpop.f32.mrb[0].mxu0
      %v2791 = vadd.f32 0.0, %v2790
      %v2792 = vpop.f32.mrb[0].mxu0
      %v2793 = vpop.f32.mrb[0].mxu0
      %v2794 = vadd.f32 0.0, %v2793
      %v2795 = vpop.f32.mrb[0].mxu0
      %2796 = vmatprep.mubr.bf16.mxu0 0
      %2797 = vmatmul.mubr.bf16.gmra.mrb[0].mxu0 %v2687
      %v2798 = vpop.f32.mrb[0].mxu0
      %v2799 = vadd.f32 0.0, %v2798
      %v2800 = vpop.f32.mrb[0].mxu0
      %v2801 = vpop.f32.mrb[0].mxu0
      %v2802 = vadd.f32 0.0, %v2801
      %v2803 = vpop.f32.mrb[0].mxu0
      %2804 = vmatprep.mubr.bf16.mxu0 0
      %2805 = vmatmul.mubr.bf16.gmra.mrb[0].mxu0 %v2690
      %v2806 = vpop.f32.mrb[0].mxu0
      %v2807 = vadd.f32 0.0, %v2806
      %v2808 = vpop.f32.mrb[0].mxu0
      %v2809 = vpop.f32.mrb[0].mxu0
      %v2810 = vadd.f32 0.0, %v2809
      %v2811 = vpop.f32.mrb[0].mxu0
      %2812 = vmatprep.mubr.bf16.mxu0 0
      %2813 = vmatmul.mubr.bf16.gmra.mrb[0].mxu0 %v2693
      %v2814 = vpop.f32.mrb[0].mxu0
      %v2815 = vadd.f32 0.0, %v2814
      %v2816 = vpop.f32.mrb[0].mxu0
      %v2817 = vpop.f32.mrb[0].mxu0
      %v2818 = vadd.f32 0.0, %v2817
      %v2819 = vpop.f32.mrb[0].mxu0
      %2820 = vmatprep.mubr.bf16.mxu0 0
      %2821 = vmatmul.mubr.bf16.gmra.mrb[0].mxu0 %v2696
      %v2822 = vpop.f32.mrb[0].mxu0
      %v2823 = vadd.f32 0.0, %v2822
      %v2824 = vpop.f32.mrb[0].mxu0
      %v2825 = vpop.f32.mrb[0].mxu0
      %v2826 = vadd.f32 0.0, %v2825
      %v2827 = vpop.f32.mrb[0].mxu0
      %2828 = vmatprep.mubr.bf16.mxu0 0
      %2829 = vmatmul.mubr.bf16.gmra.mrb[0].mxu0 %v2699
      %v2830 = vpop.f32.mrb[0].mxu0
      %v2831 = vadd.f32 0.0, %v2830
      %v2832 = vpop.f32.mrb[0].mxu0
      %v2833 = vpop.f32.mrb[0].mxu0
      %v2834 = vadd.f32 0.0, %v2833
      %v2835 = vpop.f32.mrb[0].mxu0
      %2836 = vmatprep.mubr.bf16.mxu0 0
      %2837 = vmatmul.mubr.bf16.gmra.mrb[0].mxu0 %v2702
      %v2838 = vpop.f32.mrb[0].mxu0
      %v2839 = vadd.f32 0.0, %v2838
      %v2840 = vpop.f32.mrb[0].mxu0
      %v2841 = vpop.f32.mrb[0].mxu0
      %v2842 = vadd.f32 0.0, %v2841
      %v2843 = vpop.f32.mrb[0].mxu0
      %2844 = vmatprep.mubr.bf16.mxu0 0
      %2845 = vmatmul.mubr.bf16.gmra.mrb[0].mxu0 %v2705
      %v2846 = vpop.f32.mrb[0].mxu0
      %v2847 = vadd.f32 0.0, %v2846
      %v2848 = vpop.f32.mrb[0].mxu0
      %v2849 = vpop.f32.mrb[0].mxu0
      %v2850 = vadd.f32 0.0, %v2849
      %v2851 = vpop.f32.mrb[0].mxu0
      %2852 = vmatprep.mubr.bf16.mxu0 0
      %2853 = vmatmul.mubr.bf16.gmra.mrb[0].mxu0 %v2708
      %v2854 = vpop.f32.mrb[0].mxu0
      %v2855 = vadd.f32 0.0, %v2854
      %v2856 = vpop.f32.mrb[0].mxu0
      %v2857 = vpop.f32.mrb[0].mxu0
      %v2858 = vadd.f32 0.0, %v2857
      %v2859 = vpop.f32.mrb[0].mxu0
      %2860 = vmatprep.mubr.bf16.mxu0 0
      %2861 = vmatmul.mubr.bf16.gmra.mrb[0].mxu0 %v2711
      %v2862 = vpop.f32.mrb[0].mxu0
      %v2863 = vadd.f32 0.0, %v2862
      %v2864 = vpop.f32.mrb[0].mxu0
      %v2865 = vpop.f32.mrb[0].mxu0
      %v2866 = vadd.f32 0.0, %v2865
      %v2867 = vpop.f32.mrb[0].mxu0
      %2868 = vmatprep.mubr.bf16.mxu0 0
      %2869 = vmatmul.mubr.bf16.gmra.mrb[0].mxu0 %v2714
      %v2870 = vpop.f32.mrb[0].mxu0
      %v2871 = vadd.f32 0.0, %v2870
      %v2872 = vpop.f32.mrb[0].mxu0
      %v2873 = vpop.f32.mrb[0].mxu0
      %v2874 = vadd.f32 0.0, %v2873
      %v2875 = vpop.f32.mrb[0].mxu0
      %2876 = vdwg.mxu0
      %v2877 = vmul.f32 %v2751, %v729
      %v2878 = vmul.f32 %v2754, %v730
      %v2879 = vmul.f32 %v2759, %v731
      %v2880 = vmul.f32 %v2762, %v732
      %v2881 = vmul.f32 %v2767, %v733
      %v2882 = vmul.f32 %v2770, %v734
      %v2883 = vmul.f32 %v2775, %v735
      %v2884 = vmul.f32 %v2778, %v736
      %v2885 = vmul.f32 %v2783, %v737
      %v2886 = vmul.f32 %v2786, %v738
      %v2887 = vmul.f32 %v2791, %v739
      %v2888 = vmul.f32 %v2794, %v740
      %v2889 = vmul.f32 %v2799, %v741
      %v2890 = vmul.f32 %v2802, %v742
      %v2891 = vmul.f32 %v2807, %v743
      %v2892 = vmul.f32 %v2810, %v744
      %v2893 = vmul.f32 %v2815, %v745
      %v2894 = vmul.f32 %v2818, %v746
      %v2895 = vmul.f32 %v2823, %v747
      %v2896 = vmul.f32 %v2826, %v748
      %v2897 = vmul.f32 %v2831, %v749
      %v2898 = vmul.f32 %v2834, %v750
      %v2899 = vmul.f32 %v2839, %v751
      %v2900 = vmul.f32 %v2842, %v752
      %v2901 = vmul.f32 %v2847, %v753
      %v2902 = vmul.f32 %v2850, %v754
      %v2903 = vmul.f32 %v2855, %v755
      %v2904 = vmul.f32 %v2858, %v756
      %v2905 = vmul.f32 %v2863, %v757
      %v2906 = vmul.f32 %v2866, %v758
      %v2907 = vmul.f32 %v2871, %v759
      %v2908 = vmul.f32 %v2874, %v760
      %v2909 = vld [vmem:[#allocation4] sm:$0xff]
      %v2910 = vld [vmem:[#allocation4 + $0x8] sm:$0xff]
      %v2911 = vld [vmem:[#allocation4 + $0x10] sm:$0xff]
      %v2912 = vld [vmem:[#allocation4 + $0x18] sm:$0xff]
      %v2913 = vld [vmem:[#allocation4 + $0x20] sm:$0xff]
      %v2914 = vld [vmem:[#allocation4 + $0x28] sm:$0xff]
      %v2915 = vld [vmem:[#allocation4 + $0x30] sm:$0xff]
      %v2916 = vld [vmem:[#allocation4 + $0x38] sm:$0xff]
      %v2917 = vld [vmem:[#allocation4 + $0x40] sm:$0xff]
      %v2918 = vld [vmem:[#allocation4 + $0x48] sm:$0xff]
      %v2919 = vld [vmem:[#allocation4 + $0x50] sm:$0xff]
      %v2920 = vld [vmem:[#allocation4 + $0x58] sm:$0xff]
      %v2921 = vld [vmem:[#allocation4 + $0x60] sm:$0xff]
      %v2922 = vld [vmem:[#allocation4 + $0x68] sm:$0xff]
      %v2923 = vld [vmem:[#allocation4 + $0x70] sm:$0xff]
      %v2924 = vld [vmem:[#allocation4 + $0x78] sm:$0xff]
      %v2925 = vld [vmem:[#allocation4 + $0x80] sm:$0xff]
      %v2926 = vld [vmem:[#allocation4 + $0x88] sm:$0xff]
      %v2927 = vld [vmem:[#allocation4 + $0x90] sm:$0xff]
      %v2928 = vld [vmem:[#allocation4 + $0x98] sm:$0xff]
      %v2929 = vld [vmem:[#allocation4 + $0xa0] sm:$0xff]
      %v2930 = vld [vmem:[#allocation4 + $0xa8] sm:$0xff]
      %v2931 = vld [vmem:[#allocation4 + $0xb0] sm:$0xff]
      %v2932 = vld [vmem:[#allocation4 + $0xb8] sm:$0xff]
      %v2933 = vld [vmem:[#allocation4 + $0xc0] sm:$0xff]
      %v2934 = vld [vmem:[#allocation4 + $0xc8] sm:$0xff]
      %v2935 = vld [vmem:[#allocation4 + $0xd0] sm:$0xff]
      %v2936 = vld [vmem:[#allocation4 + $0xd8] sm:$0xff]
      %v2937 = vld [vmem:[#allocation4 + $0xe0] sm:$0xff]
      %v2938 = vld [vmem:[#allocation4 + $0xe8] sm:$0xff]
      %v2939 = vld [vmem:[#allocation4 + $0xf0] sm:$0xff]
      %v2940 = vld [vmem:[#allocation4 + $0xf8] sm:$0xff]
      %v2941 = vadd.f32 %v2909, %v2877
      %v2942 = vadd.f32 %v2910, %v2878
      %v2943 = vadd.f32 %v2911, %v2879
      %v2944 = vadd.f32 %v2912, %v2880
      %v2945 = vadd.f32 %v2913, %v2881
      %v2946 = vadd.f32 %v2914, %v2882
      %v2947 = vadd.f32 %v2915, %v2883
      %v2948 = vadd.f32 %v2916, %v2884
      %v2949 = vadd.f32 %v2917, %v2885
      %v2950 = vadd.f32 %v2918, %v2886
      %v2951 = vadd.f32 %v2919, %v2887
      %v2952 = vadd.f32 %v2920, %v2888
      %v2953 = vadd.f32 %v2921, %v2889
      %v2954 = vadd.f32 %v2922, %v2890
      %v2955 = vadd.f32 %v2923, %v2891
      %v2956 = vadd.f32 %v2924, %v2892
      %v2957 = vadd.f32 %v2925, %v2893
      %v2958 = vadd.f32 %v2926, %v2894
      %v2959 = vadd.f32 %v2927, %v2895
      %v2960 = vadd.f32 %v2928, %v2896
      %v2961 = vadd.f32 %v2929, %v2897
      %v2962 = vadd.f32 %v2930, %v2898
      %v2963 = vadd.f32 %v2931, %v2899
      %v2964 = vadd.f32 %v2932, %v2900
      %v2965 = vadd.f32 %v2933, %v2901
      %v2966 = vadd.f32 %v2934, %v2902
      %v2967 = vadd.f32 %v2935, %v2903
      %v2968 = vadd.f32 %v2936, %v2904
      %v2969 = vadd.f32 %v2937, %v2905
      %v2970 = vadd.f32 %v2938, %v2906
      %v2971 = vadd.f32 %v2939, %v2907
      %v2972 = vadd.f32 %v2940, %v2908
      %2973 = vst.msk [vmem:[#allocation4] sm:$0xff] %vm825, %v2941
      %2974 = vst.msk [vmem:[#allocation4 + $0x8] sm:$0xff] %vm825, %v2942
      %2975 = vst.msk [vmem:[#allocation4 + $0x10] sm:$0xff] %vm825, %v2943
      %2976 = vst.msk [vmem:[#allocation4 + $0x18] sm:$0xff] %vm825, %v2944
      %2977 = vst.msk [vmem:[#allocation4 + $0x20] sm:$0xff] %vm825, %v2945
      %2978 = vst.msk [vmem:[#allocation4 + $0x28] sm:$0xff] %vm825, %v2946
      %2979 = vst.msk [vmem:[#allocation4 + $0x30] sm:$0xff] %vm825, %v2947
      %2980 = vst.msk [vmem:[#allocation4 + $0x38] sm:$0xff] %vm825, %v2948
      %2981 = vst.msk [vmem:[#allocation4 + $0x40] sm:$0xff] %vm825, %v2949
      %2982 = vst.msk [vmem:[#allocation4 + $0x48] sm:$0xff] %vm825, %v2950
      %2983 = vst.msk [vmem:[#allocation4 + $0x50] sm:$0xff] %vm825, %v2951
      %2984 = vst.msk [vmem:[#allocation4 + $0x58] sm:$0xff] %vm825, %v2952
      %2985 = vst.msk [vmem:[#allocation4 + $0x60] sm:$0xff] %vm825, %v2953
      %2986 = vst.msk [vmem:[#allocation4 + $0x68] sm:$0xff] %vm825, %v2954
      %2987 = vst.msk [vmem:[#allocation4 + $0x70] sm:$0xff] %vm825, %v2955
      %2988 = vst.msk [vmem:[#allocation4 + $0x78] sm:$0xff] %vm825, %v2956
      %2989 = vst.msk [vmem:[#allocation4 + $0x80] sm:$0xff] %vm825, %v2957
      %2990 = vst.msk [vmem:[#allocation4 + $0x88] sm:$0xff] %vm825, %v2958
      %2991 = vst.msk [vmem:[#allocation4 + $0x90] sm:$0xff] %vm825, %v2959
      %2992 = vst.msk [vmem:[#allocation4 + $0x98] sm:$0xff] %vm825, %v2960
      %2993 = vst.msk [vmem:[#allocation4 + $0xa0] sm:$0xff] %vm825, %v2961
      %2994 = vst.msk [vmem:[#allocation4 + $0xa8] sm:$0xff] %vm825, %v2962
      %2995 = vst.msk [vmem:[#allocation4 + $0xb0] sm:$0xff] %vm825, %v2963
      %2996 = vst.msk [vmem:[#allocation4 + $0xb8] sm:$0xff] %vm825, %v2964
      %2997 = vst.msk [vmem:[#allocation4 + $0xc0] sm:$0xff] %vm825, %v2965
      %2998 = vst.msk [vmem:[#allocation4 + $0xc8] sm:$0xff] %vm825, %v2966
      %2999 = vst.msk [vmem:[#allocation4 + $0xd0] sm:$0xff] %vm825, %v2967
      %3000 = vst.msk [vmem:[#allocation4 + $0xd8] sm:$0xff] %vm825, %v2968
      %3001 = vst.msk [vmem:[#allocation4 + $0xe0] sm:$0xff] %vm825, %v2969
      %3002 = vst.msk [vmem:[#allocation4 + $0xe8] sm:$0xff] %vm825, %v2970
      %3003 = vst.msk [vmem:[#allocation4 + $0xf0] sm:$0xff] %vm825, %v2971
      %3004 = vst.msk [vmem:[#allocation4 + $0xf8] sm:$0xff] %vm825, %v2972
      %v3005 = vld [vmem:[#allocation2 + $0x8] sm:$0xf0]
      %v3006 = vld [vmem:[#allocation2 + $0x10] sm:$0xff]
      %v3007 = vld [vmem:[#allocation2 + $0x18] sm:$0xff]
      %v3008 = vld [vmem:[#allocation2 + $0x20] sm:$0xff]
      %v3009 = vld [vmem:[#allocation2 + $0x28] sm:$0xff]
      %v3010 = vld [vmem:[#allocation2 + $0x30] sm:$0xff]
      %v3011 = vld [vmem:[#allocation2 + $0x38] sm:$0xff]
      %v3012 = vld [vmem:[#allocation2 + $0x40] sm:$0xff]
      %v3013 = vld [vmem:[#allocation2 + $0x48] sm:$0xff]
      %v3014 = vld [vmem:[#allocation2 + $0x50] sm:$0xff]
      %v3015 = vld [vmem:[#allocation2 + $0x58] sm:$0xff]
      %v3016 = vld [vmem:[#allocation2 + $0x60] sm:$0xff]
      %v3017 = vld [vmem:[#allocation2 + $0x68] sm:$0xff]
      %v3018 = vld [vmem:[#allocation2 + $0x70] sm:$0xff]
      %v3019 = vld [vmem:[#allocation2 + $0x78] sm:$0xff]
      %v3020 = vld [vmem:[#allocation2 + $0x80] sm:$0xff]
      %v3021 = vld [vmem:[#allocation2 + $0x88] sm:$0xf]
      %s3022 = scalar_lea.vmem %s1, 64
      %v3023 = vld [vmem:[%s3022] sm:$0xf]
      %v3024 = vld [vmem:[%s3022 + $0x4] sm:$0xf]
      %v3025 = vld [vmem:[%s3022 + $0x8] sm:$0xf]
      %v3026 = vld [vmem:[%s3022 + $0xc] sm:$0xf]
      %v3044 = vrot.slane %v3005, 4
      %v3045 = vrot.slane %v3006, 4
      %v3046 = vsel %vm1607, %v3044, %v3045
      %v3047 = vrot.slane %v3007, 4
      %v3048 = vsel %vm1607, %v3045, %v3047
      %v3049 = vrot.slane %v3008, 4
      %v3050 = vsel %vm1607, %v3047, %v3049
      %v3051 = vrot.slane %v3009, 4
      %v3052 = vsel %vm1607, %v3049, %v3051
      %v3053 = vrot.slane %v3010, 4
      %v3054 = vsel %vm1607, %v3051, %v3053
      %v3055 = vrot.slane %v3011, 4
      %v3056 = vsel %vm1607, %v3053, %v3055
      %v3057 = vrot.slane %v3012, 4
      %v3058 = vsel %vm1607, %v3055, %v3057
      %v3059 = vrot.slane %v3013, 4
      %v3060 = vsel %vm1607, %v3057, %v3059
      %v3061 = vrot.slane %v3014, 4
      %v3062 = vsel %vm1607, %v3059, %v3061
      %v3063 = vrot.slane %v3015, 4
      %v3064 = vsel %vm1607, %v3061, %v3063
      %v3065 = vrot.slane %v3016, 4
      %v3066 = vsel %vm1607, %v3063, %v3065
      %v3067 = vrot.slane %v3017, 4
      %v3068 = vsel %vm1607, %v3065, %v3067
      %v3069 = vrot.slane %v3018, 4
      %v3070 = vsel %vm1607, %v3067, %v3069
      %v3071 = vrot.slane %v3019, 4
      %v3072 = vsel %vm1607, %v3069, %v3071
      %v3073 = vrot.slane %v3020, 4
      %v3074 = vsel %vm1607, %v3071, %v3073
      %v3075 = vrot.slane %v3021, 4
      %v3076 = vsel %vm1607, %v3073, %v3075
      %v3081 = vunpack.c.l.b16 %v3023
      %v3082 = vunpack.c.l.b16 %v3024
      %v3083 = vunpack.c.l.b16 %v3025
      %v3084 = vunpack.c.l.b16 %v3026
      %v3085 = vpack.c.b16 %v3082, %v3081
      %v3086 = vpack.c.b16 %v3084, %v3083
      %v3090 = vsel %vm825, %v3046, 0
      %v3093 = vsel %vm825, %v3048, 0
      %v3096 = vsel %vm825, %v3050, 0
      %v3099 = vsel %vm825, %v3052, 0
      %v3102 = vsel %vm825, %v3054, 0
      %v3105 = vsel %vm825, %v3056, 0
      %v3108 = vsel %vm825, %v3058, 0
      %v3111 = vsel %vm825, %v3060, 0
      %v3114 = vsel %vm825, %v3062, 0
      %v3117 = vsel %vm825, %v3064, 0
      %v3120 = vsel %vm825, %v3066, 0
      %v3123 = vsel %vm825, %v3068, 0
      %v3126 = vsel %vm825, %v3070, 0
      %v3129 = vsel %vm825, %v3072, 0
      %v3132 = vsel %vm825, %v3074, 0
      %v3135 = vsel %vm825, %v3076, 0
      %3137 = vmatprep.subr.bf16.mxu0 0
      %3138 = vmatpush1.bf16.msra.mxu0 %v3085
      %3139 = vmatprep.subr.bf16.mxu0 0
      %3140 = vmatpush1.bf16.msra.mxu0 %v3086
      %3141 = vmatprep.subr.bf16.mxu0 0
      %3142 = vmatpush1.bf16.msra.mxu0 0
      %3143 = vmatprep.subr.bf16.mxu0 0
      %3144 = vmatpush1.bf16.msra.mxu0 0
      %3145 = vmatprep.subr.bf16.mxu0 0
      %3146 = vmatpush1.bf16.msra.mxu0 0
      %3147 = vmatprep.subr.bf16.mxu0 0
      %3148 = vmatpush1.bf16.msra.mxu0 0
      %3149 = vmatprep.subr.bf16.mxu0 0
      %3150 = vmatpush1.bf16.msra.mxu0 0
      %3151 = vmatprep.subr.bf16.mxu0 0
      %3152 = vmatpush1.bf16.msra.mxu0 0
      %3153 = vmatprep.subr.bf16.mxu0 0
      %3154 = vmatpush1.bf16.msra.mxu0 0
      %3155 = vmatprep.subr.bf16.mxu0 0
      %3156 = vmatpush1.bf16.msra.mxu0 0
      %3157 = vmatprep.subr.bf16.mxu0 0
      %3158 = vmatpush1.bf16.msra.mxu0 0
      %3159 = vmatprep.subr.bf16.mxu0 0
      %3160 = vmatpush1.bf16.msra.mxu0 0
      %3161 = vmatprep.subr.bf16.mxu0 0
      %3162 = vmatpush1.bf16.msra.mxu0 0
      %3163 = vmatprep.subr.bf16.mxu0 0
      %3164 = vmatpush1.bf16.msra.mxu0 0
      %3165 = vmatprep.subr.bf16.mxu0 0
      %3166 = vmatpush1.bf16.msra.mxu0 0
      %3167 = vmatprep.subr.bf16.mxu0 0
      %3168 = vmatpush1.bf16.msra.mxu0 0
      %3169 = vmatprep.mubr.bf16.mxu0 0
      %3170 = vmatmul.mubr.bf16.gmra.mrb[0].mxu0 %v3090
      %v3171 = vpop.f32.mrb[0].mxu0
      %v3172 = vadd.f32 0.0, %v3171
      %v3173 = vpop.f32.mrb[0].mxu0
      %v3174 = vpop.f32.mrb[0].mxu0
      %v3175 = vadd.f32 0.0, %v3174
      %v3176 = vpop.f32.mrb[0].mxu0
      %3177 = vmatprep.mubr.bf16.mxu0 0
      %3178 = vmatmul.mubr.bf16.gmra.mrb[0].mxu0 %v3093
      %v3179 = vpop.f32.mrb[0].mxu0
      %v3180 = vadd.f32 0.0, %v3179
      %v3181 = vpop.f32.mrb[0].mxu0
      %v3182 = vpop.f32.mrb[0].mxu0
      %v3183 = vadd.f32 0.0, %v3182
      %v3184 = vpop.f32.mrb[0].mxu0
      %3185 = vmatprep.mubr.bf16.mxu0 0
      %3186 = vmatmul.mubr.bf16.gmra.mrb[0].mxu0 %v3096
      %v3187 = vpop.f32.mrb[0].mxu0
      %v3188 = vadd.f32 0.0, %v3187
      %v3189 = vpop.f32.mrb[0].mxu0
      %v3190 = vpop.f32.mrb[0].mxu0
      %v3191 = vadd.f32 0.0, %v3190
      %v3192 = vpop.f32.mrb[0].mxu0
      %3193 = vmatprep.mubr.bf16.mxu0 0
      %3194 = vmatmul.mubr.bf16.gmra.mrb[0].mxu0 %v3099
      %v3195 = vpop.f32.mrb[0].mxu0
      %v3196 = vadd.f32 0.0, %v3195
      %v3197 = vpop.f32.mrb[0].mxu0
      %v3198 = vpop.f32.mrb[0].mxu0
      %v3199 = vadd.f32 0.0, %v3198
      %v3200 = vpop.f32.mrb[0].mxu0
      %3201 = vmatprep.mubr.bf16.mxu0 0
      %3202 = vmatmul.mubr.bf16.gmra.mrb[0].mxu0 %v3102
      %v3203 = vpop.f32.mrb[0].mxu0
      %v3204 = vadd.f32 0.0, %v3203
      %v3205 = vpop.f32.mrb[0].mxu0
      %v3206 = vpop.f32.mrb[0].mxu0
      %v3207 = vadd.f32 0.0, %v3206
      %v3208 = vpop.f32.mrb[0].mxu0
      %3209 = vmatprep.mubr.bf16.mxu0 0
      %3210 = vmatmul.mubr.bf16.gmra.mrb[0].mxu0 %v3105
      %v3211 = vpop.f32.mrb[0].mxu0
      %v3212 = vadd.f32 0.0, %v3211
      %v3213 = vpop.f32.mrb[0].mxu0
      %v3214 = vpop.f32.mrb[0].mxu0
      %v3215 = vadd.f32 0.0, %v3214
      %v3216 = vpop.f32.mrb[0].mxu0
      %3217 = vmatprep.mubr.bf16.mxu0 0
      %3218 = vmatmul.mubr.bf16.gmra.mrb[0].mxu0 %v3108
      %v3219 = vpop.f32.mrb[0].mxu0
      %v3220 = vadd.f32 0.0, %v3219
      %v3221 = vpop.f32.mrb[0].mxu0
      %v3222 = vpop.f32.mrb[0].mxu0
      %v3223 = vadd.f32 0.0, %v3222
      %v3224 = vpop.f32.mrb[0].mxu0
      %3225 = vmatprep.mubr.bf16.mxu0 0
      %3226 = vmatmul.mubr.bf16.gmra.mrb[0].mxu0 %v3111
      %v3227 = vpop.f32.mrb[0].mxu0
      %v3228 = vadd.f32 0.0, %v3227
      %v3229 = vpop.f32.mrb[0].mxu0
      %v3230 = vpop.f32.mrb[0].mxu0
      %v3231 = vadd.f32 0.0, %v3230
      %v3232 = vpop.f32.mrb[0].mxu0
      %3233 = vmatprep.mubr.bf16.mxu0 0
      %3234 = vmatmul.mubr.bf16.gmra.mrb[0].mxu0 %v3114
      %v3235 = vpop.f32.mrb[0].mxu0
      %v3236 = vadd.f32 0.0, %v3235
      %v3237 = vpop.f32.mrb[0].mxu0
      %v3238 = vpop.f32.mrb[0].mxu0
      %v3239 = vadd.f32 0.0, %v3238
      %v3240 = vpop.f32.mrb[0].mxu0
      %3241 = vmatprep.mubr.bf16.mxu0 0
      %3242 = vmatmul.mubr.bf16.gmra.mrb[0].mxu0 %v3117
      %v3243 = vpop.f32.mrb[0].mxu0
      %v3244 = vadd.f32 0.0, %v3243
      %v3245 = vpop.f32.mrb[0].mxu0
      %v3246 = vpop.f32.mrb[0].mxu0
      %v3247 = vadd.f32 0.0, %v3246
      %v3248 = vpop.f32.mrb[0].mxu0
      %3249 = vmatprep.mubr.bf16.mxu0 0
      %3250 = vmatmul.mubr.bf16.gmra.mrb[0].mxu0 %v3120
      %v3251 = vpop.f32.mrb[0].mxu0
      %v3252 = vadd.f32 0.0, %v3251
      %v3253 = vpop.f32.mrb[0].mxu0
      %v3254 = vpop.f32.mrb[0].mxu0
      %v3255 = vadd.f32 0.0, %v3254
      %v3256 = vpop.f32.mrb[0].mxu0
      %3257 = vmatprep.mubr.bf16.mxu0 0
      %3258 = vmatmul.mubr.bf16.gmra.mrb[0].mxu0 %v3123
      %v3259 = vpop.f32.mrb[0].mxu0
      %v3260 = vadd.f32 0.0, %v3259
      %v3261 = vpop.f32.mrb[0].mxu0
      %v3262 = vpop.f32.mrb[0].mxu0
      %v3263 = vadd.f32 0.0, %v3262
      %v3264 = vpop.f32.mrb[0].mxu0
      %3265 = vmatprep.mubr.bf16.mxu0 0
      %3266 = vmatmul.mubr.bf16.gmra.mrb[0].mxu0 %v3126
      %v3267 = vpop.f32.mrb[0].mxu0
      %v3268 = vadd.f32 0.0, %v3267
      %v3269 = vpop.f32.mrb[0].mxu0
      %v3270 = vpop.f32.mrb[0].mxu0
      %v3271 = vadd.f32 0.0, %v3270
      %v3272 = vpop.f32.mrb[0].mxu0
      %3273 = vmatprep.mubr.bf16.mxu0 0
      %3274 = vmatmul.mubr.bf16.gmra.mrb[0].mxu0 %v3129
      %v3275 = vpop.f32.mrb[0].mxu0
      %v3276 = vadd.f32 0.0, %v3275
      %v3277 = vpop.f32.mrb[0].mxu0
      %v3278 = vpop.f32.mrb[0].mxu0
      %v3279 = vadd.f32 0.0, %v3278
      %v3280 = vpop.f32.mrb[0].mxu0
      %3281 = vmatprep.mubr.bf16.mxu0 0
      %3282 = vmatmul.mubr.bf16.gmra.mrb[0].mxu0 %v3132
      %v3283 = vpop.f32.mrb[0].mxu0
      %v3284 = vadd.f32 0.0, %v3283
      %v3285 = vpop.f32.mrb[0].mxu0
      %v3286 = vpop.f32.mrb[0].mxu0
      %v3287 = vadd.f32 0.0, %v3286
      %v3288 = vpop.f32.mrb[0].mxu0
      %3289 = vmatprep.mubr.bf16.mxu0 0
      %3290 = vmatmul.mubr.bf16.gmra.mrb[0].mxu0 %v3135
      %v3291 = vpop.f32.mrb[0].mxu0
      %v3292 = vadd.f32 0.0, %v3291
      %v3293 = vpop.f32.mrb[0].mxu0
      %v3294 = vpop.f32.mrb[0].mxu0
      %v3295 = vadd.f32 0.0, %v3294
      %v3296 = vpop.f32.mrb[0].mxu0
      %3297 = vdwg.mxu0
      %v3298 = vld [vmem:[#allocation4] sm:$0xff]
      %v3299 = vld [vmem:[#allocation4 + $0x8] sm:$0xff]
      %v3300 = vld [vmem:[#allocation4 + $0x10] sm:$0xff]
      %v3301 = vld [vmem:[#allocation4 + $0x18] sm:$0xff]
      %v3302 = vld [vmem:[#allocation4 + $0x20] sm:$0xff]
      %v3303 = vld [vmem:[#allocation4 + $0x28] sm:$0xff]
      %v3304 = vld [vmem:[#allocation4 + $0x30] sm:$0xff]
      %v3305 = vld [vmem:[#allocation4 + $0x38] sm:$0xff]
      %v3306 = vld [vmem:[#allocation4 + $0x40] sm:$0xff]
      %v3307 = vld [vmem:[#allocation4 + $0x48] sm:$0xff]
      %v3308 = vld [vmem:[#allocation4 + $0x50] sm:$0xff]
      %v3309 = vld [vmem:[#allocation4 + $0x58] sm:$0xff]
      %v3310 = vld [vmem:[#allocation4 + $0x60] sm:$0xff]
      %v3311 = vld [vmem:[#allocation4 + $0x68] sm:$0xff]
      %v3312 = vld [vmem:[#allocation4 + $0x70] sm:$0xff]
      %v3313 = vld [vmem:[#allocation4 + $0x78] sm:$0xff]
      %v3314 = vld [vmem:[#allocation4 + $0x80] sm:$0xff]
      %v3315 = vld [vmem:[#allocation4 + $0x88] sm:$0xff]
      %v3316 = vld [vmem:[#allocation4 + $0x90] sm:$0xff]
      %v3317 = vld [vmem:[#allocation4 + $0x98] sm:$0xff]
      %v3318 = vld [vmem:[#allocation4 + $0xa0] sm:$0xff]
      %v3319 = vld [vmem:[#allocation4 + $0xa8] sm:$0xff]
      %v3320 = vld [vmem:[#allocation4 + $0xb0] sm:$0xff]
      %v3321 = vld [vmem:[#allocation4 + $0xb8] sm:$0xff]
      %v3322 = vld [vmem:[#allocation4 + $0xc0] sm:$0xff]
      %v3323 = vld [vmem:[#allocation4 + $0xc8] sm:$0xff]
      %v3324 = vld [vmem:[#allocation4 + $0xd0] sm:$0xff]
      %v3325 = vld [vmem:[#allocation4 + $0xd8] sm:$0xff]
      %v3326 = vld [vmem:[#allocation4 + $0xe0] sm:$0xff]
      %v3327 = vld [vmem:[#allocation4 + $0xe8] sm:$0xff]
      %v3328 = vld [vmem:[#allocation4 + $0xf0] sm:$0xff]
      %v3329 = vld [vmem:[#allocation4 + $0xf8] sm:$0xff]
      %v3330 = vadd.f32 %v3298, %v3172
      %v3331 = vadd.f32 %v3299, %v3175
      %v3332 = vadd.f32 %v3300, %v3180
      %v3333 = vadd.f32 %v3301, %v3183
      %v3334 = vadd.f32 %v3302, %v3188
      %v3335 = vadd.f32 %v3303, %v3191
      %v3336 = vadd.f32 %v3304, %v3196
      %v3337 = vadd.f32 %v3305, %v3199
      %v3338 = vadd.f32 %v3306, %v3204
      %v3339 = vadd.f32 %v3307, %v3207
      %v3340 = vadd.f32 %v3308, %v3212
      %v3341 = vadd.f32 %v3309, %v3215
      %v3342 = vadd.f32 %v3310, %v3220
      %v3343 = vadd.f32 %v3311, %v3223
      %v3344 = vadd.f32 %v3312, %v3228
      %v3345 = vadd.f32 %v3313, %v3231
      %v3346 = vadd.f32 %v3314, %v3236
      %v3347 = vadd.f32 %v3315, %v3239
      %v3348 = vadd.f32 %v3316, %v3244
      %v3349 = vadd.f32 %v3317, %v3247
      %v3350 = vadd.f32 %v3318, %v3252
      %v3351 = vadd.f32 %v3319, %v3255
      %v3352 = vadd.f32 %v3320, %v3260
      %v3353 = vadd.f32 %v3321, %v3263
      %v3354 = vadd.f32 %v3322, %v3268
      %v3355 = vadd.f32 %v3323, %v3271
      %v3356 = vadd.f32 %v3324, %v3276
      %v3357 = vadd.f32 %v3325, %v3279
      %v3358 = vadd.f32 %v3326, %v3284
      %v3359 = vadd.f32 %v3327, %v3287
      %v3360 = vadd.f32 %v3328, %v3292
      %v3361 = vadd.f32 %v3329, %v3295
      %3362 = vst.msk [vmem:[#allocation4] sm:$0xff] %vm825, %v3330
      %3363 = vst.msk [vmem:[#allocation4 + $0x8] sm:$0xff] %vm825, %v3331
      %3364 = vst.msk [vmem:[#allocation4 + $0x10] sm:$0xff] %vm825, %v3332
      %3365 = vst.msk [vmem:[#allocation4 + $0x18] sm:$0xff] %vm825, %v3333
      %3366 = vst.msk [vmem:[#allocation4 + $0x20] sm:$0xff] %vm825, %v3334
      %3367 = vst.msk [vmem:[#allocation4 + $0x28] sm:$0xff] %vm825, %v3335
      %3368 = vst.msk [vmem:[#allocation4 + $0x30] sm:$0xff] %vm825, %v3336
      %3369 = vst.msk [vmem:[#allocation4 + $0x38] sm:$0xff] %vm825, %v3337
      %3370 = vst.msk [vmem:[#allocation4 + $0x40] sm:$0xff] %vm825, %v3338
      %3371 = vst.msk [vmem:[#allocation4 + $0x48] sm:$0xff] %vm825, %v3339
      %3372 = vst.msk [vmem:[#allocation4 + $0x50] sm:$0xff] %vm825, %v3340
      %3373 = vst.msk [vmem:[#allocation4 + $0x58] sm:$0xff] %vm825, %v3341
      %3374 = vst.msk [vmem:[#allocation4 + $0x60] sm:$0xff] %vm825, %v3342
      %3375 = vst.msk [vmem:[#allocation4 + $0x68] sm:$0xff] %vm825, %v3343
      %3376 = vst.msk [vmem:[#allocation4 + $0x70] sm:$0xff] %vm825, %v3344
      %3377 = vst.msk [vmem:[#allocation4 + $0x78] sm:$0xff] %vm825, %v3345
      %3378 = vst.msk [vmem:[#allocation4 + $0x80] sm:$0xff] %vm825, %v3346
      %3379 = vst.msk [vmem:[#allocation4 + $0x88] sm:$0xff] %vm825, %v3347
      %3380 = vst.msk [vmem:[#allocation4 + $0x90] sm:$0xff] %vm825, %v3348
      %3381 = vst.msk [vmem:[#allocation4 + $0x98] sm:$0xff] %vm825, %v3349
      %3382 = vst.msk [vmem:[#allocation4 + $0xa0] sm:$0xff] %vm825, %v3350
      %3383 = vst.msk [vmem:[#allocation4 + $0xa8] sm:$0xff] %vm825, %v3351
      %3384 = vst.msk [vmem:[#allocation4 + $0xb0] sm:$0xff] %vm825, %v3352
      %3385 = vst.msk [vmem:[#allocation4 + $0xb8] sm:$0xff] %vm825, %v3353
      %3386 = vst.msk [vmem:[#allocation4 + $0xc0] sm:$0xff] %vm825, %v3354
      %3387 = vst.msk [vmem:[#allocation4 + $0xc8] sm:$0xff] %vm825, %v3355
      %3388 = vst.msk [vmem:[#allocation4 + $0xd0] sm:$0xff] %vm825, %v3356
      %3389 = vst.msk [vmem:[#allocation4 + $0xd8] sm:$0xff] %vm825, %v3357
      %3390 = vst.msk [vmem:[#allocation4 + $0xe0] sm:$0xff] %vm825, %v3358
      %3391 = vst.msk [vmem:[#allocation4 + $0xe8] sm:$0xff] %vm825, %v3359
      %3392 = vst.msk [vmem:[#allocation4 + $0xf0] sm:$0xff] %vm825, %v3360
      %3393 = vst.msk [vmem:[#allocation4 + $0xf8] sm:$0xff] %vm825, %v3361
      %v3394 = vld [vmem:[#allocation2 + $0x8] sm:$0xf0]
      %v3395 = vld [vmem:[#allocation2 + $0x10] sm:$0xff]
      %v3396 = vld [vmem:[#allocation2 + $0x18] sm:$0xff]
      %v3397 = vld [vmem:[#allocation2 + $0x20] sm:$0xff]
      %v3398 = vld [vmem:[#allocation2 + $0x28] sm:$0xff]
      %v3399 = vld [vmem:[#allocation2 + $0x30] sm:$0xff]
      %v3400 = vld [vmem:[#allocation2 + $0x38] sm:$0xff]
      %v3401 = vld [vmem:[#allocation2 + $0x40] sm:$0xff]
      %v3402 = vld [vmem:[#allocation2 + $0x48] sm:$0xff]
      %v3403 = vld [vmem:[#allocation2 + $0x50] sm:$0xff]
      %v3404 = vld [vmem:[#allocation2 + $0x58] sm:$0xff]
      %v3405 = vld [vmem:[#allocation2 + $0x60] sm:$0xff]
      %v3406 = vld [vmem:[#allocation2 + $0x68] sm:$0xff]
      %v3407 = vld [vmem:[#allocation2 + $0x70] sm:$0xff]
      %v3408 = vld [vmem:[#allocation2 + $0x78] sm:$0xff]
      %v3409 = vld [vmem:[#allocation2 + $0x80] sm:$0xff]
      %v3410 = vld [vmem:[#allocation2 + $0x88] sm:$0x1f]
      %s3411 = scalar_lea.vmem %s1, 80
      %v3412 = vld [vmem:[%s3411] sm:$0xf]
      %v3413 = vld [vmem:[%s3411 + $0x4] sm:$0xf]
      %v3414 = vld [vmem:[%s3411 + $0x8] sm:$0xf]
      %v3415 = vld [vmem:[%s3411 + $0xc] sm:$0xf]
      %v3417 = vshrl.u32 %v3394, 16
      %v3419 = vrot.slane %v3417, 4
      %v3420 = vshll.u32 %v3394, 16
      %v3422 = vrot.slane %v3420, 5
      %v3423 = vor.u32 %v3419, %v3422
      %v3425 = vshrl.u32 %v3395, 16
      %v3427 = vrot.slane %v3425, 4
      %v3428 = vshll.u32 %v3395, 16
      %v3430 = vrot.slane %v3428, 5
      %v3431 = vor.u32 %v3427, %v3430
      %v3432 = vsel %vm1980, %v3423, %v3431
      %v3434 = vshrl.u32 %v3396, 16
      %v3436 = vrot.slane %v3434, 4
      %v3437 = vshll.u32 %v3396, 16
      %v3439 = vrot.slane %v3437, 5
      %v3440 = vor.u32 %v3436, %v3439
      %v3441 = vsel %vm1980, %v3431, %v3440
      %v3443 = vshrl.u32 %v3397, 16
      %v3445 = vrot.slane %v3443, 4
      %v3446 = vshll.u32 %v3397, 16
      %v3448 = vrot.slane %v3446, 5
      %v3449 = vor.u32 %v3445, %v3448
      %v3450 = vsel %vm1980, %v3440, %v3449
      %v3452 = vshrl.u32 %v3398, 16
      %v3454 = vrot.slane %v3452, 4
      %v3455 = vshll.u32 %v3398, 16
      %v3457 = vrot.slane %v3455, 5
      %v3458 = vor.u32 %v3454, %v3457
      %v3459 = vsel %vm1980, %v3449, %v3458
      %v3461 = vshrl.u32 %v3399, 16
      %v3463 = vrot.slane %v3461, 4
      %v3464 = vshll.u32 %v3399, 16
      %v3466 = vrot.slane %v3464, 5
      %v3467 = vor.u32 %v3463, %v3466
      %v3468 = vsel %vm1980, %v3458, %v3467
      %v3470 = vshrl.u32 %v3400, 16
      %v3472 = vrot.slane %v3470, 4
      %v3473 = vshll.u32 %v3400, 16
      %v3475 = vrot.slane %v3473, 5
      %v3476 = vor.u32 %v3472, %v3475
      %v3477 = vsel %vm1980, %v3467, %v3476
      %v3479 = vshrl.u32 %v3401, 16
      %v3481 = vrot.slane %v3479, 4
      %v3482 = vshll.u32 %v3401, 16
      %v3484 = vrot.slane %v3482, 5
      %v3485 = vor.u32 %v3481, %v3484
      %v3486 = vsel %vm1980, %v3476, %v3485
      %v3488 = vshrl.u32 %v3402, 16
      %v3490 = vrot.slane %v3488, 4
      %v3491 = vshll.u32 %v3402, 16
      %v3493 = vrot.slane %v3491, 5
      %v3494 = vor.u32 %v3490, %v3493
      %v3495 = vsel %vm1980, %v3485, %v3494
      %v3497 = vshrl.u32 %v3403, 16
      %v3499 = vrot.slane %v3497, 4
      %v3500 = vshll.u32 %v3403, 16
      %v3502 = vrot.slane %v3500, 5
      %v3503 = vor.u32 %v3499, %v3502
      %v3504 = vsel %vm1980, %v3494, %v3503
      %v3506 = vshrl.u32 %v3404, 16
      %v3508 = vrot.slane %v3506, 4
      %v3509 = vshll.u32 %v3404, 16
      %v3511 = vrot.slane %v3509, 5
      %v3512 = vor.u32 %v3508, %v3511
      %v3513 = vsel %vm1980, %v3503, %v3512
      %v3515 = vshrl.u32 %v3405, 16
      %v3517 = vrot.slane %v3515, 4
      %v3518 = vshll.u32 %v3405, 16
      %v3520 = vrot.slane %v3518, 5
      %v3521 = vor.u32 %v3517, %v3520
      %v3522 = vsel %vm1980, %v3512, %v3521
      %v3524 = vshrl.u32 %v3406, 16
      %v3526 = vrot.slane %v3524, 4
      %v3527 = vshll.u32 %v3406, 16
      %v3529 = vrot.slane %v3527, 5
      %v3530 = vor.u32 %v3526, %v3529
      %v3531 = vsel %vm1980, %v3521, %v3530
      %v3533 = vshrl.u32 %v3407, 16
      %v3535 = vrot.slane %v3533, 4
      %v3536 = vshll.u32 %v3407, 16
      %v3538 = vrot.slane %v3536, 5
      %v3539 = vor.u32 %v3535, %v3538
      %v3540 = vsel %vm1980, %v3530, %v3539
      %v3542 = vshrl.u32 %v3408, 16
      %v3544 = vrot.slane %v3542, 4
      %v3545 = vshll.u32 %v3408, 16
      %v3547 = vrot.slane %v3545, 5
      %v3548 = vor.u32 %v3544, %v3547
      %v3549 = vsel %vm1980, %v3539, %v3548
      %v3551 = vshrl.u32 %v3409, 16
      %v3553 = vrot.slane %v3551, 4
      %v3554 = vshll.u32 %v3409, 16
      %v3556 = vrot.slane %v3554, 5
      %v3557 = vor.u32 %v3553, %v3556
      %v3558 = vsel %vm1980, %v3548, %v3557
      %v3560 = vshrl.u32 %v3410, 16
      %v3562 = vrot.slane %v3560, 4
      %v3563 = vshll.u32 %v3410, 16
      %v3565 = vrot.slane %v3563, 5
      %v3566 = vor.u32 %v3562, %v3565
      %v3567 = vsel %vm1980, %v3557, %v3566
      %v3572 = vunpack.c.l.b16 %v3412
      %v3573 = vunpack.c.l.b16 %v3413
      %v3574 = vunpack.c.l.b16 %v3414
      %v3575 = vunpack.c.l.b16 %v3415
      %v3576 = vpack.c.b16 %v3573, %v3572
      %v3577 = vpack.c.b16 %v3575, %v3574
      %v3581 = vsel %vm825, %v3432, 0
      %v3584 = vsel %vm825, %v3441, 0
      %v3587 = vsel %vm825, %v3450, 0
      %v3590 = vsel %vm825, %v3459, 0
      %v3593 = vsel %vm825, %v3468, 0
      %v3596 = vsel %vm825, %v3477, 0
      %v3599 = vsel %vm825, %v3486, 0
      %v3602 = vsel %vm825, %v3495, 0
      %v3605 = vsel %vm825, %v3504, 0
      %v3608 = vsel %vm825, %v3513, 0
      %v3611 = vsel %vm825, %v3522, 0
      %v3614 = vsel %vm825, %v3531, 0
      %v3617 = vsel %vm825, %v3540, 0
      %v3620 = vsel %vm825, %v3549, 0
      %v3623 = vsel %vm825, %v3558, 0
      %v3626 = vsel %vm825, %v3567, 0
      %3628 = vmatprep.subr.bf16.mxu0 0
      %3629 = vmatpush1.bf16.msra.mxu0 %v3576
      %3630 = vmatprep.subr.bf16.mxu0 0
      %3631 = vmatpush1.bf16.msra.mxu0 %v3577
      %3632 = vmatprep.subr.bf16.mxu0 0
      %3633 = vmatpush1.bf16.msra.mxu0 0
      %3634 = vmatprep.subr.bf16.mxu0 0
      %3635 = vmatpush1.bf16.msra.mxu0 0
      %3636 = vmatprep.subr.bf16.mxu0 0
      %3637 = vmatpush1.bf16.msra.mxu0 0
      %3638 = vmatprep.subr.bf16.mxu0 0
      %3639 = vmatpush1.bf16.msra.mxu0 0
      %3640 = vmatprep.subr.bf16.mxu0 0
      %3641 = vmatpush1.bf16.msra.mxu0 0
      %3642 = vmatprep.subr.bf16.mxu0 0
      %3643 = vmatpush1.bf16.msra.mxu0 0
      %3644 = vmatprep.subr.bf16.mxu0 0
      %3645 = vmatpush1.bf16.msra.mxu0 0
      %3646 = vmatprep.subr.bf16.mxu0 0
      %3647 = vmatpush1.bf16.msra.mxu0 0
      %3648 = vmatprep.subr.bf16.mxu0 0
      %3649 = vmatpush1.bf16.msra.mxu0 0
      %3650 = vmatprep.subr.bf16.mxu0 0
      %3651 = vmatpush1.bf16.msra.mxu0 0
      %3652 = vmatprep.subr.bf16.mxu0 0
      %3653 = vmatpush1.bf16.msra.mxu0 0
      %3654 = vmatprep.subr.bf16.mxu0 0
      %3655 = vmatpush1.bf16.msra.mxu0 0
      %3656 = vmatprep.subr.bf16.mxu0 0
      %3657 = vmatpush1.bf16.msra.mxu0 0
      %3658 = vmatprep.subr.bf16.mxu0 0
      %3659 = vmatpush1.bf16.msra.mxu0 0
      %3660 = vmatprep.mubr.bf16.mxu0 0
      %3661 = vmatmul.mubr.bf16.gmra.mrb[0].mxu0 %v3581
      %v3662 = vpop.f32.mrb[0].mxu0
      %v3663 = vadd.f32 0.0, %v3662
      %v3664 = vpop.f32.mrb[0].mxu0
      %v3665 = vpop.f32.mrb[0].mxu0
      %v3666 = vadd.f32 0.0, %v3665
      %v3667 = vpop.f32.mrb[0].mxu0
      %3668 = vmatprep.mubr.bf16.mxu0 0
      %3669 = vmatmul.mubr.bf16.gmra.mrb[0].mxu0 %v3584
      %v3670 = vpop.f32.mrb[0].mxu0
      %v3671 = vadd.f32 0.0, %v3670
      %v3672 = vpop.f32.mrb[0].mxu0
      %v3673 = vpop.f32.mrb[0].mxu0
      %v3674 = vadd.f32 0.0, %v3673
      %v3675 = vpop.f32.mrb[0].mxu0
      %3676 = vmatprep.mubr.bf16.mxu0 0
      %3677 = vmatmul.mubr.bf16.gmra.mrb[0].mxu0 %v3587
      %v3678 = vpop.f32.mrb[0].mxu0
      %v3679 = vadd.f32 0.0, %v3678
      %v3680 = vpop.f32.mrb[0].mxu0
      %v3681 = vpop.f32.mrb[0].mxu0
      %v3682 = vadd.f32 0.0, %v3681
      %v3683 = vpop.f32.mrb[0].mxu0
      %3684 = vmatprep.mubr.bf16.mxu0 0
      %3685 = vmatmul.mubr.bf16.gmra.mrb[0].mxu0 %v3590
      %v3686 = vpop.f32.mrb[0].mxu0
      %v3687 = vadd.f32 0.0, %v3686
      %v3688 = vpop.f32.mrb[0].mxu0
      %v3689 = vpop.f32.mrb[0].mxu0
      %v3690 = vadd.f32 0.0, %v3689
      %v3691 = vpop.f32.mrb[0].mxu0
      %3692 = vmatprep.mubr.bf16.mxu0 0
      %3693 = vmatmul.mubr.bf16.gmra.mrb[0].mxu0 %v3593
      %v3694 = vpop.f32.mrb[0].mxu0
      %v3695 = vadd.f32 0.0, %v3694
      %v3696 = vpop.f32.mrb[0].mxu0
      %v3697 = vpop.f32.mrb[0].mxu0
      %v3698 = vadd.f32 0.0, %v3697
      %v3699 = vpop.f32.mrb[0].mxu0
      %3700 = vmatprep.mubr.bf16.mxu0 0
      %3701 = vmatmul.mubr.bf16.gmra.mrb[0].mxu0 %v3596
      %v3702 = vpop.f32.mrb[0].mxu0
      %v3703 = vadd.f32 0.0, %v3702
      %v3704 = vpop.f32.mrb[0].mxu0
      %v3705 = vpop.f32.mrb[0].mxu0
      %v3706 = vadd.f32 0.0, %v3705
      %v3707 = vpop.f32.mrb[0].mxu0
      %3708 = vmatprep.mubr.bf16.mxu0 0
      %3709 = vmatmul.mubr.bf16.gmra.mrb[0].mxu0 %v3599
      %v3710 = vpop.f32.mrb[0].mxu0
      %v3711 = vadd.f32 0.0, %v3710
      %v3712 = vpop.f32.mrb[0].mxu0
      %v3713 = vpop.f32.mrb[0].mxu0
      %v3714 = vadd.f32 0.0, %v3713
      %v3715 = vpop.f32.mrb[0].mxu0
      %3716 = vmatprep.mubr.bf16.mxu0 0
      %3717 = vmatmul.mubr.bf16.gmra.mrb[0].mxu0 %v3602
      %v3718 = vpop.f32.mrb[0].mxu0
      %v3719 = vadd.f32 0.0, %v3718
      %v3720 = vpop.f32.mrb[0].mxu0
      %v3721 = vpop.f32.mrb[0].mxu0
      %v3722 = vadd.f32 0.0, %v3721
      %v3723 = vpop.f32.mrb[0].mxu0
      %3724 = vmatprep.mubr.bf16.mxu0 0
      %3725 = vmatmul.mubr.bf16.gmra.mrb[0].mxu0 %v3605
      %v3726 = vpop.f32.mrb[0].mxu0
      %v3727 = vadd.f32 0.0, %v3726
      %v3728 = vpop.f32.mrb[0].mxu0
      %v3729 = vpop.f32.mrb[0].mxu0
      %v3730 = vadd.f32 0.0, %v3729
      %v3731 = vpop.f32.mrb[0].mxu0
      %3732 = vmatprep.mubr.bf16.mxu0 0
      %3733 = vmatmul.mubr.bf16.gmra.mrb[0].mxu0 %v3608
      %v3734 = vpop.f32.mrb[0].mxu0
      %v3735 = vadd.f32 0.0, %v3734
      %v3736 = vpop.f32.mrb[0].mxu0
      %v3737 = vpop.f32.mrb[0].mxu0
      %v3738 = vadd.f32 0.0, %v3737
      %v3739 = vpop.f32.mrb[0].mxu0
      %3740 = vmatprep.mubr.bf16.mxu0 0
      %3741 = vmatmul.mubr.bf16.gmra.mrb[0].mxu0 %v3611
      %v3742 = vpop.f32.mrb[0].mxu0
      %v3743 = vadd.f32 0.0, %v3742
      %v3744 = vpop.f32.mrb[0].mxu0
      %v3745 = vpop.f32.mrb[0].mxu0
      %v3746 = vadd.f32 0.0, %v3745
      %v3747 = vpop.f32.mrb[0].mxu0
      %3748 = vmatprep.mubr.bf16.mxu0 0
      %3749 = vmatmul.mubr.bf16.gmra.mrb[0].mxu0 %v3614
      %v3750 = vpop.f32.mrb[0].mxu0
      %v3751 = vadd.f32 0.0, %v3750
      %v3752 = vpop.f32.mrb[0].mxu0
      %v3753 = vpop.f32.mrb[0].mxu0
      %v3754 = vadd.f32 0.0, %v3753
      %v3755 = vpop.f32.mrb[0].mxu0
      %3756 = vmatprep.mubr.bf16.mxu0 0
      %3757 = vmatmul.mubr.bf16.gmra.mrb[0].mxu0 %v3617
      %v3758 = vpop.f32.mrb[0].mxu0
      %v3759 = vadd.f32 0.0, %v3758
      %v3760 = vpop.f32.mrb[0].mxu0
      %v3761 = vpop.f32.mrb[0].mxu0
      %v3762 = vadd.f32 0.0, %v3761
      %v3763 = vpop.f32.mrb[0].mxu0
      %3764 = vmatprep.mubr.bf16.mxu0 0
      %3765 = vmatmul.mubr.bf16.gmra.mrb[0].mxu0 %v3620
      %v3766 = vpop.f32.mrb[0].mxu0
      %v3767 = vadd.f32 0.0, %v3766
      %v3768 = vpop.f32.mrb[0].mxu0
      %v3769 = vpop.f32.mrb[0].mxu0
      %v3770 = vadd.f32 0.0, %v3769
      %v3771 = vpop.f32.mrb[0].mxu0
      %3772 = vmatprep.mubr.bf16.mxu0 0
      %3773 = vmatmul.mubr.bf16.gmra.mrb[0].mxu0 %v3623
      %v3774 = vpop.f32.mrb[0].mxu0
      %v3775 = vadd.f32 0.0, %v3774
      %v3776 = vpop.f32.mrb[0].mxu0
      %v3777 = vpop.f32.mrb[0].mxu0
      %v3778 = vadd.f32 0.0, %v3777
      %v3779 = vpop.f32.mrb[0].mxu0
      %3780 = vmatprep.mubr.bf16.mxu0 0
      %3781 = vmatmul.mubr.bf16.gmra.mrb[0].mxu0 %v3626
      %v3782 = vpop.f32.mrb[0].mxu0
      %v3783 = vadd.f32 0.0, %v3782
      %v3784 = vpop.f32.mrb[0].mxu0
      %v3785 = vpop.f32.mrb[0].mxu0
      %v3786 = vadd.f32 0.0, %v3785
      %v3787 = vpop.f32.mrb[0].mxu0
      %3788 = vdwg.mxu0
      %v3789 = vmul.f32 %v3663, %v793
      %v3790 = vmul.f32 %v3666, %v794
      %v3791 = vmul.f32 %v3671, %v795
      %v3792 = vmul.f32 %v3674, %v796
      %v3793 = vmul.f32 %v3679, %v797
      %v3794 = vmul.f32 %v3682, %v798
      %v3795 = vmul.f32 %v3687, %v799
      %v3796 = vmul.f32 %v3690, %v800
      %v3797 = vmul.f32 %v3695, %v801
      %v3798 = vmul.f32 %v3698, %v802
      %v3799 = vmul.f32 %v3703, %v803
      %v3800 = vmul.f32 %v3706, %v804
      %v3801 = vmul.f32 %v3711, %v805
      %v3802 = vmul.f32 %v3714, %v806
      %v3803 = vmul.f32 %v3719, %v807
      %v3804 = vmul.f32 %v3722, %v808
      %v3805 = vmul.f32 %v3727, %v809
      %v3806 = vmul.f32 %v3730, %v810
      %v3807 = vmul.f32 %v3735, %v811
      %v3808 = vmul.f32 %v3738, %v812
      %v3809 = vmul.f32 %v3743, %v813
      %v3810 = vmul.f32 %v3746, %v814
      %v3811 = vmul.f32 %v3751, %v815
      %v3812 = vmul.f32 %v3754, %v816
      %v3813 = vmul.f32 %v3759, %v817
      %v3814 = vmul.f32 %v3762, %v818
      %v3815 = vmul.f32 %v3767, %v819
      %v3816 = vmul.f32 %v3770, %v820
      %v3817 = vmul.f32 %v3775, %v821
      %v3818 = vmul.f32 %v3778, %v822
      %v3819 = vmul.f32 %v3783, %v823
      %v3820 = vmul.f32 %v3786, %v824
      %v3821 = vld [vmem:[#allocation4] sm:$0xff]
      %v3822 = vld [vmem:[#allocation4 + $0x8] sm:$0xff]
      %v3823 = vld [vmem:[#allocation4 + $0x10] sm:$0xff]
      %v3824 = vld [vmem:[#allocation4 + $0x18] sm:$0xff]
      %v3825 = vld [vmem:[#allocation4 + $0x20] sm:$0xff]
      %v3826 = vld [vmem:[#allocation4 + $0x28] sm:$0xff]
      %v3827 = vld [vmem:[#allocation4 + $0x30] sm:$0xff]
      %v3828 = vld [vmem:[#allocation4 + $0x38] sm:$0xff]
      %v3829 = vld [vmem:[#allocation4 + $0x40] sm:$0xff]
      %v3830 = vld [vmem:[#allocation4 + $0x48] sm:$0xff]
      %v3831 = vld [vmem:[#allocation4 + $0x50] sm:$0xff]
      %v3832 = vld [vmem:[#allocation4 + $0x58] sm:$0xff]
      %v3833 = vld [vmem:[#allocation4 + $0x60] sm:$0xff]
      %v3834 = vld [vmem:[#allocation4 + $0x68] sm:$0xff]
      %v3835 = vld [vmem:[#allocation4 + $0x70] sm:$0xff]
      %v3836 = vld [vmem:[#allocation4 + $0x78] sm:$0xff]
      %v3837 = vld [vmem:[#allocation4 + $0x80] sm:$0xff]
      %v3838 = vld [vmem:[#allocation4 + $0x88] sm:$0xff]
      %v3839 = vld [vmem:[#allocation4 + $0x90] sm:$0xff]
      %v3840 = vld [vmem:[#allocation4 + $0x98] sm:$0xff]
      %v3841 = vld [vmem:[#allocation4 + $0xa0] sm:$0xff]
      %v3842 = vld [vmem:[#allocation4 + $0xa8] sm:$0xff]
      %v3843 = vld [vmem:[#allocation4 + $0xb0] sm:$0xff]
      %v3844 = vld [vmem:[#allocation4 + $0xb8] sm:$0xff]
      %v3845 = vld [vmem:[#allocation4 + $0xc0] sm:$0xff]
      %v3846 = vld [vmem:[#allocation4 + $0xc8] sm:$0xff]
      %v3847 = vld [vmem:[#allocation4 + $0xd0] sm:$0xff]
      %v3848 = vld [vmem:[#allocation4 + $0xd8] sm:$0xff]
      %v3849 = vld [vmem:[#allocation4 + $0xe0] sm:$0xff]
      %v3850 = vld [vmem:[#allocation4 + $0xe8] sm:$0xff]
      %v3851 = vld [vmem:[#allocation4 + $0xf0] sm:$0xff]
      %v3852 = vld [vmem:[#allocation4 + $0xf8] sm:$0xff]
      %v3853 = vadd.f32 %v3821, %v3789
      %v3854 = vadd.f32 %v3822, %v3790
      %v3855 = vadd.f32 %v3823, %v3791
      %v3856 = vadd.f32 %v3824, %v3792
      %v3857 = vadd.f32 %v3825, %v3793
      %v3858 = vadd.f32 %v3826, %v3794
      %v3859 = vadd.f32 %v3827, %v3795
      %v3860 = vadd.f32 %v3828, %v3796
      %v3861 = vadd.f32 %v3829, %v3797
      %v3862 = vadd.f32 %v3830, %v3798
      %v3863 = vadd.f32 %v3831, %v3799
      %v3864 = vadd.f32 %v3832, %v3800
      %v3865 = vadd.f32 %v3833, %v3801
      %v3866 = vadd.f32 %v3834, %v3802
      %v3867 = vadd.f32 %v3835, %v3803
      %v3868 = vadd.f32 %v3836, %v3804
      %v3869 = vadd.f32 %v3837, %v3805
      %v3870 = vadd.f32 %v3838, %v3806
      %v3871 = vadd.f32 %v3839, %v3807
      %v3872 = vadd.f32 %v3840, %v3808
      %v3873 = vadd.f32 %v3841, %v3809
      %v3874 = vadd.f32 %v3842, %v3810
      %v3875 = vadd.f32 %v3843, %v3811
      %v3876 = vadd.f32 %v3844, %v3812
      %v3877 = vadd.f32 %v3845, %v3813
      %v3878 = vadd.f32 %v3846, %v3814
      %v3879 = vadd.f32 %v3847, %v3815
      %v3880 = vadd.f32 %v3848, %v3816
      %v3881 = vadd.f32 %v3849, %v3817
      %v3882 = vadd.f32 %v3850, %v3818
      %v3883 = vadd.f32 %v3851, %v3819
      %v3884 = vadd.f32 %v3852, %v3820
      %3885 = vst.msk [vmem:[#allocation4] sm:$0xff] %vm825, %v3853
      %3886 = vst.msk [vmem:[#allocation4 + $0x8] sm:$0xff] %vm825, %v3854
      %3887 = vst.msk [vmem:[#allocation4 + $0x10] sm:$0xff] %vm825, %v3855
      %3888 = vst.msk [vmem:[#allocation4 + $0x18] sm:$0xff] %vm825, %v3856
      %3889 = vst.msk [vmem:[#allocation4 + $0x20] sm:$0xff] %vm825, %v3857
      %3890 = vst.msk [vmem:[#allocation4 + $0x28] sm:$0xff] %vm825, %v3858
      %3891 = vst.msk [vmem:[#allocation4 + $0x30] sm:$0xff] %vm825, %v3859
      %3892 = vst.msk [vmem:[#allocation4 + $0x38] sm:$0xff] %vm825, %v3860
      %3893 = vst.msk [vmem:[#allocation4 + $0x40] sm:$0xff] %vm825, %v3861
      %3894 = vst.msk [vmem:[#allocation4 + $0x48] sm:$0xff] %vm825, %v3862
      %3895 = vst.msk [vmem:[#allocation4 + $0x50] sm:$0xff] %vm825, %v3863
      %3896 = vst.msk [vmem:[#allocation4 + $0x58] sm:$0xff] %vm825, %v3864
      %3897 = vst.msk [vmem:[#allocation4 + $0x60] sm:$0xff] %vm825, %v3865
      %3898 = vst.msk [vmem:[#allocation4 + $0x68] sm:$0xff] %vm825, %v3866
      %3899 = vst.msk [vmem:[#allocation4 + $0x70] sm:$0xff] %vm825, %v3867
      %3900 = vst.msk [vmem:[#allocation4 + $0x78] sm:$0xff] %vm825, %v3868
      %3901 = vst.msk [vmem:[#allocation4 + $0x80] sm:$0xff] %vm825, %v3869
      %3902 = vst.msk [vmem:[#allocation4 + $0x88] sm:$0xff] %vm825, %v3870
      %3903 = vst.msk [vmem:[#allocation4 + $0x90] sm:$0xff] %vm825, %v3871
      %3904 = vst.msk [vmem:[#allocation4 + $0x98] sm:$0xff] %vm825, %v3872
      %3905 = vst.msk [vmem:[#allocation4 + $0xa0] sm:$0xff] %vm825, %v3873
      %3906 = vst.msk [vmem:[#allocation4 + $0xa8] sm:$0xff] %vm825, %v3874
      %3907 = vst.msk [vmem:[#allocation4 + $0xb0] sm:$0xff] %vm825, %v3875
      %3908 = vst.msk [vmem:[#allocation4 + $0xb8] sm:$0xff] %vm825, %v3876
      %3909 = vst.msk [vmem:[#allocation4 + $0xc0] sm:$0xff] %vm825, %v3877
      %3910 = vst.msk [vmem:[#allocation4 + $0xc8] sm:$0xff] %vm825, %v3878
      %3911 = vst.msk [vmem:[#allocation4 + $0xd0] sm:$0xff] %vm825, %v3879
      %3912 = vst.msk [vmem:[#allocation4 + $0xd8] sm:$0xff] %vm825, %v3880
      %3913 = vst.msk [vmem:[#allocation4 + $0xe0] sm:$0xff] %vm825, %v3881
      %3914 = vst.msk [vmem:[#allocation4 + $0xe8] sm:$0xff] %vm825, %v3882
      %3915 = vst.msk [vmem:[#allocation4 + $0xf0] sm:$0xff] %vm825, %v3883
      %3916 = vst.msk [vmem:[#allocation4 + $0xf8] sm:$0xff] %vm825, %v3884
      %v3917 = vld [vmem:[#allocation2 + $0x10] sm:$0xf8]
      %v3918 = vld [vmem:[#allocation2 + $0x18] sm:$0xff]
      %v3919 = vld [vmem:[#allocation2 + $0x20] sm:$0xff]
      %v3920 = vld [vmem:[#allocation2 + $0x28] sm:$0xff]
      %v3921 = vld [vmem:[#allocation2 + $0x30] sm:$0xff]
      %v3922 = vld [vmem:[#allocation2 + $0x38] sm:$0xff]
      %v3923 = vld [vmem:[#allocation2 + $0x40] sm:$0xff]
      %v3924 = vld [vmem:[#allocation2 + $0x48] sm:$0xff]
      %v3925 = vld [vmem:[#allocation2 + $0x50] sm:$0xff]
      %v3926 = vld [vmem:[#allocation2 + $0x58] sm:$0xff]
      %v3927 = vld [vmem:[#allocation2 + $0x60] sm:$0xff]
      %v3928 = vld [vmem:[#allocation2 + $0x68] sm:$0xff]
      %v3929 = vld [vmem:[#allocation2 + $0x70] sm:$0xff]
      %v3930 = vld [vmem:[#allocation2 + $0x78] sm:$0xff]
      %v3931 = vld [vmem:[#allocation2 + $0x80] sm:$0xff]
      %v3932 = vld [vmem:[#allocation2 + $0x88] sm:$0xff]
      %v3933 = vld [vmem:[#allocation2 + $0x90] sm:$0xf]
      %s3934 = scalar_lea.vmem %s1, 96
      %v3935 = vld [vmem:[%s3934] sm:$0xf]
      %v3936 = vld [vmem:[%s3934 + $0x4] sm:$0xf]
      %v3937 = vld [vmem:[%s3934 + $0x8] sm:$0xf]
      %v3938 = vld [vmem:[%s3934 + $0xc] sm:$0xf]
      %v3940 = vshrl.u32 %v3917, 16
      %v3942 = vrot.slane %v3940, 3
      %v3943 = vshll.u32 %v3917, 16
      %v3945 = vrot.slane %v3943, 4
      %v3946 = vor.u32 %v3942, %v3945
      %v3948 = vshrl.u32 %v3918, 16
      %v3950 = vrot.slane %v3948, 3
      %v3951 = vshll.u32 %v3918, 16
      %v3953 = vrot.slane %v3951, 4
      %v3954 = vor.u32 %v3950, %v3953
      %v3955 = vsel %vm1066, %v3946, %v3954
      %v3957 = vshrl.u32 %v3919, 16
      %v3959 = vrot.slane %v3957, 3
      %v3960 = vshll.u32 %v3919, 16
      %v3962 = vrot.slane %v3960, 4
      %v3963 = vor.u32 %v3959, %v3962
      %v3964 = vsel %vm1066, %v3954, %v3963
      %v3966 = vshrl.u32 %v3920, 16
      %v3968 = vrot.slane %v3966, 3
      %v3969 = vshll.u32 %v3920, 16
      %v3971 = vrot.slane %v3969, 4
      %v3972 = vor.u32 %v3968, %v3971
      %v3973 = vsel %vm1066, %v3963, %v3972
      %v3975 = vshrl.u32 %v3921, 16
      %v3977 = vrot.slane %v3975, 3
      %v3978 = vshll.u32 %v3921, 16
      %v3980 = vrot.slane %v3978, 4
      %v3981 = vor.u32 %v3977, %v3980
      %v3982 = vsel %vm1066, %v3972, %v3981
      %v3984 = vshrl.u32 %v3922, 16
      %v3986 = vrot.slane %v3984, 3
      %v3987 = vshll.u32 %v3922, 16
      %v3989 = vrot.slane %v3987, 4
      %v3990 = vor.u32 %v3986, %v3989
      %v3991 = vsel %vm1066, %v3981, %v3990
      %v3993 = vshrl.u32 %v3923, 16
      %v3995 = vrot.slane %v3993, 3
      %v3996 = vshll.u32 %v3923, 16
      %v3998 = vrot.slane %v3996, 4
      %v3999 = vor.u32 %v3995, %v3998
      %v4000 = vsel %vm1066, %v3990, %v3999
      %v4002 = vshrl.u32 %v3924, 16
      %v4004 = vrot.slane %v4002, 3
      %v4005 = vshll.u32 %v3924, 16
      %v4007 = vrot.slane %v4005, 4
      %v4008 = vor.u32 %v4004, %v4007
      %v4009 = vsel %vm1066, %v3999, %v4008
      %v4011 = vshrl.u32 %v3925, 16
      %v4013 = vrot.slane %v4011, 3
      %v4014 = vshll.u32 %v3925, 16
      %v4016 = vrot.slane %v4014, 4
      %v4017 = vor.u32 %v4013, %v4016
      %v4018 = vsel %vm1066, %v4008, %v4017
      %v4020 = vshrl.u32 %v3926, 16
      %v4022 = vrot.slane %v4020, 3
      %v4023 = vshll.u32 %v3926, 16
      %v4025 = vrot.slane %v4023, 4
      %v4026 = vor.u32 %v4022, %v4025
      %v4027 = vsel %vm1066, %v4017, %v4026
      %v4029 = vshrl.u32 %v3927, 16
      %v4031 = vrot.slane %v4029, 3
      %v4032 = vshll.u32 %v3927, 16
      %v4034 = vrot.slane %v4032, 4
      %v4035 = vor.u32 %v4031, %v4034
      %v4036 = vsel %vm1066, %v4026, %v4035
      %v4038 = vshrl.u32 %v3928, 16
      %v4040 = vrot.slane %v4038, 3
      %v4041 = vshll.u32 %v3928, 16
      %v4043 = vrot.slane %v4041, 4
      %v4044 = vor.u32 %v4040, %v4043
      %v4045 = vsel %vm1066, %v4035, %v4044
      %v4047 = vshrl.u32 %v3929, 16
      %v4049 = vrot.slane %v4047, 3
      %v4050 = vshll.u32 %v3929, 16
      %v4052 = vrot.slane %v4050, 4
      %v4053 = vor.u32 %v4049, %v4052
      %v4054 = vsel %vm1066, %v4044, %v4053
      %v4056 = vshrl.u32 %v3930, 16
      %v4058 = vrot.slane %v4056, 3
      %v4059 = vshll.u32 %v3930, 16
      %v4061 = vrot.slane %v4059, 4
      %v4062 = vor.u32 %v4058, %v4061
      %v4063 = vsel %vm1066, %v4053, %v4062
      %v4065 = vshrl.u32 %v3931, 16
      %v4067 = vrot.slane %v4065, 3
      %v4068 = vshll.u32 %v3931, 16
      %v4070 = vrot.slane %v4068, 4
      %v4071 = vor.u32 %v4067, %v4070
      %v4072 = vsel %vm1066, %v4062, %v4071
      %v4074 = vshrl.u32 %v3932, 16
      %v4076 = vrot.slane %v4074, 3
      %v4077 = vshll.u32 %v3932, 16
      %v4079 = vrot.slane %v4077, 4
      %v4080 = vor.u32 %v4076, %v4079
      %v4081 = vsel %vm1066, %v4071, %v4080
      %v4083 = vshrl.u32 %v3933, 16
      %v4085 = vrot.slane %v4083, 3
      %v4086 = vshll.u32 %v3933, 16
      %v4088 = vrot.slane %v4086, 4
      %v4089 = vor.u32 %v4085, %v4088
      %v4090 = vsel %vm1066, %v4080, %v4089
      %v4095 = vunpack.c.l.b16 %v3935
      %v4096 = vunpack.c.l.b16 %v3936
      %v4097 = vunpack.c.l.b16 %v3937
      %v4098 = vunpack.c.l.b16 %v3938
      %v4099 = vpack.c.b16 %v4096, %v4095
      %v4100 = vpack.c.b16 %v4098, %v4097
      %v4104 = vsel %vm825, %v3955, 0
      %v4107 = vsel %vm825, %v3964, 0
      %v4110 = vsel %vm825, %v3973, 0
      %v4113 = vsel %vm825, %v3982, 0
      %v4116 = vsel %vm825, %v3991, 0
      %v4119 = vsel %vm825, %v4000, 0
      %v4122 = vsel %vm825, %v4009, 0
      %v4125 = vsel %vm825, %v4018, 0
      %v4128 = vsel %vm825, %v4027, 0
      %v4131 = vsel %vm825, %v4036, 0
      %v4134 = vsel %vm825, %v4045, 0
      %v4137 = vsel %vm825, %v4054, 0
      %v4140 = vsel %vm825, %v4063, 0
      %v4143 = vsel %vm825, %v4072, 0
      %v4146 = vsel %vm825, %v4081, 0
      %v4149 = vsel %vm825, %v4090, 0
      %4151 = vmatprep.subr.bf16.mxu0 0
      %4152 = vmatpush1.bf16.msra.mxu0 %v4099
      %4153 = vmatprep.subr.bf16.mxu0 0
      %4154 = vmatpush1.bf16.msra.mxu0 %v4100
      %4155 = vmatprep.subr.bf16.mxu0 0
      %4156 = vmatpush1.bf16.msra.mxu0 0
      %4157 = vmatprep.subr.bf16.mxu0 0
      %4158 = vmatpush1.bf16.msra.mxu0 0
      %4159 = vmatprep.subr.bf16.mxu0 0
      %4160 = vmatpush1.bf16.msra.mxu0 0
      %4161 = vmatprep.subr.bf16.mxu0 0
      %4162 = vmatpush1.bf16.msra.mxu0 0
      %4163 = vmatprep.subr.bf16.mxu0 0
      %4164 = vmatpush1.bf16.msra.mxu0 0
      %4165 = vmatprep.subr.bf16.mxu0 0
      %4166 = vmatpush1.bf16.msra.mxu0 0
      %4167 = vmatprep.subr.bf16.mxu0 0
      %4168 = vmatpush1.bf16.msra.mxu0 0
      %4169 = vmatprep.subr.bf16.mxu0 0
      %4170 = vmatpush1.bf16.msra.mxu0 0
      %4171 = vmatprep.subr.bf16.mxu0 0
      %4172 = vmatpush1.bf16.msra.mxu0 0
      %4173 = vmatprep.subr.bf16.mxu0 0
      %4174 = vmatpush1.bf16.msra.mxu0 0
      %4175 = vmatprep.subr.bf16.mxu0 0
      %4176 = vmatpush1.bf16.msra.mxu0 0
      %4177 = vmatprep.subr.bf16.mxu0 0
      %4178 = vmatpush1.bf16.msra.mxu0 0
      %4179 = vmatprep.subr.bf16.mxu0 0
      %4180 = vmatpush1.bf16.msra.mxu0 0
      %4181 = vmatprep.subr.bf16.mxu0 0
      %4182 = vmatpush1.bf16.msra.mxu0 0
      %4183 = vmatprep.mubr.bf16.mxu0 0
      %4184 = vmatmul.mubr.bf16.gmra.mrb[0].mxu0 %v4104
      %v4185 = vpop.f32.mrb[0].mxu0
      %v4186 = vadd.f32 0.0, %v4185
      %v4187 = vpop.f32.mrb[0].mxu0
      %v4188 = vpop.f32.mrb[0].mxu0
      %v4189 = vadd.f32 0.0, %v4188
      %v4190 = vpop.f32.mrb[0].mxu0
      %4191 = vmatprep.mubr.bf16.mxu0 0
      %4192 = vmatmul.mubr.bf16.gmra.mrb[0].mxu0 %v4107
      %v4193 = vpop.f32.mrb[0].mxu0
      %v4194 = vadd.f32 0.0, %v4193
      %v4195 = vpop.f32.mrb[0].mxu0
      %v4196 = vpop.f32.mrb[0].mxu0
      %v4197 = vadd.f32 0.0, %v4196
      %v4198 = vpop.f32.mrb[0].mxu0
      %4199 = vmatprep.mubr.bf16.mxu0 0
      %4200 = vmatmul.mubr.bf16.gmra.mrb[0].mxu0 %v4110
      %v4201 = vpop.f32.mrb[0].mxu0
      %v4202 = vadd.f32 0.0, %v4201
      %v4203 = vpop.f32.mrb[0].mxu0
      %v4204 = vpop.f32.mrb[0].mxu0
      %v4205 = vadd.f32 0.0, %v4204
      %v4206 = vpop.f32.mrb[0].mxu0
      %4207 = vmatprep.mubr.bf16.mxu0 0
      %4208 = vmatmul.mubr.bf16.gmra.mrb[0].mxu0 %v4113
      %v4209 = vpop.f32.mrb[0].mxu0
      %v4210 = vadd.f32 0.0, %v4209
      %v4211 = vpop.f32.mrb[0].mxu0
      %v4212 = vpop.f32.mrb[0].mxu0
      %v4213 = vadd.f32 0.0, %v4212
      %v4214 = vpop.f32.mrb[0].mxu0
      %4215 = vmatprep.mubr.bf16.mxu0 0
      %4216 = vmatmul.mubr.bf16.gmra.mrb[0].mxu0 %v4116
      %v4217 = vpop.f32.mrb[0].mxu0
      %v4218 = vadd.f32 0.0, %v4217
      %v4219 = vpop.f32.mrb[0].mxu0
      %v4220 = vpop.f32.mrb[0].mxu0
      %v4221 = vadd.f32 0.0, %v4220
      %v4222 = vpop.f32.mrb[0].mxu0
      %4223 = vmatprep.mubr.bf16.mxu0 0
      %4224 = vmatmul.mubr.bf16.gmra.mrb[0].mxu0 %v4119
      %v4225 = vpop.f32.mrb[0].mxu0
      %v4226 = vadd.f32 0.0, %v4225
      %v4227 = vpop.f32.mrb[0].mxu0
      %v4228 = vpop.f32.mrb[0].mxu0
      %v4229 = vadd.f32 0.0, %v4228
      %v4230 = vpop.f32.mrb[0].mxu0
      %4231 = vmatprep.mubr.bf16.mxu0 0
      %4232 = vmatmul.mubr.bf16.gmra.mrb[0].mxu0 %v4122
      %v4233 = vpop.f32.mrb[0].mxu0
      %v4234 = vadd.f32 0.0, %v4233
      %v4235 = vpop.f32.mrb[0].mxu0
      %v4236 = vpop.f32.mrb[0].mxu0
      %v4237 = vadd.f32 0.0, %v4236
      %v4238 = vpop.f32.mrb[0].mxu0
      %4239 = vmatprep.mubr.bf16.mxu0 0
      %4240 = vmatmul.mubr.bf16.gmra.mrb[0].mxu0 %v4125
      %v4241 = vpop.f32.mrb[0].mxu0
      %v4242 = vadd.f32 0.0, %v4241
      %v4243 = vpop.f32.mrb[0].mxu0
      %v4244 = vpop.f32.mrb[0].mxu0
      %v4245 = vadd.f32 0.0, %v4244
      %v4246 = vpop.f32.mrb[0].mxu0
      %4247 = vmatprep.mubr.bf16.mxu0 0
      %4248 = vmatmul.mubr.bf16.gmra.mrb[0].mxu0 %v4128
      %v4249 = vpop.f32.mrb[0].mxu0
      %v4250 = vadd.f32 0.0, %v4249
      %v4251 = vpop.f32.mrb[0].mxu0
      %v4252 = vpop.f32.mrb[0].mxu0
      %v4253 = vadd.f32 0.0, %v4252
      %v4254 = vpop.f32.mrb[0].mxu0
      %4255 = vmatprep.mubr.bf16.mxu0 0
      %4256 = vmatmul.mubr.bf16.gmra.mrb[0].mxu0 %v4131
      %v4257 = vpop.f32.mrb[0].mxu0
      %v4258 = vadd.f32 0.0, %v4257
      %v4259 = vpop.f32.mrb[0].mxu0
      %v4260 = vpop.f32.mrb[0].mxu0
      %v4261 = vadd.f32 0.0, %v4260
      %v4262 = vpop.f32.mrb[0].mxu0
      %4263 = vmatprep.mubr.bf16.mxu0 0
      %4264 = vmatmul.mubr.bf16.gmra.mrb[0].mxu0 %v4134
      %v4265 = vpop.f32.mrb[0].mxu0
      %v4266 = vadd.f32 0.0, %v4265
      %v4267 = vpop.f32.mrb[0].mxu0
      %v4268 = vpop.f32.mrb[0].mxu0
      %v4269 = vadd.f32 0.0, %v4268
      %v4270 = vpop.f32.mrb[0].mxu0
      %4271 = vmatprep.mubr.bf16.mxu0 0
      %4272 = vmatmul.mubr.bf16.gmra.mrb[0].mxu0 %v4137
      %v4273 = vpop.f32.mrb[0].mxu0
      %v4274 = vadd.f32 0.0, %v4273
      %v4275 = vpop.f32.mrb[0].mxu0
      %v4276 = vpop.f32.mrb[0].mxu0
      %v4277 = vadd.f32 0.0, %v4276
      %v4278 = vpop.f32.mrb[0].mxu0
      %4279 = vmatprep.mubr.bf16.mxu0 0
      %4280 = vmatmul.mubr.bf16.gmra.mrb[0].mxu0 %v4140
      %v4281 = vpop.f32.mrb[0].mxu0
      %v4282 = vadd.f32 0.0, %v4281
      %v4283 = vpop.f32.mrb[0].mxu0
      %v4284 = vpop.f32.mrb[0].mxu0
      %v4285 = vadd.f32 0.0, %v4284
      %v4286 = vpop.f32.mrb[0].mxu0
      %4287 = vmatprep.mubr.bf16.mxu0 0
      %4288 = vmatmul.mubr.bf16.gmra.mrb[0].mxu0 %v4143
      %v4289 = vpop.f32.mrb[0].mxu0
      %v4290 = vadd.f32 0.0, %v4289
      %v4291 = vpop.f32.mrb[0].mxu0
      %v4292 = vpop.f32.mrb[0].mxu0
      %v4293 = vadd.f32 0.0, %v4292
      %v4294 = vpop.f32.mrb[0].mxu0
      %4295 = vmatprep.mubr.bf16.mxu0 0
      %4296 = vmatmul.mubr.bf16.gmra.mrb[0].mxu0 %v4146
      %v4297 = vpop.f32.mrb[0].mxu0
      %v4298 = vadd.f32 0.0, %v4297
      %v4299 = vpop.f32.mrb[0].mxu0
      %v4300 = vpop.f32.mrb[0].mxu0
      %v4301 = vadd.f32 0.0, %v4300
      %v4302 = vpop.f32.mrb[0].mxu0
      %4303 = vmatprep.mubr.bf16.mxu0 0
      %4304 = vmatmul.mubr.bf16.gmra.mrb[0].mxu0 %v4149
      %v4305 = vpop.f32.mrb[0].mxu0
      %v4306 = vadd.f32 0.0, %v4305
      %v4307 = vpop.f32.mrb[0].mxu0
      %v4308 = vpop.f32.mrb[0].mxu0
      %v4309 = vadd.f32 0.0, %v4308
      %v4310 = vpop.f32.mrb[0].mxu0
      %4311 = vdwg.mxu0
      %v4312 = vmul.f32 %v4186, %v729
      %v4313 = vmul.f32 %v4189, %v730
      %v4314 = vmul.f32 %v4194, %v731
      %v4315 = vmul.f32 %v4197, %v732
      %v4316 = vmul.f32 %v4202, %v733
      %v4317 = vmul.f32 %v4205, %v734
      %v4318 = vmul.f32 %v4210, %v735
      %v4319 = vmul.f32 %v4213, %v736
      %v4320 = vmul.f32 %v4218, %v737
      %v4321 = vmul.f32 %v4221, %v738
      %v4322 = vmul.f32 %v4226, %v739
      %v4323 = vmul.f32 %v4229, %v740
      %v4324 = vmul.f32 %v4234, %v741
      %v4325 = vmul.f32 %v4237, %v742
      %v4326 = vmul.f32 %v4242, %v743
      %v4327 = vmul.f32 %v4245, %v744
      %v4328 = vmul.f32 %v4250, %v745
      %v4329 = vmul.f32 %v4253, %v746
      %v4330 = vmul.f32 %v4258, %v747
      %v4331 = vmul.f32 %v4261, %v748
      %v4332 = vmul.f32 %v4266, %v749
      %v4333 = vmul.f32 %v4269, %v750
      %v4334 = vmul.f32 %v4274, %v751
      %v4335 = vmul.f32 %v4277, %v752
      %v4336 = vmul.f32 %v4282, %v753
      %v4337 = vmul.f32 %v4285, %v754
      %v4338 = vmul.f32 %v4290, %v755
      %v4339 = vmul.f32 %v4293, %v756
      %v4340 = vmul.f32 %v4298, %v757
      %v4341 = vmul.f32 %v4301, %v758
      %v4342 = vmul.f32 %v4306, %v759
      %v4343 = vmul.f32 %v4309, %v760
      %v4344 = vld [vmem:[#allocation4] sm:$0xff]
      %v4345 = vld [vmem:[#allocation4 + $0x8] sm:$0xff]
      %v4346 = vld [vmem:[#allocation4 + $0x10] sm:$0xff]
      %v4347 = vld [vmem:[#allocation4 + $0x18] sm:$0xff]
      %v4348 = vld [vmem:[#allocation4 + $0x20] sm:$0xff]
      %v4349 = vld [vmem:[#allocation4 + $0x28] sm:$0xff]
      %v4350 = vld [vmem:[#allocation4 + $0x30] sm:$0xff]
      %v4351 = vld [vmem:[#allocation4 + $0x38] sm:$0xff]
      %v4352 = vld [vmem:[#allocation4 + $0x40] sm:$0xff]
      %v4353 = vld [vmem:[#allocation4 + $0x48] sm:$0xff]
      %v4354 = vld [vmem:[#allocation4 + $0x50] sm:$0xff]
      %v4355 = vld [vmem:[#allocation4 + $0x58] sm:$0xff]
      %v4356 = vld [vmem:[#allocation4 + $0x60] sm:$0xff]
      %v4357 = vld [vmem:[#allocation4 + $0x68] sm:$0xff]
      %v4358 = vld [vmem:[#allocation4 + $0x70] sm:$0xff]
      %v4359 = vld [vmem:[#allocation4 + $0x78] sm:$0xff]
      %v4360 = vld [vmem:[#allocation4 + $0x80] sm:$0xff]
      %v4361 = vld [vmem:[#allocation4 + $0x88] sm:$0xff]
      %v4362 = vld [vmem:[#allocation4 + $0x90] sm:$0xff]
      %v4363 = vld [vmem:[#allocation4 + $0x98] sm:$0xff]
      %v4364 = vld [vmem:[#allocation4 + $0xa0] sm:$0xff]
      %v4365 = vld [vmem:[#allocation4 + $0xa8] sm:$0xff]
      %v4366 = vld [vmem:[#allocation4 + $0xb0] sm:$0xff]
      %v4367 = vld [vmem:[#allocation4 + $0xb8] sm:$0xff]
      %v4368 = vld [vmem:[#allocation4 + $0xc0] sm:$0xff]
      %v4369 = vld [vmem:[#allocation4 + $0xc8] sm:$0xff]
      %v4370 = vld [vmem:[#allocation4 + $0xd0] sm:$0xff]
      %v4371 = vld [vmem:[#allocation4 + $0xd8] sm:$0xff]
      %v4372 = vld [vmem:[#allocation4 + $0xe0] sm:$0xff]
      %v4373 = vld [vmem:[#allocation4 + $0xe8] sm:$0xff]
      %v4374 = vld [vmem:[#allocation4 + $0xf0] sm:$0xff]
      %v4375 = vld [vmem:[#allocation4 + $0xf8] sm:$0xff]
      %v4376 = vadd.f32 %v4344, %v4312
      %v4377 = vadd.f32 %v4345, %v4313
      %v4378 = vadd.f32 %v4346, %v4314
      %v4379 = vadd.f32 %v4347, %v4315
      %v4380 = vadd.f32 %v4348, %v4316
      %v4381 = vadd.f32 %v4349, %v4317
      %v4382 = vadd.f32 %v4350, %v4318
      %v4383 = vadd.f32 %v4351, %v4319
      %v4384 = vadd.f32 %v4352, %v4320
      %v4385 = vadd.f32 %v4353, %v4321
      %v4386 = vadd.f32 %v4354, %v4322
      %v4387 = vadd.f32 %v4355, %v4323
      %v4388 = vadd.f32 %v4356, %v4324
      %v4389 = vadd.f32 %v4357, %v4325
      %v4390 = vadd.f32 %v4358, %v4326
      %v4391 = vadd.f32 %v4359, %v4327
      %v4392 = vadd.f32 %v4360, %v4328
      %v4393 = vadd.f32 %v4361, %v4329
      %v4394 = vadd.f32 %v4362, %v4330
      %v4395 = vadd.f32 %v4363, %v4331
      %v4396 = vadd.f32 %v4364, %v4332
      %v4397 = vadd.f32 %v4365, %v4333
      %v4398 = vadd.f32 %v4366, %v4334
      %v4399 = vadd.f32 %v4367, %v4335
      %v4400 = vadd.f32 %v4368, %v4336
      %v4401 = vadd.f32 %v4369, %v4337
      %v4402 = vadd.f32 %v4370, %v4338
      %v4403 = vadd.f32 %v4371, %v4339
      %v4404 = vadd.f32 %v4372, %v4340
      %v4405 = vadd.f32 %v4373, %v4341
      %v4406 = vadd.f32 %v4374, %v4342
      %v4407 = vadd.f32 %v4375, %v4343
      %4408 = vst.msk [vmem:[#allocation4] sm:$0xff] %vm825, %v4376
      %4409 = vst.msk [vmem:[#allocation4 + $0x8] sm:$0xff] %vm825, %v4377
      %4410 = vst.msk [vmem:[#allocation4 + $0x10] sm:$0xff] %vm825, %v4378
      %4411 = vst.msk [vmem:[#allocation4 + $0x18] sm:$0xff] %vm825, %v4379
      %4412 = vst.msk [vmem:[#allocation4 + $0x20] sm:$0xff] %vm825, %v4380
      %4413 = vst.msk [vmem:[#allocation4 + $0x28] sm:$0xff] %vm825, %v4381
      %4414 = vst.msk [vmem:[#allocation4 + $0x30] sm:$0xff] %vm825, %v4382
      %4415 = vst.msk [vmem:[#allocation4 + $0x38] sm:$0xff] %vm825, %v4383
      %4416 = vst.msk [vmem:[#allocation4 + $0x40] sm:$0xff] %vm825, %v4384
      %4417 = vst.msk [vmem:[#allocation4 + $0x48] sm:$0xff] %vm825, %v4385
      %4418 = vst.msk [vmem:[#allocation4 + $0x50] sm:$0xff] %vm825, %v4386
      %4419 = vst.msk [vmem:[#allocation4 + $0x58] sm:$0xff] %vm825, %v4387
      %4420 = vst.msk [vmem:[#allocation4 + $0x60] sm:$0xff] %vm825, %v4388
      %4421 = vst.msk [vmem:[#allocation4 + $0x68] sm:$0xff] %vm825, %v4389
      %4422 = vst.msk [vmem:[#allocation4 + $0x70] sm:$0xff] %vm825, %v4390
      %4423 = vst.msk [vmem:[#allocation4 + $0x78] sm:$0xff] %vm825, %v4391
      %4424 = vst.msk [vmem:[#allocation4 + $0x80] sm:$0xff] %vm825, %v4392
      %4425 = vst.msk [vmem:[#allocation4 + $0x88] sm:$0xff] %vm825, %v4393
      %4426 = vst.msk [vmem:[#allocation4 + $0x90] sm:$0xff] %vm825, %v4394
      %4427 = vst.msk [vmem:[#allocation4 + $0x98] sm:$0xff] %vm825, %v4395
      %4428 = vst.msk [vmem:[#allocation4 + $0xa0] sm:$0xff] %vm825, %v4396
      %4429 = vst.msk [vmem:[#allocation4 + $0xa8] sm:$0xff] %vm825, %v4397
      %4430 = vst.msk [vmem:[#allocation4 + $0xb0] sm:$0xff] %vm825, %v4398
      %4431 = vst.msk [vmem:[#allocation4 + $0xb8] sm:$0xff] %vm825, %v4399
      %4432 = vst.msk [vmem:[#allocation4 + $0xc0] sm:$0xff] %vm825, %v4400
      %4433 = vst.msk [vmem:[#allocation4 + $0xc8] sm:$0xff] %vm825, %v4401
      %4434 = vst.msk [vmem:[#allocation4 + $0xd0] sm:$0xff] %vm825, %v4402
      %4435 = vst.msk [vmem:[#allocation4 + $0xd8] sm:$0xff] %vm825, %v4403
      %4436 = vst.msk [vmem:[#allocation4 + $0xe0] sm:$0xff] %vm825, %v4404
      %4437 = vst.msk [vmem:[#allocation4 + $0xe8] sm:$0xff] %vm825, %v4405
      %4438 = vst.msk [vmem:[#allocation4 + $0xf0] sm:$0xff] %vm825, %v4406
      %4439 = vst.msk [vmem:[#allocation4 + $0xf8] sm:$0xff] %vm825, %v4407
      %v4440 = vld [vmem:[#allocation2 + $0x10] sm:$0xf0]
      %v4441 = vld [vmem:[#allocation2 + $0x18] sm:$0xff]
      %v4442 = vld [vmem:[#allocation2 + $0x20] sm:$0xff]
      %v4443 = vld [vmem:[#allocation2 + $0x28] sm:$0xff]
      %v4444 = vld [vmem:[#allocation2 + $0x30] sm:$0xff]
      %v4445 = vld [vmem:[#allocation2 + $0x38] sm:$0xff]
      %v4446 = vld [vmem:[#allocation2 + $0x40] sm:$0xff]
      %v4447 = vld [vmem:[#allocation2 + $0x48] sm:$0xff]
      %v4448 = vld [vmem:[#allocation2 + $0x50] sm:$0xff]
      %v4449 = vld [vmem:[#allocation2 + $0x58] sm:$0xff]
      %v4450 = vld [vmem:[#allocation2 + $0x60] sm:$0xff]
      %v4451 = vld [vmem:[#allocation2 + $0x68] sm:$0xff]
      %v4452 = vld [vmem:[#allocation2 + $0x70] sm:$0xff]
      %v4453 = vld [vmem:[#allocation2 + $0x78] sm:$0xff]
      %v4454 = vld [vmem:[#allocation2 + $0x80] sm:$0xff]
      %v4455 = vld [vmem:[#allocation2 + $0x88] sm:$0xff]
      %v4456 = vld [vmem:[#allocation2 + $0x90] sm:$0xf]
      %s4457 = scalar_lea.vmem %s1, 112
      %v4458 = vld [vmem:[%s4457] sm:$0xf]
      %v4459 = vld [vmem:[%s4457 + $0x4] sm:$0xf]
      %v4460 = vld [vmem:[%s4457 + $0x8] sm:$0xf]
      %v4461 = vld [vmem:[%s4457 + $0xc] sm:$0xf]
      %v4479 = vrot.slane %v4440, 4
      %v4480 = vrot.slane %v4441, 4
      %v4481 = vsel %vm1607, %v4479, %v4480
      %v4482 = vrot.slane %v4442, 4
      %v4483 = vsel %vm1607, %v4480, %v4482
      %v4484 = vrot.slane %v4443, 4
      %v4485 = vsel %vm1607, %v4482, %v4484
      %v4486 = vrot.slane %v4444, 4
      %v4487 = vsel %vm1607, %v4484, %v4486
      %v4488 = vrot.slane %v4445, 4
      %v4489 = vsel %vm1607, %v4486, %v4488
      %v4490 = vrot.slane %v4446, 4
      %v4491 = vsel %vm1607, %v4488, %v4490
      %v4492 = vrot.slane %v4447, 4
      %v4493 = vsel %vm1607, %v4490, %v4492
      %v4494 = vrot.slane %v4448, 4
      %v4495 = vsel %vm1607, %v4492, %v4494
      %v4496 = vrot.slane %v4449, 4
      %v4497 = vsel %vm1607, %v4494, %v4496
      %v4498 = vrot.slane %v4450, 4
      %v4499 = vsel %vm1607, %v4496, %v4498
      %v4500 = vrot.slane %v4451, 4
      %v4501 = vsel %vm1607, %v4498, %v4500
      %v4502 = vrot.slane %v4452, 4
      %v4503 = vsel %vm1607, %v4500, %v4502
      %v4504 = vrot.slane %v4453, 4
      %v4505 = vsel %vm1607, %v4502, %v4504
      %v4506 = vrot.slane %v4454, 4
      %v4507 = vsel %vm1607, %v4504, %v4506
      %v4508 = vrot.slane %v4455, 4
      %v4509 = vsel %vm1607, %v4506, %v4508
      %v4510 = vrot.slane %v4456, 4
      %v4511 = vsel %vm1607, %v4508, %v4510
      %v4516 = vunpack.c.l.b16 %v4458
      %v4517 = vunpack.c.l.b16 %v4459
      %v4518 = vunpack.c.l.b16 %v4460
      %v4519 = vunpack.c.l.b16 %v4461
      %v4520 = vpack.c.b16 %v4517, %v4516
      %v4521 = vpack.c.b16 %v4519, %v4518
      %v4525 = vsel %vm825, %v4481, 0
      %v4528 = vsel %vm825, %v4483, 0
      %v4531 = vsel %vm825, %v4485, 0
      %v4534 = vsel %vm825, %v4487, 0
      %v4537 = vsel %vm825, %v4489, 0
      %v4540 = vsel %vm825, %v4491, 0
      %v4543 = vsel %vm825, %v4493, 0
      %v4546 = vsel %vm825, %v4495, 0
      %v4549 = vsel %vm825, %v4497, 0
      %v4552 = vsel %vm825, %v4499, 0
      %v4555 = vsel %vm825, %v4501, 0
      %v4558 = vsel %vm825, %v4503, 0
      %v4561 = vsel %vm825, %v4505, 0
      %v4564 = vsel %vm825, %v4507, 0
      %v4567 = vsel %vm825, %v4509, 0
      %v4570 = vsel %vm825, %v4511, 0
      %4572 = vmatprep.subr.bf16.mxu0 0
      %4573 = vmatpush1.bf16.msra.mxu0 %v4520
      %4574 = vmatprep.subr.bf16.mxu0 0
      %4575 = vmatpush1.bf16.msra.mxu0 %v4521
      %4576 = vmatprep.subr.bf16.mxu0 0
      %4577 = vmatpush1.bf16.msra.mxu0 0
      %4578 = vmatprep.subr.bf16.mxu0 0
      %4579 = vmatpush1.bf16.msra.mxu0 0
      %4580 = vmatprep.subr.bf16.mxu0 0
      %4581 = vmatpush1.bf16.msra.mxu0 0
      %4582 = vmatprep.subr.bf16.mxu0 0
      %4583 = vmatpush1.bf16.msra.mxu0 0
      %4584 = vmatprep.subr.bf16.mxu0 0
      %4585 = vmatpush1.bf16.msra.mxu0 0
      %4586 = vmatprep.subr.bf16.mxu0 0
      %4587 = vmatpush1.bf16.msra.mxu0 0
      %4588 = vmatprep.subr.bf16.mxu0 0
      %4589 = vmatpush1.bf16.msra.mxu0 0
      %4590 = vmatprep.subr.bf16.mxu0 0
      %4591 = vmatpush1.bf16.msra.mxu0 0
      %4592 = vmatprep.subr.bf16.mxu0 0
      %4593 = vmatpush1.bf16.msra.mxu0 0
      %4594 = vmatprep.subr.bf16.mxu0 0
      %4595 = vmatpush1.bf16.msra.mxu0 0
      %4596 = vmatprep.subr.bf16.mxu0 0
      %4597 = vmatpush1.bf16.msra.mxu0 0
      %4598 = vmatprep.subr.bf16.mxu0 0
      %4599 = vmatpush1.bf16.msra.mxu0 0
      %4600 = vmatprep.subr.bf16.mxu0 0
      %4601 = vmatpush1.bf16.msra.mxu0 0
      %4602 = vmatprep.subr.bf16.mxu0 0
      %4603 = vmatpush1.bf16.msra.mxu0 0
      %4604 = vmatprep.mubr.bf16.mxu0 0
      %4605 = vmatmul.mubr.bf16.gmra.mrb[0].mxu0 %v4525
      %v4606 = vpop.f32.mrb[0].mxu0
      %v4607 = vadd.f32 0.0, %v4606
      %v4608 = vpop.f32.mrb[0].mxu0
      %v4609 = vpop.f32.mrb[0].mxu0
      %v4610 = vadd.f32 0.0, %v4609
      %v4611 = vpop.f32.mrb[0].mxu0
      %4612 = vmatprep.mubr.bf16.mxu0 0
      %4613 = vmatmul.mubr.bf16.gmra.mrb[0].mxu0 %v4528
      %v4614 = vpop.f32.mrb[0].mxu0
      %v4615 = vadd.f32 0.0, %v4614
      %v4616 = vpop.f32.mrb[0].mxu0
      %v4617 = vpop.f32.mrb[0].mxu0
      %v4618 = vadd.f32 0.0, %v4617
      %v4619 = vpop.f32.mrb[0].mxu0
      %4620 = vmatprep.mubr.bf16.mxu0 0
      %4621 = vmatmul.mubr.bf16.gmra.mrb[0].mxu0 %v4531
      %v4622 = vpop.f32.mrb[0].mxu0
      %v4623 = vadd.f32 0.0, %v4622
      %v4624 = vpop.f32.mrb[0].mxu0
      %v4625 = vpop.f32.mrb[0].mxu0
      %v4626 = vadd.f32 0.0, %v4625
      %v4627 = vpop.f32.mrb[0].mxu0
      %4628 = vmatprep.mubr.bf16.mxu0 0
      %4629 = vmatmul.mubr.bf16.gmra.mrb[0].mxu0 %v4534
      %v4630 = vpop.f32.mrb[0].mxu0
      %v4631 = vadd.f32 0.0, %v4630
      %v4632 = vpop.f32.mrb[0].mxu0
      %v4633 = vpop.f32.mrb[0].mxu0
      %v4634 = vadd.f32 0.0, %v4633
      %v4635 = vpop.f32.mrb[0].mxu0
      %4636 = vmatprep.mubr.bf16.mxu0 0
      %4637 = vmatmul.mubr.bf16.gmra.mrb[0].mxu0 %v4537
      %v4638 = vpop.f32.mrb[0].mxu0
      %v4639 = vadd.f32 0.0, %v4638
      %v4640 = vpop.f32.mrb[0].mxu0
      %v4641 = vpop.f32.mrb[0].mxu0
      %v4642 = vadd.f32 0.0, %v4641
      %v4643 = vpop.f32.mrb[0].mxu0
      %4644 = vmatprep.mubr.bf16.mxu0 0
      %4645 = vmatmul.mubr.bf16.gmra.mrb[0].mxu0 %v4540
      %v4646 = vpop.f32.mrb[0].mxu0
      %v4647 = vadd.f32 0.0, %v4646
      %v4648 = vpop.f32.mrb[0].mxu0
      %v4649 = vpop.f32.mrb[0].mxu0
      %v4650 = vadd.f32 0.0, %v4649
      %v4651 = vpop.f32.mrb[0].mxu0
      %4652 = vmatprep.mubr.bf16.mxu0 0
      %4653 = vmatmul.mubr.bf16.gmra.mrb[0].mxu0 %v4543
      %v4654 = vpop.f32.mrb[0].mxu0
      %v4655 = vadd.f32 0.0, %v4654
      %v4656 = vpop.f32.mrb[0].mxu0
      %v4657 = vpop.f32.mrb[0].mxu0
      %v4658 = vadd.f32 0.0, %v4657
      %v4659 = vpop.f32.mrb[0].mxu0
      %4660 = vmatprep.mubr.bf16.mxu0 0
      %4661 = vmatmul.mubr.bf16.gmra.mrb[0].mxu0 %v4546
      %v4662 = vpop.f32.mrb[0].mxu0
      %v4663 = vadd.f32 0.0, %v4662
      %v4664 = vpop.f32.mrb[0].mxu0
      %v4665 = vpop.f32.mrb[0].mxu0
      %v4666 = vadd.f32 0.0, %v4665
      %v4667 = vpop.f32.mrb[0].mxu0
      %4668 = vmatprep.mubr.bf16.mxu0 0
      %4669 = vmatmul.mubr.bf16.gmra.mrb[0].mxu0 %v4549
      %v4670 = vpop.f32.mrb[0].mxu0
      %v4671 = vadd.f32 0.0, %v4670
      %v4672 = vpop.f32.mrb[0].mxu0
      %v4673 = vpop.f32.mrb[0].mxu0
      %v4674 = vadd.f32 0.0, %v4673
      %v4675 = vpop.f32.mrb[0].mxu0
      %4676 = vmatprep.mubr.bf16.mxu0 0
      %4677 = vmatmul.mubr.bf16.gmra.mrb[0].mxu0 %v4552
      %v4678 = vpop.f32.mrb[0].mxu0
      %v4679 = vadd.f32 0.0, %v4678
      %v4680 = vpop.f32.mrb[0].mxu0
      %v4681 = vpop.f32.mrb[0].mxu0
      %v4682 = vadd.f32 0.0, %v4681
      %v4683 = vpop.f32.mrb[0].mxu0
      %4684 = vmatprep.mubr.bf16.mxu0 0
      %4685 = vmatmul.mubr.bf16.gmra.mrb[0].mxu0 %v4555
      %v4686 = vpop.f32.mrb[0].mxu0
      %v4687 = vadd.f32 0.0, %v4686
      %v4688 = vpop.f32.mrb[0].mxu0
      %v4689 = vpop.f32.mrb[0].mxu0
      %v4690 = vadd.f32 0.0, %v4689
      %v4691 = vpop.f32.mrb[0].mxu0
      %4692 = vmatprep.mubr.bf16.mxu0 0
      %4693 = vmatmul.mubr.bf16.gmra.mrb[0].mxu0 %v4558
      %v4694 = vpop.f32.mrb[0].mxu0
      %v4695 = vadd.f32 0.0, %v4694
      %v4696 = vpop.f32.mrb[0].mxu0
      %v4697 = vpop.f32.mrb[0].mxu0
      %v4698 = vadd.f32 0.0, %v4697
      %v4699 = vpop.f32.mrb[0].mxu0
      %4700 = vmatprep.mubr.bf16.mxu0 0
      %4701 = vmatmul.mubr.bf16.gmra.mrb[0].mxu0 %v4561
      %v4702 = vpop.f32.mrb[0].mxu0
      %v4703 = vadd.f32 0.0, %v4702
      %v4704 = vpop.f32.mrb[0].mxu0
      %v4705 = vpop.f32.mrb[0].mxu0
      %v4706 = vadd.f32 0.0, %v4705
      %v4707 = vpop.f32.mrb[0].mxu0
      %4708 = vmatprep.mubr.bf16.mxu0 0
      %4709 = vmatmul.mubr.bf16.gmra.mrb[0].mxu0 %v4564
      %v4710 = vpop.f32.mrb[0].mxu0
      %v4711 = vadd.f32 0.0, %v4710
      %v4712 = vpop.f32.mrb[0].mxu0
      %v4713 = vpop.f32.mrb[0].mxu0
      %v4714 = vadd.f32 0.0, %v4713
      %v4715 = vpop.f32.mrb[0].mxu0
      %4716 = vmatprep.mubr.bf16.mxu0 0
      %4717 = vmatmul.mubr.bf16.gmra.mrb[0].mxu0 %v4567
      %v4718 = vpop.f32.mrb[0].mxu0
      %v4719 = vadd.f32 0.0, %v4718
      %v4720 = vpop.f32.mrb[0].mxu0
      %v4721 = vpop.f32.mrb[0].mxu0
      %v4722 = vadd.f32 0.0, %v4721
      %v4723 = vpop.f32.mrb[0].mxu0
      %4724 = vmatprep.mubr.bf16.mxu0 0
      %4725 = vmatmul.mubr.bf16.gmra.mrb[0].mxu0 %v4570
      %v4726 = vpop.f32.mrb[0].mxu0
      %v4727 = vadd.f32 0.0, %v4726
      %v4728 = vpop.f32.mrb[0].mxu0
      %v4729 = vpop.f32.mrb[0].mxu0
      %v4730 = vadd.f32 0.0, %v4729
      %v4731 = vpop.f32.mrb[0].mxu0
      %4732 = vdwg.mxu0
      %v4733 = vld [vmem:[#allocation4] sm:$0xff]
      %v4734 = vld [vmem:[#allocation4 + $0x8] sm:$0xff]
      %v4735 = vld [vmem:[#allocation4 + $0x10] sm:$0xff]
      %v4736 = vld [vmem:[#allocation4 + $0x18] sm:$0xff]
      %v4737 = vld [vmem:[#allocation4 + $0x20] sm:$0xff]
      %v4738 = vld [vmem:[#allocation4 + $0x28] sm:$0xff]
      %v4739 = vld [vmem:[#allocation4 + $0x30] sm:$0xff]
      %v4740 = vld [vmem:[#allocation4 + $0x38] sm:$0xff]
      %v4741 = vld [vmem:[#allocation4 + $0x40] sm:$0xff]
      %v4742 = vld [vmem:[#allocation4 + $0x48] sm:$0xff]
      %v4743 = vld [vmem:[#allocation4 + $0x50] sm:$0xff]
      %v4744 = vld [vmem:[#allocation4 + $0x58] sm:$0xff]
      %v4745 = vld [vmem:[#allocation4 + $0x60] sm:$0xff]
      %v4746 = vld [vmem:[#allocation4 + $0x68] sm:$0xff]
      %v4747 = vld [vmem:[#allocation4 + $0x70] sm:$0xff]
      %v4748 = vld [vmem:[#allocation4 + $0x78] sm:$0xff]
      %v4749 = vld [vmem:[#allocation4 + $0x80] sm:$0xff]
      %v4750 = vld [vmem:[#allocation4 + $0x88] sm:$0xff]
      %v4751 = vld [vmem:[#allocation4 + $0x90] sm:$0xff]
      %v4752 = vld [vmem:[#allocation4 + $0x98] sm:$0xff]
      %v4753 = vld [vmem:[#allocation4 + $0xa0] sm:$0xff]
      %v4754 = vld [vmem:[#allocation4 + $0xa8] sm:$0xff]
      %v4755 = vld [vmem:[#allocation4 + $0xb0] sm:$0xff]
      %v4756 = vld [vmem:[#allocation4 + $0xb8] sm:$0xff]
      %v4757 = vld [vmem:[#allocation4 + $0xc0] sm:$0xff]
      %v4758 = vld [vmem:[#allocation4 + $0xc8] sm:$0xff]
      %v4759 = vld [vmem:[#allocation4 + $0xd0] sm:$0xff]
      %v4760 = vld [vmem:[#allocation4 + $0xd8] sm:$0xff]
      %v4761 = vld [vmem:[#allocation4 + $0xe0] sm:$0xff]
      %v4762 = vld [vmem:[#allocation4 + $0xe8] sm:$0xff]
      %v4763 = vld [vmem:[#allocation4 + $0xf0] sm:$0xff]
      %v4764 = vld [vmem:[#allocation4 + $0xf8] sm:$0xff]
      %v4765 = vadd.f32 %v4733, %v4607
      %v4766 = vadd.f32 %v4734, %v4610
      %v4767 = vadd.f32 %v4735, %v4615
      %v4768 = vadd.f32 %v4736, %v4618
      %v4769 = vadd.f32 %v4737, %v4623
      %v4770 = vadd.f32 %v4738, %v4626
      %v4771 = vadd.f32 %v4739, %v4631
      %v4772 = vadd.f32 %v4740, %v4634
      %v4773 = vadd.f32 %v4741, %v4639
      %v4774 = vadd.f32 %v4742, %v4642
      %v4775 = vadd.f32 %v4743, %v4647
      %v4776 = vadd.f32 %v4744, %v4650
      %v4777 = vadd.f32 %v4745, %v4655
      %v4778 = vadd.f32 %v4746, %v4658
      %v4779 = vadd.f32 %v4747, %v4663
      %v4780 = vadd.f32 %v4748, %v4666
      %v4781 = vadd.f32 %v4749, %v4671
      %v4782 = vadd.f32 %v4750, %v4674
      %v4783 = vadd.f32 %v4751, %v4679
      %v4784 = vadd.f32 %v4752, %v4682
      %v4785 = vadd.f32 %v4753, %v4687
      %v4786 = vadd.f32 %v4754, %v4690
      %v4787 = vadd.f32 %v4755, %v4695
      %v4788 = vadd.f32 %v4756, %v4698
      %v4789 = vadd.f32 %v4757, %v4703
      %v4790 = vadd.f32 %v4758, %v4706
      %v4791 = vadd.f32 %v4759, %v4711
      %v4792 = vadd.f32 %v4760, %v4714
      %v4793 = vadd.f32 %v4761, %v4719
      %v4794 = vadd.f32 %v4762, %v4722
      %v4795 = vadd.f32 %v4763, %v4727
      %v4796 = vadd.f32 %v4764, %v4730
      %4797 = vst.msk [vmem:[#allocation4] sm:$0xff] %vm825, %v4765
      %4798 = vst.msk [vmem:[#allocation4 + $0x8] sm:$0xff] %vm825, %v4766
      %4799 = vst.msk [vmem:[#allocation4 + $0x10] sm:$0xff] %vm825, %v4767
      %4800 = vst.msk [vmem:[#allocation4 + $0x18] sm:$0xff] %vm825, %v4768
      %4801 = vst.msk [vmem:[#allocation4 + $0x20] sm:$0xff] %vm825, %v4769
      %4802 = vst.msk [vmem:[#allocation4 + $0x28] sm:$0xff] %vm825, %v4770
      %4803 = vst.msk [vmem:[#allocation4 + $0x30] sm:$0xff] %vm825, %v4771
      %4804 = vst.msk [vmem:[#allocation4 + $0x38] sm:$0xff] %vm825, %v4772
      %4805 = vst.msk [vmem:[#allocation4 + $0x40] sm:$0xff] %vm825, %v4773
      %4806 = vst.msk [vmem:[#allocation4 + $0x48] sm:$0xff] %vm825, %v4774
      %4807 = vst.msk [vmem:[#allocation4 + $0x50] sm:$0xff] %vm825, %v4775
      %4808 = vst.msk [vmem:[#allocation4 + $0x58] sm:$0xff] %vm825, %v4776
      %4809 = vst.msk [vmem:[#allocation4 + $0x60] sm:$0xff] %vm825, %v4777
      %4810 = vst.msk [vmem:[#allocation4 + $0x68] sm:$0xff] %vm825, %v4778
      %4811 = vst.msk [vmem:[#allocation4 + $0x70] sm:$0xff] %vm825, %v4779
      %4812 = vst.msk [vmem:[#allocation4 + $0x78] sm:$0xff] %vm825, %v4780
      %4813 = vst.msk [vmem:[#allocation4 + $0x80] sm:$0xff] %vm825, %v4781
      %4814 = vst.msk [vmem:[#allocation4 + $0x88] sm:$0xff] %vm825, %v4782
      %4815 = vst.msk [vmem:[#allocation4 + $0x90] sm:$0xff] %vm825, %v4783
      %4816 = vst.msk [vmem:[#allocation4 + $0x98] sm:$0xff] %vm825, %v4784
      %4817 = vst.msk [vmem:[#allocation4 + $0xa0] sm:$0xff] %vm825, %v4785
      %4818 = vst.msk [vmem:[#allocation4 + $0xa8] sm:$0xff] %vm825, %v4786
      %4819 = vst.msk [vmem:[#allocation4 + $0xb0] sm:$0xff] %vm825, %v4787
      %4820 = vst.msk [vmem:[#allocation4 + $0xb8] sm:$0xff] %vm825, %v4788
      %4821 = vst.msk [vmem:[#allocation4 + $0xc0] sm:$0xff] %vm825, %v4789
      %4822 = vst.msk [vmem:[#allocation4 + $0xc8] sm:$0xff] %vm825, %v4790
      %4823 = vst.msk [vmem:[#allocation4 + $0xd0] sm:$0xff] %vm825, %v4791
      %4824 = vst.msk [vmem:[#allocation4 + $0xd8] sm:$0xff] %vm825, %v4792
      %4825 = vst.msk [vmem:[#allocation4 + $0xe0] sm:$0xff] %vm825, %v4793
      %4826 = vst.msk [vmem:[#allocation4 + $0xe8] sm:$0xff] %vm825, %v4794
      %4827 = vst.msk [vmem:[#allocation4 + $0xf0] sm:$0xff] %vm825, %v4795
      %4828 = vst.msk [vmem:[#allocation4 + $0xf8] sm:$0xff] %vm825, %v4796
      %v4829 = vld [vmem:[#allocation2 + $0x10] sm:$0xf0]
      %v4830 = vld [vmem:[#allocation2 + $0x18] sm:$0xff]
      %v4831 = vld [vmem:[#allocation2 + $0x20] sm:$0xff]
      %v4832 = vld [vmem:[#allocation2 + $0x28] sm:$0xff]
      %v4833 = vld [vmem:[#allocation2 + $0x30] sm:$0xff]
      %v4834 = vld [vmem:[#allocation2 + $0x38] sm:$0xff]
      %v4835 = vld [vmem:[#allocation2 + $0x40] sm:$0xff]
      %v4836 = vld [vmem:[#allocation2 + $0x48] sm:$0xff]
      %v4837 = vld [vmem:[#allocation2 + $0x50] sm:$0xff]
      %v4838 = vld [vmem:[#allocation2 + $0x58] sm:$0xff]
      %v4839 = vld [vmem:[#allocation2 + $0x60] sm:$0xff]
      %v4840 = vld [vmem:[#allocation2 + $0x68] sm:$0xff]
      %v4841 = vld [vmem:[#allocation2 + $0x70] sm:$0xff]
      %v4842 = vld [vmem:[#allocation2 + $0x78] sm:$0xff]
      %v4843 = vld [vmem:[#allocation2 + $0x80] sm:$0xff]
      %v4844 = vld [vmem:[#allocation2 + $0x88] sm:$0xff]
      %v4845 = vld [vmem:[#allocation2 + $0x90] sm:$0x1f]
      %s4846 = scalar_lea.vmem %s1, 128
      %v4847 = vld [vmem:[%s4846] sm:$0xf]
      %v4848 = vld [vmem:[%s4846 + $0x4] sm:$0xf]
      %v4849 = vld [vmem:[%s4846 + $0x8] sm:$0xf]
      %v4850 = vld [vmem:[%s4846 + $0xc] sm:$0xf]
      %v4852 = vshrl.u32 %v4829, 16
      %v4854 = vrot.slane %v4852, 4
      %v4855 = vshll.u32 %v4829, 16
      %v4857 = vrot.slane %v4855, 5
      %v4858 = vor.u32 %v4854, %v4857
      %v4860 = vshrl.u32 %v4830, 16
      %v4862 = vrot.slane %v4860, 4
      %v4863 = vshll.u32 %v4830, 16
      %v4865 = vrot.slane %v4863, 5
      %v4866 = vor.u32 %v4862, %v4865
      %v4867 = vsel %vm1980, %v4858, %v4866
      %v4869 = vshrl.u32 %v4831, 16
      %v4871 = vrot.slane %v4869, 4
      %v4872 = vshll.u32 %v4831, 16
      %v4874 = vrot.slane %v4872, 5
      %v4875 = vor.u32 %v4871, %v4874
      %v4876 = vsel %vm1980, %v4866, %v4875
      %v4878 = vshrl.u32 %v4832, 16
      %v4880 = vrot.slane %v4878, 4
      %v4881 = vshll.u32 %v4832, 16
      %v4883 = vrot.slane %v4881, 5
      %v4884 = vor.u32 %v4880, %v4883
      %v4885 = vsel %vm1980, %v4875, %v4884
      %v4887 = vshrl.u32 %v4833, 16
      %v4889 = vrot.slane %v4887, 4
      %v4890 = vshll.u32 %v4833, 16
      %v4892 = vrot.slane %v4890, 5
      %v4893 = vor.u32 %v4889, %v4892
      %v4894 = vsel %vm1980, %v4884, %v4893
      %v4896 = vshrl.u32 %v4834, 16
      %v4898 = vrot.slane %v4896, 4
      %v4899 = vshll.u32 %v4834, 16
      %v4901 = vrot.slane %v4899, 5
      %v4902 = vor.u32 %v4898, %v4901
      %v4903 = vsel %vm1980, %v4893, %v4902
      %v4905 = vshrl.u32 %v4835, 16
      %v4907 = vrot.slane %v4905, 4
      %v4908 = vshll.u32 %v4835, 16
      %v4910 = vrot.slane %v4908, 5
      %v4911 = vor.u32 %v4907, %v4910
      %v4912 = vsel %vm1980, %v4902, %v4911
      %v4914 = vshrl.u32 %v4836, 16
      %v4916 = vrot.slane %v4914, 4
      %v4917 = vshll.u32 %v4836, 16
      %v4919 = vrot.slane %v4917, 5
      %v4920 = vor.u32 %v4916, %v4919
      %v4921 = vsel %vm1980, %v4911, %v4920
      %v4923 = vshrl.u32 %v4837, 16
      %v4925 = vrot.slane %v4923, 4
      %v4926 = vshll.u32 %v4837, 16
      %v4928 = vrot.slane %v4926, 5
      %v4929 = vor.u32 %v4925, %v4928
      %v4930 = vsel %vm1980, %v4920, %v4929
      %v4932 = vshrl.u32 %v4838, 16
      %v4934 = vrot.slane %v4932, 4
      %v4935 = vshll.u32 %v4838, 16
      %v4937 = vrot.slane %v4935, 5
      %v4938 = vor.u32 %v4934, %v4937
      %v4939 = vsel %vm1980, %v4929, %v4938
      %v4941 = vshrl.u32 %v4839, 16
      %v4943 = vrot.slane %v4941, 4
      %v4944 = vshll.u32 %v4839, 16
      %v4946 = vrot.slane %v4944, 5
      %v4947 = vor.u32 %v4943, %v4946
      %v4948 = vsel %vm1980, %v4938, %v4947
      %v4950 = vshrl.u32 %v4840, 16
      %v4952 = vrot.slane %v4950, 4
      %v4953 = vshll.u32 %v4840, 16
      %v4955 = vrot.slane %v4953, 5
      %v4956 = vor.u32 %v4952, %v4955
      %v4957 = vsel %vm1980, %v4947, %v4956
      %v4959 = vshrl.u32 %v4841, 16
      %v4961 = vrot.slane %v4959, 4
      %v4962 = vshll.u32 %v4841, 16
      %v4964 = vrot.slane %v4962, 5
      %v4965 = vor.u32 %v4961, %v4964
      %v4966 = vsel %vm1980, %v4956, %v4965
      %v4968 = vshrl.u32 %v4842, 16
      %v4970 = vrot.slane %v4968, 4
      %v4971 = vshll.u32 %v4842, 16
      %v4973 = vrot.slane %v4971, 5
      %v4974 = vor.u32 %v4970, %v4973
      %v4975 = vsel %vm1980, %v4965, %v4974
      %v4977 = vshrl.u32 %v4843, 16
      %v4979 = vrot.slane %v4977, 4
      %v4980 = vshll.u32 %v4843, 16
      %v4982 = vrot.slane %v4980, 5
      %v4983 = vor.u32 %v4979, %v4982
      %v4984 = vsel %vm1980, %v4974, %v4983
      %v4986 = vshrl.u32 %v4844, 16
      %v4988 = vrot.slane %v4986, 4
      %v4989 = vshll.u32 %v4844, 16
      %v4991 = vrot.slane %v4989, 5
      %v4992 = vor.u32 %v4988, %v4991
      %v4993 = vsel %vm1980, %v4983, %v4992
      %v4995 = vshrl.u32 %v4845, 16
      %v4997 = vrot.slane %v4995, 4
      %v4998 = vshll.u32 %v4845, 16
      %v5000 = vrot.slane %v4998, 5
      %v5001 = vor.u32 %v4997, %v5000
      %v5002 = vsel %vm1980, %v4992, %v5001
      %v5007 = vunpack.c.l.b16 %v4847
      %v5008 = vunpack.c.l.b16 %v4848
      %v5009 = vunpack.c.l.b16 %v4849
      %v5010 = vunpack.c.l.b16 %v4850
      %v5011 = vpack.c.b16 %v5008, %v5007
      %v5012 = vpack.c.b16 %v5010, %v5009
      %v5016 = vsel %vm825, %v4867, 0
      %v5019 = vsel %vm825, %v4876, 0
      %v5022 = vsel %vm825, %v4885, 0
      %v5025 = vsel %vm825, %v4894, 0
      %v5028 = vsel %vm825, %v4903, 0
      %v5031 = vsel %vm825, %v4912, 0
      %v5034 = vsel %vm825, %v4921, 0
      %v5037 = vsel %vm825, %v4930, 0
      %v5040 = vsel %vm825, %v4939, 0
      %v5043 = vsel %vm825, %v4948, 0
      %v5046 = vsel %vm825, %v4957, 0
      %v5049 = vsel %vm825, %v4966, 0
      %v5052 = vsel %vm825, %v4975, 0
      %v5055 = vsel %vm825, %v4984, 0
      %v5058 = vsel %vm825, %v4993, 0
      %v5061 = vsel %vm825, %v5002, 0
      %5063 = vmatprep.subr.bf16.mxu0 0
      %5064 = vmatpush1.bf16.msra.mxu0 %v5011
      %5065 = vmatprep.subr.bf16.mxu0 0
      %5066 = vmatpush1.bf16.msra.mxu0 %v5012
      %5067 = vmatprep.subr.bf16.mxu0 0
      %5068 = vmatpush1.bf16.msra.mxu0 0
      %5069 = vmatprep.subr.bf16.mxu0 0
      %5070 = vmatpush1.bf16.msra.mxu0 0
      %5071 = vmatprep.subr.bf16.mxu0 0
      %5072 = vmatpush1.bf16.msra.mxu0 0
      %5073 = vmatprep.subr.bf16.mxu0 0
      %5074 = vmatpush1.bf16.msra.mxu0 0
      %5075 = vmatprep.subr.bf16.mxu0 0
      %5076 = vmatpush1.bf16.msra.mxu0 0
      %5077 = vmatprep.subr.bf16.mxu0 0
      %5078 = vmatpush1.bf16.msra.mxu0 0
      %5079 = vmatprep.subr.bf16.mxu0 0
      %5080 = vmatpush1.bf16.msra.mxu0 0
      %5081 = vmatprep.subr.bf16.mxu0 0
      %5082 = vmatpush1.bf16.msra.mxu0 0
      %5083 = vmatprep.subr.bf16.mxu0 0
      %5084 = vmatpush1.bf16.msra.mxu0 0
      %5085 = vmatprep.subr.bf16.mxu0 0
      %5086 = vmatpush1.bf16.msra.mxu0 0
      %5087 = vmatprep.subr.bf16.mxu0 0
      %5088 = vmatpush1.bf16.msra.mxu0 0
      %5089 = vmatprep.subr.bf16.mxu0 0
      %5090 = vmatpush1.bf16.msra.mxu0 0
      %5091 = vmatprep.subr.bf16.mxu0 0
      %5092 = vmatpush1.bf16.msra.mxu0 0
      %5093 = vmatprep.subr.bf16.mxu0 0
      %5094 = vmatpush1.bf16.msra.mxu0 0
      %5095 = vmatprep.mubr.bf16.mxu0 0
      %5096 = vmatmul.mubr.bf16.gmra.mrb[0].mxu0 %v5016
      %v5097 = vpop.f32.mrb[0].mxu0
      %v5098 = vadd.f32 0.0, %v5097
      %v5099 = vpop.f32.mrb[0].mxu0
      %v5100 = vpop.f32.mrb[0].mxu0
      %v5101 = vadd.f32 0.0, %v5100
      %v5102 = vpop.f32.mrb[0].mxu0
      %5103 = vmatprep.mubr.bf16.mxu0 0
      %5104 = vmatmul.mubr.bf16.gmra.mrb[0].mxu0 %v5019
      %v5105 = vpop.f32.mrb[0].mxu0
      %v5106 = vadd.f32 0.0, %v5105
      %v5107 = vpop.f32.mrb[0].mxu0
      %v5108 = vpop.f32.mrb[0].mxu0
      %v5109 = vadd.f32 0.0, %v5108
      %v5110 = vpop.f32.mrb[0].mxu0
      %5111 = vmatprep.mubr.bf16.mxu0 0
      %5112 = vmatmul.mubr.bf16.gmra.mrb[0].mxu0 %v5022
      %v5113 = vpop.f32.mrb[0].mxu0
      %v5114 = vadd.f32 0.0, %v5113
      %v5115 = vpop.f32.mrb[0].mxu0
      %v5116 = vpop.f32.mrb[0].mxu0
      %v5117 = vadd.f32 0.0, %v5116
      %v5118 = vpop.f32.mrb[0].mxu0
      %5119 = vmatprep.mubr.bf16.mxu0 0
      %5120 = vmatmul.mubr.bf16.gmra.mrb[0].mxu0 %v5025
      %v5121 = vpop.f32.mrb[0].mxu0
      %v5122 = vadd.f32 0.0, %v5121
      %v5123 = vpop.f32.mrb[0].mxu0
      %v5124 = vpop.f32.mrb[0].mxu0
      %v5125 = vadd.f32 0.0, %v5124
      %v5126 = vpop.f32.mrb[0].mxu0
      %5127 = vmatprep.mubr.bf16.mxu0 0
      %5128 = vmatmul.mubr.bf16.gmra.mrb[0].mxu0 %v5028
      %v5129 = vpop.f32.mrb[0].mxu0
      %v5130 = vadd.f32 0.0, %v5129
      %v5131 = vpop.f32.mrb[0].mxu0
      %v5132 = vpop.f32.mrb[0].mxu0
      %v5133 = vadd.f32 0.0, %v5132
      %v5134 = vpop.f32.mrb[0].mxu0
      %5135 = vmatprep.mubr.bf16.mxu0 0
      %5136 = vmatmul.mubr.bf16.gmra.mrb[0].mxu0 %v5031
      %v5137 = vpop.f32.mrb[0].mxu0
      %v5138 = vadd.f32 0.0, %v5137
      %v5139 = vpop.f32.mrb[0].mxu0
      %v5140 = vpop.f32.mrb[0].mxu0
      %v5141 = vadd.f32 0.0, %v5140
      %v5142 = vpop.f32.mrb[0].mxu0
      %5143 = vmatprep.mubr.bf16.mxu0 0
      %5144 = vmatmul.mubr.bf16.gmra.mrb[0].mxu0 %v5034
      %v5145 = vpop.f32.mrb[0].mxu0
      %v5146 = vadd.f32 0.0, %v5145
      %v5147 = vpop.f32.mrb[0].mxu0
      %v5148 = vpop.f32.mrb[0].mxu0
      %v5149 = vadd.f32 0.0, %v5148
      %v5150 = vpop.f32.mrb[0].mxu0
      %5151 = vmatprep.mubr.bf16.mxu0 0
      %5152 = vmatmul.mubr.bf16.gmra.mrb[0].mxu0 %v5037
      %v5153 = vpop.f32.mrb[0].mxu0
      %v5154 = vadd.f32 0.0, %v5153
      %v5155 = vpop.f32.mrb[0].mxu0
      %v5156 = vpop.f32.mrb[0].mxu0
      %v5157 = vadd.f32 0.0, %v5156
      %v5158 = vpop.f32.mrb[0].mxu0
      %5159 = vmatprep.mubr.bf16.mxu0 0
      %5160 = vmatmul.mubr.bf16.gmra.mrb[0].mxu0 %v5040
      %v5161 = vpop.f32.mrb[0].mxu0
      %v5162 = vadd.f32 0.0, %v5161
      %v5163 = vpop.f32.mrb[0].mxu0
      %v5164 = vpop.f32.mrb[0].mxu0
      %v5165 = vadd.f32 0.0, %v5164
      %v5166 = vpop.f32.mrb[0].mxu0
      %5167 = vmatprep.mubr.bf16.mxu0 0
      %5168 = vmatmul.mubr.bf16.gmra.mrb[0].mxu0 %v5043
      %v5169 = vpop.f32.mrb[0].mxu0
      %v5170 = vadd.f32 0.0, %v5169
      %v5171 = vpop.f32.mrb[0].mxu0
      %v5172 = vpop.f32.mrb[0].mxu0
      %v5173 = vadd.f32 0.0, %v5172
      %v5174 = vpop.f32.mrb[0].mxu0
      %5175 = vmatprep.mubr.bf16.mxu0 0
      %5176 = vmatmul.mubr.bf16.gmra.mrb[0].mxu0 %v5046
      %v5177 = vpop.f32.mrb[0].mxu0
      %v5178 = vadd.f32 0.0, %v5177
      %v5179 = vpop.f32.mrb[0].mxu0
      %v5180 = vpop.f32.mrb[0].mxu0
      %v5181 = vadd.f32 0.0, %v5180
      %v5182 = vpop.f32.mrb[0].mxu0
      %5183 = vmatprep.mubr.bf16.mxu0 0
      %5184 = vmatmul.mubr.bf16.gmra.mrb[0].mxu0 %v5049
      %v5185 = vpop.f32.mrb[0].mxu0
      %v5186 = vadd.f32 0.0, %v5185
      %v5187 = vpop.f32.mrb[0].mxu0
      %v5188 = vpop.f32.mrb[0].mxu0
      %v5189 = vadd.f32 0.0, %v5188
      %v5190 = vpop.f32.mrb[0].mxu0
      %5191 = vmatprep.mubr.bf16.mxu0 0
      %5192 = vmatmul.mubr.bf16.gmra.mrb[0].mxu0 %v5052
      %v5193 = vpop.f32.mrb[0].mxu0
      %v5194 = vadd.f32 0.0, %v5193
      %v5195 = vpop.f32.mrb[0].mxu0
      %v5196 = vpop.f32.mrb[0].mxu0
      %v5197 = vadd.f32 0.0, %v5196
      %v5198 = vpop.f32.mrb[0].mxu0
      %5199 = vmatprep.mubr.bf16.mxu0 0
      %5200 = vmatmul.mubr.bf16.gmra.mrb[0].mxu0 %v5055
      %v5201 = vpop.f32.mrb[0].mxu0
      %v5202 = vadd.f32 0.0, %v5201
      %v5203 = vpop.f32.mrb[0].mxu0
      %v5204 = vpop.f32.mrb[0].mxu0
      %v5205 = vadd.f32 0.0, %v5204
      %v5206 = vpop.f32.mrb[0].mxu0
      %5207 = vmatprep.mubr.bf16.mxu0 0
      %5208 = vmatmul.mubr.bf16.gmra.mrb[0].mxu0 %v5058
      %v5209 = vpop.f32.mrb[0].mxu0
      %v5210 = vadd.f32 0.0, %v5209
      %v5211 = vpop.f32.mrb[0].mxu0
      %v5212 = vpop.f32.mrb[0].mxu0
      %v5213 = vadd.f32 0.0, %v5212
      %v5214 = vpop.f32.mrb[0].mxu0
      %5215 = vmatprep.mubr.bf16.mxu0 0
      %5216 = vmatmul.mubr.bf16.gmra.mrb[0].mxu0 %v5061
      %v5217 = vpop.f32.mrb[0].mxu0
      %v5218 = vadd.f32 0.0, %v5217
      %v5219 = vpop.f32.mrb[0].mxu0
      %v5220 = vpop.f32.mrb[0].mxu0
      %v5221 = vadd.f32 0.0, %v5220
      %v5222 = vpop.f32.mrb[0].mxu0
      %5223 = vdwg.mxu0
      %v5224 = vmul.f32 %v5098, %v793
      %v5225 = vmul.f32 %v5101, %v794
      %v5226 = vmul.f32 %v5106, %v795
      %v5227 = vmul.f32 %v5109, %v796
      %v5228 = vmul.f32 %v5114, %v797
      %v5229 = vmul.f32 %v5117, %v798
      %v5230 = vmul.f32 %v5122, %v799
      %v5231 = vmul.f32 %v5125, %v800
      %v5232 = vmul.f32 %v5130, %v801
      %v5233 = vmul.f32 %v5133, %v802
      %v5234 = vmul.f32 %v5138, %v803
      %v5235 = vmul.f32 %v5141, %v804
      %v5236 = vmul.f32 %v5146, %v805
      %v5237 = vmul.f32 %v5149, %v806
      %v5238 = vmul.f32 %v5154, %v807
      %v5239 = vmul.f32 %v5157, %v808
      %v5240 = vmul.f32 %v5162, %v809
      %v5241 = vmul.f32 %v5165, %v810
      %v5242 = vmul.f32 %v5170, %v811
      %v5243 = vmul.f32 %v5173, %v812
      %v5244 = vmul.f32 %v5178, %v813
      %v5245 = vmul.f32 %v5181, %v814
      %v5246 = vmul.f32 %v5186, %v815
      %v5247 = vmul.f32 %v5189, %v816
      %v5248 = vmul.f32 %v5194, %v817
      %v5249 = vmul.f32 %v5197, %v818
      %v5250 = vmul.f32 %v5202, %v819
      %v5251 = vmul.f32 %v5205, %v820
      %v5252 = vmul.f32 %v5210, %v821
      %v5253 = vmul.f32 %v5213, %v822
      %v5254 = vmul.f32 %v5218, %v823
      %v5255 = vmul.f32 %v5221, %v824
      %v5256 = vld [vmem:[#allocation4] sm:$0xff]
      %v5257 = vld [vmem:[#allocation4 + $0x8] sm:$0xff]
      %v5258 = vld [vmem:[#allocation4 + $0x10] sm:$0xff]
      %v5259 = vld [vmem:[#allocation4 + $0x18] sm:$0xff]
      %v5260 = vld [vmem:[#allocation4 + $0x20] sm:$0xff]
      %v5261 = vld [vmem:[#allocation4 + $0x28] sm:$0xff]
      %v5262 = vld [vmem:[#allocation4 + $0x30] sm:$0xff]
      %v5263 = vld [vmem:[#allocation4 + $0x38] sm:$0xff]
      %v5264 = vld [vmem:[#allocation4 + $0x40] sm:$0xff]
      %v5265 = vld [vmem:[#allocation4 + $0x48] sm:$0xff]
      %v5266 = vld [vmem:[#allocation4 + $0x50] sm:$0xff]
      %v5267 = vld [vmem:[#allocation4 + $0x58] sm:$0xff]
      %v5268 = vld [vmem:[#allocation4 + $0x60] sm:$0xff]
      %v5269 = vld [vmem:[#allocation4 + $0x68] sm:$0xff]
      %v5270 = vld [vmem:[#allocation4 + $0x70] sm:$0xff]
      %v5271 = vld [vmem:[#allocation4 + $0x78] sm:$0xff]
      %v5272 = vld [vmem:[#allocation4 + $0x80] sm:$0xff]
      %v5273 = vld [vmem:[#allocation4 + $0x88] sm:$0xff]
      %v5274 = vld [vmem:[#allocation4 + $0x90] sm:$0xff]
      %v5275 = vld [vmem:[#allocation4 + $0x98] sm:$0xff]
      %v5276 = vld [vmem:[#allocation4 + $0xa0] sm:$0xff]
      %v5277 = vld [vmem:[#allocation4 + $0xa8] sm:$0xff]
      %v5278 = vld [vmem:[#allocation4 + $0xb0] sm:$0xff]
      %v5279 = vld [vmem:[#allocation4 + $0xb8] sm:$0xff]
      %v5280 = vld [vmem:[#allocation4 + $0xc0] sm:$0xff]
      %v5281 = vld [vmem:[#allocation4 + $0xc8] sm:$0xff]
      %v5282 = vld [vmem:[#allocation4 + $0xd0] sm:$0xff]
      %v5283 = vld [vmem:[#allocation4 + $0xd8] sm:$0xff]
      %v5284 = vld [vmem:[#allocation4 + $0xe0] sm:$0xff]
      %v5285 = vld [vmem:[#allocation4 + $0xe8] sm:$0xff]
      %v5286 = vld [vmem:[#allocation4 + $0xf0] sm:$0xff]
      %v5287 = vld [vmem:[#allocation4 + $0xf8] sm:$0xff]
      %v5288 = vadd.f32 %v5256, %v5224
      %v5289 = vadd.f32 %v5257, %v5225
      %v5290 = vadd.f32 %v5258, %v5226
      %v5291 = vadd.f32 %v5259, %v5227
      %v5292 = vadd.f32 %v5260, %v5228
      %v5293 = vadd.f32 %v5261, %v5229
      %v5294 = vadd.f32 %v5262, %v5230
      %v5295 = vadd.f32 %v5263, %v5231
      %v5296 = vadd.f32 %v5264, %v5232
      %v5297 = vadd.f32 %v5265, %v5233
      %v5298 = vadd.f32 %v5266, %v5234
      %v5299 = vadd.f32 %v5267, %v5235
      %v5300 = vadd.f32 %v5268, %v5236
      %v5301 = vadd.f32 %v5269, %v5237
      %v5302 = vadd.f32 %v5270, %v5238
      %v5303 = vadd.f32 %v5271, %v5239
      %v5304 = vadd.f32 %v5272, %v5240
      %v5305 = vadd.f32 %v5273, %v5241
      %v5306 = vadd.f32 %v5274, %v5242
      %v5307 = vadd.f32 %v5275, %v5243
      %v5308 = vadd.f32 %v5276, %v5244
      %v5309 = vadd.f32 %v5277, %v5245
      %v5310 = vadd.f32 %v5278, %v5246
      %v5311 = vadd.f32 %v5279, %v5247
      %v5312 = vadd.f32 %v5280, %v5248
      %v5313 = vadd.f32 %v5281, %v5249
      %v5314 = vadd.f32 %v5282, %v5250
      %v5315 = vadd.f32 %v5283, %v5251
      %v5316 = vadd.f32 %v5284, %v5252
      %v5317 = vadd.f32 %v5285, %v5253
      %v5318 = vadd.f32 %v5286, %v5254
      %v5319 = vadd.f32 %v5287, %v5255
      %5320 = vst.msk [vmem:[#allocation4] sm:$0xff] %vm825, %v5288
      %5321 = vst.msk [vmem:[#allocation4 + $0x8] sm:$0xff] %vm825, %v5289
      %5322 = vst.msk [vmem:[#allocation4 + $0x10] sm:$0xff] %vm825, %v5290
      %5323 = vst.msk [vmem:[#allocation4 + $0x18] sm:$0xff] %vm825, %v5291
      %5324 = vst.msk [vmem:[#allocation4 + $0x20] sm:$0xff] %vm825, %v5292
      %5325 = vst.msk [vmem:[#allocation4 + $0x28] sm:$0xff] %vm825, %v5293
      %5326 = vst.msk [vmem:[#allocation4 + $0x30] sm:$0xff] %vm825, %v5294
      %5327 = vst.msk [vmem:[#allocation4 + $0x38] sm:$0xff] %vm825, %v5295
      %5328 = vst.msk [vmem:[#allocation4 + $0x40] sm:$0xff] %vm825, %v5296
      %5329 = vst.msk [vmem:[#allocation4 + $0x48] sm:$0xff] %vm825, %v5297
      %5330 = vst.msk [vmem:[#allocation4 + $0x50] sm:$0xff] %vm825, %v5298
      %5331 = vst.msk [vmem:[#allocation4 + $0x58] sm:$0xff] %vm825, %v5299
      %5332 = vst.msk [vmem:[#allocation4 + $0x60] sm:$0xff] %vm825, %v5300
      %5333 = vst.msk [vmem:[#allocation4 + $0x68] sm:$0xff] %vm825, %v5301
      %5334 = vst.msk [vmem:[#allocation4 + $0x70] sm:$0xff] %vm825, %v5302
      %5335 = vst.msk [vmem:[#allocation4 + $0x78] sm:$0xff] %vm825, %v5303
      %5336 = vst.msk [vmem:[#allocation4 + $0x80] sm:$0xff] %vm825, %v5304
      %5337 = vst.msk [vmem:[#allocation4 + $0x88] sm:$0xff] %vm825, %v5305
      %5338 = vst.msk [vmem:[#allocation4 + $0x90] sm:$0xff] %vm825, %v5306
      %5339 = vst.msk [vmem:[#allocation4 + $0x98] sm:$0xff] %vm825, %v5307
      %5340 = vst.msk [vmem:[#allocation4 + $0xa0] sm:$0xff] %vm825, %v5308
      %5341 = vst.msk [vmem:[#allocation4 + $0xa8] sm:$0xff] %vm825, %v5309
      %5342 = vst.msk [vmem:[#allocation4 + $0xb0] sm:$0xff] %vm825, %v5310
      %5343 = vst.msk [vmem:[#allocation4 + $0xb8] sm:$0xff] %vm825, %v5311
      %5344 = vst.msk [vmem:[#allocation4 + $0xc0] sm:$0xff] %vm825, %v5312
      %5345 = vst.msk [vmem:[#allocation4 + $0xc8] sm:$0xff] %vm825, %v5313
      %5346 = vst.msk [vmem:[#allocation4 + $0xd0] sm:$0xff] %vm825, %v5314
      %5347 = vst.msk [vmem:[#allocation4 + $0xd8] sm:$0xff] %vm825, %v5315
      %5348 = vst.msk [vmem:[#allocation4 + $0xe0] sm:$0xff] %vm825, %v5316
      %5349 = vst.msk [vmem:[#allocation4 + $0xe8] sm:$0xff] %vm825, %v5317
      %5350 = vst.msk [vmem:[#allocation4 + $0xf0] sm:$0xff] %vm825, %v5318
      %5351 = vst.msk [vmem:[#allocation4 + $0xf8] sm:$0xff] %vm825, %v5319
      %v5352 = vld [vmem:[#allocation4] sm:$0xff]
      %v5353 = vld [vmem:[#allocation4 + $0x8] sm:$0xff]
      %v5354 = vld [vmem:[#allocation4 + $0x10] sm:$0xff]
      %v5355 = vld [vmem:[#allocation4 + $0x18] sm:$0xff]
      %v5356 = vld [vmem:[#allocation4 + $0x20] sm:$0xff]
      %v5357 = vld [vmem:[#allocation4 + $0x28] sm:$0xff]
      %v5358 = vld [vmem:[#allocation4 + $0x30] sm:$0xff]
      %v5359 = vld [vmem:[#allocation4 + $0x38] sm:$0xff]
      %v5360 = vld [vmem:[#allocation4 + $0x40] sm:$0xff]
      %v5361 = vld [vmem:[#allocation4 + $0x48] sm:$0xff]
      %v5362 = vld [vmem:[#allocation4 + $0x50] sm:$0xff]
      %v5363 = vld [vmem:[#allocation4 + $0x58] sm:$0xff]
      %v5364 = vld [vmem:[#allocation4 + $0x60] sm:$0xff]
      %v5365 = vld [vmem:[#allocation4 + $0x68] sm:$0xff]
      %v5366 = vld [vmem:[#allocation4 + $0x70] sm:$0xff]
      %v5367 = vld [vmem:[#allocation4 + $0x78] sm:$0xff]
      %v5368 = vld [vmem:[#allocation4 + $0x80] sm:$0xff]
      %v5369 = vld [vmem:[#allocation4 + $0x88] sm:$0xff]
      %v5370 = vld [vmem:[#allocation4 + $0x90] sm:$0xff]
      %v5371 = vld [vmem:[#allocation4 + $0x98] sm:$0xff]
      %v5372 = vld [vmem:[#allocation4 + $0xa0] sm:$0xff]
      %v5373 = vld [vmem:[#allocation4 + $0xa8] sm:$0xff]
      %v5374 = vld [vmem:[#allocation4 + $0xb0] sm:$0xff]
      %v5375 = vld [vmem:[#allocation4 + $0xb8] sm:$0xff]
      %v5376 = vld [vmem:[#allocation4 + $0xc0] sm:$0xff]
      %v5377 = vld [vmem:[#allocation4 + $0xc8] sm:$0xff]
      %v5378 = vld [vmem:[#allocation4 + $0xd0] sm:$0xff]
      %v5379 = vld [vmem:[#allocation4 + $0xd8] sm:$0xff]
      %v5380 = vld [vmem:[#allocation4 + $0xe0] sm:$0xff]
      %v5381 = vld [vmem:[#allocation4 + $0xe8] sm:$0xff]
      %v5382 = vld [vmem:[#allocation4 + $0xf0] sm:$0xff]
      %v5383 = vld [vmem:[#allocation4 + $0xf8] sm:$0xff]
      %v5384 = vld [vmem:[%s2] sm:$0x1]
      %v5386 = vlaneseq
      %v5387 = vshrl.u32 %v5386, 7
      %v5388 = vsub.s32 0, %v5387
      %v5389 = vrot.slane %v5384, %v5388
      %v5391 = vmul.f32 %v5352, %v5389
      %v5392 = vmul.f32 %v5353, %v5389
      %v5393 = vmul.f32 %v5354, %v5389
      %v5394 = vmul.f32 %v5355, %v5389
      %v5395 = vmul.f32 %v5356, %v5389
      %v5396 = vmul.f32 %v5357, %v5389
      %v5397 = vmul.f32 %v5358, %v5389
      %v5398 = vmul.f32 %v5359, %v5389
      %v5399 = vmul.f32 %v5360, %v5389
      %v5400 = vmul.f32 %v5361, %v5389
      %v5401 = vmul.f32 %v5362, %v5389
      %v5402 = vmul.f32 %v5363, %v5389
      %v5403 = vmul.f32 %v5364, %v5389
      %v5404 = vmul.f32 %v5365, %v5389
      %v5405 = vmul.f32 %v5366, %v5389
      %v5406 = vmul.f32 %v5367, %v5389
      %v5407 = vmul.f32 %v5368, %v5389
      %v5408 = vmul.f32 %v5369, %v5389
      %v5409 = vmul.f32 %v5370, %v5389
      %v5410 = vmul.f32 %v5371, %v5389
      %v5411 = vmul.f32 %v5372, %v5389
      %v5412 = vmul.f32 %v5373, %v5389
      %v5413 = vmul.f32 %v5374, %v5389
      %v5414 = vmul.f32 %v5375, %v5389
      %v5415 = vmul.f32 %v5376, %v5389
      %v5416 = vmul.f32 %v5377, %v5389
      %v5417 = vmul.f32 %v5378, %v5389
      %v5418 = vmul.f32 %v5379, %v5389
      %v5419 = vmul.f32 %v5380, %v5389
      %v5420 = vmul.f32 %v5381, %v5389
      %v5421 = vmul.f32 %v5382, %v5389
      %v5422 = vmul.f32 %v5383, %v5389
      %v5423 = vld [vmem:[%s3] sm:$0x1]
      %v5425 = vlaneseq
      %v5426 = vshrl.u32 %v5425, 7
      %v5427 = vsub.s32 0, %v5426
      %v5428 = vrot.slane %v5423, %v5427
      %v5430 = vadd.f32 %v5391, %v5428
      %v5431 = vadd.f32 %v5392, %v5428
      %v5432 = vadd.f32 %v5393, %v5428
      %v5433 = vadd.f32 %v5394, %v5428
      %v5434 = vadd.f32 %v5395, %v5428
      %v5435 = vadd.f32 %v5396, %v5428
      %v5436 = vadd.f32 %v5397, %v5428
      %v5437 = vadd.f32 %v5398, %v5428
      %v5438 = vadd.f32 %v5399, %v5428
      %v5439 = vadd.f32 %v5400, %v5428
      %v5440 = vadd.f32 %v5401, %v5428
      %v5441 = vadd.f32 %v5402, %v5428
      %v5442 = vadd.f32 %v5403, %v5428
      %v5443 = vadd.f32 %v5404, %v5428
      %v5444 = vadd.f32 %v5405, %v5428
      %v5445 = vadd.f32 %v5406, %v5428
      %v5446 = vadd.f32 %v5407, %v5428
      %v5447 = vadd.f32 %v5408, %v5428
      %v5448 = vadd.f32 %v5409, %v5428
      %v5449 = vadd.f32 %v5410, %v5428
      %v5450 = vadd.f32 %v5411, %v5428
      %v5451 = vadd.f32 %v5412, %v5428
      %v5452 = vadd.f32 %v5413, %v5428
      %v5453 = vadd.f32 %v5414, %v5428
      %v5454 = vadd.f32 %v5415, %v5428
      %v5455 = vadd.f32 %v5416, %v5428
      %v5456 = vadd.f32 %v5417, %v5428
      %v5457 = vadd.f32 %v5418, %v5428
      %v5458 = vadd.f32 %v5419, %v5428
      %v5459 = vadd.f32 %v5420, %v5428
      %v5460 = vadd.f32 %v5421, %v5428
      %v5461 = vadd.f32 %v5422, %v5428
      %v5462 = vmax.f32 %v5430, 0.0
      %v5463 = vmax.f32 %v5431, 0.0
      %v5464 = vmax.f32 %v5432, 0.0
      %v5465 = vmax.f32 %v5433, 0.0
      %v5466 = vmax.f32 %v5434, 0.0
      %v5467 = vmax.f32 %v5435, 0.0
      %v5468 = vmax.f32 %v5436, 0.0
      %v5469 = vmax.f32 %v5437, 0.0
      %v5470 = vmax.f32 %v5438, 0.0
      %v5471 = vmax.f32 %v5439, 0.0
      %v5472 = vmax.f32 %v5440, 0.0
      %v5473 = vmax.f32 %v5441, 0.0
      %v5474 = vmax.f32 %v5442, 0.0
      %v5475 = vmax.f32 %v5443, 0.0
      %v5476 = vmax.f32 %v5444, 0.0
      %v5477 = vmax.f32 %v5445, 0.0
      %v5478 = vmax.f32 %v5446, 0.0
      %v5479 = vmax.f32 %v5447, 0.0
      %v5480 = vmax.f32 %v5448, 0.0
      %v5481 = vmax.f32 %v5449, 0.0
      %v5482 = vmax.f32 %v5450, 0.0
      %v5483 = vmax.f32 %v5451, 0.0
      %v5484 = vmax.f32 %v5452, 0.0
      %v5485 = vmax.f32 %v5453, 0.0
      %v5486 = vmax.f32 %v5454, 0.0
      %v5487 = vmax.f32 %v5455, 0.0
      %v5488 = vmax.f32 %v5456, 0.0
      %v5489 = vmax.f32 %v5457, 0.0
      %v5490 = vmax.f32 %v5458, 0.0
      %v5491 = vmax.f32 %v5459, 0.0
      %v5492 = vmax.f32 %v5460, 0.0
      %v5493 = vmax.f32 %v5461, 0.0
      %v5494 = vpack.c.bf16 %v5463, %v5462
      %v5495 = vpack.c.bf16 %v5465, %v5464
      %v5496 = vpack.c.bf16 %v5467, %v5466
      %v5497 = vpack.c.bf16 %v5469, %v5468
      %v5498 = vpack.c.bf16 %v5471, %v5470
      %v5499 = vpack.c.bf16 %v5473, %v5472
      %v5500 = vpack.c.bf16 %v5475, %v5474
      %v5501 = vpack.c.bf16 %v5477, %v5476
      %v5502 = vpack.c.bf16 %v5479, %v5478
      %v5503 = vpack.c.bf16 %v5481, %v5480
      %v5504 = vpack.c.bf16 %v5483, %v5482
      %v5505 = vpack.c.bf16 %v5485, %v5484
      %v5506 = vpack.c.bf16 %v5487, %v5486
      %v5507 = vpack.c.bf16 %v5489, %v5488
      %v5508 = vpack.c.bf16 %v5491, %v5490
      %v5509 = vpack.c.bf16 %v5493, %v5492
      %v5526 = vrot.slane %v5494, 4
      %v5527 = vrot.slane %v5495, 4
      %v5528 = vsel %vm1607, %v5526, %v5527
      %v5529 = vrot.slane %v5496, 4
      %v5530 = vsel %vm1607, %v5527, %v5529
      %v5531 = vrot.slane %v5497, 4
      %v5532 = vsel %vm1607, %v5529, %v5531
      %v5533 = vrot.slane %v5498, 4
      %v5534 = vsel %vm1607, %v5531, %v5533
      %v5535 = vrot.slane %v5499, 4
      %v5536 = vsel %vm1607, %v5533, %v5535
      %v5537 = vrot.slane %v5500, 4
      %v5538 = vsel %vm1607, %v5535, %v5537
      %v5539 = vrot.slane %v5501, 4
      %v5540 = vsel %vm1607, %v5537, %v5539
      %v5541 = vrot.slane %v5502, 4
      %v5542 = vsel %vm1607, %v5539, %v5541
      %v5543 = vrot.slane %v5503, 4
      %v5544 = vsel %vm1607, %v5541, %v5543
      %v5545 = vrot.slane %v5504, 4
      %v5546 = vsel %vm1607, %v5543, %v5545
      %v5547 = vrot.slane %v5505, 4
      %v5548 = vsel %vm1607, %v5545, %v5547
      %v5549 = vrot.slane %v5506, 4
      %v5550 = vsel %vm1607, %v5547, %v5549
      %v5551 = vrot.slane %v5507, 4
      %v5552 = vsel %vm1607, %v5549, %v5551
      %v5553 = vrot.slane %v5508, 4
      %v5554 = vsel %vm1607, %v5551, %v5553
      %v5555 = vrot.slane %v5509, 4
      %v5556 = vsel %vm1607, %v5553, %v5555
      %5574 = vst.msk [vmem:[#allocation3 + $0x8] sm:$0xf0] %vm994, %v5526
      %5575 = vst.msk [vmem:[#allocation3 + $0x10] sm:$0xff] %vm825, %v5528
      %5576 = vst.msk [vmem:[#allocation3 + $0x18] sm:$0xff] %vm825, %v5530
      %5577 = vst.msk [vmem:[#allocation3 + $0x20] sm:$0xff] %vm825, %v5532
      %5578 = vst.msk [vmem:[#allocation3 + $0x28] sm:$0xff] %vm825, %v5534
      %5579 = vst.msk [vmem:[#allocation3 + $0x30] sm:$0xff] %vm825, %v5536
      %5580 = vst.msk [vmem:[#allocation3 + $0x38] sm:$0xff] %vm825, %v5538
      %5581 = vst.msk [vmem:[#allocation3 + $0x40] sm:$0xff] %vm825, %v5540
      %5582 = vst.msk [vmem:[#allocation3 + $0x48] sm:$0xff] %vm825, %v5542
      %5583 = vst.msk [vmem:[#allocation3 + $0x50] sm:$0xff] %vm825, %v5544
      %5584 = vst.msk [vmem:[#allocation3 + $0x58] sm:$0xff] %vm825, %v5546
      %5585 = vst.msk [vmem:[#allocation3 + $0x60] sm:$0xff] %vm825, %v5548
      %5586 = vst.msk [vmem:[#allocation3 + $0x68] sm:$0xff] %vm825, %v5550
      %5587 = vst.msk [vmem:[#allocation3 + $0x70] sm:$0xff] %vm825, %v5552
      %5588 = vst.msk [vmem:[#allocation3 + $0x78] sm:$0xff] %vm825, %v5554
      %5589 = vst.msk [vmem:[#allocation3 + $0x80] sm:$0xff] %vm825, %v5556
      %5590 = vst.msk [vmem:[#allocation3 + $0x88] sm:$0xf] %vm1011, %v5555
      %5591 = vst.msk [vmem:[#allocation4] sm:$0xff] %vm825, 0.0
      %5592 = vst.msk [vmem:[#allocation4 + $0x8] sm:$0xff] %vm825, 0.0
      %5593 = vst.msk [vmem:[#allocation4 + $0x10] sm:$0xff] %vm825, 0.0
      %5594 = vst.msk [vmem:[#allocation4 + $0x18] sm:$0xff] %vm825, 0.0
      %5595 = vst.msk [vmem:[#allocation4 + $0x20] sm:$0xff] %vm825, 0.0
      %5596 = vst.msk [vmem:[#allocation4 + $0x28] sm:$0xff] %vm825, 0.0
      %5597 = vst.msk [vmem:[#allocation4 + $0x30] sm:$0xff] %vm825, 0.0
      %5598 = vst.msk [vmem:[#allocation4 + $0x38] sm:$0xff] %vm825, 0.0
      %5599 = vst.msk [vmem:[#allocation4 + $0x40] sm:$0xff] %vm825, 0.0
      %5600 = vst.msk [vmem:[#allocation4 + $0x48] sm:$0xff] %vm825, 0.0
      %5601 = vst.msk [vmem:[#allocation4 + $0x50] sm:$0xff] %vm825, 0.0
      %5602 = vst.msk [vmem:[#allocation4 + $0x58] sm:$0xff] %vm825, 0.0
      %5603 = vst.msk [vmem:[#allocation4 + $0x60] sm:$0xff] %vm825, 0.0
      %5604 = vst.msk [vmem:[#allocation4 + $0x68] sm:$0xff] %vm825, 0.0
      %5605 = vst.msk [vmem:[#allocation4 + $0x70] sm:$0xff] %vm825, 0.0
      %5606 = vst.msk [vmem:[#allocation4 + $0x78] sm:$0xff] %vm825, 0.0
      %5607 = vst.msk [vmem:[#allocation4 + $0x80] sm:$0xff] %vm825, 0.0
      %5608 = vst.msk [vmem:[#allocation4 + $0x88] sm:$0xff] %vm825, 0.0
      %5609 = vst.msk [vmem:[#allocation4 + $0x90] sm:$0xff] %vm825, 0.0
      %5610 = vst.msk [vmem:[#allocation4 + $0x98] sm:$0xff] %vm825, 0.0
      %5611 = vst.msk [vmem:[#allocation4 + $0xa0] sm:$0xff] %vm825, 0.0
      %5612 = vst.msk [vmem:[#allocation4 + $0xa8] sm:$0xff] %vm825, 0.0
      %5613 = vst.msk [vmem:[#allocation4 + $0xb0] sm:$0xff] %vm825, 0.0
      %5614 = vst.msk [vmem:[#allocation4 + $0xb8] sm:$0xff] %vm825, 0.0
      %5615 = vst.msk [vmem:[#allocation4 + $0xc0] sm:$0xff] %vm825, 0.0
      %5616 = vst.msk [vmem:[#allocation4 + $0xc8] sm:$0xff] %vm825, 0.0
      %5617 = vst.msk [vmem:[#allocation4 + $0xd0] sm:$0xff] %vm825, 0.0
      %5618 = vst.msk [vmem:[#allocation4 + $0xd8] sm:$0xff] %vm825, 0.0
      %5619 = vst.msk [vmem:[#allocation4 + $0xe0] sm:$0xff] %vm825, 0.0
      %5620 = vst.msk [vmem:[#allocation4 + $0xe8] sm:$0xff] %vm825, 0.0
      %5621 = vst.msk [vmem:[#allocation4 + $0xf0] sm:$0xff] %vm825, 0.0
      %5622 = vst.msk [vmem:[#allocation4 + $0xf8] sm:$0xff] %vm825, 0.0
      %v5623 = vld [vmem:[#allocation3] sm:$0xf8]
      %v5624 = vld [vmem:[#allocation3 + $0x8] sm:$0xff]
      %v5625 = vld [vmem:[#allocation3 + $0x10] sm:$0xff]
      %v5626 = vld [vmem:[#allocation3 + $0x18] sm:$0xff]
      %v5627 = vld [vmem:[#allocation3 + $0x20] sm:$0xff]
      %v5628 = vld [vmem:[#allocation3 + $0x28] sm:$0xff]
      %v5629 = vld [vmem:[#allocation3 + $0x30] sm:$0xff]
      %v5630 = vld [vmem:[#allocation3 + $0x38] sm:$0xff]
      %v5631 = vld [vmem:[#allocation3 + $0x40] sm:$0xff]
      %v5632 = vld [vmem:[#allocation3 + $0x48] sm:$0xff]
      %v5633 = vld [vmem:[#allocation3 + $0x50] sm:$0xff]
      %v5634 = vld [vmem:[#allocation3 + $0x58] sm:$0xff]
      %v5635 = vld [vmem:[#allocation3 + $0x60] sm:$0xff]
      %v5636 = vld [vmem:[#allocation3 + $0x68] sm:$0xff]
      %v5637 = vld [vmem:[#allocation3 + $0x70] sm:$0xff]
      %v5638 = vld [vmem:[#allocation3 + $0x78] sm:$0xff]
      %v5639 = vld [vmem:[#allocation3 + $0x80] sm:$0xf]
      %v5640 = vld [vmem:[%s4] sm:$0xf]
      %v5641 = vld [vmem:[%s4 + $0x4] sm:$0xf]
      %v5642 = vld [vmem:[%s4 + $0x8] sm:$0xf]
      %v5643 = vld [vmem:[%s4 + $0xc] sm:$0xf]
      %v5645 = vshrl.u32 %v5623, 16
      %v5647 = vrot.slane %v5645, 3
      %v5648 = vshll.u32 %v5623, 16
      %v5650 = vrot.slane %v5648, 4
      %v5651 = vor.u32 %v5647, %v5650
      %v5653 = vshrl.u32 %v5624, 16
      %v5655 = vrot.slane %v5653, 3
      %v5656 = vshll.u32 %v5624, 16
      %v5658 = vrot.slane %v5656, 4
      %v5659 = vor.u32 %v5655, %v5658
      %v5660 = vsel %vm1066, %v5651, %v5659
      %v5662 = vshrl.u32 %v5625, 16
      %v5664 = vrot.slane %v5662, 3
      %v5665 = vshll.u32 %v5625, 16
      %v5667 = vrot.slane %v5665, 4
      %v5668 = vor.u32 %v5664, %v5667
      %v5669 = vsel %vm1066, %v5659, %v5668
      %v5671 = vshrl.u32 %v5626, 16
      %v5673 = vrot.slane %v5671, 3
      %v5674 = vshll.u32 %v5626, 16
      %v5676 = vrot.slane %v5674, 4
      %v5677 = vor.u32 %v5673, %v5676
      %v5678 = vsel %vm1066, %v5668, %v5677
      %v5680 = vshrl.u32 %v5627, 16
      %v5682 = vrot.slane %v5680, 3
      %v5683 = vshll.u32 %v5627, 16
      %v5685 = vrot.slane %v5683, 4
      %v5686 = vor.u32 %v5682, %v5685
      %v5687 = vsel %vm1066, %v5677, %v5686
      %v5689 = vshrl.u32 %v5628, 16
      %v5691 = vrot.slane %v5689, 3
      %v5692 = vshll.u32 %v5628, 16
      %v5694 = vrot.slane %v5692, 4
      %v5695 = vor.u32 %v5691, %v5694
      %v5696 = vsel %vm1066, %v5686, %v5695
      %v5698 = vshrl.u32 %v5629, 16
      %v5700 = vrot.slane %v5698, 3
      %v5701 = vshll.u32 %v5629, 16
      %v5703 = vrot.slane %v5701, 4
      %v5704 = vor.u32 %v5700, %v5703
      %v5705 = vsel %vm1066, %v5695, %v5704
      %v5707 = vshrl.u32 %v5630, 16
      %v5709 = vrot.slane %v5707, 3
      %v5710 = vshll.u32 %v5630, 16
      %v5712 = vrot.slane %v5710, 4
      %v5713 = vor.u32 %v5709, %v5712
      %v5714 = vsel %vm1066, %v5704, %v5713
      %v5716 = vshrl.u32 %v5631, 16
      %v5718 = vrot.slane %v5716, 3
      %v5719 = vshll.u32 %v5631, 16
      %v5721 = vrot.slane %v5719, 4
      %v5722 = vor.u32 %v5718, %v5721
      %v5723 = vsel %vm1066, %v5713, %v5722
      %v5725 = vshrl.u32 %v5632, 16
      %v5727 = vrot.slane %v5725, 3
      %v5728 = vshll.u32 %v5632, 16
      %v5730 = vrot.slane %v5728, 4
      %v5731 = vor.u32 %v5727, %v5730
      %v5732 = vsel %vm1066, %v5722, %v5731
      %v5734 = vshrl.u32 %v5633, 16
      %v5736 = vrot.slane %v5734, 3
      %v5737 = vshll.u32 %v5633, 16
      %v5739 = vrot.slane %v5737, 4
      %v5740 = vor.u32 %v5736, %v5739
      %v5741 = vsel %vm1066, %v5731, %v5740
      %v5743 = vshrl.u32 %v5634, 16
      %v5745 = vrot.slane %v5743, 3
      %v5746 = vshll.u32 %v5634, 16
      %v5748 = vrot.slane %v5746, 4
      %v5749 = vor.u32 %v5745, %v5748
      %v5750 = vsel %vm1066, %v5740, %v5749
      %v5752 = vshrl.u32 %v5635, 16
      %v5754 = vrot.slane %v5752, 3
      %v5755 = vshll.u32 %v5635, 16
      %v5757 = vrot.slane %v5755, 4
      %v5758 = vor.u32 %v5754, %v5757
      %v5759 = vsel %vm1066, %v5749, %v5758
      %v5761 = vshrl.u32 %v5636, 16
      %v5763 = vrot.slane %v5761, 3
      %v5764 = vshll.u32 %v5636, 16
      %v5766 = vrot.slane %v5764, 4
      %v5767 = vor.u32 %v5763, %v5766
      %v5768 = vsel %vm1066, %v5758, %v5767
      %v5770 = vshrl.u32 %v5637, 16
      %v5772 = vrot.slane %v5770, 3
      %v5773 = vshll.u32 %v5637, 16
      %v5775 = vrot.slane %v5773, 4
      %v5776 = vor.u32 %v5772, %v5775
      %v5777 = vsel %vm1066, %v5767, %v5776
      %v5779 = vshrl.u32 %v5638, 16
      %v5781 = vrot.slane %v5779, 3
      %v5782 = vshll.u32 %v5638, 16
      %v5784 = vrot.slane %v5782, 4
      %v5785 = vor.u32 %v5781, %v5784
      %v5786 = vsel %vm1066, %v5776, %v5785
      %v5788 = vshrl.u32 %v5639, 16
      %v5790 = vrot.slane %v5788, 3
      %v5791 = vshll.u32 %v5639, 16
      %v5793 = vrot.slane %v5791, 4
      %v5794 = vor.u32 %v5790, %v5793
      %v5795 = vsel %vm1066, %v5785, %v5794
      %v5800 = vunpack.c.l.b16 %v5640
      %v5801 = vunpack.c.l.b16 %v5641
      %v5802 = vunpack.c.l.b16 %v5642
      %v5803 = vunpack.c.l.b16 %v5643
      %v5804 = vpack.c.b16 %v5801, %v5800
      %v5805 = vpack.c.b16 %v5803, %v5802
      %v5809 = vsel %vm825, %v5660, 0
      %v5812 = vsel %vm825, %v5669, 0
      %v5815 = vsel %vm825, %v5678, 0
      %v5818 = vsel %vm825, %v5687, 0
      %v5821 = vsel %vm825, %v5696, 0
      %v5824 = vsel %vm825, %v5705, 0
      %v5827 = vsel %vm825, %v5714, 0
      %v5830 = vsel %vm825, %v5723, 0
      %v5833 = vsel %vm825, %v5732, 0
      %v5836 = vsel %vm825, %v5741, 0
      %v5839 = vsel %vm825, %v5750, 0
      %v5842 = vsel %vm825, %v5759, 0
      %v5845 = vsel %vm825, %v5768, 0
      %v5848 = vsel %vm825, %v5777, 0
      %v5851 = vsel %vm825, %v5786, 0
      %v5854 = vsel %vm825, %v5795, 0
      %5856 = vmatprep.subr.bf16.mxu0 0
      %5857 = vmatpush1.bf16.msra.mxu0 %v5804
      %5858 = vmatprep.subr.bf16.mxu0 0
      %5859 = vmatpush1.bf16.msra.mxu0 %v5805
      %5860 = vmatprep.subr.bf16.mxu0 0
      %5861 = vmatpush1.bf16.msra.mxu0 0
      %5862 = vmatprep.subr.bf16.mxu0 0
      %5863 = vmatpush1.bf16.msra.mxu0 0
      %5864 = vmatprep.subr.bf16.mxu0 0
      %5865 = vmatpush1.bf16.msra.mxu0 0
      %5866 = vmatprep.subr.bf16.mxu0 0
      %5867 = vmatpush1.bf16.msra.mxu0 0
      %5868 = vmatprep.subr.bf16.mxu0 0
      %5869 = vmatpush1.bf16.msra.mxu0 0
      %5870 = vmatprep.subr.bf16.mxu0 0
      %5871 = vmatpush1.bf16.msra.mxu0 0
      %5872 = vmatprep.subr.bf16.mxu0 0
      %5873 = vmatpush1.bf16.msra.mxu0 0
      %5874 = vmatprep.subr.bf16.mxu0 0
      %5875 = vmatpush1.bf16.msra.mxu0 0
      %5876 = vmatprep.subr.bf16.mxu0 0
      %5877 = vmatpush1.bf16.msra.mxu0 0
      %5878 = vmatprep.subr.bf16.mxu0 0
      %5879 = vmatpush1.bf16.msra.mxu0 0
      %5880 = vmatprep.subr.bf16.mxu0 0
      %5881 = vmatpush1.bf16.msra.mxu0 0
      %5882 = vmatprep.subr.bf16.mxu0 0
      %5883 = vmatpush1.bf16.msra.mxu0 0
      %5884 = vmatprep.subr.bf16.mxu0 0
      %5885 = vmatpush1.bf16.msra.mxu0 0
      %5886 = vmatprep.subr.bf16.mxu0 0
      %5887 = vmatpush1.bf16.msra.mxu0 0
      %5888 = vmatprep.mubr.bf16.mxu0 0
      %5889 = vmatmul.mubr.bf16.gmra.mrb[0].mxu0 %v5809
      %v5890 = vpop.f32.mrb[0].mxu0
      %v5891 = vadd.f32 0.0, %v5890
      %v5892 = vpop.f32.mrb[0].mxu0
      %v5893 = vpop.f32.mrb[0].mxu0
      %v5894 = vadd.f32 0.0, %v5893
      %v5895 = vpop.f32.mrb[0].mxu0
      %5896 = vmatprep.mubr.bf16.mxu0 0
      %5897 = vmatmul.mubr.bf16.gmra.mrb[0].mxu0 %v5812
      %v5898 = vpop.f32.mrb[0].mxu0
      %v5899 = vadd.f32 0.0, %v5898
      %v5900 = vpop.f32.mrb[0].mxu0
      %v5901 = vpop.f32.mrb[0].mxu0
      %v5902 = vadd.f32 0.0, %v5901
      %v5903 = vpop.f32.mrb[0].mxu0
      %5904 = vmatprep.mubr.bf16.mxu0 0
      %5905 = vmatmul.mubr.bf16.gmra.mrb[0].mxu0 %v5815
      %v5906 = vpop.f32.mrb[0].mxu0
      %v5907 = vadd.f32 0.0, %v5906
      %v5908 = vpop.f32.mrb[0].mxu0
      %v5909 = vpop.f32.mrb[0].mxu0
      %v5910 = vadd.f32 0.0, %v5909
      %v5911 = vpop.f32.mrb[0].mxu0
      %5912 = vmatprep.mubr.bf16.mxu0 0
      %5913 = vmatmul.mubr.bf16.gmra.mrb[0].mxu0 %v5818
      %v5914 = vpop.f32.mrb[0].mxu0
      %v5915 = vadd.f32 0.0, %v5914
      %v5916 = vpop.f32.mrb[0].mxu0
      %v5917 = vpop.f32.mrb[0].mxu0
      %v5918 = vadd.f32 0.0, %v5917
      %v5919 = vpop.f32.mrb[0].mxu0
      %5920 = vmatprep.mubr.bf16.mxu0 0
      %5921 = vmatmul.mubr.bf16.gmra.mrb[0].mxu0 %v5821
      %v5922 = vpop.f32.mrb[0].mxu0
      %v5923 = vadd.f32 0.0, %v5922
      %v5924 = vpop.f32.mrb[0].mxu0
      %v5925 = vpop.f32.mrb[0].mxu0
      %v5926 = vadd.f32 0.0, %v5925
      %v5927 = vpop.f32.mrb[0].mxu0
      %5928 = vmatprep.mubr.bf16.mxu0 0
      %5929 = vmatmul.mubr.bf16.gmra.mrb[0].mxu0 %v5824
      %v5930 = vpop.f32.mrb[0].mxu0
      %v5931 = vadd.f32 0.0, %v5930
      %v5932 = vpop.f32.mrb[0].mxu0
      %v5933 = vpop.f32.mrb[0].mxu0
      %v5934 = vadd.f32 0.0, %v5933
      %v5935 = vpop.f32.mrb[0].mxu0
      %5936 = vmatprep.mubr.bf16.mxu0 0
      %5937 = vmatmul.mubr.bf16.gmra.mrb[0].mxu0 %v5827
      %v5938 = vpop.f32.mrb[0].mxu0
      %v5939 = vadd.f32 0.0, %v5938
      %v5940 = vpop.f32.mrb[0].mxu0
      %v5941 = vpop.f32.mrb[0].mxu0
      %v5942 = vadd.f32 0.0, %v5941
      %v5943 = vpop.f32.mrb[0].mxu0
      %5944 = vmatprep.mubr.bf16.mxu0 0
      %5945 = vmatmul.mubr.bf16.gmra.mrb[0].mxu0 %v5830
      %v5946 = vpop.f32.mrb[0].mxu0
      %v5947 = vadd.f32 0.0, %v5946
      %v5948 = vpop.f32.mrb[0].mxu0
      %v5949 = vpop.f32.mrb[0].mxu0
      %v5950 = vadd.f32 0.0, %v5949
      %v5951 = vpop.f32.mrb[0].mxu0
      %5952 = vmatprep.mubr.bf16.mxu0 0
      %5953 = vmatmul.mubr.bf16.gmra.mrb[0].mxu0 %v5833
      %v5954 = vpop.f32.mrb[0].mxu0
      %v5955 = vadd.f32 0.0, %v5954
      %v5956 = vpop.f32.mrb[0].mxu0
      %v5957 = vpop.f32.mrb[0].mxu0
      %v5958 = vadd.f32 0.0, %v5957
      %v5959 = vpop.f32.mrb[0].mxu0
      %5960 = vmatprep.mubr.bf16.mxu0 0
      %5961 = vmatmul.mubr.bf16.gmra.mrb[0].mxu0 %v5836
      %v5962 = vpop.f32.mrb[0].mxu0
      %v5963 = vadd.f32 0.0, %v5962
      %v5964 = vpop.f32.mrb[0].mxu0
      %v5965 = vpop.f32.mrb[0].mxu0
      %v5966 = vadd.f32 0.0, %v5965
      %v5967 = vpop.f32.mrb[0].mxu0
      %5968 = vmatprep.mubr.bf16.mxu0 0
      %5969 = vmatmul.mubr.bf16.gmra.mrb[0].mxu0 %v5839
      %v5970 = vpop.f32.mrb[0].mxu0
      %v5971 = vadd.f32 0.0, %v5970
      %v5972 = vpop.f32.mrb[0].mxu0
      %v5973 = vpop.f32.mrb[0].mxu0
      %v5974 = vadd.f32 0.0, %v5973
      %v5975 = vpop.f32.mrb[0].mxu0
      %5976 = vmatprep.mubr.bf16.mxu0 0
      %5977 = vmatmul.mubr.bf16.gmra.mrb[0].mxu0 %v5842
      %v5978 = vpop.f32.mrb[0].mxu0
      %v5979 = vadd.f32 0.0, %v5978
      %v5980 = vpop.f32.mrb[0].mxu0
      %v5981 = vpop.f32.mrb[0].mxu0
      %v5982 = vadd.f32 0.0, %v5981
      %v5983 = vpop.f32.mrb[0].mxu0
      %5984 = vmatprep.mubr.bf16.mxu0 0
      %5985 = vmatmul.mubr.bf16.gmra.mrb[0].mxu0 %v5845
      %v5986 = vpop.f32.mrb[0].mxu0
      %v5987 = vadd.f32 0.0, %v5986
      %v5988 = vpop.f32.mrb[0].mxu0
      %v5989 = vpop.f32.mrb[0].mxu0
      %v5990 = vadd.f32 0.0, %v5989
      %v5991 = vpop.f32.mrb[0].mxu0
      %5992 = vmatprep.mubr.bf16.mxu0 0
      %5993 = vmatmul.mubr.bf16.gmra.mrb[0].mxu0 %v5848
      %v5994 = vpop.f32.mrb[0].mxu0
      %v5995 = vadd.f32 0.0, %v5994
      %v5996 = vpop.f32.mrb[0].mxu0
      %v5997 = vpop.f32.mrb[0].mxu0
      %v5998 = vadd.f32 0.0, %v5997
      %v5999 = vpop.f32.mrb[0].mxu0
      %6000 = vmatprep.mubr.bf16.mxu0 0
      %6001 = vmatmul.mubr.bf16.gmra.mrb[0].mxu0 %v5851
      %v6002 = vpop.f32.mrb[0].mxu0
      %v6003 = vadd.f32 0.0, %v6002
      %v6004 = vpop.f32.mrb[0].mxu0
      %v6005 = vpop.f32.mrb[0].mxu0
      %v6006 = vadd.f32 0.0, %v6005
      %v6007 = vpop.f32.mrb[0].mxu0
      %6008 = vmatprep.mubr.bf16.mxu0 0
      %6009 = vmatmul.mubr.bf16.gmra.mrb[0].mxu0 %v5854
      %v6010 = vpop.f32.mrb[0].mxu0
      %v6011 = vadd.f32 0.0, %v6010
      %v6012 = vpop.f32.mrb[0].mxu0
      %v6013 = vpop.f32.mrb[0].mxu0
      %v6014 = vadd.f32 0.0, %v6013
      %v6015 = vpop.f32.mrb[0].mxu0
      %6016 = vdwg.mxu0
      %v6017 = vmul.f32 %v5891, %v729
      %v6018 = vmul.f32 %v5894, %v730
      %v6019 = vmul.f32 %v5899, %v731
      %v6020 = vmul.f32 %v5902, %v732
      %v6021 = vmul.f32 %v5907, %v733
      %v6022 = vmul.f32 %v5910, %v734
      %v6023 = vmul.f32 %v5915, %v735
      %v6024 = vmul.f32 %v5918, %v736
      %v6025 = vmul.f32 %v5923, %v737
      %v6026 = vmul.f32 %v5926, %v738
      %v6027 = vmul.f32 %v5931, %v739
      %v6028 = vmul.f32 %v5934, %v740
      %v6029 = vmul.f32 %v5939, %v741
      %v6030 = vmul.f32 %v5942, %v742
      %v6031 = vmul.f32 %v5947, %v743
      %v6032 = vmul.f32 %v5950, %v744
      %v6033 = vmul.f32 %v5955, %v745
      %v6034 = vmul.f32 %v5958, %v746
      %v6035 = vmul.f32 %v5963, %v747
      %v6036 = vmul.f32 %v5966, %v748
      %v6037 = vmul.f32 %v5971, %v749
      %v6038 = vmul.f32 %v5974, %v750
      %v6039 = vmul.f32 %v5979, %v751
      %v6040 = vmul.f32 %v5982, %v752
      %v6041 = vmul.f32 %v5987, %v753
      %v6042 = vmul.f32 %v5990, %v754
      %v6043 = vmul.f32 %v5995, %v755
      %v6044 = vmul.f32 %v5998, %v756
      %v6045 = vmul.f32 %v6003, %v757
      %v6046 = vmul.f32 %v6006, %v758
      %v6047 = vmul.f32 %v6011, %v759
      %v6048 = vmul.f32 %v6014, %v760
      %v6049 = vld [vmem:[#allocation4] sm:$0xff]
      %v6050 = vld [vmem:[#allocation4 + $0x8] sm:$0xff]
      %v6051 = vld [vmem:[#allocation4 + $0x10] sm:$0xff]
      %v6052 = vld [vmem:[#allocation4 + $0x18] sm:$0xff]
      %v6053 = vld [vmem:[#allocation4 + $0x20] sm:$0xff]
      %v6054 = vld [vmem:[#allocation4 + $0x28] sm:$0xff]
      %v6055 = vld [vmem:[#allocation4 + $0x30] sm:$0xff]
      %v6056 = vld [vmem:[#allocation4 + $0x38] sm:$0xff]
      %v6057 = vld [vmem:[#allocation4 + $0x40] sm:$0xff]
      %v6058 = vld [vmem:[#allocation4 + $0x48] sm:$0xff]
      %v6059 = vld [vmem:[#allocation4 + $0x50] sm:$0xff]
      %v6060 = vld [vmem:[#allocation4 + $0x58] sm:$0xff]
      %v6061 = vld [vmem:[#allocation4 + $0x60] sm:$0xff]
      %v6062 = vld [vmem:[#allocation4 + $0x68] sm:$0xff]
      %v6063 = vld [vmem:[#allocation4 + $0x70] sm:$0xff]
      %v6064 = vld [vmem:[#allocation4 + $0x78] sm:$0xff]
      %v6065 = vld [vmem:[#allocation4 + $0x80] sm:$0xff]
      %v6066 = vld [vmem:[#allocation4 + $0x88] sm:$0xff]
      %v6067 = vld [vmem:[#allocation4 + $0x90] sm:$0xff]
      %v6068 = vld [vmem:[#allocation4 + $0x98] sm:$0xff]
      %v6069 = vld [vmem:[#allocation4 + $0xa0] sm:$0xff]
      %v6070 = vld [vmem:[#allocation4 + $0xa8] sm:$0xff]
      %v6071 = vld [vmem:[#allocation4 + $0xb0] sm:$0xff]
      %v6072 = vld [vmem:[#allocation4 + $0xb8] sm:$0xff]
      %v6073 = vld [vmem:[#allocation4 + $0xc0] sm:$0xff]
      %v6074 = vld [vmem:[#allocation4 + $0xc8] sm:$0xff]
      %v6075 = vld [vmem:[#allocation4 + $0xd0] sm:$0xff]
      %v6076 = vld [vmem:[#allocation4 + $0xd8] sm:$0xff]
      %v6077 = vld [vmem:[#allocation4 + $0xe0] sm:$0xff]
      %v6078 = vld [vmem:[#allocation4 + $0xe8] sm:$0xff]
      %v6079 = vld [vmem:[#allocation4 + $0xf0] sm:$0xff]
      %v6080 = vld [vmem:[#allocation4 + $0xf8] sm:$0xff]
      %v6081 = vadd.f32 %v6049, %v6017
      %v6082 = vadd.f32 %v6050, %v6018
      %v6083 = vadd.f32 %v6051, %v6019
      %v6084 = vadd.f32 %v6052, %v6020
      %v6085 = vadd.f32 %v6053, %v6021
      %v6086 = vadd.f32 %v6054, %v6022
      %v6087 = vadd.f32 %v6055, %v6023
      %v6088 = vadd.f32 %v6056, %v6024
      %v6089 = vadd.f32 %v6057, %v6025
      %v6090 = vadd.f32 %v6058, %v6026
      %v6091 = vadd.f32 %v6059, %v6027
      %v6092 = vadd.f32 %v6060, %v6028
      %v6093 = vadd.f32 %v6061, %v6029
      %v6094 = vadd.f32 %v6062, %v6030
      %v6095 = vadd.f32 %v6063, %v6031
      %v6096 = vadd.f32 %v6064, %v6032
      %v6097 = vadd.f32 %v6065, %v6033
      %v6098 = vadd.f32 %v6066, %v6034
      %v6099 = vadd.f32 %v6067, %v6035
      %v6100 = vadd.f32 %v6068, %v6036
      %v6101 = vadd.f32 %v6069, %v6037
      %v6102 = vadd.f32 %v6070, %v6038
      %v6103 = vadd.f32 %v6071, %v6039
      %v6104 = vadd.f32 %v6072, %v6040
      %v6105 = vadd.f32 %v6073, %v6041
      %v6106 = vadd.f32 %v6074, %v6042
      %v6107 = vadd.f32 %v6075, %v6043
      %v6108 = vadd.f32 %v6076, %v6044
      %v6109 = vadd.f32 %v6077, %v6045
      %v6110 = vadd.f32 %v6078, %v6046
      %v6111 = vadd.f32 %v6079, %v6047
      %v6112 = vadd.f32 %v6080, %v6048
      %6113 = vst.msk [vmem:[#allocation4] sm:$0xff] %vm825, %v6081
      %6114 = vst.msk [vmem:[#allocation4 + $0x8] sm:$0xff] %vm825, %v6082
      %6115 = vst.msk [vmem:[#allocation4 + $0x10] sm:$0xff] %vm825, %v6083
      %6116 = vst.msk [vmem:[#allocation4 + $0x18] sm:$0xff] %vm825, %v6084
      %6117 = vst.msk [vmem:[#allocation4 + $0x20] sm:$0xff] %vm825, %v6085
      %6118 = vst.msk [vmem:[#allocation4 + $0x28] sm:$0xff] %vm825, %v6086
      %6119 = vst.msk [vmem:[#allocation4 + $0x30] sm:$0xff] %vm825, %v6087
      %6120 = vst.msk [vmem:[#allocation4 + $0x38] sm:$0xff] %vm825, %v6088
      %6121 = vst.msk [vmem:[#allocation4 + $0x40] sm:$0xff] %vm825, %v6089
      %6122 = vst.msk [vmem:[#allocation4 + $0x48] sm:$0xff] %vm825, %v6090
      %6123 = vst.msk [vmem:[#allocation4 + $0x50] sm:$0xff] %vm825, %v6091
      %6124 = vst.msk [vmem:[#allocation4 + $0x58] sm:$0xff] %vm825, %v6092
      %6125 = vst.msk [vmem:[#allocation4 + $0x60] sm:$0xff] %vm825, %v6093
      %6126 = vst.msk [vmem:[#allocation4 + $0x68] sm:$0xff] %vm825, %v6094
      %6127 = vst.msk [vmem:[#allocation4 + $0x70] sm:$0xff] %vm825, %v6095
      %6128 = vst.msk [vmem:[#allocation4 + $0x78] sm:$0xff] %vm825, %v6096
      %6129 = vst.msk [vmem:[#allocation4 + $0x80] sm:$0xff] %vm825, %v6097
      %6130 = vst.msk [vmem:[#allocation4 + $0x88] sm:$0xff] %vm825, %v6098
      %6131 = vst.msk [vmem:[#allocation4 + $0x90] sm:$0xff] %vm825, %v6099
      %6132 = vst.msk [vmem:[#allocation4 + $0x98] sm:$0xff] %vm825, %v6100
      %6133 = vst.msk [vmem:[#allocation4 + $0xa0] sm:$0xff] %vm825, %v6101
      %6134 = vst.msk [vmem:[#allocation4 + $0xa8] sm:$0xff] %vm825, %v6102
      %6135 = vst.msk [vmem:[#allocation4 + $0xb0] sm:$0xff] %vm825, %v6103
      %6136 = vst.msk [vmem:[#allocation4 + $0xb8] sm:$0xff] %vm825, %v6104
      %6137 = vst.msk [vmem:[#allocation4 + $0xc0] sm:$0xff] %vm825, %v6105
      %6138 = vst.msk [vmem:[#allocation4 + $0xc8] sm:$0xff] %vm825, %v6106
      %6139 = vst.msk [vmem:[#allocation4 + $0xd0] sm:$0xff] %vm825, %v6107
      %6140 = vst.msk [vmem:[#allocation4 + $0xd8] sm:$0xff] %vm825, %v6108
      %6141 = vst.msk [vmem:[#allocation4 + $0xe0] sm:$0xff] %vm825, %v6109
      %6142 = vst.msk [vmem:[#allocation4 + $0xe8] sm:$0xff] %vm825, %v6110
      %6143 = vst.msk [vmem:[#allocation4 + $0xf0] sm:$0xff] %vm825, %v6111
      %6144 = vst.msk [vmem:[#allocation4 + $0xf8] sm:$0xff] %vm825, %v6112
      %v6145 = vld [vmem:[#allocation3] sm:$0xf0]
      %v6146 = vld [vmem:[#allocation3 + $0x8] sm:$0xff]
      %v6147 = vld [vmem:[#allocation3 + $0x10] sm:$0xff]
      %v6148 = vld [vmem:[#allocation3 + $0x18] sm:$0xff]
      %v6149 = vld [vmem:[#allocation3 + $0x20] sm:$0xff]
      %v6150 = vld [vmem:[#allocation3 + $0x28] sm:$0xff]
      %v6151 = vld [vmem:[#allocation3 + $0x30] sm:$0xff]
      %v6152 = vld [vmem:[#allocation3 + $0x38] sm:$0xff]
      %v6153 = vld [vmem:[#allocation3 + $0x40] sm:$0xff]
      %v6154 = vld [vmem:[#allocation3 + $0x48] sm:$0xff]
      %v6155 = vld [vmem:[#allocation3 + $0x50] sm:$0xff]
      %v6156 = vld [vmem:[#allocation3 + $0x58] sm:$0xff]
      %v6157 = vld [vmem:[#allocation3 + $0x60] sm:$0xff]
      %v6158 = vld [vmem:[#allocation3 + $0x68] sm:$0xff]
      %v6159 = vld [vmem:[#allocation3 + $0x70] sm:$0xff]
      %v6160 = vld [vmem:[#allocation3 + $0x78] sm:$0xff]
      %v6161 = vld [vmem:[#allocation3 + $0x80] sm:$0xf]
      %s6162 = scalar_lea.vmem %s4, 16
      %v6163 = vld [vmem:[%s6162] sm:$0xf]
      %v6164 = vld [vmem:[%s6162 + $0x4] sm:$0xf]
      %v6165 = vld [vmem:[%s6162 + $0x8] sm:$0xf]
      %v6166 = vld [vmem:[%s6162 + $0xc] sm:$0xf]
      %v6184 = vrot.slane %v6145, 4
      %v6185 = vrot.slane %v6146, 4
      %v6186 = vsel %vm1607, %v6184, %v6185
      %v6187 = vrot.slane %v6147, 4
      %v6188 = vsel %vm1607, %v6185, %v6187
      %v6189 = vrot.slane %v6148, 4
      %v6190 = vsel %vm1607, %v6187, %v6189
      %v6191 = vrot.slane %v6149, 4
      %v6192 = vsel %vm1607, %v6189, %v6191
      %v6193 = vrot.slane %v6150, 4
      %v6194 = vsel %vm1607, %v6191, %v6193
      %v6195 = vrot.slane %v6151, 4
      %v6196 = vsel %vm1607, %v6193, %v6195
      %v6197 = vrot.slane %v6152, 4
      %v6198 = vsel %vm1607, %v6195, %v6197
      %v6199 = vrot.slane %v6153, 4
      %v6200 = vsel %vm1607, %v6197, %v6199
      %v6201 = vrot.slane %v6154, 4
      %v6202 = vsel %vm1607, %v6199, %v6201
      %v6203 = vrot.slane %v6155, 4
      %v6204 = vsel %vm1607, %v6201, %v6203
      %v6205 = vrot.slane %v6156, 4
      %v6206 = vsel %vm1607, %v6203, %v6205
      %v6207 = vrot.slane %v6157, 4
      %v6208 = vsel %vm1607, %v6205, %v6207
      %v6209 = vrot.slane %v6158, 4
      %v6210 = vsel %vm1607, %v6207, %v6209
      %v6211 = vrot.slane %v6159, 4
      %v6212 = vsel %vm1607, %v6209, %v6211
      %v6213 = vrot.slane %v6160, 4
      %v6214 = vsel %vm1607, %v6211, %v6213
      %v6215 = vrot.slane %v6161, 4
      %v6216 = vsel %vm1607, %v6213, %v6215
      %v6221 = vunpack.c.l.b16 %v6163
      %v6222 = vunpack.c.l.b16 %v6164
      %v6223 = vunpack.c.l.b16 %v6165
      %v6224 = vunpack.c.l.b16 %v6166
      %v6225 = vpack.c.b16 %v6222, %v6221
      %v6226 = vpack.c.b16 %v6224, %v6223
      %v6230 = vsel %vm825, %v6186, 0
      %v6233 = vsel %vm825, %v6188, 0
      %v6236 = vsel %vm825, %v6190, 0
      %v6239 = vsel %vm825, %v6192, 0
      %v6242 = vsel %vm825, %v6194, 0
      %v6245 = vsel %vm825, %v6196, 0
      %v6248 = vsel %vm825, %v6198, 0
      %v6251 = vsel %vm825, %v6200, 0
      %v6254 = vsel %vm825, %v6202, 0
      %v6257 = vsel %vm825, %v6204, 0
      %v6260 = vsel %vm825, %v6206, 0
      %v6263 = vsel %vm825, %v6208, 0
      %v6266 = vsel %vm825, %v6210, 0
      %v6269 = vsel %vm825, %v6212, 0
      %v6272 = vsel %vm825, %v6214, 0
      %v6275 = vsel %vm825, %v6216, 0
      %6277 = vmatprep.subr.bf16.mxu0 0
      %6278 = vmatpush1.bf16.msra.mxu0 %v6225
      %6279 = vmatprep.subr.bf16.mxu0 0
      %6280 = vmatpush1.bf16.msra.mxu0 %v6226
      %6281 = vmatprep.subr.bf16.mxu0 0
      %6282 = vmatpush1.bf16.msra.mxu0 0
      %6283 = vmatprep.subr.bf16.mxu0 0
      %6284 = vmatpush1.bf16.msra.mxu0 0
      %6285 = vmatprep.subr.bf16.mxu0 0
      %6286 = vmatpush1.bf16.msra.mxu0 0
      %6287 = vmatprep.subr.bf16.mxu0 0
      %6288 = vmatpush1.bf16.msra.mxu0 0
      %6289 = vmatprep.subr.bf16.mxu0 0
      %6290 = vmatpush1.bf16.msra.mxu0 0
      %6291 = vmatprep.subr.bf16.mxu0 0
      %6292 = vmatpush1.bf16.msra.mxu0 0
      %6293 = vmatprep.subr.bf16.mxu0 0
      %6294 = vmatpush1.bf16.msra.mxu0 0
      %6295 = vmatprep.subr.bf16.mxu0 0
      %6296 = vmatpush1.bf16.msra.mxu0 0
      %6297 = vmatprep.subr.bf16.mxu0 0
      %6298 = vmatpush1.bf16.msra.mxu0 0
      %6299 = vmatprep.subr.bf16.mxu0 0
      %6300 = vmatpush1.bf16.msra.mxu0 0
      %6301 = vmatprep.subr.bf16.mxu0 0
      %6302 = vmatpush1.bf16.msra.mxu0 0
      %6303 = vmatprep.subr.bf16.mxu0 0
      %6304 = vmatpush1.bf16.msra.mxu0 0
      %6305 = vmatprep.subr.bf16.mxu0 0
      %6306 = vmatpush1.bf16.msra.mxu0 0
      %6307 = vmatprep.subr.bf16.mxu0 0
      %6308 = vmatpush1.bf16.msra.mxu0 0
      %6309 = vmatprep.mubr.bf16.mxu0 0
      %6310 = vmatmul.mubr.bf16.gmra.mrb[0].mxu0 %v6230
      %v6311 = vpop.f32.mrb[0].mxu0
      %v6312 = vadd.f32 0.0, %v6311
      %v6313 = vpop.f32.mrb[0].mxu0
      %v6314 = vpop.f32.mrb[0].mxu0
      %v6315 = vadd.f32 0.0, %v6314
      %v6316 = vpop.f32.mrb[0].mxu0
      %6317 = vmatprep.mubr.bf16.mxu0 0
      %6318 = vmatmul.mubr.bf16.gmra.mrb[0].mxu0 %v6233
      %v6319 = vpop.f32.mrb[0].mxu0
      %v6320 = vadd.f32 0.0, %v6319
      %v6321 = vpop.f32.mrb[0].mxu0
      %v6322 = vpop.f32.mrb[0].mxu0
      %v6323 = vadd.f32 0.0, %v6322
      %v6324 = vpop.f32.mrb[0].mxu0
      %6325 = vmatprep.mubr.bf16.mxu0 0
      %6326 = vmatmul.mubr.bf16.gmra.mrb[0].mxu0 %v6236
      %v6327 = vpop.f32.mrb[0].mxu0
      %v6328 = vadd.f32 0.0, %v6327
      %v6329 = vpop.f32.mrb[0].mxu0
      %v6330 = vpop.f32.mrb[0].mxu0
      %v6331 = vadd.f32 0.0, %v6330
      %v6332 = vpop.f32.mrb[0].mxu0
      %6333 = vmatprep.mubr.bf16.mxu0 0
      %6334 = vmatmul.mubr.bf16.gmra.mrb[0].mxu0 %v6239
      %v6335 = vpop.f32.mrb[0].mxu0
      %v6336 = vadd.f32 0.0, %v6335
      %v6337 = vpop.f32.mrb[0].mxu0
      %v6338 = vpop.f32.mrb[0].mxu0
      %v6339 = vadd.f32 0.0, %v6338
      %v6340 = vpop.f32.mrb[0].mxu0
      %6341 = vmatprep.mubr.bf16.mxu0 0
      %6342 = vmatmul.mubr.bf16.gmra.mrb[0].mxu0 %v6242
      %v6343 = vpop.f32.mrb[0].mxu0
      %v6344 = vadd.f32 0.0, %v6343
      %v6345 = vpop.f32.mrb[0].mxu0
      %v6346 = vpop.f32.mrb[0].mxu0
      %v6347 = vadd.f32 0.0, %v6346
      %v6348 = vpop.f32.mrb[0].mxu0
      %6349 = vmatprep.mubr.bf16.mxu0 0
      %6350 = vmatmul.mubr.bf16.gmra.mrb[0].mxu0 %v6245
      %v6351 = vpop.f32.mrb[0].mxu0
      %v6352 = vadd.f32 0.0, %v6351
      %v6353 = vpop.f32.mrb[0].mxu0
      %v6354 = vpop.f32.mrb[0].mxu0
      %v6355 = vadd.f32 0.0, %v6354
      %v6356 = vpop.f32.mrb[0].mxu0
      %6357 = vmatprep.mubr.bf16.mxu0 0
      %6358 = vmatmul.mubr.bf16.gmra.mrb[0].mxu0 %v6248
      %v6359 = vpop.f32.mrb[0].mxu0
      %v6360 = vadd.f32 0.0, %v6359
      %v6361 = vpop.f32.mrb[0].mxu0
      %v6362 = vpop.f32.mrb[0].mxu0
      %v6363 = vadd.f32 0.0, %v6362
      %v6364 = vpop.f32.mrb[0].mxu0
      %6365 = vmatprep.mubr.bf16.mxu0 0
      %6366 = vmatmul.mubr.bf16.gmra.mrb[0].mxu0 %v6251
      %v6367 = vpop.f32.mrb[0].mxu0
      %v6368 = vadd.f32 0.0, %v6367
      %v6369 = vpop.f32.mrb[0].mxu0
      %v6370 = vpop.f32.mrb[0].mxu0
      %v6371 = vadd.f32 0.0, %v6370
      %v6372 = vpop.f32.mrb[0].mxu0
      %6373 = vmatprep.mubr.bf16.mxu0 0
      %6374 = vmatmul.mubr.bf16.gmra.mrb[0].mxu0 %v6254
      %v6375 = vpop.f32.mrb[0].mxu0
      %v6376 = vadd.f32 0.0, %v6375
      %v6377 = vpop.f32.mrb[0].mxu0
      %v6378 = vpop.f32.mrb[0].mxu0
      %v6379 = vadd.f32 0.0, %v6378
      %v6380 = vpop.f32.mrb[0].mxu0
      %6381 = vmatprep.mubr.bf16.mxu0 0
      %6382 = vmatmul.mubr.bf16.gmra.mrb[0].mxu0 %v6257
      %v6383 = vpop.f32.mrb[0].mxu0
      %v6384 = vadd.f32 0.0, %v6383
      %v6385 = vpop.f32.mrb[0].mxu0
      %v6386 = vpop.f32.mrb[0].mxu0
      %v6387 = vadd.f32 0.0, %v6386
      %v6388 = vpop.f32.mrb[0].mxu0
      %6389 = vmatprep.mubr.bf16.mxu0 0
      %6390 = vmatmul.mubr.bf16.gmra.mrb[0].mxu0 %v6260
      %v6391 = vpop.f32.mrb[0].mxu0
      %v6392 = vadd.f32 0.0, %v6391
      %v6393 = vpop.f32.mrb[0].mxu0
      %v6394 = vpop.f32.mrb[0].mxu0
      %v6395 = vadd.f32 0.0, %v6394
      %v6396 = vpop.f32.mrb[0].mxu0
      %6397 = vmatprep.mubr.bf16.mxu0 0
      %6398 = vmatmul.mubr.bf16.gmra.mrb[0].mxu0 %v6263
      %v6399 = vpop.f32.mrb[0].mxu0
      %v6400 = vadd.f32 0.0, %v6399
      %v6401 = vpop.f32.mrb[0].mxu0
      %v6402 = vpop.f32.mrb[0].mxu0
      %v6403 = vadd.f32 0.0, %v6402
      %v6404 = vpop.f32.mrb[0].mxu0
      %6405 = vmatprep.mubr.bf16.mxu0 0
      %6406 = vmatmul.mubr.bf16.gmra.mrb[0].mxu0 %v6266
      %v6407 = vpop.f32.mrb[0].mxu0
      %v6408 = vadd.f32 0.0, %v6407
      %v6409 = vpop.f32.mrb[0].mxu0
      %v6410 = vpop.f32.mrb[0].mxu0
      %v6411 = vadd.f32 0.0, %v6410
      %v6412 = vpop.f32.mrb[0].mxu0
      %6413 = vmatprep.mubr.bf16.mxu0 0
      %6414 = vmatmul.mubr.bf16.gmra.mrb[0].mxu0 %v6269
      %v6415 = vpop.f32.mrb[0].mxu0
      %v6416 = vadd.f32 0.0, %v6415
      %v6417 = vpop.f32.mrb[0].mxu0
      %v6418 = vpop.f32.mrb[0].mxu0
      %v6419 = vadd.f32 0.0, %v6418
      %v6420 = vpop.f32.mrb[0].mxu0
      %6421 = vmatprep.mubr.bf16.mxu0 0
      %6422 = vmatmul.mubr.bf16.gmra.mrb[0].mxu0 %v6272
      %v6423 = vpop.f32.mrb[0].mxu0
      %v6424 = vadd.f32 0.0, %v6423
      %v6425 = vpop.f32.mrb[0].mxu0
      %v6426 = vpop.f32.mrb[0].mxu0
      %v6427 = vadd.f32 0.0, %v6426
      %v6428 = vpop.f32.mrb[0].mxu0
      %6429 = vmatprep.mubr.bf16.mxu0 0
      %6430 = vmatmul.mubr.bf16.gmra.mrb[0].mxu0 %v6275
      %v6431 = vpop.f32.mrb[0].mxu0
      %v6432 = vadd.f32 0.0, %v6431
      %v6433 = vpop.f32.mrb[0].mxu0
      %v6434 = vpop.f32.mrb[0].mxu0
      %v6435 = vadd.f32 0.0, %v6434
      %v6436 = vpop.f32.mrb[0].mxu0
      %6437 = vdwg.mxu0
      %v6438 = vld [vmem:[#allocation4] sm:$0xff]
      %v6439 = vld [vmem:[#allocation4 + $0x8] sm:$0xff]
      %v6440 = vld [vmem:[#allocation4 + $0x10] sm:$0xff]
      %v6441 = vld [vmem:[#allocation4 + $0x18] sm:$0xff]
      %v6442 = vld [vmem:[#allocation4 + $0x20] sm:$0xff]
      %v6443 = vld [vmem:[#allocation4 + $0x28] sm:$0xff]
      %v6444 = vld [vmem:[#allocation4 + $0x30] sm:$0xff]
      %v6445 = vld [vmem:[#allocation4 + $0x38] sm:$0xff]
      %v6446 = vld [vmem:[#allocation4 + $0x40] sm:$0xff]
      %v6447 = vld [vmem:[#allocation4 + $0x48] sm:$0xff]
      %v6448 = vld [vmem:[#allocation4 + $0x50] sm:$0xff]
      %v6449 = vld [vmem:[#allocation4 + $0x58] sm:$0xff]
      %v6450 = vld [vmem:[#allocation4 + $0x60] sm:$0xff]
      %v6451 = vld [vmem:[#allocation4 + $0x68] sm:$0xff]
      %v6452 = vld [vmem:[#allocation4 + $0x70] sm:$0xff]
      %v6453 = vld [vmem:[#allocation4 + $0x78] sm:$0xff]
      %v6454 = vld [vmem:[#allocation4 + $0x80] sm:$0xff]
      %v6455 = vld [vmem:[#allocation4 + $0x88] sm:$0xff]
      %v6456 = vld [vmem:[#allocation4 + $0x90] sm:$0xff]
      %v6457 = vld [vmem:[#allocation4 + $0x98] sm:$0xff]
      %v6458 = vld [vmem:[#allocation4 + $0xa0] sm:$0xff]
      %v6459 = vld [vmem:[#allocation4 + $0xa8] sm:$0xff]
      %v6460 = vld [vmem:[#allocation4 + $0xb0] sm:$0xff]
      %v6461 = vld [vmem:[#allocation4 + $0xb8] sm:$0xff]
      %v6462 = vld [vmem:[#allocation4 + $0xc0] sm:$0xff]
      %v6463 = vld [vmem:[#allocation4 + $0xc8] sm:$0xff]
      %v6464 = vld [vmem:[#allocation4 + $0xd0] sm:$0xff]
      %v6465 = vld [vmem:[#allocation4 + $0xd8] sm:$0xff]
      %v6466 = vld [vmem:[#allocation4 + $0xe0] sm:$0xff]
      %v6467 = vld [vmem:[#allocation4 + $0xe8] sm:$0xff]
      %v6468 = vld [vmem:[#allocation4 + $0xf0] sm:$0xff]
      %v6469 = vld [vmem:[#allocation4 + $0xf8] sm:$0xff]
      %v6470 = vadd.f32 %v6438, %v6312
      %v6471 = vadd.f32 %v6439, %v6315
      %v6472 = vadd.f32 %v6440, %v6320
      %v6473 = vadd.f32 %v6441, %v6323
      %v6474 = vadd.f32 %v6442, %v6328
      %v6475 = vadd.f32 %v6443, %v6331
      %v6476 = vadd.f32 %v6444, %v6336
      %v6477 = vadd.f32 %v6445, %v6339
      %v6478 = vadd.f32 %v6446, %v6344
      %v6479 = vadd.f32 %v6447, %v6347
      %v6480 = vadd.f32 %v6448, %v6352
      %v6481 = vadd.f32 %v6449, %v6355
      %v6482 = vadd.f32 %v6450, %v6360
      %v6483 = vadd.f32 %v6451, %v6363
      %v6484 = vadd.f32 %v6452, %v6368
      %v6485 = vadd.f32 %v6453, %v6371
      %v6486 = vadd.f32 %v6454, %v6376
      %v6487 = vadd.f32 %v6455, %v6379
      %v6488 = vadd.f32 %v6456, %v6384
      %v6489 = vadd.f32 %v6457, %v6387
      %v6490 = vadd.f32 %v6458, %v6392
      %v6491 = vadd.f32 %v6459, %v6395
      %v6492 = vadd.f32 %v6460, %v6400
      %v6493 = vadd.f32 %v6461, %v6403
      %v6494 = vadd.f32 %v6462, %v6408
      %v6495 = vadd.f32 %v6463, %v6411
      %v6496 = vadd.f32 %v6464, %v6416
      %v6497 = vadd.f32 %v6465, %v6419
      %v6498 = vadd.f32 %v6466, %v6424
      %v6499 = vadd.f32 %v6467, %v6427
      %v6500 = vadd.f32 %v6468, %v6432
      %v6501 = vadd.f32 %v6469, %v6435
      %6502 = vst.msk [vmem:[#allocation4] sm:$0xff] %vm825, %v6470
      %6503 = vst.msk [vmem:[#allocation4 + $0x8] sm:$0xff] %vm825, %v6471
      %6504 = vst.msk [vmem:[#allocation4 + $0x10] sm:$0xff] %vm825, %v6472
      %6505 = vst.msk [vmem:[#allocation4 + $0x18] sm:$0xff] %vm825, %v6473
      %6506 = vst.msk [vmem:[#allocation4 + $0x20] sm:$0xff] %vm825, %v6474
      %6507 = vst.msk [vmem:[#allocation4 + $0x28] sm:$0xff] %vm825, %v6475
      %6508 = vst.msk [vmem:[#allocation4 + $0x30] sm:$0xff] %vm825, %v6476
      %6509 = vst.msk [vmem:[#allocation4 + $0x38] sm:$0xff] %vm825, %v6477
      %6510 = vst.msk [vmem:[#allocation4 + $0x40] sm:$0xff] %vm825, %v6478
      %6511 = vst.msk [vmem:[#allocation4 + $0x48] sm:$0xff] %vm825, %v6479
      %6512 = vst.msk [vmem:[#allocation4 + $0x50] sm:$0xff] %vm825, %v6480
      %6513 = vst.msk [vmem:[#allocation4 + $0x58] sm:$0xff] %vm825, %v6481
      %6514 = vst.msk [vmem:[#allocation4 + $0x60] sm:$0xff] %vm825, %v6482
      %6515 = vst.msk [vmem:[#allocation4 + $0x68] sm:$0xff] %vm825, %v6483
      %6516 = vst.msk [vmem:[#allocation4 + $0x70] sm:$0xff] %vm825, %v6484
      %6517 = vst.msk [vmem:[#allocation4 + $0x78] sm:$0xff] %vm825, %v6485
      %6518 = vst.msk [vmem:[#allocation4 + $0x80] sm:$0xff] %vm825, %v6486
      %6519 = vst.msk [vmem:[#allocation4 + $0x88] sm:$0xff] %vm825, %v6487
      %6520 = vst.msk [vmem:[#allocation4 + $0x90] sm:$0xff] %vm825, %v6488
      %6521 = vst.msk [vmem:[#allocation4 + $0x98] sm:$0xff] %vm825, %v6489
      %6522 = vst.msk [vmem:[#allocation4 + $0xa0] sm:$0xff] %vm825, %v6490
      %6523 = vst.msk [vmem:[#allocation4 + $0xa8] sm:$0xff] %vm825, %v6491
      %6524 = vst.msk [vmem:[#allocation4 + $0xb0] sm:$0xff] %vm825, %v6492
      %6525 = vst.msk [vmem:[#allocation4 + $0xb8] sm:$0xff] %vm825, %v6493
      %6526 = vst.msk [vmem:[#allocation4 + $0xc0] sm:$0xff] %vm825, %v6494
      %6527 = vst.msk [vmem:[#allocation4 + $0xc8] sm:$0xff] %vm825, %v6495
      %6528 = vst.msk [vmem:[#allocation4 + $0xd0] sm:$0xff] %vm825, %v6496
      %6529 = vst.msk [vmem:[#allocation4 + $0xd8] sm:$0xff] %vm825, %v6497
      %6530 = vst.msk [vmem:[#allocation4 + $0xe0] sm:$0xff] %vm825, %v6498
      %6531 = vst.msk [vmem:[#allocation4 + $0xe8] sm:$0xff] %vm825, %v6499
      %6532 = vst.msk [vmem:[#allocation4 + $0xf0] sm:$0xff] %vm825, %v6500
      %6533 = vst.msk [vmem:[#allocation4 + $0xf8] sm:$0xff] %vm825, %v6501
      %v6534 = vld [vmem:[#allocation3] sm:$0xf0]
      %v6535 = vld [vmem:[#allocation3 + $0x8] sm:$0xff]
      %v6536 = vld [vmem:[#allocation3 + $0x10] sm:$0xff]
      %v6537 = vld [vmem:[#allocation3 + $0x18] sm:$0xff]
      %v6538 = vld [vmem:[#allocation3 + $0x20] sm:$0xff]
      %v6539 = vld [vmem:[#allocation3 + $0x28] sm:$0xff]
      %v6540 = vld [vmem:[#allocation3 + $0x30] sm:$0xff]
      %v6541 = vld [vmem:[#allocation3 + $0x38] sm:$0xff]
      %v6542 = vld [vmem:[#allocation3 + $0x40] sm:$0xff]
      %v6543 = vld [vmem:[#allocation3 + $0x48] sm:$0xff]
      %v6544 = vld [vmem:[#allocation3 + $0x50] sm:$0xff]
      %v6545 = vld [vmem:[#allocation3 + $0x58] sm:$0xff]
      %v6546 = vld [vmem:[#allocation3 + $0x60] sm:$0xff]
      %v6547 = vld [vmem:[#allocation3 + $0x68] sm:$0xff]
      %v6548 = vld [vmem:[#allocation3 + $0x70] sm:$0xff]
      %v6549 = vld [vmem:[#allocation3 + $0x78] sm:$0xff]
      %v6550 = vld [vmem:[#allocation3 + $0x80] sm:$0x1f]
      %s6551 = scalar_lea.vmem %s4, 32
      %v6552 = vld [vmem:[%s6551] sm:$0xf]
      %v6553 = vld [vmem:[%s6551 + $0x4] sm:$0xf]
      %v6554 = vld [vmem:[%s6551 + $0x8] sm:$0xf]
      %v6555 = vld [vmem:[%s6551 + $0xc] sm:$0xf]
      %v6557 = vshrl.u32 %v6534, 16
      %v6559 = vrot.slane %v6557, 4
      %v6560 = vshll.u32 %v6534, 16
      %v6562 = vrot.slane %v6560, 5
      %v6563 = vor.u32 %v6559, %v6562
      %v6565 = vshrl.u32 %v6535, 16
      %v6567 = vrot.slane %v6565, 4
      %v6568 = vshll.u32 %v6535, 16
      %v6570 = vrot.slane %v6568, 5
      %v6571 = vor.u32 %v6567, %v6570
      %v6572 = vsel %vm1980, %v6563, %v6571
      %v6574 = vshrl.u32 %v6536, 16
      %v6576 = vrot.slane %v6574, 4
      %v6577 = vshll.u32 %v6536, 16
      %v6579 = vrot.slane %v6577, 5
      %v6580 = vor.u32 %v6576, %v6579
      %v6581 = vsel %vm1980, %v6571, %v6580
      %v6583 = vshrl.u32 %v6537, 16
      %v6585 = vrot.slane %v6583, 4
      %v6586 = vshll.u32 %v6537, 16
      %v6588 = vrot.slane %v6586, 5
      %v6589 = vor.u32 %v6585, %v6588
      %v6590 = vsel %vm1980, %v6580, %v6589
      %v6592 = vshrl.u32 %v6538, 16
      %v6594 = vrot.slane %v6592, 4
      %v6595 = vshll.u32 %v6538, 16
      %v6597 = vrot.slane %v6595, 5
      %v6598 = vor.u32 %v6594, %v6597
      %v6599 = vsel %vm1980, %v6589, %v6598
      %v6601 = vshrl.u32 %v6539, 16
      %v6603 = vrot.slane %v6601, 4
      %v6604 = vshll.u32 %v6539, 16
      %v6606 = vrot.slane %v6604, 5
      %v6607 = vor.u32 %v6603, %v6606
      %v6608 = vsel %vm1980, %v6598, %v6607
      %v6610 = vshrl.u32 %v6540, 16
      %v6612 = vrot.slane %v6610, 4
      %v6613 = vshll.u32 %v6540, 16
      %v6615 = vrot.slane %v6613, 5
      %v6616 = vor.u32 %v6612, %v6615
      %v6617 = vsel %vm1980, %v6607, %v6616
      %v6619 = vshrl.u32 %v6541, 16
      %v6621 = vrot.slane %v6619, 4
      %v6622 = vshll.u32 %v6541, 16
      %v6624 = vrot.slane %v6622, 5
      %v6625 = vor.u32 %v6621, %v6624
      %v6626 = vsel %vm1980, %v6616, %v6625
      %v6628 = vshrl.u32 %v6542, 16
      %v6630 = vrot.slane %v6628, 4
      %v6631 = vshll.u32 %v6542, 16
      %v6633 = vrot.slane %v6631, 5
      %v6634 = vor.u32 %v6630, %v6633
      %v6635 = vsel %vm1980, %v6625, %v6634
      %v6637 = vshrl.u32 %v6543, 16
      %v6639 = vrot.slane %v6637, 4
      %v6640 = vshll.u32 %v6543, 16
      %v6642 = vrot.slane %v6640, 5
      %v6643 = vor.u32 %v6639, %v6642
      %v6644 = vsel %vm1980, %v6634, %v6643
      %v6646 = vshrl.u32 %v6544, 16
      %v6648 = vrot.slane %v6646, 4
      %v6649 = vshll.u32 %v6544, 16
      %v6651 = vrot.slane %v6649, 5
      %v6652 = vor.u32 %v6648, %v6651
      %v6653 = vsel %vm1980, %v6643, %v6652
      %v6655 = vshrl.u32 %v6545, 16
      %v6657 = vrot.slane %v6655, 4
      %v6658 = vshll.u32 %v6545, 16
      %v6660 = vrot.slane %v6658, 5
      %v6661 = vor.u32 %v6657, %v6660
      %v6662 = vsel %vm1980, %v6652, %v6661
      %v6664 = vshrl.u32 %v6546, 16
      %v6666 = vrot.slane %v6664, 4
      %v6667 = vshll.u32 %v6546, 16
      %v6669 = vrot.slane %v6667, 5
      %v6670 = vor.u32 %v6666, %v6669
      %v6671 = vsel %vm1980, %v6661, %v6670
      %v6673 = vshrl.u32 %v6547, 16
      %v6675 = vrot.slane %v6673, 4
      %v6676 = vshll.u32 %v6547, 16
      %v6678 = vrot.slane %v6676, 5
      %v6679 = vor.u32 %v6675, %v6678
      %v6680 = vsel %vm1980, %v6670, %v6679
      %v6682 = vshrl.u32 %v6548, 16
      %v6684 = vrot.slane %v6682, 4
      %v6685 = vshll.u32 %v6548, 16
      %v6687 = vrot.slane %v6685, 5
      %v6688 = vor.u32 %v6684, %v6687
      %v6689 = vsel %vm1980, %v6679, %v6688
      %v6691 = vshrl.u32 %v6549, 16
      %v6693 = vrot.slane %v6691, 4
      %v6694 = vshll.u32 %v6549, 16
      %v6696 = vrot.slane %v6694, 5
      %v6697 = vor.u32 %v6693, %v6696
      %v6698 = vsel %vm1980, %v6688, %v6697
      %v6700 = vshrl.u32 %v6550, 16
      %v6702 = vrot.slane %v6700, 4
      %v6703 = vshll.u32 %v6550, 16
      %v6705 = vrot.slane %v6703, 5
      %v6706 = vor.u32 %v6702, %v6705
      %v6707 = vsel %vm1980, %v6697, %v6706
      %v6712 = vunpack.c.l.b16 %v6552
      %v6713 = vunpack.c.l.b16 %v6553
      %v6714 = vunpack.c.l.b16 %v6554
      %v6715 = vunpack.c.l.b16 %v6555
      %v6716 = vpack.c.b16 %v6713, %v6712
      %v6717 = vpack.c.b16 %v6715, %v6714
      %v6721 = vsel %vm825, %v6572, 0
      %v6724 = vsel %vm825, %v6581, 0
      %v6727 = vsel %vm825, %v6590, 0
      %v6730 = vsel %vm825, %v6599, 0
      %v6733 = vsel %vm825, %v6608, 0
      %v6736 = vsel %vm825, %v6617, 0
      %v6739 = vsel %vm825, %v6626, 0
      %v6742 = vsel %vm825, %v6635, 0
      %v6745 = vsel %vm825, %v6644, 0
      %v6748 = vsel %vm825, %v6653, 0
      %v6751 = vsel %vm825, %v6662, 0
      %v6754 = vsel %vm825, %v6671, 0
      %v6757 = vsel %vm825, %v6680, 0
      %v6760 = vsel %vm825, %v6689, 0
      %v6763 = vsel %vm825, %v6698, 0
      %v6766 = vsel %vm825, %v6707, 0
      %6768 = vmatprep.subr.bf16.mxu0 0
      %6769 = vmatpush1.bf16.msra.mxu0 %v6716
      %6770 = vmatprep.subr.bf16.mxu0 0
      %6771 = vmatpush1.bf16.msra.mxu0 %v6717
      %6772 = vmatprep.subr.bf16.mxu0 0
      %6773 = vmatpush1.bf16.msra.mxu0 0
      %6774 = vmatprep.subr.bf16.mxu0 0
      %6775 = vmatpush1.bf16.msra.mxu0 0
      %6776 = vmatprep.subr.bf16.mxu0 0
      %6777 = vmatpush1.bf16.msra.mxu0 0
      %6778 = vmatprep.subr.bf16.mxu0 0
      %6779 = vmatpush1.bf16.msra.mxu0 0
      %6780 = vmatprep.subr.bf16.mxu0 0
      %6781 = vmatpush1.bf16.msra.mxu0 0
      %6782 = vmatprep.subr.bf16.mxu0 0
      %6783 = vmatpush1.bf16.msra.mxu0 0
      %6784 = vmatprep.subr.bf16.mxu0 0
      %6785 = vmatpush1.bf16.msra.mxu0 0
      %6786 = vmatprep.subr.bf16.mxu0 0
      %6787 = vmatpush1.bf16.msra.mxu0 0
      %6788 = vmatprep.subr.bf16.mxu0 0
      %6789 = vmatpush1.bf16.msra.mxu0 0
      %6790 = vmatprep.subr.bf16.mxu0 0
      %6791 = vmatpush1.bf16.msra.mxu0 0
      %6792 = vmatprep.subr.bf16.mxu0 0
      %6793 = vmatpush1.bf16.msra.mxu0 0
      %6794 = vmatprep.subr.bf16.mxu0 0
      %6795 = vmatpush1.bf16.msra.mxu0 0
      %6796 = vmatprep.subr.bf16.mxu0 0
      %6797 = vmatpush1.bf16.msra.mxu0 0
      %6798 = vmatprep.subr.bf16.mxu0 0
      %6799 = vmatpush1.bf16.msra.mxu0 0
      %6800 = vmatprep.mubr.bf16.mxu0 0
      %6801 = vmatmul.mubr.bf16.gmra.mrb[0].mxu0 %v6721
      %v6802 = vpop.f32.mrb[0].mxu0
      %v6803 = vadd.f32 0.0, %v6802
      %v6804 = vpop.f32.mrb[0].mxu0
      %v6805 = vpop.f32.mrb[0].mxu0
      %v6806 = vadd.f32 0.0, %v6805
      %v6807 = vpop.f32.mrb[0].mxu0
      %6808 = vmatprep.mubr.bf16.mxu0 0
      %6809 = vmatmul.mubr.bf16.gmra.mrb[0].mxu0 %v6724
      %v6810 = vpop.f32.mrb[0].mxu0
      %v6811 = vadd.f32 0.0, %v6810
      %v6812 = vpop.f32.mrb[0].mxu0
      %v6813 = vpop.f32.mrb[0].mxu0
      %v6814 = vadd.f32 0.0, %v6813
      %v6815 = vpop.f32.mrb[0].mxu0
      %6816 = vmatprep.mubr.bf16.mxu0 0
      %6817 = vmatmul.mubr.bf16.gmra.mrb[0].mxu0 %v6727
      %v6818 = vpop.f32.mrb[0].mxu0
      %v6819 = vadd.f32 0.0, %v6818
      %v6820 = vpop.f32.mrb[0].mxu0
      %v6821 = vpop.f32.mrb[0].mxu0
      %v6822 = vadd.f32 0.0, %v6821
      %v6823 = vpop.f32.mrb[0].mxu0
      %6824 = vmatprep.mubr.bf16.mxu0 0
      %6825 = vmatmul.mubr.bf16.gmra.mrb[0].mxu0 %v6730
      %v6826 = vpop.f32.mrb[0].mxu0
      %v6827 = vadd.f32 0.0, %v6826
      %v6828 = vpop.f32.mrb[0].mxu0
      %v6829 = vpop.f32.mrb[0].mxu0
      %v6830 = vadd.f32 0.0, %v6829
      %v6831 = vpop.f32.mrb[0].mxu0
      %6832 = vmatprep.mubr.bf16.mxu0 0
      %6833 = vmatmul.mubr.bf16.gmra.mrb[0].mxu0 %v6733
      %v6834 = vpop.f32.mrb[0].mxu0
      %v6835 = vadd.f32 0.0, %v6834
      %v6836 = vpop.f32.mrb[0].mxu0
      %v6837 = vpop.f32.mrb[0].mxu0
      %v6838 = vadd.f32 0.0, %v6837
      %v6839 = vpop.f32.mrb[0].mxu0
      %6840 = vmatprep.mubr.bf16.mxu0 0
      %6841 = vmatmul.mubr.bf16.gmra.mrb[0].mxu0 %v6736
      %v6842 = vpop.f32.mrb[0].mxu0
      %v6843 = vadd.f32 0.0, %v6842
      %v6844 = vpop.f32.mrb[0].mxu0
      %v6845 = vpop.f32.mrb[0].mxu0
      %v6846 = vadd.f32 0.0, %v6845
      %v6847 = vpop.f32.mrb[0].mxu0
      %6848 = vmatprep.mubr.bf16.mxu0 0
      %6849 = vmatmul.mubr.bf16.gmra.mrb[0].mxu0 %v6739
      %v6850 = vpop.f32.mrb[0].mxu0
      %v6851 = vadd.f32 0.0, %v6850
      %v6852 = vpop.f32.mrb[0].mxu0
      %v6853 = vpop.f32.mrb[0].mxu0
      %v6854 = vadd.f32 0.0, %v6853
      %v6855 = vpop.f32.mrb[0].mxu0
      %6856 = vmatprep.mubr.bf16.mxu0 0
      %6857 = vmatmul.mubr.bf16.gmra.mrb[0].mxu0 %v6742
      %v6858 = vpop.f32.mrb[0].mxu0
      %v6859 = vadd.f32 0.0, %v6858
      %v6860 = vpop.f32.mrb[0].mxu0
      %v6861 = vpop.f32.mrb[0].mxu0
      %v6862 = vadd.f32 0.0, %v6861
      %v6863 = vpop.f32.mrb[0].mxu0
      %6864 = vmatprep.mubr.bf16.mxu0 0
      %6865 = vmatmul.mubr.bf16.gmra.mrb[0].mxu0 %v6745
      %v6866 = vpop.f32.mrb[0].mxu0
      %v6867 = vadd.f32 0.0, %v6866
      %v6868 = vpop.f32.mrb[0].mxu0
      %v6869 = vpop.f32.mrb[0].mxu0
      %v6870 = vadd.f32 0.0, %v6869
      %v6871 = vpop.f32.mrb[0].mxu0
      %6872 = vmatprep.mubr.bf16.mxu0 0
      %6873 = vmatmul.mubr.bf16.gmra.mrb[0].mxu0 %v6748
      %v6874 = vpop.f32.mrb[0].mxu0
      %v6875 = vadd.f32 0.0, %v6874
      %v6876 = vpop.f32.mrb[0].mxu0
      %v6877 = vpop.f32.mrb[0].mxu0
      %v6878 = vadd.f32 0.0, %v6877
      %v6879 = vpop.f32.mrb[0].mxu0
      %6880 = vmatprep.mubr.bf16.mxu0 0
      %6881 = vmatmul.mubr.bf16.gmra.mrb[0].mxu0 %v6751
      %v6882 = vpop.f32.mrb[0].mxu0
      %v6883 = vadd.f32 0.0, %v6882
      %v6884 = vpop.f32.mrb[0].mxu0
      %v6885 = vpop.f32.mrb[0].mxu0
      %v6886 = vadd.f32 0.0, %v6885
      %v6887 = vpop.f32.mrb[0].mxu0
      %6888 = vmatprep.mubr.bf16.mxu0 0
      %6889 = vmatmul.mubr.bf16.gmra.mrb[0].mxu0 %v6754
      %v6890 = vpop.f32.mrb[0].mxu0
      %v6891 = vadd.f32 0.0, %v6890
      %v6892 = vpop.f32.mrb[0].mxu0
      %v6893 = vpop.f32.mrb[0].mxu0
      %v6894 = vadd.f32 0.0, %v6893
      %v6895 = vpop.f32.mrb[0].mxu0
      %6896 = vmatprep.mubr.bf16.mxu0 0
      %6897 = vmatmul.mubr.bf16.gmra.mrb[0].mxu0 %v6757
      %v6898 = vpop.f32.mrb[0].mxu0
      %v6899 = vadd.f32 0.0, %v6898
      %v6900 = vpop.f32.mrb[0].mxu0
      %v6901 = vpop.f32.mrb[0].mxu0
      %v6902 = vadd.f32 0.0, %v6901
      %v6903 = vpop.f32.mrb[0].mxu0
      %6904 = vmatprep.mubr.bf16.mxu0 0
      %6905 = vmatmul.mubr.bf16.gmra.mrb[0].mxu0 %v6760
      %v6906 = vpop.f32.mrb[0].mxu0
      %v6907 = vadd.f32 0.0, %v6906
      %v6908 = vpop.f32.mrb[0].mxu0
      %v6909 = vpop.f32.mrb[0].mxu0
      %v6910 = vadd.f32 0.0, %v6909
      %v6911 = vpop.f32.mrb[0].mxu0
      %6912 = vmatprep.mubr.bf16.mxu0 0
      %6913 = vmatmul.mubr.bf16.gmra.mrb[0].mxu0 %v6763
      %v6914 = vpop.f32.mrb[0].mxu0
      %v6915 = vadd.f32 0.0, %v6914
      %v6916 = vpop.f32.mrb[0].mxu0
      %v6917 = vpop.f32.mrb[0].mxu0
      %v6918 = vadd.f32 0.0, %v6917
      %v6919 = vpop.f32.mrb[0].mxu0
      %6920 = vmatprep.mubr.bf16.mxu0 0
      %6921 = vmatmul.mubr.bf16.gmra.mrb[0].mxu0 %v6766
      %v6922 = vpop.f32.mrb[0].mxu0
      %v6923 = vadd.f32 0.0, %v6922
      %v6924 = vpop.f32.mrb[0].mxu0
      %v6925 = vpop.f32.mrb[0].mxu0
      %v6926 = vadd.f32 0.0, %v6925
      %v6927 = vpop.f32.mrb[0].mxu0
      %6928 = vdwg.mxu0
      %v6929 = vmul.f32 %v6803, %v793
      %v6930 = vmul.f32 %v6806, %v794
      %v6931 = vmul.f32 %v6811, %v795
      %v6932 = vmul.f32 %v6814, %v796
      %v6933 = vmul.f32 %v6819, %v797
      %v6934 = vmul.f32 %v6822, %v798
      %v6935 = vmul.f32 %v6827, %v799
      %v6936 = vmul.f32 %v6830, %v800
      %v6937 = vmul.f32 %v6835, %v801
      %v6938 = vmul.f32 %v6838, %v802
      %v6939 = vmul.f32 %v6843, %v803
      %v6940 = vmul.f32 %v6846, %v804
      %v6941 = vmul.f32 %v6851, %v805
      %v6942 = vmul.f32 %v6854, %v806
      %v6943 = vmul.f32 %v6859, %v807
      %v6944 = vmul.f32 %v6862, %v808
      %v6945 = vmul.f32 %v6867, %v809
      %v6946 = vmul.f32 %v6870, %v810
      %v6947 = vmul.f32 %v6875, %v811
      %v6948 = vmul.f32 %v6878, %v812
      %v6949 = vmul.f32 %v6883, %v813
      %v6950 = vmul.f32 %v6886, %v814
      %v6951 = vmul.f32 %v6891, %v815
      %v6952 = vmul.f32 %v6894, %v816
      %v6953 = vmul.f32 %v6899, %v817
      %v6954 = vmul.f32 %v6902, %v818
      %v6955 = vmul.f32 %v6907, %v819
      %v6956 = vmul.f32 %v6910, %v820
      %v6957 = vmul.f32 %v6915, %v821
      %v6958 = vmul.f32 %v6918, %v822
      %v6959 = vmul.f32 %v6923, %v823
      %v6960 = vmul.f32 %v6926, %v824
      %v6961 = vld [vmem:[#allocation4] sm:$0xff]
      %v6962 = vld [vmem:[#allocation4 + $0x8] sm:$0xff]
      %v6963 = vld [vmem:[#allocation4 + $0x10] sm:$0xff]
      %v6964 = vld [vmem:[#allocation4 + $0x18] sm:$0xff]
      %v6965 = vld [vmem:[#allocation4 + $0x20] sm:$0xff]
      %v6966 = vld [vmem:[#allocation4 + $0x28] sm:$0xff]
      %v6967 = vld [vmem:[#allocation4 + $0x30] sm:$0xff]
      %v6968 = vld [vmem:[#allocation4 + $0x38] sm:$0xff]
      %v6969 = vld [vmem:[#allocation4 + $0x40] sm:$0xff]
      %v6970 = vld [vmem:[#allocation4 + $0x48] sm:$0xff]
      %v6971 = vld [vmem:[#allocation4 + $0x50] sm:$0xff]
      %v6972 = vld [vmem:[#allocation4 + $0x58] sm:$0xff]
      %v6973 = vld [vmem:[#allocation4 + $0x60] sm:$0xff]
      %v6974 = vld [vmem:[#allocation4 + $0x68] sm:$0xff]
      %v6975 = vld [vmem:[#allocation4 + $0x70] sm:$0xff]
      %v6976 = vld [vmem:[#allocation4 + $0x78] sm:$0xff]
      %v6977 = vld [vmem:[#allocation4 + $0x80] sm:$0xff]
      %v6978 = vld [vmem:[#allocation4 + $0x88] sm:$0xff]
      %v6979 = vld [vmem:[#allocation4 + $0x90] sm:$0xff]
      %v6980 = vld [vmem:[#allocation4 + $0x98] sm:$0xff]
      %v6981 = vld [vmem:[#allocation4 + $0xa0] sm:$0xff]
      %v6982 = vld [vmem:[#allocation4 + $0xa8] sm:$0xff]
      %v6983 = vld [vmem:[#allocation4 + $0xb0] sm:$0xff]
      %v6984 = vld [vmem:[#allocation4 + $0xb8] sm:$0xff]
      %v6985 = vld [vmem:[#allocation4 + $0xc0] sm:$0xff]
      %v6986 = vld [vmem:[#allocation4 + $0xc8] sm:$0xff]
      %v6987 = vld [vmem:[#allocation4 + $0xd0] sm:$0xff]
      %v6988 = vld [vmem:[#allocation4 + $0xd8] sm:$0xff]
      %v6989 = vld [vmem:[#allocation4 + $0xe0] sm:$0xff]
      %v6990 = vld [vmem:[#allocation4 + $0xe8] sm:$0xff]
      %v6991 = vld [vmem:[#allocation4 + $0xf0] sm:$0xff]
      %v6992 = vld [vmem:[#allocation4 + $0xf8] sm:$0xff]
      %v6993 = vadd.f32 %v6961, %v6929
      %v6994 = vadd.f32 %v6962, %v6930
      %v6995 = vadd.f32 %v6963, %v6931
      %v6996 = vadd.f32 %v6964, %v6932
      %v6997 = vadd.f32 %v6965, %v6933
      %v6998 = vadd.f32 %v6966, %v6934
      %v6999 = vadd.f32 %v6967, %v6935
      %v7000 = vadd.f32 %v6968, %v6936
      %v7001 = vadd.f32 %v6969, %v6937
      %v7002 = vadd.f32 %v6970, %v6938
      %v7003 = vadd.f32 %v6971, %v6939
      %v7004 = vadd.f32 %v6972, %v6940
      %v7005 = vadd.f32 %v6973, %v6941
      %v7006 = vadd.f32 %v6974, %v6942
      %v7007 = vadd.f32 %v6975, %v6943
      %v7008 = vadd.f32 %v6976, %v6944
      %v7009 = vadd.f32 %v6977, %v6945
      %v7010 = vadd.f32 %v6978, %v6946
      %v7011 = vadd.f32 %v6979, %v6947
      %v7012 = vadd.f32 %v6980, %v6948
      %v7013 = vadd.f32 %v6981, %v6949
      %v7014 = vadd.f32 %v6982, %v6950
      %v7015 = vadd.f32 %v6983, %v6951
      %v7016 = vadd.f32 %v6984, %v6952
      %v7017 = vadd.f32 %v6985, %v6953
      %v7018 = vadd.f32 %v6986, %v6954
      %v7019 = vadd.f32 %v6987, %v6955
      %v7020 = vadd.f32 %v6988, %v6956
      %v7021 = vadd.f32 %v6989, %v6957
      %v7022 = vadd.f32 %v6990, %v6958
      %v7023 = vadd.f32 %v6991, %v6959
      %v7024 = vadd.f32 %v6992, %v6960
      %7025 = vst.msk [vmem:[#allocation4] sm:$0xff] %vm825, %v6993
      %7026 = vst.msk [vmem:[#allocation4 + $0x8] sm:$0xff] %vm825, %v6994
      %7027 = vst.msk [vmem:[#allocation4 + $0x10] sm:$0xff] %vm825, %v6995
      %7028 = vst.msk [vmem:[#allocation4 + $0x18] sm:$0xff] %vm825, %v6996
      %7029 = vst.msk [vmem:[#allocation4 + $0x20] sm:$0xff] %vm825, %v6997
      %7030 = vst.msk [vmem:[#allocation4 + $0x28] sm:$0xff] %vm825, %v6998
      %7031 = vst.msk [vmem:[#allocation4 + $0x30] sm:$0xff] %vm825, %v6999
      %7032 = vst.msk [vmem:[#allocation4 + $0x38] sm:$0xff] %vm825, %v7000
      %7033 = vst.msk [vmem:[#allocation4 + $0x40] sm:$0xff] %vm825, %v7001
      %7034 = vst.msk [vmem:[#allocation4 + $0x48] sm:$0xff] %vm825, %v7002
      %7035 = vst.msk [vmem:[#allocation4 + $0x50] sm:$0xff] %vm825, %v7003
      %7036 = vst.msk [vmem:[#allocation4 + $0x58] sm:$0xff] %vm825, %v7004
      %7037 = vst.msk [vmem:[#allocation4 + $0x60] sm:$0xff] %vm825, %v7005
      %7038 = vst.msk [vmem:[#allocation4 + $0x68] sm:$0xff] %vm825, %v7006
      %7039 = vst.msk [vmem:[#allocation4 + $0x70] sm:$0xff] %vm825, %v7007
      %7040 = vst.msk [vmem:[#allocation4 + $0x78] sm:$0xff] %vm825, %v7008
      %7041 = vst.msk [vmem:[#allocation4 + $0x80] sm:$0xff] %vm825, %v7009
      %7042 = vst.msk [vmem:[#allocation4 + $0x88] sm:$0xff] %vm825, %v7010
      %7043 = vst.msk [vmem:[#allocation4 + $0x90] sm:$0xff] %vm825, %v7011
      %7044 = vst.msk [vmem:[#allocation4 + $0x98] sm:$0xff] %vm825, %v7012
      %7045 = vst.msk [vmem:[#allocation4 + $0xa0] sm:$0xff] %vm825, %v7013
      %7046 = vst.msk [vmem:[#allocation4 + $0xa8] sm:$0xff] %vm825, %v7014
      %7047 = vst.msk [vmem:[#allocation4 + $0xb0] sm:$0xff] %vm825, %v7015
      %7048 = vst.msk [vmem:[#allocation4 + $0xb8] sm:$0xff] %vm825, %v7016
      %7049 = vst.msk [vmem:[#allocation4 + $0xc0] sm:$0xff] %vm825, %v7017
      %7050 = vst.msk [vmem:[#allocation4 + $0xc8] sm:$0xff] %vm825, %v7018
      %7051 = vst.msk [vmem:[#allocation4 + $0xd0] sm:$0xff] %vm825, %v7019
      %7052 = vst.msk [vmem:[#allocation4 + $0xd8] sm:$0xff] %vm825, %v7020
      %7053 = vst.msk [vmem:[#allocation4 + $0xe0] sm:$0xff] %vm825, %v7021
      %7054 = vst.msk [vmem:[#allocation4 + $0xe8] sm:$0xff] %vm825, %v7022
      %7055 = vst.msk [vmem:[#allocation4 + $0xf0] sm:$0xff] %vm825, %v7023
      %7056 = vst.msk [vmem:[#allocation4 + $0xf8] sm:$0xff] %vm825, %v7024
      %v7057 = vld [vmem:[#allocation3 + $0x8] sm:$0xf8]
      %v7058 = vld [vmem:[#allocation3 + $0x10] sm:$0xff]
      %v7059 = vld [vmem:[#allocation3 + $0x18] sm:$0xff]
      %v7060 = vld [vmem:[#allocation3 + $0x20] sm:$0xff]
      %v7061 = vld [vmem:[#allocation3 + $0x28] sm:$0xff]
      %v7062 = vld [vmem:[#allocation3 + $0x30] sm:$0xff]
      %v7063 = vld [vmem:[#allocation3 + $0x38] sm:$0xff]
      %v7064 = vld [vmem:[#allocation3 + $0x40] sm:$0xff]
      %v7065 = vld [vmem:[#allocation3 + $0x48] sm:$0xff]
      %v7066 = vld [vmem:[#allocation3 + $0x50] sm:$0xff]
      %v7067 = vld [vmem:[#allocation3 + $0x58] sm:$0xff]
      %v7068 = vld [vmem:[#allocation3 + $0x60] sm:$0xff]
      %v7069 = vld [vmem:[#allocation3 + $0x68] sm:$0xff]
      %v7070 = vld [vmem:[#allocation3 + $0x70] sm:$0xff]
      %v7071 = vld [vmem:[#allocation3 + $0x78] sm:$0xff]
      %v7072 = vld [vmem:[#allocation3 + $0x80] sm:$0xff]
      %v7073 = vld [vmem:[#allocation3 + $0x88] sm:$0xf]
      %s7074 = scalar_lea.vmem %s4, 48
      %v7075 = vld [vmem:[%s7074] sm:$0xf]
      %v7076 = vld [vmem:[%s7074 + $0x4] sm:$0xf]
      %v7077 = vld [vmem:[%s7074 + $0x8] sm:$0xf]
      %v7078 = vld [vmem:[%s7074 + $0xc] sm:$0xf]
      %v7080 = vshrl.u32 %v7057, 16
      %v7082 = vrot.slane %v7080, 3
      %v7083 = vshll.u32 %v7057, 16
      %v7085 = vrot.slane %v7083, 4
      %v7086 = vor.u32 %v7082, %v7085
      %v7088 = vshrl.u32 %v7058, 16
      %v7090 = vrot.slane %v7088, 3
      %v7091 = vshll.u32 %v7058, 16
      %v7093 = vrot.slane %v7091, 4
      %v7094 = vor.u32 %v7090, %v7093
      %v7095 = vsel %vm1066, %v7086, %v7094
      %v7097 = vshrl.u32 %v7059, 16
      %v7099 = vrot.slane %v7097, 3
      %v7100 = vshll.u32 %v7059, 16
      %v7102 = vrot.slane %v7100, 4
      %v7103 = vor.u32 %v7099, %v7102
      %v7104 = vsel %vm1066, %v7094, %v7103
      %v7106 = vshrl.u32 %v7060, 16
      %v7108 = vrot.slane %v7106, 3
      %v7109 = vshll.u32 %v7060, 16
      %v7111 = vrot.slane %v7109, 4
      %v7112 = vor.u32 %v7108, %v7111
      %v7113 = vsel %vm1066, %v7103, %v7112
      %v7115 = vshrl.u32 %v7061, 16
      %v7117 = vrot.slane %v7115, 3
      %v7118 = vshll.u32 %v7061, 16
      %v7120 = vrot.slane %v7118, 4
      %v7121 = vor.u32 %v7117, %v7120
      %v7122 = vsel %vm1066, %v7112, %v7121
      %v7124 = vshrl.u32 %v7062, 16
      %v7126 = vrot.slane %v7124, 3
      %v7127 = vshll.u32 %v7062, 16
      %v7129 = vrot.slane %v7127, 4
      %v7130 = vor.u32 %v7126, %v7129
      %v7131 = vsel %vm1066, %v7121, %v7130
      %v7133 = vshrl.u32 %v7063, 16
      %v7135 = vrot.slane %v7133, 3
      %v7136 = vshll.u32 %v7063, 16
      %v7138 = vrot.slane %v7136, 4
      %v7139 = vor.u32 %v7135, %v7138
      %v7140 = vsel %vm1066, %v7130, %v7139
      %v7142 = vshrl.u32 %v7064, 16
      %v7144 = vrot.slane %v7142, 3
      %v7145 = vshll.u32 %v7064, 16
      %v7147 = vrot.slane %v7145, 4
      %v7148 = vor.u32 %v7144, %v7147
      %v7149 = vsel %vm1066, %v7139, %v7148
      %v7151 = vshrl.u32 %v7065, 16
      %v7153 = vrot.slane %v7151, 3
      %v7154 = vshll.u32 %v7065, 16
      %v7156 = vrot.slane %v7154, 4
      %v7157 = vor.u32 %v7153, %v7156
      %v7158 = vsel %vm1066, %v7148, %v7157
      %v7160 = vshrl.u32 %v7066, 16
      %v7162 = vrot.slane %v7160, 3
      %v7163 = vshll.u32 %v7066, 16
      %v7165 = vrot.slane %v7163, 4
      %v7166 = vor.u32 %v7162, %v7165
      %v7167 = vsel %vm1066, %v7157, %v7166
      %v7169 = vshrl.u32 %v7067, 16
      %v7171 = vrot.slane %v7169, 3
      %v7172 = vshll.u32 %v7067, 16
      %v7174 = vrot.slane %v7172, 4
      %v7175 = vor.u32 %v7171, %v7174
      %v7176 = vsel %vm1066, %v7166, %v7175
      %v7178 = vshrl.u32 %v7068, 16
      %v7180 = vrot.slane %v7178, 3
      %v7181 = vshll.u32 %v7068, 16
      %v7183 = vrot.slane %v7181, 4
      %v7184 = vor.u32 %v7180, %v7183
      %v7185 = vsel %vm1066, %v7175, %v7184
      %v7187 = vshrl.u32 %v7069, 16
      %v7189 = vrot.slane %v7187, 3
      %v7190 = vshll.u32 %v7069, 16
      %v7192 = vrot.slane %v7190, 4
      %v7193 = vor.u32 %v7189, %v7192
      %v7194 = vsel %vm1066, %v7184, %v7193
      %v7196 = vshrl.u32 %v7070, 16
      %v7198 = vrot.slane %v7196, 3
      %v7199 = vshll.u32 %v7070, 16
      %v7201 = vrot.slane %v7199, 4
      %v7202 = vor.u32 %v7198, %v7201
      %v7203 = vsel %vm1066, %v7193, %v7202
      %v7205 = vshrl.u32 %v7071, 16
      %v7207 = vrot.slane %v7205, 3
      %v7208 = vshll.u32 %v7071, 16
      %v7210 = vrot.slane %v7208, 4
      %v7211 = vor.u32 %v7207, %v7210
      %v7212 = vsel %vm1066, %v7202, %v7211
      %v7214 = vshrl.u32 %v7072, 16
      %v7216 = vrot.slane %v7214, 3
      %v7217 = vshll.u32 %v7072, 16
      %v7219 = vrot.slane %v7217, 4
      %v7220 = vor.u32 %v7216, %v7219
      %v7221 = vsel %vm1066, %v7211, %v7220
      %v7223 = vshrl.u32 %v7073, 16
      %v7225 = vrot.slane %v7223, 3
      %v7226 = vshll.u32 %v7073, 16
      %v7228 = vrot.slane %v7226, 4
      %v7229 = vor.u32 %v7225, %v7228
      %v7230 = vsel %vm1066, %v7220, %v7229
      %v7235 = vunpack.c.l.b16 %v7075
      %v7236 = vunpack.c.l.b16 %v7076
      %v7237 = vunpack.c.l.b16 %v7077
      %v7238 = vunpack.c.l.b16 %v7078
      %v7239 = vpack.c.b16 %v7236, %v7235
      %v7240 = vpack.c.b16 %v7238, %v7237
      %v7244 = vsel %vm825, %v7095, 0
      %v7247 = vsel %vm825, %v7104, 0
      %v7250 = vsel %vm825, %v7113, 0
      %v7253 = vsel %vm825, %v7122, 0
      %v7256 = vsel %vm825, %v7131, 0
      %v7259 = vsel %vm825, %v7140, 0
      %v7262 = vsel %vm825, %v7149, 0
      %v7265 = vsel %vm825, %v7158, 0
      %v7268 = vsel %vm825, %v7167, 0
      %v7271 = vsel %vm825, %v7176, 0
      %v7274 = vsel %vm825, %v7185, 0
      %v7277 = vsel %vm825, %v7194, 0
      %v7280 = vsel %vm825, %v7203, 0
      %v7283 = vsel %vm825, %v7212, 0
      %v7286 = vsel %vm825, %v7221, 0
      %v7289 = vsel %vm825, %v7230, 0
      %7291 = vmatprep.subr.bf16.mxu0 0
      %7292 = vmatpush1.bf16.msra.mxu0 %v7239
      %7293 = vmatprep.subr.bf16.mxu0 0
      %7294 = vmatpush1.bf16.msra.mxu0 %v7240
      %7295 = vmatprep.subr.bf16.mxu0 0
      %7296 = vmatpush1.bf16.msra.mxu0 0
      %7297 = vmatprep.subr.bf16.mxu0 0
      %7298 = vmatpush1.bf16.msra.mxu0 0
      %7299 = vmatprep.subr.bf16.mxu0 0
      %7300 = vmatpush1.bf16.msra.mxu0 0
      %7301 = vmatprep.subr.bf16.mxu0 0
      %7302 = vmatpush1.bf16.msra.mxu0 0
      %7303 = vmatprep.subr.bf16.mxu0 0
      %7304 = vmatpush1.bf16.msra.mxu0 0
      %7305 = vmatprep.subr.bf16.mxu0 0
      %7306 = vmatpush1.bf16.msra.mxu0 0
      %7307 = vmatprep.subr.bf16.mxu0 0
      %7308 = vmatpush1.bf16.msra.mxu0 0
      %7309 = vmatprep.subr.bf16.mxu0 0
      %7310 = vmatpush1.bf16.msra.mxu0 0
      %7311 = vmatprep.subr.bf16.mxu0 0
      %7312 = vmatpush1.bf16.msra.mxu0 0
      %7313 = vmatprep.subr.bf16.mxu0 0
      %7314 = vmatpush1.bf16.msra.mxu0 0
      %7315 = vmatprep.subr.bf16.mxu0 0
      %7316 = vmatpush1.bf16.msra.mxu0 0
      %7317 = vmatprep.subr.bf16.mxu0 0
      %7318 = vmatpush1.bf16.msra.mxu0 0
      %7319 = vmatprep.subr.bf16.mxu0 0
      %7320 = vmatpush1.bf16.msra.mxu0 0
      %7321 = vmatprep.subr.bf16.mxu0 0
      %7322 = vmatpush1.bf16.msra.mxu0 0
      %7323 = vmatprep.mubr.bf16.mxu0 0
      %7324 = vmatmul.mubr.bf16.gmra.mrb[0].mxu0 %v7244
      %v7325 = vpop.f32.mrb[0].mxu0
      %v7326 = vadd.f32 0.0, %v7325
      %v7327 = vpop.f32.mrb[0].mxu0
      %v7328 = vpop.f32.mrb[0].mxu0
      %v7329 = vadd.f32 0.0, %v7328
      %v7330 = vpop.f32.mrb[0].mxu0
      %7331 = vmatprep.mubr.bf16.mxu0 0
      %7332 = vmatmul.mubr.bf16.gmra.mrb[0].mxu0 %v7247
      %v7333 = vpop.f32.mrb[0].mxu0
      %v7334 = vadd.f32 0.0, %v7333
      %v7335 = vpop.f32.mrb[0].mxu0
      %v7336 = vpop.f32.mrb[0].mxu0
      %v7337 = vadd.f32 0.0, %v7336
      %v7338 = vpop.f32.mrb[0].mxu0
      %7339 = vmatprep.mubr.bf16.mxu0 0
      %7340 = vmatmul.mubr.bf16.gmra.mrb[0].mxu0 %v7250
      %v7341 = vpop.f32.mrb[0].mxu0
      %v7342 = vadd.f32 0.0, %v7341
      %v7343 = vpop.f32.mrb[0].mxu0
      %v7344 = vpop.f32.mrb[0].mxu0
      %v7345 = vadd.f32 0.0, %v7344
      %v7346 = vpop.f32.mrb[0].mxu0
      %7347 = vmatprep.mubr.bf16.mxu0 0
      %7348 = vmatmul.mubr.bf16.gmra.mrb[0].mxu0 %v7253
      %v7349 = vpop.f32.mrb[0].mxu0
      %v7350 = vadd.f32 0.0, %v7349
      %v7351 = vpop.f32.mrb[0].mxu0
      %v7352 = vpop.f32.mrb[0].mxu0
      %v7353 = vadd.f32 0.0, %v7352
      %v7354 = vpop.f32.mrb[0].mxu0
      %7355 = vmatprep.mubr.bf16.mxu0 0
      %7356 = vmatmul.mubr.bf16.gmra.mrb[0].mxu0 %v7256
      %v7357 = vpop.f32.mrb[0].mxu0
      %v7358 = vadd.f32 0.0, %v7357
      %v7359 = vpop.f32.mrb[0].mxu0
      %v7360 = vpop.f32.mrb[0].mxu0
      %v7361 = vadd.f32 0.0, %v7360
      %v7362 = vpop.f32.mrb[0].mxu0
      %7363 = vmatprep.mubr.bf16.mxu0 0
      %7364 = vmatmul.mubr.bf16.gmra.mrb[0].mxu0 %v7259
      %v7365 = vpop.f32.mrb[0].mxu0
      %v7366 = vadd.f32 0.0, %v7365
      %v7367 = vpop.f32.mrb[0].mxu0
      %v7368 = vpop.f32.mrb[0].mxu0
      %v7369 = vadd.f32 0.0, %v7368
      %v7370 = vpop.f32.mrb[0].mxu0
      %7371 = vmatprep.mubr.bf16.mxu0 0
      %7372 = vmatmul.mubr.bf16.gmra.mrb[0].mxu0 %v7262
      %v7373 = vpop.f32.mrb[0].mxu0
      %v7374 = vadd.f32 0.0, %v7373
      %v7375 = vpop.f32.mrb[0].mxu0
      %v7376 = vpop.f32.mrb[0].mxu0
      %v7377 = vadd.f32 0.0, %v7376
      %v7378 = vpop.f32.mrb[0].mxu0
      %7379 = vmatprep.mubr.bf16.mxu0 0
      %7380 = vmatmul.mubr.bf16.gmra.mrb[0].mxu0 %v7265
      %v7381 = vpop.f32.mrb[0].mxu0
      %v7382 = vadd.f32 0.0, %v7381
      %v7383 = vpop.f32.mrb[0].mxu0
      %v7384 = vpop.f32.mrb[0].mxu0
      %v7385 = vadd.f32 0.0, %v7384
      %v7386 = vpop.f32.mrb[0].mxu0
      %7387 = vmatprep.mubr.bf16.mxu0 0
      %7388 = vmatmul.mubr.bf16.gmra.mrb[0].mxu0 %v7268
      %v7389 = vpop.f32.mrb[0].mxu0
      %v7390 = vadd.f32 0.0, %v7389
      %v7391 = vpop.f32.mrb[0].mxu0
      %v7392 = vpop.f32.mrb[0].mxu0
      %v7393 = vadd.f32 0.0, %v7392
      %v7394 = vpop.f32.mrb[0].mxu0
      %7395 = vmatprep.mubr.bf16.mxu0 0
      %7396 = vmatmul.mubr.bf16.gmra.mrb[0].mxu0 %v7271
      %v7397 = vpop.f32.mrb[0].mxu0
      %v7398 = vadd.f32 0.0, %v7397
      %v7399 = vpop.f32.mrb[0].mxu0
      %v7400 = vpop.f32.mrb[0].mxu0
      %v7401 = vadd.f32 0.0, %v7400
      %v7402 = vpop.f32.mrb[0].mxu0
      %7403 = vmatprep.mubr.bf16.mxu0 0
      %7404 = vmatmul.mubr.bf16.gmra.mrb[0].mxu0 %v7274
      %v7405 = vpop.f32.mrb[0].mxu0
      %v7406 = vadd.f32 0.0, %v7405
      %v7407 = vpop.f32.mrb[0].mxu0
      %v7408 = vpop.f32.mrb[0].mxu0
      %v7409 = vadd.f32 0.0, %v7408
      %v7410 = vpop.f32.mrb[0].mxu0
      %7411 = vmatprep.mubr.bf16.mxu0 0
      %7412 = vmatmul.mubr.bf16.gmra.mrb[0].mxu0 %v7277
      %v7413 = vpop.f32.mrb[0].mxu0
      %v7414 = vadd.f32 0.0, %v7413
      %v7415 = vpop.f32.mrb[0].mxu0
      %v7416 = vpop.f32.mrb[0].mxu0
      %v7417 = vadd.f32 0.0, %v7416
      %v7418 = vpop.f32.mrb[0].mxu0
      %7419 = vmatprep.mubr.bf16.mxu0 0
      %7420 = vmatmul.mubr.bf16.gmra.mrb[0].mxu0 %v7280
      %v7421 = vpop.f32.mrb[0].mxu0
      %v7422 = vadd.f32 0.0, %v7421
      %v7423 = vpop.f32.mrb[0].mxu0
      %v7424 = vpop.f32.mrb[0].mxu0
      %v7425 = vadd.f32 0.0, %v7424
      %v7426 = vpop.f32.mrb[0].mxu0
      %7427 = vmatprep.mubr.bf16.mxu0 0
      %7428 = vmatmul.mubr.bf16.gmra.mrb[0].mxu0 %v7283
      %v7429 = vpop.f32.mrb[0].mxu0
      %v7430 = vadd.f32 0.0, %v7429
      %v7431 = vpop.f32.mrb[0].mxu0
      %v7432 = vpop.f32.mrb[0].mxu0
      %v7433 = vadd.f32 0.0, %v7432
      %v7434 = vpop.f32.mrb[0].mxu0
      %7435 = vmatprep.mubr.bf16.mxu0 0
      %7436 = vmatmul.mubr.bf16.gmra.mrb[0].mxu0 %v7286
      %v7437 = vpop.f32.mrb[0].mxu0
      %v7438 = vadd.f32 0.0, %v7437
      %v7439 = vpop.f32.mrb[0].mxu0
      %v7440 = vpop.f32.mrb[0].mxu0
      %v7441 = vadd.f32 0.0, %v7440
      %v7442 = vpop.f32.mrb[0].mxu0
      %7443 = vmatprep.mubr.bf16.mxu0 0
      %7444 = vmatmul.mubr.bf16.gmra.mrb[0].mxu0 %v7289
      %v7445 = vpop.f32.mrb[0].mxu0
      %v7446 = vadd.f32 0.0, %v7445
      %v7447 = vpop.f32.mrb[0].mxu0
      %v7448 = vpop.f32.mrb[0].mxu0
      %v7449 = vadd.f32 0.0, %v7448
      %v7450 = vpop.f32.mrb[0].mxu0
      %7451 = vdwg.mxu0
      %v7452 = vmul.f32 %v7326, %v729
      %v7453 = vmul.f32 %v7329, %v730
      %v7454 = vmul.f32 %v7334, %v731
      %v7455 = vmul.f32 %v7337, %v732
      %v7456 = vmul.f32 %v7342, %v733
      %v7457 = vmul.f32 %v7345, %v734
      %v7458 = vmul.f32 %v7350, %v735
      %v7459 = vmul.f32 %v7353, %v736
      %v7460 = vmul.f32 %v7358, %v737
      %v7461 = vmul.f32 %v7361, %v738
      %v7462 = vmul.f32 %v7366, %v739
      %v7463 = vmul.f32 %v7369, %v740
      %v7464 = vmul.f32 %v7374, %v741
      %v7465 = vmul.f32 %v7377, %v742
      %v7466 = vmul.f32 %v7382, %v743
      %v7467 = vmul.f32 %v7385, %v744
      %v7468 = vmul.f32 %v7390, %v745
      %v7469 = vmul.f32 %v7393, %v746
      %v7470 = vmul.f32 %v7398, %v747
      %v7471 = vmul.f32 %v7401, %v748
      %v7472 = vmul.f32 %v7406, %v749
      %v7473 = vmul.f32 %v7409, %v750
      %v7474 = vmul.f32 %v7414, %v751
      %v7475 = vmul.f32 %v7417, %v752
      %v7476 = vmul.f32 %v7422, %v753
      %v7477 = vmul.f32 %v7425, %v754
      %v7478 = vmul.f32 %v7430, %v755
      %v7479 = vmul.f32 %v7433, %v756
      %v7480 = vmul.f32 %v7438, %v757
      %v7481 = vmul.f32 %v7441, %v758
      %v7482 = vmul.f32 %v7446, %v759
      %v7483 = vmul.f32 %v7449, %v760
      %v7484 = vld [vmem:[#allocation4] sm:$0xff]
      %v7485 = vld [vmem:[#allocation4 + $0x8] sm:$0xff]
      %v7486 = vld [vmem:[#allocation4 + $0x10] sm:$0xff]
      %v7487 = vld [vmem:[#allocation4 + $0x18] sm:$0xff]
      %v7488 = vld [vmem:[#allocation4 + $0x20] sm:$0xff]
      %v7489 = vld [vmem:[#allocation4 + $0x28] sm:$0xff]
      %v7490 = vld [vmem:[#allocation4 + $0x30] sm:$0xff]
      %v7491 = vld [vmem:[#allocation4 + $0x38] sm:$0xff]
      %v7492 = vld [vmem:[#allocation4 + $0x40] sm:$0xff]
      %v7493 = vld [vmem:[#allocation4 + $0x48] sm:$0xff]
      %v7494 = vld [vmem:[#allocation4 + $0x50] sm:$0xff]
      %v7495 = vld [vmem:[#allocation4 + $0x58] sm:$0xff]
      %v7496 = vld [vmem:[#allocation4 + $0x60] sm:$0xff]
      %v7497 = vld [vmem:[#allocation4 + $0x68] sm:$0xff]
      %v7498 = vld [vmem:[#allocation4 + $0x70] sm:$0xff]
      %v7499 = vld [vmem:[#allocation4 + $0x78] sm:$0xff]
      %v7500 = vld [vmem:[#allocation4 + $0x80] sm:$0xff]
      %v7501 = vld [vmem:[#allocation4 + $0x88] sm:$0xff]
      %v7502 = vld [vmem:[#allocation4 + $0x90] sm:$0xff]
      %v7503 = vld [vmem:[#allocation4 + $0x98] sm:$0xff]
      %v7504 = vld [vmem:[#allocation4 + $0xa0] sm:$0xff]
      %v7505 = vld [vmem:[#allocation4 + $0xa8] sm:$0xff]
      %v7506 = vld [vmem:[#allocation4 + $0xb0] sm:$0xff]
      %v7507 = vld [vmem:[#allocation4 + $0xb8] sm:$0xff]
      %v7508 = vld [vmem:[#allocation4 + $0xc0] sm:$0xff]
      %v7509 = vld [vmem:[#allocation4 + $0xc8] sm:$0xff]
      %v7510 = vld [vmem:[#allocation4 + $0xd0] sm:$0xff]
      %v7511 = vld [vmem:[#allocation4 + $0xd8] sm:$0xff]
      %v7512 = vld [vmem:[#allocation4 + $0xe0] sm:$0xff]
      %v7513 = vld [vmem:[#allocation4 + $0xe8] sm:$0xff]
      %v7514 = vld [vmem:[#allocation4 + $0xf0] sm:$0xff]
      %v7515 = vld [vmem:[#allocation4 + $0xf8] sm:$0xff]
      %v7516 = vadd.f32 %v7484, %v7452
      %v7517 = vadd.f32 %v7485, %v7453
      %v7518 = vadd.f32 %v7486, %v7454
      %v7519 = vadd.f32 %v7487, %v7455
      %v7520 = vadd.f32 %v7488, %v7456
      %v7521 = vadd.f32 %v7489, %v7457
      %v7522 = vadd.f32 %v7490, %v7458
      %v7523 = vadd.f32 %v7491, %v7459
      %v7524 = vadd.f32 %v7492, %v7460
      %v7525 = vadd.f32 %v7493, %v7461
      %v7526 = vadd.f32 %v7494, %v7462
      %v7527 = vadd.f32 %v7495, %v7463
      %v7528 = vadd.f32 %v7496, %v7464
      %v7529 = vadd.f32 %v7497, %v7465
      %v7530 = vadd.f32 %v7498, %v7466
      %v7531 = vadd.f32 %v7499, %v7467
      %v7532 = vadd.f32 %v7500, %v7468
      %v7533 = vadd.f32 %v7501, %v7469
      %v7534 = vadd.f32 %v7502, %v7470
      %v7535 = vadd.f32 %v7503, %v7471
      %v7536 = vadd.f32 %v7504, %v7472
      %v7537 = vadd.f32 %v7505, %v7473
      %v7538 = vadd.f32 %v7506, %v7474
      %v7539 = vadd.f32 %v7507, %v7475
      %v7540 = vadd.f32 %v7508, %v7476
      %v7541 = vadd.f32 %v7509, %v7477
      %v7542 = vadd.f32 %v7510, %v7478
      %v7543 = vadd.f32 %v7511, %v7479
      %v7544 = vadd.f32 %v7512, %v7480
      %v7545 = vadd.f32 %v7513, %v7481
      %v7546 = vadd.f32 %v7514, %v7482
      %v7547 = vadd.f32 %v7515, %v7483
      %7548 = vst.msk [vmem:[#allocation4] sm:$0xff] %vm825, %v7516
      %7549 = vst.msk [vmem:[#allocation4 + $0x8] sm:$0xff] %vm825, %v7517
      %7550 = vst.msk [vmem:[#allocation4 + $0x10] sm:$0xff] %vm825, %v7518
      %7551 = vst.msk [vmem:[#allocation4 + $0x18] sm:$0xff] %vm825, %v7519
      %7552 = vst.msk [vmem:[#allocation4 + $0x20] sm:$0xff] %vm825, %v7520
      %7553 = vst.msk [vmem:[#allocation4 + $0x28] sm:$0xff] %vm825, %v7521
      %7554 = vst.msk [vmem:[#allocation4 + $0x30] sm:$0xff] %vm825, %v7522
      %7555 = vst.msk [vmem:[#allocation4 + $0x38] sm:$0xff] %vm825, %v7523
      %7556 = vst.msk [vmem:[#allocation4 + $0x40] sm:$0xff] %vm825, %v7524
      %7557 = vst.msk [vmem:[#allocation4 + $0x48] sm:$0xff] %vm825, %v7525
      %7558 = vst.msk [vmem:[#allocation4 + $0x50] sm:$0xff] %vm825, %v7526
      %7559 = vst.msk [vmem:[#allocation4 + $0x58] sm:$0xff] %vm825, %v7527
      %7560 = vst.msk [vmem:[#allocation4 + $0x60] sm:$0xff] %vm825, %v7528
      %7561 = vst.msk [vmem:[#allocation4 + $0x68] sm:$0xff] %vm825, %v7529
      %7562 = vst.msk [vmem:[#allocation4 + $0x70] sm:$0xff] %vm825, %v7530
      %7563 = vst.msk [vmem:[#allocation4 + $0x78] sm:$0xff] %vm825, %v7531
      %7564 = vst.msk [vmem:[#allocation4 + $0x80] sm:$0xff] %vm825, %v7532
      %7565 = vst.msk [vmem:[#allocation4 + $0x88] sm:$0xff] %vm825, %v7533
      %7566 = vst.msk [vmem:[#allocation4 + $0x90] sm:$0xff] %vm825, %v7534
      %7567 = vst.msk [vmem:[#allocation4 + $0x98] sm:$0xff] %vm825, %v7535
      %7568 = vst.msk [vmem:[#allocation4 + $0xa0] sm:$0xff] %vm825, %v7536
      %7569 = vst.msk [vmem:[#allocation4 + $0xa8] sm:$0xff] %vm825, %v7537
      %7570 = vst.msk [vmem:[#allocation4 + $0xb0] sm:$0xff] %vm825, %v7538
      %7571 = vst.msk [vmem:[#allocation4 + $0xb8] sm:$0xff] %vm825, %v7539
      %7572 = vst.msk [vmem:[#allocation4 + $0xc0] sm:$0xff] %vm825, %v7540
      %7573 = vst.msk [vmem:[#allocation4 + $0xc8] sm:$0xff] %vm825, %v7541
      %7574 = vst.msk [vmem:[#allocation4 + $0xd0] sm:$0xff] %vm825, %v7542
      %7575 = vst.msk [vmem:[#allocation4 + $0xd8] sm:$0xff] %vm825, %v7543
      %7576 = vst.msk [vmem:[#allocation4 + $0xe0] sm:$0xff] %vm825, %v7544
      %7577 = vst.msk [vmem:[#allocation4 + $0xe8] sm:$0xff] %vm825, %v7545
      %7578 = vst.msk [vmem:[#allocation4 + $0xf0] sm:$0xff] %vm825, %v7546
      %7579 = vst.msk [vmem:[#allocation4 + $0xf8] sm:$0xff] %vm825, %v7547
      %v7580 = vld [vmem:[#allocation3 + $0x8] sm:$0xf0]
      %v7581 = vld [vmem:[#allocation3 + $0x10] sm:$0xff]
      %v7582 = vld [vmem:[#allocation3 + $0x18] sm:$0xff]
      %v7583 = vld [vmem:[#allocation3 + $0x20] sm:$0xff]
      %v7584 = vld [vmem:[#allocation3 + $0x28] sm:$0xff]
      %v7585 = vld [vmem:[#allocation3 + $0x30] sm:$0xff]
      %v7586 = vld [vmem:[#allocation3 + $0x38] sm:$0xff]
      %v7587 = vld [vmem:[#allocation3 + $0x40] sm:$0xff]
      %v7588 = vld [vmem:[#allocation3 + $0x48] sm:$0xff]
      %v7589 = vld [vmem:[#allocation3 + $0x50] sm:$0xff]
      %v7590 = vld [vmem:[#allocation3 + $0x58] sm:$0xff]
      %v7591 = vld [vmem:[#allocation3 + $0x60] sm:$0xff]
      %v7592 = vld [vmem:[#allocation3 + $0x68] sm:$0xff]
      %v7593 = vld [vmem:[#allocation3 + $0x70] sm:$0xff]
      %v7594 = vld [vmem:[#allocation3 + $0x78] sm:$0xff]
      %v7595 = vld [vmem:[#allocation3 + $0x80] sm:$0xff]
      %v7596 = vld [vmem:[#allocation3 + $0x88] sm:$0xf]
      %s7597 = scalar_lea.vmem %s4, 64
      %v7598 = vld [vmem:[%s7597] sm:$0xf]
      %v7599 = vld [vmem:[%s7597 + $0x4] sm:$0xf]
      %v7600 = vld [vmem:[%s7597 + $0x8] sm:$0xf]
      %v7601 = vld [vmem:[%s7597 + $0xc] sm:$0xf]
      %v7619 = vrot.slane %v7580, 4
      %v7620 = vrot.slane %v7581, 4
      %v7621 = vsel %vm1607, %v7619, %v7620
      %v7622 = vrot.slane %v7582, 4
      %v7623 = vsel %vm1607, %v7620, %v7622
      %v7624 = vrot.slane %v7583, 4
      %v7625 = vsel %vm1607, %v7622, %v7624
      %v7626 = vrot.slane %v7584, 4
      %v7627 = vsel %vm1607, %v7624, %v7626
      %v7628 = vrot.slane %v7585, 4
      %v7629 = vsel %vm1607, %v7626, %v7628
      %v7630 = vrot.slane %v7586, 4
      %v7631 = vsel %vm1607, %v7628, %v7630
      %v7632 = vrot.slane %v7587, 4
      %v7633 = vsel %vm1607, %v7630, %v7632
      %v7634 = vrot.slane %v7588, 4
      %v7635 = vsel %vm1607, %v7632, %v7634
      %v7636 = vrot.slane %v7589, 4
      %v7637 = vsel %vm1607, %v7634, %v7636
      %v7638 = vrot.slane %v7590, 4
      %v7639 = vsel %vm1607, %v7636, %v7638
      %v7640 = vrot.slane %v7591, 4
      %v7641 = vsel %vm1607, %v7638, %v7640
      %v7642 = vrot.slane %v7592, 4
      %v7643 = vsel %vm1607, %v7640, %v7642
      %v7644 = vrot.slane %v7593, 4
      %v7645 = vsel %vm1607, %v7642, %v7644
      %v7646 = vrot.slane %v7594, 4
      %v7647 = vsel %vm1607, %v7644, %v7646
      %v7648 = vrot.slane %v7595, 4
      %v7649 = vsel %vm1607, %v7646, %v7648
      %v7650 = vrot.slane %v7596, 4
      %v7651 = vsel %vm1607, %v7648, %v7650
      %v7656 = vunpack.c.l.b16 %v7598
      %v7657 = vunpack.c.l.b16 %v7599
      %v7658 = vunpack.c.l.b16 %v7600
      %v7659 = vunpack.c.l.b16 %v7601
      %v7660 = vpack.c.b16 %v7657, %v7656
      %v7661 = vpack.c.b16 %v7659, %v7658
      %v7665 = vsel %vm825, %v7621, 0
      %v7668 = vsel %vm825, %v7623, 0
      %v7671 = vsel %vm825, %v7625, 0
      %v7674 = vsel %vm825, %v7627, 0
      %v7677 = vsel %vm825, %v7629, 0
      %v7680 = vsel %vm825, %v7631, 0
      %v7683 = vsel %vm825, %v7633, 0
      %v7686 = vsel %vm825, %v7635, 0
      %v7689 = vsel %vm825, %v7637, 0
      %v7692 = vsel %vm825, %v7639, 0
      %v7695 = vsel %vm825, %v7641, 0
      %v7698 = vsel %vm825, %v7643, 0
      %v7701 = vsel %vm825, %v7645, 0
      %v7704 = vsel %vm825, %v7647, 0
      %v7707 = vsel %vm825, %v7649, 0
      %v7710 = vsel %vm825, %v7651, 0
      %7712 = vmatprep.subr.bf16.mxu0 0
      %7713 = vmatpush1.bf16.msra.mxu0 %v7660
      %7714 = vmatprep.subr.bf16.mxu0 0
      %7715 = vmatpush1.bf16.msra.mxu0 %v7661
      %7716 = vmatprep.subr.bf16.mxu0 0
      %7717 = vmatpush1.bf16.msra.mxu0 0
      %7718 = vmatprep.subr.bf16.mxu0 0
      %7719 = vmatpush1.bf16.msra.mxu0 0
      %7720 = vmatprep.subr.bf16.mxu0 0
      %7721 = vmatpush1.bf16.msra.mxu0 0
      %7722 = vmatprep.subr.bf16.mxu0 0
      %7723 = vmatpush1.bf16.msra.mxu0 0
      %7724 = vmatprep.subr.bf16.mxu0 0
      %7725 = vmatpush1.bf16.msra.mxu0 0
      %7726 = vmatprep.subr.bf16.mxu0 0
      %7727 = vmatpush1.bf16.msra.mxu0 0
      %7728 = vmatprep.subr.bf16.mxu0 0
      %7729 = vmatpush1.bf16.msra.mxu0 0
      %7730 = vmatprep.subr.bf16.mxu0 0
      %7731 = vmatpush1.bf16.msra.mxu0 0
      %7732 = vmatprep.subr.bf16.mxu0 0
      %7733 = vmatpush1.bf16.msra.mxu0 0
      %7734 = vmatprep.subr.bf16.mxu0 0
      %7735 = vmatpush1.bf16.msra.mxu0 0
      %7736 = vmatprep.subr.bf16.mxu0 0
      %7737 = vmatpush1.bf16.msra.mxu0 0
      %7738 = vmatprep.subr.bf16.mxu0 0
      %7739 = vmatpush1.bf16.msra.mxu0 0
      %7740 = vmatprep.subr.bf16.mxu0 0
      %7741 = vmatpush1.bf16.msra.mxu0 0
      %7742 = vmatprep.subr.bf16.mxu0 0
      %7743 = vmatpush1.bf16.msra.mxu0 0
      %7744 = vmatprep.mubr.bf16.mxu0 0
      %7745 = vmatmul.mubr.bf16.gmra.mrb[0].mxu0 %v7665
      %v7746 = vpop.f32.mrb[0].mxu0
      %v7747 = vadd.f32 0.0, %v7746
      %v7748 = vpop.f32.mrb[0].mxu0
      %v7749 = vpop.f32.mrb[0].mxu0
      %v7750 = vadd.f32 0.0, %v7749
      %v7751 = vpop.f32.mrb[0].mxu0
      %7752 = vmatprep.mubr.bf16.mxu0 0
      %7753 = vmatmul.mubr.bf16.gmra.mrb[0].mxu0 %v7668
      %v7754 = vpop.f32.mrb[0].mxu0
      %v7755 = vadd.f32 0.0, %v7754
      %v7756 = vpop.f32.mrb[0].mxu0
      %v7757 = vpop.f32.mrb[0].mxu0
      %v7758 = vadd.f32 0.0, %v7757
      %v7759 = vpop.f32.mrb[0].mxu0
      %7760 = vmatprep.mubr.bf16.mxu0 0
      %7761 = vmatmul.mubr.bf16.gmra.mrb[0].mxu0 %v7671
      %v7762 = vpop.f32.mrb[0].mxu0
      %v7763 = vadd.f32 0.0, %v7762
      %v7764 = vpop.f32.mrb[0].mxu0
      %v7765 = vpop.f32.mrb[0].mxu0
      %v7766 = vadd.f32 0.0, %v7765
      %v7767 = vpop.f32.mrb[0].mxu0
      %7768 = vmatprep.mubr.bf16.mxu0 0
      %7769 = vmatmul.mubr.bf16.gmra.mrb[0].mxu0 %v7674
      %v7770 = vpop.f32.mrb[0].mxu0
      %v7771 = vadd.f32 0.0, %v7770
      %v7772 = vpop.f32.mrb[0].mxu0
      %v7773 = vpop.f32.mrb[0].mxu0
      %v7774 = vadd.f32 0.0, %v7773
      %v7775 = vpop.f32.mrb[0].mxu0
      %7776 = vmatprep.mubr.bf16.mxu0 0
      %7777 = vmatmul.mubr.bf16.gmra.mrb[0].mxu0 %v7677
      %v7778 = vpop.f32.mrb[0].mxu0
      %v7779 = vadd.f32 0.0, %v7778
      %v7780 = vpop.f32.mrb[0].mxu0
      %v7781 = vpop.f32.mrb[0].mxu0
      %v7782 = vadd.f32 0.0, %v7781
      %v7783 = vpop.f32.mrb[0].mxu0
      %7784 = vmatprep.mubr.bf16.mxu0 0
      %7785 = vmatmul.mubr.bf16.gmra.mrb[0].mxu0 %v7680
      %v7786 = vpop.f32.mrb[0].mxu0
      %v7787 = vadd.f32 0.0, %v7786
      %v7788 = vpop.f32.mrb[0].mxu0
      %v7789 = vpop.f32.mrb[0].mxu0
      %v7790 = vadd.f32 0.0, %v7789
      %v7791 = vpop.f32.mrb[0].mxu0
      %7792 = vmatprep.mubr.bf16.mxu0 0
      %7793 = vmatmul.mubr.bf16.gmra.mrb[0].mxu0 %v7683
      %v7794 = vpop.f32.mrb[0].mxu0
      %v7795 = vadd.f32 0.0, %v7794
      %v7796 = vpop.f32.mrb[0].mxu0
      %v7797 = vpop.f32.mrb[0].mxu0
      %v7798 = vadd.f32 0.0, %v7797
      %v7799 = vpop.f32.mrb[0].mxu0
      %7800 = vmatprep.mubr.bf16.mxu0 0
      %7801 = vmatmul.mubr.bf16.gmra.mrb[0].mxu0 %v7686
      %v7802 = vpop.f32.mrb[0].mxu0
      %v7803 = vadd.f32 0.0, %v7802
      %v7804 = vpop.f32.mrb[0].mxu0
      %v7805 = vpop.f32.mrb[0].mxu0
      %v7806 = vadd.f32 0.0, %v7805
      %v7807 = vpop.f32.mrb[0].mxu0
      %7808 = vmatprep.mubr.bf16.mxu0 0
      %7809 = vmatmul.mubr.bf16.gmra.mrb[0].mxu0 %v7689
      %v7810 = vpop.f32.mrb[0].mxu0
      %v7811 = vadd.f32 0.0, %v7810
      %v7812 = vpop.f32.mrb[0].mxu0
      %v7813 = vpop.f32.mrb[0].mxu0
      %v7814 = vadd.f32 0.0, %v7813
      %v7815 = vpop.f32.mrb[0].mxu0
      %7816 = vmatprep.mubr.bf16.mxu0 0
      %7817 = vmatmul.mubr.bf16.gmra.mrb[0].mxu0 %v7692
      %v7818 = vpop.f32.mrb[0].mxu0
      %v7819 = vadd.f32 0.0, %v7818
      %v7820 = vpop.f32.mrb[0].mxu0
      %v7821 = vpop.f32.mrb[0].mxu0
      %v7822 = vadd.f32 0.0, %v7821
      %v7823 = vpop.f32.mrb[0].mxu0
      %7824 = vmatprep.mubr.bf16.mxu0 0
      %7825 = vmatmul.mubr.bf16.gmra.mrb[0].mxu0 %v7695
      %v7826 = vpop.f32.mrb[0].mxu0
      %v7827 = vadd.f32 0.0, %v7826
      %v7828 = vpop.f32.mrb[0].mxu0
      %v7829 = vpop.f32.mrb[0].mxu0
      %v7830 = vadd.f32 0.0, %v7829
      %v7831 = vpop.f32.mrb[0].mxu0
      %7832 = vmatprep.mubr.bf16.mxu0 0
      %7833 = vmatmul.mubr.bf16.gmra.mrb[0].mxu0 %v7698
      %v7834 = vpop.f32.mrb[0].mxu0
      %v7835 = vadd.f32 0.0, %v7834
      %v7836 = vpop.f32.mrb[0].mxu0
      %v7837 = vpop.f32.mrb[0].mxu0
      %v7838 = vadd.f32 0.0, %v7837
      %v7839 = vpop.f32.mrb[0].mxu0
      %7840 = vmatprep.mubr.bf16.mxu0 0
      %7841 = vmatmul.mubr.bf16.gmra.mrb[0].mxu0 %v7701
      %v7842 = vpop.f32.mrb[0].mxu0
      %v7843 = vadd.f32 0.0, %v7842
      %v7844 = vpop.f32.mrb[0].mxu0
      %v7845 = vpop.f32.mrb[0].mxu0
      %v7846 = vadd.f32 0.0, %v7845
      %v7847 = vpop.f32.mrb[0].mxu0
      %7848 = vmatprep.mubr.bf16.mxu0 0
      %7849 = vmatmul.mubr.bf16.gmra.mrb[0].mxu0 %v7704
      %v7850 = vpop.f32.mrb[0].mxu0
      %v7851 = vadd.f32 0.0, %v7850
      %v7852 = vpop.f32.mrb[0].mxu0
      %v7853 = vpop.f32.mrb[0].mxu0
      %v7854 = vadd.f32 0.0, %v7853
      %v7855 = vpop.f32.mrb[0].mxu0
      %7856 = vmatprep.mubr.bf16.mxu0 0
      %7857 = vmatmul.mubr.bf16.gmra.mrb[0].mxu0 %v7707
      %v7858 = vpop.f32.mrb[0].mxu0
      %v7859 = vadd.f32 0.0, %v7858
      %v7860 = vpop.f32.mrb[0].mxu0
      %v7861 = vpop.f32.mrb[0].mxu0
      %v7862 = vadd.f32 0.0, %v7861
      %v7863 = vpop.f32.mrb[0].mxu0
      %7864 = vmatprep.mubr.bf16.mxu0 0
      %7865 = vmatmul.mubr.bf16.gmra.mrb[0].mxu0 %v7710
      %v7866 = vpop.f32.mrb[0].mxu0
      %v7867 = vadd.f32 0.0, %v7866
      %v7868 = vpop.f32.mrb[0].mxu0
      %v7869 = vpop.f32.mrb[0].mxu0
      %v7870 = vadd.f32 0.0, %v7869
      %v7871 = vpop.f32.mrb[0].mxu0
      %7872 = vdwg.mxu0
      %v7873 = vld [vmem:[#allocation4] sm:$0xff]
      %v7874 = vld [vmem:[#allocation4 + $0x8] sm:$0xff]
      %v7875 = vld [vmem:[#allocation4 + $0x10] sm:$0xff]
      %v7876 = vld [vmem:[#allocation4 + $0x18] sm:$0xff]
      %v7877 = vld [vmem:[#allocation4 + $0x20] sm:$0xff]
      %v7878 = vld [vmem:[#allocation4 + $0x28] sm:$0xff]
      %v7879 = vld [vmem:[#allocation4 + $0x30] sm:$0xff]
      %v7880 = vld [vmem:[#allocation4 + $0x38] sm:$0xff]
      %v7881 = vld [vmem:[#allocation4 + $0x40] sm:$0xff]
      %v7882 = vld [vmem:[#allocation4 + $0x48] sm:$0xff]
      %v7883 = vld [vmem:[#allocation4 + $0x50] sm:$0xff]
      %v7884 = vld [vmem:[#allocation4 + $0x58] sm:$0xff]
      %v7885 = vld [vmem:[#allocation4 + $0x60] sm:$0xff]
      %v7886 = vld [vmem:[#allocation4 + $0x68] sm:$0xff]
      %v7887 = vld [vmem:[#allocation4 + $0x70] sm:$0xff]
      %v7888 = vld [vmem:[#allocation4 + $0x78] sm:$0xff]
      %v7889 = vld [vmem:[#allocation4 + $0x80] sm:$0xff]
      %v7890 = vld [vmem:[#allocation4 + $0x88] sm:$0xff]
      %v7891 = vld [vmem:[#allocation4 + $0x90] sm:$0xff]
      %v7892 = vld [vmem:[#allocation4 + $0x98] sm:$0xff]
      %v7893 = vld [vmem:[#allocation4 + $0xa0] sm:$0xff]
      %v7894 = vld [vmem:[#allocation4 + $0xa8] sm:$0xff]
      %v7895 = vld [vmem:[#allocation4 + $0xb0] sm:$0xff]
      %v7896 = vld [vmem:[#allocation4 + $0xb8] sm:$0xff]
      %v7897 = vld [vmem:[#allocation4 + $0xc0] sm:$0xff]
      %v7898 = vld [vmem:[#allocation4 + $0xc8] sm:$0xff]
      %v7899 = vld [vmem:[#allocation4 + $0xd0] sm:$0xff]
      %v7900 = vld [vmem:[#allocation4 + $0xd8] sm:$0xff]
      %v7901 = vld [vmem:[#allocation4 + $0xe0] sm:$0xff]
      %v7902 = vld [vmem:[#allocation4 + $0xe8] sm:$0xff]
      %v7903 = vld [vmem:[#allocation4 + $0xf0] sm:$0xff]
      %v7904 = vld [vmem:[#allocation4 + $0xf8] sm:$0xff]
      %v7905 = vadd.f32 %v7873, %v7747
      %v7906 = vadd.f32 %v7874, %v7750
      %v7907 = vadd.f32 %v7875, %v7755
      %v7908 = vadd.f32 %v7876, %v7758
      %v7909 = vadd.f32 %v7877, %v7763
      %v7910 = vadd.f32 %v7878, %v7766
      %v7911 = vadd.f32 %v7879, %v7771
      %v7912 = vadd.f32 %v7880, %v7774
      %v7913 = vadd.f32 %v7881, %v7779
      %v7914 = vadd.f32 %v7882, %v7782
      %v7915 = vadd.f32 %v7883, %v7787
      %v7916 = vadd.f32 %v7884, %v7790
      %v7917 = vadd.f32 %v7885, %v7795
      %v7918 = vadd.f32 %v7886, %v7798
      %v7919 = vadd.f32 %v7887, %v7803
      %v7920 = vadd.f32 %v7888, %v7806
      %v7921 = vadd.f32 %v7889, %v7811
      %v7922 = vadd.f32 %v7890, %v7814
      %v7923 = vadd.f32 %v7891, %v7819
      %v7924 = vadd.f32 %v7892, %v7822
      %v7925 = vadd.f32 %v7893, %v7827
      %v7926 = vadd.f32 %v7894, %v7830
      %v7927 = vadd.f32 %v7895, %v7835
      %v7928 = vadd.f32 %v7896, %v7838
      %v7929 = vadd.f32 %v7897, %v7843
      %v7930 = vadd.f32 %v7898, %v7846
      %v7931 = vadd.f32 %v7899, %v7851
      %v7932 = vadd.f32 %v7900, %v7854
      %v7933 = vadd.f32 %v7901, %v7859
      %v7934 = vadd.f32 %v7902, %v7862
      %v7935 = vadd.f32 %v7903, %v7867
      %v7936 = vadd.f32 %v7904, %v7870
      %7937 = vst.msk [vmem:[#allocation4] sm:$0xff] %vm825, %v7905
      %7938 = vst.msk [vmem:[#allocation4 + $0x8] sm:$0xff] %vm825, %v7906
      %7939 = vst.msk [vmem:[#allocation4 + $0x10] sm:$0xff] %vm825, %v7907
      %7940 = vst.msk [vmem:[#allocation4 + $0x18] sm:$0xff] %vm825, %v7908
      %7941 = vst.msk [vmem:[#allocation4 + $0x20] sm:$0xff] %vm825, %v7909
      %7942 = vst.msk [vmem:[#allocation4 + $0x28] sm:$0xff] %vm825, %v7910
      %7943 = vst.msk [vmem:[#allocation4 + $0x30] sm:$0xff] %vm825, %v7911
      %7944 = vst.msk [vmem:[#allocation4 + $0x38] sm:$0xff] %vm825, %v7912
      %7945 = vst.msk [vmem:[#allocation4 + $0x40] sm:$0xff] %vm825, %v7913
      %7946 = vst.msk [vmem:[#allocation4 + $0x48] sm:$0xff] %vm825, %v7914
      %7947 = vst.msk [vmem:[#allocation4 + $0x50] sm:$0xff] %vm825, %v7915
      %7948 = vst.msk [vmem:[#allocation4 + $0x58] sm:$0xff] %vm825, %v7916
      %7949 = vst.msk [vmem:[#allocation4 + $0x60] sm:$0xff] %vm825, %v7917
      %7950 = vst.msk [vmem:[#allocation4 + $0x68] sm:$0xff] %vm825, %v7918
      %7951 = vst.msk [vmem:[#allocation4 + $0x70] sm:$0xff] %vm825, %v7919
      %7952 = vst.msk [vmem:[#allocation4 + $0x78] sm:$0xff] %vm825, %v7920
      %7953 = vst.msk [vmem:[#allocation4 + $0x80] sm:$0xff] %vm825, %v7921
      %7954 = vst.msk [vmem:[#allocation4 + $0x88] sm:$0xff] %vm825, %v7922
      %7955 = vst.msk [vmem:[#allocation4 + $0x90] sm:$0xff] %vm825, %v7923
      %7956 = vst.msk [vmem:[#allocation4 + $0x98] sm:$0xff] %vm825, %v7924
      %7957 = vst.msk [vmem:[#allocation4 + $0xa0] sm:$0xff] %vm825, %v7925
      %7958 = vst.msk [vmem:[#allocation4 + $0xa8] sm:$0xff] %vm825, %v7926
      %7959 = vst.msk [vmem:[#allocation4 + $0xb0] sm:$0xff] %vm825, %v7927
      %7960 = vst.msk [vmem:[#allocation4 + $0xb8] sm:$0xff] %vm825, %v7928
      %7961 = vst.msk [vmem:[#allocation4 + $0xc0] sm:$0xff] %vm825, %v7929
      %7962 = vst.msk [vmem:[#allocation4 + $0xc8] sm:$0xff] %vm825, %v7930
      %7963 = vst.msk [vmem:[#allocation4 + $0xd0] sm:$0xff] %vm825, %v7931
      %7964 = vst.msk [vmem:[#allocation4 + $0xd8] sm:$0xff] %vm825, %v7932
      %7965 = vst.msk [vmem:[#allocation4 + $0xe0] sm:$0xff] %vm825, %v7933
      %7966 = vst.msk [vmem:[#allocation4 + $0xe8] sm:$0xff] %vm825, %v7934
      %7967 = vst.msk [vmem:[#allocation4 + $0xf0] sm:$0xff] %vm825, %v7935
      %7968 = vst.msk [vmem:[#allocation4 + $0xf8] sm:$0xff] %vm825, %v7936
      %v7969 = vld [vmem:[#allocation3 + $0x8] sm:$0xf0]
      %v7970 = vld [vmem:[#allocation3 + $0x10] sm:$0xff]
      %v7971 = vld [vmem:[#allocation3 + $0x18] sm:$0xff]
      %v7972 = vld [vmem:[#allocation3 + $0x20] sm:$0xff]
      %v7973 = vld [vmem:[#allocation3 + $0x28] sm:$0xff]
      %v7974 = vld [vmem:[#allocation3 + $0x30] sm:$0xff]
      %v7975 = vld [vmem:[#allocation3 + $0x38] sm:$0xff]
      %v7976 = vld [vmem:[#allocation3 + $0x40] sm:$0xff]
      %v7977 = vld [vmem:[#allocation3 + $0x48] sm:$0xff]
      %v7978 = vld [vmem:[#allocation3 + $0x50] sm:$0xff]
      %v7979 = vld [vmem:[#allocation3 + $0x58] sm:$0xff]
      %v7980 = vld [vmem:[#allocation3 + $0x60] sm:$0xff]
      %v7981 = vld [vmem:[#allocation3 + $0x68] sm:$0xff]
      %v7982 = vld [vmem:[#allocation3 + $0x70] sm:$0xff]
      %v7983 = vld [vmem:[#allocation3 + $0x78] sm:$0xff]
      %v7984 = vld [vmem:[#allocation3 + $0x80] sm:$0xff]
      %v7985 = vld [vmem:[#allocation3 + $0x88] sm:$0x1f]
      %s7986 = scalar_lea.vmem %s4, 80
      %v7987 = vld [vmem:[%s7986] sm:$0xf]
      %v7988 = vld [vmem:[%s7986 + $0x4] sm:$0xf]
      %v7989 = vld [vmem:[%s7986 + $0x8] sm:$0xf]
      %v7990 = vld [vmem:[%s7986 + $0xc] sm:$0xf]
      %v7992 = vshrl.u32 %v7969, 16
      %v7994 = vrot.slane %v7992, 4
      %v7995 = vshll.u32 %v7969, 16
      %v7997 = vrot.slane %v7995, 5
      %v7998 = vor.u32 %v7994, %v7997
      %v8000 = vshrl.u32 %v7970, 16
      %v8002 = vrot.slane %v8000, 4
      %v8003 = vshll.u32 %v7970, 16
      %v8005 = vrot.slane %v8003, 5
      %v8006 = vor.u32 %v8002, %v8005
      %v8007 = vsel %vm1980, %v7998, %v8006
      %v8009 = vshrl.u32 %v7971, 16
      %v8011 = vrot.slane %v8009, 4
      %v8012 = vshll.u32 %v7971, 16
      %v8014 = vrot.slane %v8012, 5
      %v8015 = vor.u32 %v8011, %v8014
      %v8016 = vsel %vm1980, %v8006, %v8015
      %v8018 = vshrl.u32 %v7972, 16
      %v8020 = vrot.slane %v8018, 4
      %v8021 = vshll.u32 %v7972, 16
      %v8023 = vrot.slane %v8021, 5
      %v8024 = vor.u32 %v8020, %v8023
      %v8025 = vsel %vm1980, %v8015, %v8024
      %v8027 = vshrl.u32 %v7973, 16
      %v8029 = vrot.slane %v8027, 4
      %v8030 = vshll.u32 %v7973, 16
      %v8032 = vrot.slane %v8030, 5
      %v8033 = vor.u32 %v8029, %v8032
      %v8034 = vsel %vm1980, %v8024, %v8033
      %v8036 = vshrl.u32 %v7974, 16
      %v8038 = vrot.slane %v8036, 4
      %v8039 = vshll.u32 %v7974, 16
      %v8041 = vrot.slane %v8039, 5
      %v8042 = vor.u32 %v8038, %v8041
      %v8043 = vsel %vm1980, %v8033, %v8042
      %v8045 = vshrl.u32 %v7975, 16
      %v8047 = vrot.slane %v8045, 4
      %v8048 = vshll.u32 %v7975, 16
      %v8050 = vrot.slane %v8048, 5
      %v8051 = vor.u32 %v8047, %v8050
      %v8052 = vsel %vm1980, %v8042, %v8051
      %v8054 = vshrl.u32 %v7976, 16
      %v8056 = vrot.slane %v8054, 4
      %v8057 = vshll.u32 %v7976, 16
      %v8059 = vrot.slane %v8057, 5
      %v8060 = vor.u32 %v8056, %v8059
      %v8061 = vsel %vm1980, %v8051, %v8060
      %v8063 = vshrl.u32 %v7977, 16
      %v8065 = vrot.slane %v8063, 4
      %v8066 = vshll.u32 %v7977, 16
      %v8068 = vrot.slane %v8066, 5
      %v8069 = vor.u32 %v8065, %v8068
      %v8070 = vsel %vm1980, %v8060, %v8069
      %v8072 = vshrl.u32 %v7978, 16
      %v8074 = vrot.slane %v8072, 4
      %v8075 = vshll.u32 %v7978, 16
      %v8077 = vrot.slane %v8075, 5
      %v8078 = vor.u32 %v8074, %v8077
      %v8079 = vsel %vm1980, %v8069, %v8078
      %v8081 = vshrl.u32 %v7979, 16
      %v8083 = vrot.slane %v8081, 4
      %v8084 = vshll.u32 %v7979, 16
      %v8086 = vrot.slane %v8084, 5
      %v8087 = vor.u32 %v8083, %v8086
      %v8088 = vsel %vm1980, %v8078, %v8087
      %v8090 = vshrl.u32 %v7980, 16
      %v8092 = vrot.slane %v8090, 4
      %v8093 = vshll.u32 %v7980, 16
      %v8095 = vrot.slane %v8093, 5
      %v8096 = vor.u32 %v8092, %v8095
      %v8097 = vsel %vm1980, %v8087, %v8096
      %v8099 = vshrl.u32 %v7981, 16
      %v8101 = vrot.slane %v8099, 4
      %v8102 = vshll.u32 %v7981, 16
      %v8104 = vrot.slane %v8102, 5
      %v8105 = vor.u32 %v8101, %v8104
      %v8106 = vsel %vm1980, %v8096, %v8105
      %v8108 = vshrl.u32 %v7982, 16
      %v8110 = vrot.slane %v8108, 4
      %v8111 = vshll.u32 %v7982, 16
      %v8113 = vrot.slane %v8111, 5
      %v8114 = vor.u32 %v8110, %v8113
      %v8115 = vsel %vm1980, %v8105, %v8114
      %v8117 = vshrl.u32 %v7983, 16
      %v8119 = vrot.slane %v8117, 4
      %v8120 = vshll.u32 %v7983, 16
      %v8122 = vrot.slane %v8120, 5
      %v8123 = vor.u32 %v8119, %v8122
      %v8124 = vsel %vm1980, %v8114, %v8123
      %v8126 = vshrl.u32 %v7984, 16
      %v8128 = vrot.slane %v8126, 4
      %v8129 = vshll.u32 %v7984, 16
      %v8131 = vrot.slane %v8129, 5
      %v8132 = vor.u32 %v8128, %v8131
      %v8133 = vsel %vm1980, %v8123, %v8132
      %v8135 = vshrl.u32 %v7985, 16
      %v8137 = vrot.slane %v8135, 4
      %v8138 = vshll.u32 %v7985, 16
      %v8140 = vrot.slane %v8138, 5
      %v8141 = vor.u32 %v8137, %v8140
      %v8142 = vsel %vm1980, %v8132, %v8141
      %v8147 = vunpack.c.l.b16 %v7987
      %v8148 = vunpack.c.l.b16 %v7988
      %v8149 = vunpack.c.l.b16 %v7989
      %v8150 = vunpack.c.l.b16 %v7990
      %v8151 = vpack.c.b16 %v8148, %v8147
      %v8152 = vpack.c.b16 %v8150, %v8149
      %v8156 = vsel %vm825, %v8007, 0
      %v8159 = vsel %vm825, %v8016, 0
      %v8162 = vsel %vm825, %v8025, 0
      %v8165 = vsel %vm825, %v8034, 0
      %v8168 = vsel %vm825, %v8043, 0
      %v8171 = vsel %vm825, %v8052, 0
      %v8174 = vsel %vm825, %v8061, 0
      %v8177 = vsel %vm825, %v8070, 0
      %v8180 = vsel %vm825, %v8079, 0
      %v8183 = vsel %vm825, %v8088, 0
      %v8186 = vsel %vm825, %v8097, 0
      %v8189 = vsel %vm825, %v8106, 0
      %v8192 = vsel %vm825, %v8115, 0
      %v8195 = vsel %vm825, %v8124, 0
      %v8198 = vsel %vm825, %v8133, 0
      %v8201 = vsel %vm825, %v8142, 0
      %8203 = vmatprep.subr.bf16.mxu0 0
      %8204 = vmatpush1.bf16.msra.mxu0 %v8151
      %8205 = vmatprep.subr.bf16.mxu0 0
      %8206 = vmatpush1.bf16.msra.mxu0 %v8152
      %8207 = vmatprep.subr.bf16.mxu0 0
      %8208 = vmatpush1.bf16.msra.mxu0 0
      %8209 = vmatprep.subr.bf16.mxu0 0
      %8210 = vmatpush1.bf16.msra.mxu0 0
      %8211 = vmatprep.subr.bf16.mxu0 0
      %8212 = vmatpush1.bf16.msra.mxu0 0
      %8213 = vmatprep.subr.bf16.mxu0 0
      %8214 = vmatpush1.bf16.msra.mxu0 0
      %8215 = vmatprep.subr.bf16.mxu0 0
      %8216 = vmatpush1.bf16.msra.mxu0 0
      %8217 = vmatprep.subr.bf16.mxu0 0
      %8218 = vmatpush1.bf16.msra.mxu0 0
      %8219 = vmatprep.subr.bf16.mxu0 0
      %8220 = vmatpush1.bf16.msra.mxu0 0
      %8221 = vmatprep.subr.bf16.mxu0 0
      %8222 = vmatpush1.bf16.msra.mxu0 0
      %8223 = vmatprep.subr.bf16.mxu0 0
      %8224 = vmatpush1.bf16.msra.mxu0 0
      %8225 = vmatprep.subr.bf16.mxu0 0
      %8226 = vmatpush1.bf16.msra.mxu0 0
      %8227 = vmatprep.subr.bf16.mxu0 0
      %8228 = vmatpush1.bf16.msra.mxu0 0
      %8229 = vmatprep.subr.bf16.mxu0 0
      %8230 = vmatpush1.bf16.msra.mxu0 0
      %8231 = vmatprep.subr.bf16.mxu0 0
      %8232 = vmatpush1.bf16.msra.mxu0 0
      %8233 = vmatprep.subr.bf16.mxu0 0
      %8234 = vmatpush1.bf16.msra.mxu0 0
      %8235 = vmatprep.mubr.bf16.mxu0 0
      %8236 = vmatmul.mubr.bf16.gmra.mrb[0].mxu0 %v8156
      %v8237 = vpop.f32.mrb[0].mxu0
      %v8238 = vadd.f32 0.0, %v8237
      %v8239 = vpop.f32.mrb[0].mxu0
      %v8240 = vpop.f32.mrb[0].mxu0
      %v8241 = vadd.f32 0.0, %v8240
      %v8242 = vpop.f32.mrb[0].mxu0
      %8243 = vmatprep.mubr.bf16.mxu0 0
      %8244 = vmatmul.mubr.bf16.gmra.mrb[0].mxu0 %v8159
      %v8245 = vpop.f32.mrb[0].mxu0
      %v8246 = vadd.f32 0.0, %v8245
      %v8247 = vpop.f32.mrb[0].mxu0
      %v8248 = vpop.f32.mrb[0].mxu0
      %v8249 = vadd.f32 0.0, %v8248
      %v8250 = vpop.f32.mrb[0].mxu0
      %8251 = vmatprep.mubr.bf16.mxu0 0
      %8252 = vmatmul.mubr.bf16.gmra.mrb[0].mxu0 %v8162
      %v8253 = vpop.f32.mrb[0].mxu0
      %v8254 = vadd.f32 0.0, %v8253
      %v8255 = vpop.f32.mrb[0].mxu0
      %v8256 = vpop.f32.mrb[0].mxu0
      %v8257 = vadd.f32 0.0, %v8256
      %v8258 = vpop.f32.mrb[0].mxu0
      %8259 = vmatprep.mubr.bf16.mxu0 0
      %8260 = vmatmul.mubr.bf16.gmra.mrb[0].mxu0 %v8165
      %v8261 = vpop.f32.mrb[0].mxu0
      %v8262 = vadd.f32 0.0, %v8261
      %v8263 = vpop.f32.mrb[0].mxu0
      %v8264 = vpop.f32.mrb[0].mxu0
      %v8265 = vadd.f32 0.0, %v8264
      %v8266 = vpop.f32.mrb[0].mxu0
      %8267 = vmatprep.mubr.bf16.mxu0 0
      %8268 = vmatmul.mubr.bf16.gmra.mrb[0].mxu0 %v8168
      %v8269 = vpop.f32.mrb[0].mxu0
      %v8270 = vadd.f32 0.0, %v8269
      %v8271 = vpop.f32.mrb[0].mxu0
      %v8272 = vpop.f32.mrb[0].mxu0
      %v8273 = vadd.f32 0.0, %v8272
      %v8274 = vpop.f32.mrb[0].mxu0
      %8275 = vmatprep.mubr.bf16.mxu0 0
      %8276 = vmatmul.mubr.bf16.gmra.mrb[0].mxu0 %v8171
      %v8277 = vpop.f32.mrb[0].mxu0
      %v8278 = vadd.f32 0.0, %v8277
      %v8279 = vpop.f32.mrb[0].mxu0
      %v8280 = vpop.f32.mrb[0].mxu0
      %v8281 = vadd.f32 0.0, %v8280
      %v8282 = vpop.f32.mrb[0].mxu0
      %8283 = vmatprep.mubr.bf16.mxu0 0
      %8284 = vmatmul.mubr.bf16.gmra.mrb[0].mxu0 %v8174
      %v8285 = vpop.f32.mrb[0].mxu0
      %v8286 = vadd.f32 0.0, %v8285
      %v8287 = vpop.f32.mrb[0].mxu0
      %v8288 = vpop.f32.mrb[0].mxu0
      %v8289 = vadd.f32 0.0, %v8288
      %v8290 = vpop.f32.mrb[0].mxu0
      %8291 = vmatprep.mubr.bf16.mxu0 0
      %8292 = vmatmul.mubr.bf16.gmra.mrb[0].mxu0 %v8177
      %v8293 = vpop.f32.mrb[0].mxu0
      %v8294 = vadd.f32 0.0, %v8293
      %v8295 = vpop.f32.mrb[0].mxu0
      %v8296 = vpop.f32.mrb[0].mxu0
      %v8297 = vadd.f32 0.0, %v8296
      %v8298 = vpop.f32.mrb[0].mxu0
      %8299 = vmatprep.mubr.bf16.mxu0 0
      %8300 = vmatmul.mubr.bf16.gmra.mrb[0].mxu0 %v8180
      %v8301 = vpop.f32.mrb[0].mxu0
      %v8302 = vadd.f32 0.0, %v8301
      %v8303 = vpop.f32.mrb[0].mxu0
      %v8304 = vpop.f32.mrb[0].mxu0
      %v8305 = vadd.f32 0.0, %v8304
      %v8306 = vpop.f32.mrb[0].mxu0
      %8307 = vmatprep.mubr.bf16.mxu0 0
      %8308 = vmatmul.mubr.bf16.gmra.mrb[0].mxu0 %v8183
      %v8309 = vpop.f32.mrb[0].mxu0
      %v8310 = vadd.f32 0.0, %v8309
      %v8311 = vpop.f32.mrb[0].mxu0
      %v8312 = vpop.f32.mrb[0].mxu0
      %v8313 = vadd.f32 0.0, %v8312
      %v8314 = vpop.f32.mrb[0].mxu0
      %8315 = vmatprep.mubr.bf16.mxu0 0
      %8316 = vmatmul.mubr.bf16.gmra.mrb[0].mxu0 %v8186
      %v8317 = vpop.f32.mrb[0].mxu0
      %v8318 = vadd.f32 0.0, %v8317
      %v8319 = vpop.f32.mrb[0].mxu0
      %v8320 = vpop.f32.mrb[0].mxu0
      %v8321 = vadd.f32 0.0, %v8320
      %v8322 = vpop.f32.mrb[0].mxu0
      %8323 = vmatprep.mubr.bf16.mxu0 0
      %8324 = vmatmul.mubr.bf16.gmra.mrb[0].mxu0 %v8189
      %v8325 = vpop.f32.mrb[0].mxu0
      %v8326 = vadd.f32 0.0, %v8325
      %v8327 = vpop.f32.mrb[0].mxu0
      %v8328 = vpop.f32.mrb[0].mxu0
      %v8329 = vadd.f32 0.0, %v8328
      %v8330 = vpop.f32.mrb[0].mxu0
      %8331 = vmatprep.mubr.bf16.mxu0 0
      %8332 = vmatmul.mubr.bf16.gmra.mrb[0].mxu0 %v8192
      %v8333 = vpop.f32.mrb[0].mxu0
      %v8334 = vadd.f32 0.0, %v8333
      %v8335 = vpop.f32.mrb[0].mxu0
      %v8336 = vpop.f32.mrb[0].mxu0
      %v8337 = vadd.f32 0.0, %v8336
      %v8338 = vpop.f32.mrb[0].mxu0
      %8339 = vmatprep.mubr.bf16.mxu0 0
      %8340 = vmatmul.mubr.bf16.gmra.mrb[0].mxu0 %v8195
      %v8341 = vpop.f32.mrb[0].mxu0
      %v8342 = vadd.f32 0.0, %v8341
      %v8343 = vpop.f32.mrb[0].mxu0
      %v8344 = vpop.f32.mrb[0].mxu0
      %v8345 = vadd.f32 0.0, %v8344
      %v8346 = vpop.f32.mrb[0].mxu0
      %8347 = vmatprep.mubr.bf16.mxu0 0
      %8348 = vmatmul.mubr.bf16.gmra.mrb[0].mxu0 %v8198
      %v8349 = vpop.f32.mrb[0].mxu0
      %v8350 = vadd.f32 0.0, %v8349
      %v8351 = vpop.f32.mrb[0].mxu0
      %v8352 = vpop.f32.mrb[0].mxu0
      %v8353 = vadd.f32 0.0, %v8352
      %v8354 = vpop.f32.mrb[0].mxu0
      %8355 = vmatprep.mubr.bf16.mxu0 0
      %8356 = vmatmul.mubr.bf16.gmra.mrb[0].mxu0 %v8201
      %v8357 = vpop.f32.mrb[0].mxu0
      %v8358 = vadd.f32 0.0, %v8357
      %v8359 = vpop.f32.mrb[0].mxu0
      %v8360 = vpop.f32.mrb[0].mxu0
      %v8361 = vadd.f32 0.0, %v8360
      %v8362 = vpop.f32.mrb[0].mxu0
      %8363 = vdwg.mxu0
      %v8364 = vmul.f32 %v8238, %v793
      %v8365 = vmul.f32 %v8241, %v794
      %v8366 = vmul.f32 %v8246, %v795
      %v8367 = vmul.f32 %v8249, %v796
      %v8368 = vmul.f32 %v8254, %v797
      %v8369 = vmul.f32 %v8257, %v798
      %v8370 = vmul.f32 %v8262, %v799
      %v8371 = vmul.f32 %v8265, %v800
      %v8372 = vmul.f32 %v8270, %v801
      %v8373 = vmul.f32 %v8273, %v802
      %v8374 = vmul.f32 %v8278, %v803
      %v8375 = vmul.f32 %v8281, %v804
      %v8376 = vmul.f32 %v8286, %v805
      %v8377 = vmul.f32 %v8289, %v806
      %v8378 = vmul.f32 %v8294, %v807
      %v8379 = vmul.f32 %v8297, %v808
      %v8380 = vmul.f32 %v8302, %v809
      %v8381 = vmul.f32 %v8305, %v810
      %v8382 = vmul.f32 %v8310, %v811
      %v8383 = vmul.f32 %v8313, %v812
      %v8384 = vmul.f32 %v8318, %v813
      %v8385 = vmul.f32 %v8321, %v814
      %v8386 = vmul.f32 %v8326, %v815
      %v8387 = vmul.f32 %v8329, %v816
      %v8388 = vmul.f32 %v8334, %v817
      %v8389 = vmul.f32 %v8337, %v818
      %v8390 = vmul.f32 %v8342, %v819
      %v8391 = vmul.f32 %v8345, %v820
      %v8392 = vmul.f32 %v8350, %v821
      %v8393 = vmul.f32 %v8353, %v822
      %v8394 = vmul.f32 %v8358, %v823
      %v8395 = vmul.f32 %v8361, %v824
      %v8396 = vld [vmem:[#allocation4] sm:$0xff]
      %v8397 = vld [vmem:[#allocation4 + $0x8] sm:$0xff]
      %v8398 = vld [vmem:[#allocation4 + $0x10] sm:$0xff]
      %v8399 = vld [vmem:[#allocation4 + $0x18] sm:$0xff]
      %v8400 = vld [vmem:[#allocation4 + $0x20] sm:$0xff]
      %v8401 = vld [vmem:[#allocation4 + $0x28] sm:$0xff]
      %v8402 = vld [vmem:[#allocation4 + $0x30] sm:$0xff]
      %v8403 = vld [vmem:[#allocation4 + $0x38] sm:$0xff]
      %v8404 = vld [vmem:[#allocation4 + $0x40] sm:$0xff]
      %v8405 = vld [vmem:[#allocation4 + $0x48] sm:$0xff]
      %v8406 = vld [vmem:[#allocation4 + $0x50] sm:$0xff]
      %v8407 = vld [vmem:[#allocation4 + $0x58] sm:$0xff]
      %v8408 = vld [vmem:[#allocation4 + $0x60] sm:$0xff]
      %v8409 = vld [vmem:[#allocation4 + $0x68] sm:$0xff]
      %v8410 = vld [vmem:[#allocation4 + $0x70] sm:$0xff]
      %v8411 = vld [vmem:[#allocation4 + $0x78] sm:$0xff]
      %v8412 = vld [vmem:[#allocation4 + $0x80] sm:$0xff]
      %v8413 = vld [vmem:[#allocation4 + $0x88] sm:$0xff]
      %v8414 = vld [vmem:[#allocation4 + $0x90] sm:$0xff]
      %v8415 = vld [vmem:[#allocation4 + $0x98] sm:$0xff]
      %v8416 = vld [vmem:[#allocation4 + $0xa0] sm:$0xff]
      %v8417 = vld [vmem:[#allocation4 + $0xa8] sm:$0xff]
      %v8418 = vld [vmem:[#allocation4 + $0xb0] sm:$0xff]
      %v8419 = vld [vmem:[#allocation4 + $0xb8] sm:$0xff]
      %v8420 = vld [vmem:[#allocation4 + $0xc0] sm:$0xff]
      %v8421 = vld [vmem:[#allocation4 + $0xc8] sm:$0xff]
      %v8422 = vld [vmem:[#allocation4 + $0xd0] sm:$0xff]
      %v8423 = vld [vmem:[#allocation4 + $0xd8] sm:$0xff]
      %v8424 = vld [vmem:[#allocation4 + $0xe0] sm:$0xff]
      %v8425 = vld [vmem:[#allocation4 + $0xe8] sm:$0xff]
      %v8426 = vld [vmem:[#allocation4 + $0xf0] sm:$0xff]
      %v8427 = vld [vmem:[#allocation4 + $0xf8] sm:$0xff]
      %v8428 = vadd.f32 %v8396, %v8364
      %v8429 = vadd.f32 %v8397, %v8365
      %v8430 = vadd.f32 %v8398, %v8366
      %v8431 = vadd.f32 %v8399, %v8367
      %v8432 = vadd.f32 %v8400, %v8368
      %v8433 = vadd.f32 %v8401, %v8369
      %v8434 = vadd.f32 %v8402, %v8370
      %v8435 = vadd.f32 %v8403, %v8371
      %v8436 = vadd.f32 %v8404, %v8372
      %v8437 = vadd.f32 %v8405, %v8373
      %v8438 = vadd.f32 %v8406, %v8374
      %v8439 = vadd.f32 %v8407, %v8375
      %v8440 = vadd.f32 %v8408, %v8376
      %v8441 = vadd.f32 %v8409, %v8377
      %v8442 = vadd.f32 %v8410, %v8378
      %v8443 = vadd.f32 %v8411, %v8379
      %v8444 = vadd.f32 %v8412, %v8380
      %v8445 = vadd.f32 %v8413, %v8381
      %v8446 = vadd.f32 %v8414, %v8382
      %v8447 = vadd.f32 %v8415, %v8383
      %v8448 = vadd.f32 %v8416, %v8384
      %v8449 = vadd.f32 %v8417, %v8385
      %v8450 = vadd.f32 %v8418, %v8386
      %v8451 = vadd.f32 %v8419, %v8387
      %v8452 = vadd.f32 %v8420, %v8388
      %v8453 = vadd.f32 %v8421, %v8389
      %v8454 = vadd.f32 %v8422, %v8390
      %v8455 = vadd.f32 %v8423, %v8391
      %v8456 = vadd.f32 %v8424, %v8392
      %v8457 = vadd.f32 %v8425, %v8393
      %v8458 = vadd.f32 %v8426, %v8394
      %v8459 = vadd.f32 %v8427, %v8395
      %8460 = vst.msk [vmem:[#allocation4] sm:$0xff] %vm825, %v8428
      %8461 = vst.msk [vmem:[#allocation4 + $0x8] sm:$0xff] %vm825, %v8429
      %8462 = vst.msk [vmem:[#allocation4 + $0x10] sm:$0xff] %vm825, %v8430
      %8463 = vst.msk [vmem:[#allocation4 + $0x18] sm:$0xff] %vm825, %v8431
      %8464 = vst.msk [vmem:[#allocation4 + $0x20] sm:$0xff] %vm825, %v8432
      %8465 = vst.msk [vmem:[#allocation4 + $0x28] sm:$0xff] %vm825, %v8433
      %8466 = vst.msk [vmem:[#allocation4 + $0x30] sm:$0xff] %vm825, %v8434
      %8467 = vst.msk [vmem:[#allocation4 + $0x38] sm:$0xff] %vm825, %v8435
      %8468 = vst.msk [vmem:[#allocation4 + $0x40] sm:$0xff] %vm825, %v8436
      %8469 = vst.msk [vmem:[#allocation4 + $0x48] sm:$0xff] %vm825, %v8437
      %8470 = vst.msk [vmem:[#allocation4 + $0x50] sm:$0xff] %vm825, %v8438
      %8471 = vst.msk [vmem:[#allocation4 + $0x58] sm:$0xff] %vm825, %v8439
      %8472 = vst.msk [vmem:[#allocation4 + $0x60] sm:$0xff] %vm825, %v8440
      %8473 = vst.msk [vmem:[#allocation4 + $0x68] sm:$0xff] %vm825, %v8441
      %8474 = vst.msk [vmem:[#allocation4 + $0x70] sm:$0xff] %vm825, %v8442
      %8475 = vst.msk [vmem:[#allocation4 + $0x78] sm:$0xff] %vm825, %v8443
      %8476 = vst.msk [vmem:[#allocation4 + $0x80] sm:$0xff] %vm825, %v8444
      %8477 = vst.msk [vmem:[#allocation4 + $0x88] sm:$0xff] %vm825, %v8445
      %8478 = vst.msk [vmem:[#allocation4 + $0x90] sm:$0xff] %vm825, %v8446
      %8479 = vst.msk [vmem:[#allocation4 + $0x98] sm:$0xff] %vm825, %v8447
      %8480 = vst.msk [vmem:[#allocation4 + $0xa0] sm:$0xff] %vm825, %v8448
      %8481 = vst.msk [vmem:[#allocation4 + $0xa8] sm:$0xff] %vm825, %v8449
      %8482 = vst.msk [vmem:[#allocation4 + $0xb0] sm:$0xff] %vm825, %v8450
      %8483 = vst.msk [vmem:[#allocation4 + $0xb8] sm:$0xff] %vm825, %v8451
      %8484 = vst.msk [vmem:[#allocation4 + $0xc0] sm:$0xff] %vm825, %v8452
      %8485 = vst.msk [vmem:[#allocation4 + $0xc8] sm:$0xff] %vm825, %v8453
      %8486 = vst.msk [vmem:[#allocation4 + $0xd0] sm:$0xff] %vm825, %v8454
      %8487 = vst.msk [vmem:[#allocation4 + $0xd8] sm:$0xff] %vm825, %v8455
      %8488 = vst.msk [vmem:[#allocation4 + $0xe0] sm:$0xff] %vm825, %v8456
      %8489 = vst.msk [vmem:[#allocation4 + $0xe8] sm:$0xff] %vm825, %v8457
      %8490 = vst.msk [vmem:[#allocation4 + $0xf0] sm:$0xff] %vm825, %v8458
      %8491 = vst.msk [vmem:[#allocation4 + $0xf8] sm:$0xff] %vm825, %v8459
      %v8492 = vld [vmem:[#allocation3 + $0x10] sm:$0xf8]
      %v8493 = vld [vmem:[#allocation3 + $0x18] sm:$0xff]
      %v8494 = vld [vmem:[#allocation3 + $0x20] sm:$0xff]
      %v8495 = vld [vmem:[#allocation3 + $0x28] sm:$0xff]
      %v8496 = vld [vmem:[#allocation3 + $0x30] sm:$0xff]
      %v8497 = vld [vmem:[#allocation3 + $0x38] sm:$0xff]
      %v8498 = vld [vmem:[#allocation3 + $0x40] sm:$0xff]
      %v8499 = vld [vmem:[#allocation3 + $0x48] sm:$0xff]
      %v8500 = vld [vmem:[#allocation3 + $0x50] sm:$0xff]
      %v8501 = vld [vmem:[#allocation3 + $0x58] sm:$0xff]
      %v8502 = vld [vmem:[#allocation3 + $0x60] sm:$0xff]
      %v8503 = vld [vmem:[#allocation3 + $0x68] sm:$0xff]
      %v8504 = vld [vmem:[#allocation3 + $0x70] sm:$0xff]
      %v8505 = vld [vmem:[#allocation3 + $0x78] sm:$0xff]
      %v8506 = vld [vmem:[#allocation3 + $0x80] sm:$0xff]
      %v8507 = vld [vmem:[#allocation3 + $0x88] sm:$0xff]
      %v8508 = vld [vmem:[#allocation3 + $0x90] sm:$0xf]
      %s8509 = scalar_lea.vmem %s4, 96
      %v8510 = vld [vmem:[%s8509] sm:$0xf]
      %v8511 = vld [vmem:[%s8509 + $0x4] sm:$0xf]
      %v8512 = vld [vmem:[%s8509 + $0x8] sm:$0xf]
      %v8513 = vld [vmem:[%s8509 + $0xc] sm:$0xf]
      %v8515 = vshrl.u32 %v8492, 16
      %v8517 = vrot.slane %v8515, 3
      %v8518 = vshll.u32 %v8492, 16
      %v8520 = vrot.slane %v8518, 4
      %v8521 = vor.u32 %v8517, %v8520
      %v8523 = vshrl.u32 %v8493, 16
      %v8525 = vrot.slane %v8523, 3
      %v8526 = vshll.u32 %v8493, 16
      %v8528 = vrot.slane %v8526, 4
      %v8529 = vor.u32 %v8525, %v8528
      %v8530 = vsel %vm1066, %v8521, %v8529
      %v8532 = vshrl.u32 %v8494, 16
      %v8534 = vrot.slane %v8532, 3
      %v8535 = vshll.u32 %v8494, 16
      %v8537 = vrot.slane %v8535, 4
      %v8538 = vor.u32 %v8534, %v8537
      %v8539 = vsel %vm1066, %v8529, %v8538
      %v8541 = vshrl.u32 %v8495, 16
      %v8543 = vrot.slane %v8541, 3
      %v8544 = vshll.u32 %v8495, 16
      %v8546 = vrot.slane %v8544, 4
      %v8547 = vor.u32 %v8543, %v8546
      %v8548 = vsel %vm1066, %v8538, %v8547
      %v8550 = vshrl.u32 %v8496, 16
      %v8552 = vrot.slane %v8550, 3
      %v8553 = vshll.u32 %v8496, 16
      %v8555 = vrot.slane %v8553, 4
      %v8556 = vor.u32 %v8552, %v8555
      %v8557 = vsel %vm1066, %v8547, %v8556
      %v8559 = vshrl.u32 %v8497, 16
      %v8561 = vrot.slane %v8559, 3
      %v8562 = vshll.u32 %v8497, 16
      %v8564 = vrot.slane %v8562, 4
      %v8565 = vor.u32 %v8561, %v8564
      %v8566 = vsel %vm1066, %v8556, %v8565
      %v8568 = vshrl.u32 %v8498, 16
      %v8570 = vrot.slane %v8568, 3
      %v8571 = vshll.u32 %v8498, 16
      %v8573 = vrot.slane %v8571, 4
      %v8574 = vor.u32 %v8570, %v8573
      %v8575 = vsel %vm1066, %v8565, %v8574
      %v8577 = vshrl.u32 %v8499, 16
      %v8579 = vrot.slane %v8577, 3
      %v8580 = vshll.u32 %v8499, 16
      %v8582 = vrot.slane %v8580, 4
      %v8583 = vor.u32 %v8579, %v8582
      %v8584 = vsel %vm1066, %v8574, %v8583
      %v8586 = vshrl.u32 %v8500, 16
      %v8588 = vrot.slane %v8586, 3
      %v8589 = vshll.u32 %v8500, 16
      %v8591 = vrot.slane %v8589, 4
      %v8592 = vor.u32 %v8588, %v8591
      %v8593 = vsel %vm1066, %v8583, %v8592
      %v8595 = vshrl.u32 %v8501, 16
      %v8597 = vrot.slane %v8595, 3
      %v8598 = vshll.u32 %v8501, 16
      %v8600 = vrot.slane %v8598, 4
      %v8601 = vor.u32 %v8597, %v8600
      %v8602 = vsel %vm1066, %v8592, %v8601
      %v8604 = vshrl.u32 %v8502, 16
      %v8606 = vrot.slane %v8604, 3
      %v8607 = vshll.u32 %v8502, 16
      %v8609 = vrot.slane %v8607, 4
      %v8610 = vor.u32 %v8606, %v8609
      %v8611 = vsel %vm1066, %v8601, %v8610
      %v8613 = vshrl.u32 %v8503, 16
      %v8615 = vrot.slane %v8613, 3
      %v8616 = vshll.u32 %v8503, 16
      %v8618 = vrot.slane %v8616, 4
      %v8619 = vor.u32 %v8615, %v8618
      %v8620 = vsel %vm1066, %v8610, %v8619
      %v8622 = vshrl.u32 %v8504, 16
      %v8624 = vrot.slane %v8622, 3
      %v8625 = vshll.u32 %v8504, 16
      %v8627 = vrot.slane %v8625, 4
      %v8628 = vor.u32 %v8624, %v8627
      %v8629 = vsel %vm1066, %v8619, %v8628
      %v8631 = vshrl.u32 %v8505, 16
      %v8633 = vrot.slane %v8631, 3
      %v8634 = vshll.u32 %v8505, 16
      %v8636 = vrot.slane %v8634, 4
      %v8637 = vor.u32 %v8633, %v8636
      %v8638 = vsel %vm1066, %v8628, %v8637
      %v8640 = vshrl.u32 %v8506, 16
      %v8642 = vrot.slane %v8640, 3
      %v8643 = vshll.u32 %v8506, 16
      %v8645 = vrot.slane %v8643, 4
      %v8646 = vor.u32 %v8642, %v8645
      %v8647 = vsel %vm1066, %v8637, %v8646
      %v8649 = vshrl.u32 %v8507, 16
      %v8651 = vrot.slane %v8649, 3
      %v8652 = vshll.u32 %v8507, 16
      %v8654 = vrot.slane %v8652, 4
      %v8655 = vor.u32 %v8651, %v8654
      %v8656 = vsel %vm1066, %v8646, %v8655
      %v8658 = vshrl.u32 %v8508, 16
      %v8660 = vrot.slane %v8658, 3
      %v8661 = vshll.u32 %v8508, 16
      %v8663 = vrot.slane %v8661, 4
      %v8664 = vor.u32 %v8660, %v8663
      %v8665 = vsel %vm1066, %v8655, %v8664
      %v8670 = vunpack.c.l.b16 %v8510
      %v8671 = vunpack.c.l.b16 %v8511
      %v8672 = vunpack.c.l.b16 %v8512
      %v8673 = vunpack.c.l.b16 %v8513
      %v8674 = vpack.c.b16 %v8671, %v8670
      %v8675 = vpack.c.b16 %v8673, %v8672
      %v8679 = vsel %vm825, %v8530, 0
      %v8682 = vsel %vm825, %v8539, 0
      %v8685 = vsel %vm825, %v8548, 0
      %v8688 = vsel %vm825, %v8557, 0
      %v8691 = vsel %vm825, %v8566, 0
      %v8694 = vsel %vm825, %v8575, 0
      %v8697 = vsel %vm825, %v8584, 0
      %v8700 = vsel %vm825, %v8593, 0
      %v8703 = vsel %vm825, %v8602, 0
      %v8706 = vsel %vm825, %v8611, 0
      %v8709 = vsel %vm825, %v8620, 0
      %v8712 = vsel %vm825, %v8629, 0
      %v8715 = vsel %vm825, %v8638, 0
      %v8718 = vsel %vm825, %v8647, 0
      %v8721 = vsel %vm825, %v8656, 0
      %v8724 = vsel %vm825, %v8665, 0
      %8726 = vmatprep.subr.bf16.mxu0 0
      %8727 = vmatpush1.bf16.msra.mxu0 %v8674
      %8728 = vmatprep.subr.bf16.mxu0 0
      %8729 = vmatpush1.bf16.msra.mxu0 %v8675
      %8730 = vmatprep.subr.bf16.mxu0 0
      %8731 = vmatpush1.bf16.msra.mxu0 0
      %8732 = vmatprep.subr.bf16.mxu0 0
      %8733 = vmatpush1.bf16.msra.mxu0 0
      %8734 = vmatprep.subr.bf16.mxu0 0
      %8735 = vmatpush1.bf16.msra.mxu0 0
      %8736 = vmatprep.subr.bf16.mxu0 0
      %8737 = vmatpush1.bf16.msra.mxu0 0
      %8738 = vmatprep.subr.bf16.mxu0 0
      %8739 = vmatpush1.bf16.msra.mxu0 0
      %8740 = vmatprep.subr.bf16.mxu0 0
      %8741 = vmatpush1.bf16.msra.mxu0 0
      %8742 = vmatprep.subr.bf16.mxu0 0
      %8743 = vmatpush1.bf16.msra.mxu0 0
      %8744 = vmatprep.subr.bf16.mxu0 0
      %8745 = vmatpush1.bf16.msra.mxu0 0
      %8746 = vmatprep.subr.bf16.mxu0 0
      %8747 = vmatpush1.bf16.msra.mxu0 0
      %8748 = vmatprep.subr.bf16.mxu0 0
      %8749 = vmatpush1.bf16.msra.mxu0 0
      %8750 = vmatprep.subr.bf16.mxu0 0
      %8751 = vmatpush1.bf16.msra.mxu0 0
      %8752 = vmatprep.subr.bf16.mxu0 0
      %8753 = vmatpush1.bf16.msra.mxu0 0
      %8754 = vmatprep.subr.bf16.mxu0 0
      %8755 = vmatpush1.bf16.msra.mxu0 0
      %8756 = vmatprep.subr.bf16.mxu0 0
      %8757 = vmatpush1.bf16.msra.mxu0 0
      %8758 = vmatprep.mubr.bf16.mxu0 0
      %8759 = vmatmul.mubr.bf16.gmra.mrb[0].mxu0 %v8679
      %v8760 = vpop.f32.mrb[0].mxu0
      %v8761 = vadd.f32 0.0, %v8760
      %v8762 = vpop.f32.mrb[0].mxu0
      %v8763 = vpop.f32.mrb[0].mxu0
      %v8764 = vadd.f32 0.0, %v8763
      %v8765 = vpop.f32.mrb[0].mxu0
      %8766 = vmatprep.mubr.bf16.mxu0 0
      %8767 = vmatmul.mubr.bf16.gmra.mrb[0].mxu0 %v8682
      %v8768 = vpop.f32.mrb[0].mxu0
      %v8769 = vadd.f32 0.0, %v8768
      %v8770 = vpop.f32.mrb[0].mxu0
      %v8771 = vpop.f32.mrb[0].mxu0
      %v8772 = vadd.f32 0.0, %v8771
      %v8773 = vpop.f32.mrb[0].mxu0
      %8774 = vmatprep.mubr.bf16.mxu0 0
      %8775 = vmatmul.mubr.bf16.gmra.mrb[0].mxu0 %v8685
      %v8776 = vpop.f32.mrb[0].mxu0
      %v8777 = vadd.f32 0.0, %v8776
      %v8778 = vpop.f32.mrb[0].mxu0
      %v8779 = vpop.f32.mrb[0].mxu0
      %v8780 = vadd.f32 0.0, %v8779
      %v8781 = vpop.f32.mrb[0].mxu0
      %8782 = vmatprep.mubr.bf16.mxu0 0
      %8783 = vmatmul.mubr.bf16.gmra.mrb[0].mxu0 %v8688
      %v8784 = vpop.f32.mrb[0].mxu0
      %v8785 = vadd.f32 0.0, %v8784
      %v8786 = vpop.f32.mrb[0].mxu0
      %v8787 = vpop.f32.mrb[0].mxu0
      %v8788 = vadd.f32 0.0, %v8787
      %v8789 = vpop.f32.mrb[0].mxu0
      %8790 = vmatprep.mubr.bf16.mxu0 0
      %8791 = vmatmul.mubr.bf16.gmra.mrb[0].mxu0 %v8691
      %v8792 = vpop.f32.mrb[0].mxu0
      %v8793 = vadd.f32 0.0, %v8792
      %v8794 = vpop.f32.mrb[0].mxu0
      %v8795 = vpop.f32.mrb[0].mxu0
      %v8796 = vadd.f32 0.0, %v8795
      %v8797 = vpop.f32.mrb[0].mxu0
      %8798 = vmatprep.mubr.bf16.mxu0 0
      %8799 = vmatmul.mubr.bf16.gmra.mrb[0].mxu0 %v8694
      %v8800 = vpop.f32.mrb[0].mxu0
      %v8801 = vadd.f32 0.0, %v8800
      %v8802 = vpop.f32.mrb[0].mxu0
      %v8803 = vpop.f32.mrb[0].mxu0
      %v8804 = vadd.f32 0.0, %v8803
      %v8805 = vpop.f32.mrb[0].mxu0
      %8806 = vmatprep.mubr.bf16.mxu0 0
      %8807 = vmatmul.mubr.bf16.gmra.mrb[0].mxu0 %v8697
      %v8808 = vpop.f32.mrb[0].mxu0
      %v8809 = vadd.f32 0.0, %v8808
      %v8810 = vpop.f32.mrb[0].mxu0
      %v8811 = vpop.f32.mrb[0].mxu0
      %v8812 = vadd.f32 0.0, %v8811
      %v8813 = vpop.f32.mrb[0].mxu0
      %8814 = vmatprep.mubr.bf16.mxu0 0
      %8815 = vmatmul.mubr.bf16.gmra.mrb[0].mxu0 %v8700
      %v8816 = vpop.f32.mrb[0].mxu0
      %v8817 = vadd.f32 0.0, %v8816
      %v8818 = vpop.f32.mrb[0].mxu0
      %v8819 = vpop.f32.mrb[0].mxu0
      %v8820 = vadd.f32 0.0, %v8819
      %v8821 = vpop.f32.mrb[0].mxu0
      %8822 = vmatprep.mubr.bf16.mxu0 0
      %8823 = vmatmul.mubr.bf16.gmra.mrb[0].mxu0 %v8703
      %v8824 = vpop.f32.mrb[0].mxu0
      %v8825 = vadd.f32 0.0, %v8824
      %v8826 = vpop.f32.mrb[0].mxu0
      %v8827 = vpop.f32.mrb[0].mxu0
      %v8828 = vadd.f32 0.0, %v8827
      %v8829 = vpop.f32.mrb[0].mxu0
      %8830 = vmatprep.mubr.bf16.mxu0 0
      %8831 = vmatmul.mubr.bf16.gmra.mrb[0].mxu0 %v8706
      %v8832 = vpop.f32.mrb[0].mxu0
      %v8833 = vadd.f32 0.0, %v8832
      %v8834 = vpop.f32.mrb[0].mxu0
      %v8835 = vpop.f32.mrb[0].mxu0
      %v8836 = vadd.f32 0.0, %v8835
      %v8837 = vpop.f32.mrb[0].mxu0
      %8838 = vmatprep.mubr.bf16.mxu0 0
      %8839 = vmatmul.mubr.bf16.gmra.mrb[0].mxu0 %v8709
      %v8840 = vpop.f32.mrb[0].mxu0
      %v8841 = vadd.f32 0.0, %v8840
      %v8842 = vpop.f32.mrb[0].mxu0
      %v8843 = vpop.f32.mrb[0].mxu0
      %v8844 = vadd.f32 0.0, %v8843
      %v8845 = vpop.f32.mrb[0].mxu0
      %8846 = vmatprep.mubr.bf16.mxu0 0
      %8847 = vmatmul.mubr.bf16.gmra.mrb[0].mxu0 %v8712
      %v8848 = vpop.f32.mrb[0].mxu0
      %v8849 = vadd.f32 0.0, %v8848
      %v8850 = vpop.f32.mrb[0].mxu0
      %v8851 = vpop.f32.mrb[0].mxu0
      %v8852 = vadd.f32 0.0, %v8851
      %v8853 = vpop.f32.mrb[0].mxu0
      %8854 = vmatprep.mubr.bf16.mxu0 0
      %8855 = vmatmul.mubr.bf16.gmra.mrb[0].mxu0 %v8715
      %v8856 = vpop.f32.mrb[0].mxu0
      %v8857 = vadd.f32 0.0, %v8856
      %v8858 = vpop.f32.mrb[0].mxu0
      %v8859 = vpop.f32.mrb[0].mxu0
      %v8860 = vadd.f32 0.0, %v8859
      %v8861 = vpop.f32.mrb[0].mxu0
      %8862 = vmatprep.mubr.bf16.mxu0 0
      %8863 = vmatmul.mubr.bf16.gmra.mrb[0].mxu0 %v8718
      %v8864 = vpop.f32.mrb[0].mxu0
      %v8865 = vadd.f32 0.0, %v8864
      %v8866 = vpop.f32.mrb[0].mxu0
      %v8867 = vpop.f32.mrb[0].mxu0
      %v8868 = vadd.f32 0.0, %v8867
      %v8869 = vpop.f32.mrb[0].mxu0
      %8870 = vmatprep.mubr.bf16.mxu0 0
      %8871 = vmatmul.mubr.bf16.gmra.mrb[0].mxu0 %v8721
      %v8872 = vpop.f32.mrb[0].mxu0
      %v8873 = vadd.f32 0.0, %v8872
      %v8874 = vpop.f32.mrb[0].mxu0
      %v8875 = vpop.f32.mrb[0].mxu0
      %v8876 = vadd.f32 0.0, %v8875
      %v8877 = vpop.f32.mrb[0].mxu0
      %8878 = vmatprep.mubr.bf16.mxu0 0
      %8879 = vmatmul.mubr.bf16.gmra.mrb[0].mxu0 %v8724
      %v8880 = vpop.f32.mrb[0].mxu0
      %v8881 = vadd.f32 0.0, %v8880
      %v8882 = vpop.f32.mrb[0].mxu0
      %v8883 = vpop.f32.mrb[0].mxu0
      %v8884 = vadd.f32 0.0, %v8883
      %v8885 = vpop.f32.mrb[0].mxu0
      %8886 = vdwg.mxu0
      %v8887 = vmul.f32 %v8761, %v729
      %v8888 = vmul.f32 %v8764, %v730
      %v8889 = vmul.f32 %v8769, %v731
      %v8890 = vmul.f32 %v8772, %v732
      %v8891 = vmul.f32 %v8777, %v733
      %v8892 = vmul.f32 %v8780, %v734
      %v8893 = vmul.f32 %v8785, %v735
      %v8894 = vmul.f32 %v8788, %v736
      %v8895 = vmul.f32 %v8793, %v737
      %v8896 = vmul.f32 %v8796, %v738
      %v8897 = vmul.f32 %v8801, %v739
      %v8898 = vmul.f32 %v8804, %v740
      %v8899 = vmul.f32 %v8809, %v741
      %v8900 = vmul.f32 %v8812, %v742
      %v8901 = vmul.f32 %v8817, %v743
      %v8902 = vmul.f32 %v8820, %v744
      %v8903 = vmul.f32 %v8825, %v745
      %v8904 = vmul.f32 %v8828, %v746
      %v8905 = vmul.f32 %v8833, %v747
      %v8906 = vmul.f32 %v8836, %v748
      %v8907 = vmul.f32 %v8841, %v749
      %v8908 = vmul.f32 %v8844, %v750
      %v8909 = vmul.f32 %v8849, %v751
      %v8910 = vmul.f32 %v8852, %v752
      %v8911 = vmul.f32 %v8857, %v753
      %v8912 = vmul.f32 %v8860, %v754
      %v8913 = vmul.f32 %v8865, %v755
      %v8914 = vmul.f32 %v8868, %v756
      %v8915 = vmul.f32 %v8873, %v757
      %v8916 = vmul.f32 %v8876, %v758
      %v8917 = vmul.f32 %v8881, %v759
      %v8918 = vmul.f32 %v8884, %v760
      %v8919 = vld [vmem:[#allocation4] sm:$0xff]
      %v8920 = vld [vmem:[#allocation4 + $0x8] sm:$0xff]
      %v8921 = vld [vmem:[#allocation4 + $0x10] sm:$0xff]
      %v8922 = vld [vmem:[#allocation4 + $0x18] sm:$0xff]
      %v8923 = vld [vmem:[#allocation4 + $0x20] sm:$0xff]
      %v8924 = vld [vmem:[#allocation4 + $0x28] sm:$0xff]
      %v8925 = vld [vmem:[#allocation4 + $0x30] sm:$0xff]
      %v8926 = vld [vmem:[#allocation4 + $0x38] sm:$0xff]
      %v8927 = vld [vmem:[#allocation4 + $0x40] sm:$0xff]
      %v8928 = vld [vmem:[#allocation4 + $0x48] sm:$0xff]
      %v8929 = vld [vmem:[#allocation4 + $0x50] sm:$0xff]
      %v8930 = vld [vmem:[#allocation4 + $0x58] sm:$0xff]
      %v8931 = vld [vmem:[#allocation4 + $0x60] sm:$0xff]
      %v8932 = vld [vmem:[#allocation4 + $0x68] sm:$0xff]
      %v8933 = vld [vmem:[#allocation4 + $0x70] sm:$0xff]
      %v8934 = vld [vmem:[#allocation4 + $0x78] sm:$0xff]
      %v8935 = vld [vmem:[#allocation4 + $0x80] sm:$0xff]
      %v8936 = vld [vmem:[#allocation4 + $0x88] sm:$0xff]
      %v8937 = vld [vmem:[#allocation4 + $0x90] sm:$0xff]
      %v8938 = vld [vmem:[#allocation4 + $0x98] sm:$0xff]
      %v8939 = vld [vmem:[#allocation4 + $0xa0] sm:$0xff]
      %v8940 = vld [vmem:[#allocation4 + $0xa8] sm:$0xff]
      %v8941 = vld [vmem:[#allocation4 + $0xb0] sm:$0xff]
      %v8942 = vld [vmem:[#allocation4 + $0xb8] sm:$0xff]
      %v8943 = vld [vmem:[#allocation4 + $0xc0] sm:$0xff]
      %v8944 = vld [vmem:[#allocation4 + $0xc8] sm:$0xff]
      %v8945 = vld [vmem:[#allocation4 + $0xd0] sm:$0xff]
      %v8946 = vld [vmem:[#allocation4 + $0xd8] sm:$0xff]
      %v8947 = vld [vmem:[#allocation4 + $0xe0] sm:$0xff]
      %v8948 = vld [vmem:[#allocation4 + $0xe8] sm:$0xff]
      %v8949 = vld [vmem:[#allocation4 + $0xf0] sm:$0xff]
      %v8950 = vld [vmem:[#allocation4 + $0xf8] sm:$0xff]
      %v8951 = vadd.f32 %v8919, %v8887
      %v8952 = vadd.f32 %v8920, %v8888
      %v8953 = vadd.f32 %v8921, %v8889
      %v8954 = vadd.f32 %v8922, %v8890
      %v8955 = vadd.f32 %v8923, %v8891
      %v8956 = vadd.f32 %v8924, %v8892
      %v8957 = vadd.f32 %v8925, %v8893
      %v8958 = vadd.f32 %v8926, %v8894
      %v8959 = vadd.f32 %v8927, %v8895
      %v8960 = vadd.f32 %v8928, %v8896
      %v8961 = vadd.f32 %v8929, %v8897
      %v8962 = vadd.f32 %v8930, %v8898
      %v8963 = vadd.f32 %v8931, %v8899
      %v8964 = vadd.f32 %v8932, %v8900
      %v8965 = vadd.f32 %v8933, %v8901
      %v8966 = vadd.f32 %v8934, %v8902
      %v8967 = vadd.f32 %v8935, %v8903
      %v8968 = vadd.f32 %v8936, %v8904
      %v8969 = vadd.f32 %v8937, %v8905
      %v8970 = vadd.f32 %v8938, %v8906
      %v8971 = vadd.f32 %v8939, %v8907
      %v8972 = vadd.f32 %v8940, %v8908
      %v8973 = vadd.f32 %v8941, %v8909
      %v8974 = vadd.f32 %v8942, %v8910
      %v8975 = vadd.f32 %v8943, %v8911
      %v8976 = vadd.f32 %v8944, %v8912
      %v8977 = vadd.f32 %v8945, %v8913
      %v8978 = vadd.f32 %v8946, %v8914
      %v8979 = vadd.f32 %v8947, %v8915
      %v8980 = vadd.f32 %v8948, %v8916
      %v8981 = vadd.f32 %v8949, %v8917
      %v8982 = vadd.f32 %v8950, %v8918
      %8983 = vst.msk [vmem:[#allocation4] sm:$0xff] %vm825, %v8951
      %8984 = vst.msk [vmem:[#allocation4 + $0x8] sm:$0xff] %vm825, %v8952
      %8985 = vst.msk [vmem:[#allocation4 + $0x10] sm:$0xff] %vm825, %v8953
      %8986 = vst.msk [vmem:[#allocation4 + $0x18] sm:$0xff] %vm825, %v8954
      %8987 = vst.msk [vmem:[#allocation4 + $0x20] sm:$0xff] %vm825, %v8955
      %8988 = vst.msk [vmem:[#allocation4 + $0x28] sm:$0xff] %vm825, %v8956
      %8989 = vst.msk [vmem:[#allocation4 + $0x30] sm:$0xff] %vm825, %v8957
      %8990 = vst.msk [vmem:[#allocation4 + $0x38] sm:$0xff] %vm825, %v8958
      %8991 = vst.msk [vmem:[#allocation4 + $0x40] sm:$0xff] %vm825, %v8959
      %8992 = vst.msk [vmem:[#allocation4 + $0x48] sm:$0xff] %vm825, %v8960
      %8993 = vst.msk [vmem:[#allocation4 + $0x50] sm:$0xff] %vm825, %v8961
      %8994 = vst.msk [vmem:[#allocation4 + $0x58] sm:$0xff] %vm825, %v8962
      %8995 = vst.msk [vmem:[#allocation4 + $0x60] sm:$0xff] %vm825, %v8963
      %8996 = vst.msk [vmem:[#allocation4 + $0x68] sm:$0xff] %vm825, %v8964
      %8997 = vst.msk [vmem:[#allocation4 + $0x70] sm:$0xff] %vm825, %v8965
      %8998 = vst.msk [vmem:[#allocation4 + $0x78] sm:$0xff] %vm825, %v8966
      %8999 = vst.msk [vmem:[#allocation4 + $0x80] sm:$0xff] %vm825, %v8967
      %9000 = vst.msk [vmem:[#allocation4 + $0x88] sm:$0xff] %vm825, %v8968
      %9001 = vst.msk [vmem:[#allocation4 + $0x90] sm:$0xff] %vm825, %v8969
      %9002 = vst.msk [vmem:[#allocation4 + $0x98] sm:$0xff] %vm825, %v8970
      %9003 = vst.msk [vmem:[#allocation4 + $0xa0] sm:$0xff] %vm825, %v8971
      %9004 = vst.msk [vmem:[#allocation4 + $0xa8] sm:$0xff] %vm825, %v8972
      %9005 = vst.msk [vmem:[#allocation4 + $0xb0] sm:$0xff] %vm825, %v8973
      %9006 = vst.msk [vmem:[#allocation4 + $0xb8] sm:$0xff] %vm825, %v8974
      %9007 = vst.msk [vmem:[#allocation4 + $0xc0] sm:$0xff] %vm825, %v8975
      %9008 = vst.msk [vmem:[#allocation4 + $0xc8] sm:$0xff] %vm825, %v8976
      %9009 = vst.msk [vmem:[#allocation4 + $0xd0] sm:$0xff] %vm825, %v8977
      %9010 = vst.msk [vmem:[#allocation4 + $0xd8] sm:$0xff] %vm825, %v8978
      %9011 = vst.msk [vmem:[#allocation4 + $0xe0] sm:$0xff] %vm825, %v8979
      %9012 = vst.msk [vmem:[#allocation4 + $0xe8] sm:$0xff] %vm825, %v8980
      %9013 = vst.msk [vmem:[#allocation4 + $0xf0] sm:$0xff] %vm825, %v8981
      %9014 = vst.msk [vmem:[#allocation4 + $0xf8] sm:$0xff] %vm825, %v8982
      %v9015 = vld [vmem:[#allocation3 + $0x10] sm:$0xf0]
      %v9016 = vld [vmem:[#allocation3 + $0x18] sm:$0xff]
      %v9017 = vld [vmem:[#allocation3 + $0x20] sm:$0xff]
      %v9018 = vld [vmem:[#allocation3 + $0x28] sm:$0xff]
      %v9019 = vld [vmem:[#allocation3 + $0x30] sm:$0xff]
      %v9020 = vld [vmem:[#allocation3 + $0x38] sm:$0xff]
      %v9021 = vld [vmem:[#allocation3 + $0x40] sm:$0xff]
      %v9022 = vld [vmem:[#allocation3 + $0x48] sm:$0xff]
      %v9023 = vld [vmem:[#allocation3 + $0x50] sm:$0xff]
      %v9024 = vld [vmem:[#allocation3 + $0x58] sm:$0xff]
      %v9025 = vld [vmem:[#allocation3 + $0x60] sm:$0xff]
      %v9026 = vld [vmem:[#allocation3 + $0x68] sm:$0xff]
      %v9027 = vld [vmem:[#allocation3 + $0x70] sm:$0xff]
      %v9028 = vld [vmem:[#allocation3 + $0x78] sm:$0xff]
      %v9029 = vld [vmem:[#allocation3 + $0x80] sm:$0xff]
      %v9030 = vld [vmem:[#allocation3 + $0x88] sm:$0xff]
      %v9031 = vld [vmem:[#allocation3 + $0x90] sm:$0xf]
      %s9032 = scalar_lea.vmem %s4, 112
      %v9033 = vld [vmem:[%s9032] sm:$0xf]
      %v9034 = vld [vmem:[%s9032 + $0x4] sm:$0xf]
      %v9035 = vld [vmem:[%s9032 + $0x8] sm:$0xf]
      %v9036 = vld [vmem:[%s9032 + $0xc] sm:$0xf]
      %v9054 = vrot.slane %v9015, 4
      %v9055 = vrot.slane %v9016, 4
      %v9056 = vsel %vm1607, %v9054, %v9055
      %v9057 = vrot.slane %v9017, 4
      %v9058 = vsel %vm1607, %v9055, %v9057
      %v9059 = vrot.slane %v9018, 4
      %v9060 = vsel %vm1607, %v9057, %v9059
      %v9061 = vrot.slane %v9019, 4
      %v9062 = vsel %vm1607, %v9059, %v9061
      %v9063 = vrot.slane %v9020, 4
      %v9064 = vsel %vm1607, %v9061, %v9063
      %v9065 = vrot.slane %v9021, 4
      %v9066 = vsel %vm1607, %v9063, %v9065
      %v9067 = vrot.slane %v9022, 4
      %v9068 = vsel %vm1607, %v9065, %v9067
      %v9069 = vrot.slane %v9023, 4
      %v9070 = vsel %vm1607, %v9067, %v9069
      %v9071 = vrot.slane %v9024, 4
      %v9072 = vsel %vm1607, %v9069, %v9071
      %v9073 = vrot.slane %v9025, 4
      %v9074 = vsel %vm1607, %v9071, %v9073
      %v9075 = vrot.slane %v9026, 4
      %v9076 = vsel %vm1607, %v9073, %v9075
      %v9077 = vrot.slane %v9027, 4
      %v9078 = vsel %vm1607, %v9075, %v9077
      %v9079 = vrot.slane %v9028, 4
      %v9080 = vsel %vm1607, %v9077, %v9079
      %v9081 = vrot.slane %v9029, 4
      %v9082 = vsel %vm1607, %v9079, %v9081
      %v9083 = vrot.slane %v9030, 4
      %v9084 = vsel %vm1607, %v9081, %v9083
      %v9085 = vrot.slane %v9031, 4
      %v9086 = vsel %vm1607, %v9083, %v9085
      %v9091 = vunpack.c.l.b16 %v9033
      %v9092 = vunpack.c.l.b16 %v9034
      %v9093 = vunpack.c.l.b16 %v9035
      %v9094 = vunpack.c.l.b16 %v9036
      %v9095 = vpack.c.b16 %v9092, %v9091
      %v9096 = vpack.c.b16 %v9094, %v9093
      %v9100 = vsel %vm825, %v9056, 0
      %v9103 = vsel %vm825, %v9058, 0
      %v9106 = vsel %vm825, %v9060, 0
      %v9109 = vsel %vm825, %v9062, 0
      %v9112 = vsel %vm825, %v9064, 0
      %v9115 = vsel %vm825, %v9066, 0
      %v9118 = vsel %vm825, %v9068, 0
      %v9121 = vsel %vm825, %v9070, 0
      %v9124 = vsel %vm825, %v9072, 0
      %v9127 = vsel %vm825, %v9074, 0
      %v9130 = vsel %vm825, %v9076, 0
      %v9133 = vsel %vm825, %v9078, 0
      %v9136 = vsel %vm825, %v9080, 0
      %v9139 = vsel %vm825, %v9082, 0
      %v9142 = vsel %vm825, %v9084, 0
      %v9145 = vsel %vm825, %v9086, 0
      %9147 = vmatprep.subr.bf16.mxu0 0
      %9148 = vmatpush1.bf16.msra.mxu0 %v9095
      %9149 = vmatprep.subr.bf16.mxu0 0
      %9150 = vmatpush1.bf16.msra.mxu0 %v9096
      %9151 = vmatprep.subr.bf16.mxu0 0
      %9152 = vmatpush1.bf16.msra.mxu0 0
      %9153 = vmatprep.subr.bf16.mxu0 0
      %9154 = vmatpush1.bf16.msra.mxu0 0
      %9155 = vmatprep.subr.bf16.mxu0 0
      %9156 = vmatpush1.bf16.msra.mxu0 0
      %9157 = vmatprep.subr.bf16.mxu0 0
      %9158 = vmatpush1.bf16.msra.mxu0 0
      %9159 = vmatprep.subr.bf16.mxu0 0
      %9160 = vmatpush1.bf16.msra.mxu0 0
      %9161 = vmatprep.subr.bf16.mxu0 0
      %9162 = vmatpush1.bf16.msra.mxu0 0
      %9163 = vmatprep.subr.bf16.mxu0 0
      %9164 = vmatpush1.bf16.msra.mxu0 0
      %9165 = vmatprep.subr.bf16.mxu0 0
      %9166 = vmatpush1.bf16.msra.mxu0 0
      %9167 = vmatprep.subr.bf16.mxu0 0
      %9168 = vmatpush1.bf16.msra.mxu0 0
      %9169 = vmatprep.subr.bf16.mxu0 0
      %9170 = vmatpush1.bf16.msra.mxu0 0
      %9171 = vmatprep.subr.bf16.mxu0 0
      %9172 = vmatpush1.bf16.msra.mxu0 0
      %9173 = vmatprep.subr.bf16.mxu0 0
      %9174 = vmatpush1.bf16.msra.mxu0 0
      %9175 = vmatprep.subr.bf16.mxu0 0
      %9176 = vmatpush1.bf16.msra.mxu0 0
      %9177 = vmatprep.subr.bf16.mxu0 0
      %9178 = vmatpush1.bf16.msra.mxu0 0
      %9179 = vmatprep.mubr.bf16.mxu0 0
      %9180 = vmatmul.mubr.bf16.gmra.mrb[0].mxu0 %v9100
      %v9181 = vpop.f32.mrb[0].mxu0
      %v9182 = vadd.f32 0.0, %v9181
      %v9183 = vpop.f32.mrb[0].mxu0
      %v9184 = vpop.f32.mrb[0].mxu0
      %v9185 = vadd.f32 0.0, %v9184
      %v9186 = vpop.f32.mrb[0].mxu0
      %9187 = vmatprep.mubr.bf16.mxu0 0
      %9188 = vmatmul.mubr.bf16.gmra.mrb[0].mxu0 %v9103
      %v9189 = vpop.f32.mrb[0].mxu0
      %v9190 = vadd.f32 0.0, %v9189
      %v9191 = vpop.f32.mrb[0].mxu0
      %v9192 = vpop.f32.mrb[0].mxu0
      %v9193 = vadd.f32 0.0, %v9192
      %v9194 = vpop.f32.mrb[0].mxu0
      %9195 = vmatprep.mubr.bf16.mxu0 0
      %9196 = vmatmul.mubr.bf16.gmra.mrb[0].mxu0 %v9106
      %v9197 = vpop.f32.mrb[0].mxu0
      %v9198 = vadd.f32 0.0, %v9197
      %v9199 = vpop.f32.mrb[0].mxu0
      %v9200 = vpop.f32.mrb[0].mxu0
      %v9201 = vadd.f32 0.0, %v9200
      %v9202 = vpop.f32.mrb[0].mxu0
      %9203 = vmatprep.mubr.bf16.mxu0 0
      %9204 = vmatmul.mubr.bf16.gmra.mrb[0].mxu0 %v9109
      %v9205 = vpop.f32.mrb[0].mxu0
      %v9206 = vadd.f32 0.0, %v9205
      %v9207 = vpop.f32.mrb[0].mxu0
      %v9208 = vpop.f32.mrb[0].mxu0
      %v9209 = vadd.f32 0.0, %v9208
      %v9210 = vpop.f32.mrb[0].mxu0
      %9211 = vmatprep.mubr.bf16.mxu0 0
      %9212 = vmatmul.mubr.bf16.gmra.mrb[0].mxu0 %v9112
      %v9213 = vpop.f32.mrb[0].mxu0
      %v9214 = vadd.f32 0.0, %v9213
      %v9215 = vpop.f32.mrb[0].mxu0
      %v9216 = vpop.f32.mrb[0].mxu0
      %v9217 = vadd.f32 0.0, %v9216
      %v9218 = vpop.f32.mrb[0].mxu0
      %9219 = vmatprep.mubr.bf16.mxu0 0
      %9220 = vmatmul.mubr.bf16.gmra.mrb[0].mxu0 %v9115
      %v9221 = vpop.f32.mrb[0].mxu0
      %v9222 = vadd.f32 0.0, %v9221
      %v9223 = vpop.f32.mrb[0].mxu0
      %v9224 = vpop.f32.mrb[0].mxu0
      %v9225 = vadd.f32 0.0, %v9224
      %v9226 = vpop.f32.mrb[0].mxu0
      %9227 = vmatprep.mubr.bf16.mxu0 0
      %9228 = vmatmul.mubr.bf16.gmra.mrb[0].mxu0 %v9118
      %v9229 = vpop.f32.mrb[0].mxu0
      %v9230 = vadd.f32 0.0, %v9229
      %v9231 = vpop.f32.mrb[0].mxu0
      %v9232 = vpop.f32.mrb[0].mxu0
      %v9233 = vadd.f32 0.0, %v9232
      %v9234 = vpop.f32.mrb[0].mxu0
      %9235 = vmatprep.mubr.bf16.mxu0 0
      %9236 = vmatmul.mubr.bf16.gmra.mrb[0].mxu0 %v9121
      %v9237 = vpop.f32.mrb[0].mxu0
      %v9238 = vadd.f32 0.0, %v9237
      %v9239 = vpop.f32.mrb[0].mxu0
      %v9240 = vpop.f32.mrb[0].mxu0
      %v9241 = vadd.f32 0.0, %v9240
      %v9242 = vpop.f32.mrb[0].mxu0
      %9243 = vmatprep.mubr.bf16.mxu0 0
      %9244 = vmatmul.mubr.bf16.gmra.mrb[0].mxu0 %v9124
      %v9245 = vpop.f32.mrb[0].mxu0
      %v9246 = vadd.f32 0.0, %v9245
      %v9247 = vpop.f32.mrb[0].mxu0
      %v9248 = vpop.f32.mrb[0].mxu0
      %v9249 = vadd.f32 0.0, %v9248
      %v9250 = vpop.f32.mrb[0].mxu0
      %9251 = vmatprep.mubr.bf16.mxu0 0
      %9252 = vmatmul.mubr.bf16.gmra.mrb[0].mxu0 %v9127
      %v9253 = vpop.f32.mrb[0].mxu0
      %v9254 = vadd.f32 0.0, %v9253
      %v9255 = vpop.f32.mrb[0].mxu0
      %v9256 = vpop.f32.mrb[0].mxu0
      %v9257 = vadd.f32 0.0, %v9256
      %v9258 = vpop.f32.mrb[0].mxu0
      %9259 = vmatprep.mubr.bf16.mxu0 0
      %9260 = vmatmul.mubr.bf16.gmra.mrb[0].mxu0 %v9130
      %v9261 = vpop.f32.mrb[0].mxu0
      %v9262 = vadd.f32 0.0, %v9261
      %v9263 = vpop.f32.mrb[0].mxu0
      %v9264 = vpop.f32.mrb[0].mxu0
      %v9265 = vadd.f32 0.0, %v9264
      %v9266 = vpop.f32.mrb[0].mxu0
      %9267 = vmatprep.mubr.bf16.mxu0 0
      %9268 = vmatmul.mubr.bf16.gmra.mrb[0].mxu0 %v9133
      %v9269 = vpop.f32.mrb[0].mxu0
      %v9270 = vadd.f32 0.0, %v9269
      %v9271 = vpop.f32.mrb[0].mxu0
      %v9272 = vpop.f32.mrb[0].mxu0
      %v9273 = vadd.f32 0.0, %v9272
      %v9274 = vpop.f32.mrb[0].mxu0
      %9275 = vmatprep.mubr.bf16.mxu0 0
      %9276 = vmatmul.mubr.bf16.gmra.mrb[0].mxu0 %v9136
      %v9277 = vpop.f32.mrb[0].mxu0
      %v9278 = vadd.f32 0.0, %v9277
      %v9279 = vpop.f32.mrb[0].mxu0
      %v9280 = vpop.f32.mrb[0].mxu0
      %v9281 = vadd.f32 0.0, %v9280
      %v9282 = vpop.f32.mrb[0].mxu0
      %9283 = vmatprep.mubr.bf16.mxu0 0
      %9284 = vmatmul.mubr.bf16.gmra.mrb[0].mxu0 %v9139
      %v9285 = vpop.f32.mrb[0].mxu0
      %v9286 = vadd.f32 0.0, %v9285
      %v9287 = vpop.f32.mrb[0].mxu0
      %v9288 = vpop.f32.mrb[0].mxu0
      %v9289 = vadd.f32 0.0, %v9288
      %v9290 = vpop.f32.mrb[0].mxu0
      %9291 = vmatprep.mubr.bf16.mxu0 0
      %9292 = vmatmul.mubr.bf16.gmra.mrb[0].mxu0 %v9142
      %v9293 = vpop.f32.mrb[0].mxu0
      %v9294 = vadd.f32 0.0, %v9293
      %v9295 = vpop.f32.mrb[0].mxu0
      %v9296 = vpop.f32.mrb[0].mxu0
      %v9297 = vadd.f32 0.0, %v9296
      %v9298 = vpop.f32.mrb[0].mxu0
      %9299 = vmatprep.mubr.bf16.mxu0 0
      %9300 = vmatmul.mubr.bf16.gmra.mrb[0].mxu0 %v9145
      %v9301 = vpop.f32.mrb[0].mxu0
      %v9302 = vadd.f32 0.0, %v9301
      %v9303 = vpop.f32.mrb[0].mxu0
      %v9304 = vpop.f32.mrb[0].mxu0
      %v9305 = vadd.f32 0.0, %v9304
      %v9306 = vpop.f32.mrb[0].mxu0
      %9307 = vdwg.mxu0
      %v9308 = vld [vmem:[#allocation4] sm:$0xff]
      %v9309 = vld [vmem:[#allocation4 + $0x8] sm:$0xff]
      %v9310 = vld [vmem:[#allocation4 + $0x10] sm:$0xff]
      %v9311 = vld [vmem:[#allocation4 + $0x18] sm:$0xff]
      %v9312 = vld [vmem:[#allocation4 + $0x20] sm:$0xff]
      %v9313 = vld [vmem:[#allocation4 + $0x28] sm:$0xff]
      %v9314 = vld [vmem:[#allocation4 + $0x30] sm:$0xff]
      %v9315 = vld [vmem:[#allocation4 + $0x38] sm:$0xff]
      %v9316 = vld [vmem:[#allocation4 + $0x40] sm:$0xff]
      %v9317 = vld [vmem:[#allocation4 + $0x48] sm:$0xff]
      %v9318 = vld [vmem:[#allocation4 + $0x50] sm:$0xff]
      %v9319 = vld [vmem:[#allocation4 + $0x58] sm:$0xff]
      %v9320 = vld [vmem:[#allocation4 + $0x60] sm:$0xff]
      %v9321 = vld [vmem:[#allocation4 + $0x68] sm:$0xff]
      %v9322 = vld [vmem:[#allocation4 + $0x70] sm:$0xff]
      %v9323 = vld [vmem:[#allocation4 + $0x78] sm:$0xff]
      %v9324 = vld [vmem:[#allocation4 + $0x80] sm:$0xff]
      %v9325 = vld [vmem:[#allocation4 + $0x88] sm:$0xff]
      %v9326 = vld [vmem:[#allocation4 + $0x90] sm:$0xff]
      %v9327 = vld [vmem:[#allocation4 + $0x98] sm:$0xff]
      %v9328 = vld [vmem:[#allocation4 + $0xa0] sm:$0xff]
      %v9329 = vld [vmem:[#allocation4 + $0xa8] sm:$0xff]
      %v9330 = vld [vmem:[#allocation4 + $0xb0] sm:$0xff]
      %v9331 = vld [vmem:[#allocation4 + $0xb8] sm:$0xff]
      %v9332 = vld [vmem:[#allocation4 + $0xc0] sm:$0xff]
      %v9333 = vld [vmem:[#allocation4 + $0xc8] sm:$0xff]
      %v9334 = vld [vmem:[#allocation4 + $0xd0] sm:$0xff]
      %v9335 = vld [vmem:[#allocation4 + $0xd8] sm:$0xff]
      %v9336 = vld [vmem:[#allocation4 + $0xe0] sm:$0xff]
      %v9337 = vld [vmem:[#allocation4 + $0xe8] sm:$0xff]
      %v9338 = vld [vmem:[#allocation4 + $0xf0] sm:$0xff]
      %v9339 = vld [vmem:[#allocation4 + $0xf8] sm:$0xff]
      %v9340 = vadd.f32 %v9308, %v9182
      %v9341 = vadd.f32 %v9309, %v9185
      %v9342 = vadd.f32 %v9310, %v9190
      %v9343 = vadd.f32 %v9311, %v9193
      %v9344 = vadd.f32 %v9312, %v9198
      %v9345 = vadd.f32 %v9313, %v9201
      %v9346 = vadd.f32 %v9314, %v9206
      %v9347 = vadd.f32 %v9315, %v9209
      %v9348 = vadd.f32 %v9316, %v9214
      %v9349 = vadd.f32 %v9317, %v9217
      %v9350 = vadd.f32 %v9318, %v9222
      %v9351 = vadd.f32 %v9319, %v9225
      %v9352 = vadd.f32 %v9320, %v9230
      %v9353 = vadd.f32 %v9321, %v9233
      %v9354 = vadd.f32 %v9322, %v9238
      %v9355 = vadd.f32 %v9323, %v9241
      %v9356 = vadd.f32 %v9324, %v9246
      %v9357 = vadd.f32 %v9325, %v9249
      %v9358 = vadd.f32 %v9326, %v9254
      %v9359 = vadd.f32 %v9327, %v9257
      %v9360 = vadd.f32 %v9328, %v9262
      %v9361 = vadd.f32 %v9329, %v9265
      %v9362 = vadd.f32 %v9330, %v9270
      %v9363 = vadd.f32 %v9331, %v9273
      %v9364 = vadd.f32 %v9332, %v9278
      %v9365 = vadd.f32 %v9333, %v9281
      %v9366 = vadd.f32 %v9334, %v9286
      %v9367 = vadd.f32 %v9335, %v9289
      %v9368 = vadd.f32 %v9336, %v9294
      %v9369 = vadd.f32 %v9337, %v9297
      %v9370 = vadd.f32 %v9338, %v9302
      %v9371 = vadd.f32 %v9339, %v9305
      %9372 = vst.msk [vmem:[#allocation4] sm:$0xff] %vm825, %v9340
      %9373 = vst.msk [vmem:[#allocation4 + $0x8] sm:$0xff] %vm825, %v9341
      %9374 = vst.msk [vmem:[#allocation4 + $0x10] sm:$0xff] %vm825, %v9342
      %9375 = vst.msk [vmem:[#allocation4 + $0x18] sm:$0xff] %vm825, %v9343
      %9376 = vst.msk [vmem:[#allocation4 + $0x20] sm:$0xff] %vm825, %v9344
      %9377 = vst.msk [vmem:[#allocation4 + $0x28] sm:$0xff] %vm825, %v9345
      %9378 = vst.msk [vmem:[#allocation4 + $0x30] sm:$0xff] %vm825, %v9346
      %9379 = vst.msk [vmem:[#allocation4 + $0x38] sm:$0xff] %vm825, %v9347
      %9380 = vst.msk [vmem:[#allocation4 + $0x40] sm:$0xff] %vm825, %v9348
      %9381 = vst.msk [vmem:[#allocation4 + $0x48] sm:$0xff] %vm825, %v9349
      %9382 = vst.msk [vmem:[#allocation4 + $0x50] sm:$0xff] %vm825, %v9350
      %9383 = vst.msk [vmem:[#allocation4 + $0x58] sm:$0xff] %vm825, %v9351
      %9384 = vst.msk [vmem:[#allocation4 + $0x60] sm:$0xff] %vm825, %v9352
      %9385 = vst.msk [vmem:[#allocation4 + $0x68] sm:$0xff] %vm825, %v9353
      %9386 = vst.msk [vmem:[#allocation4 + $0x70] sm:$0xff] %vm825, %v9354
      %9387 = vst.msk [vmem:[#allocation4 + $0x78] sm:$0xff] %vm825, %v9355
      %9388 = vst.msk [vmem:[#allocation4 + $0x80] sm:$0xff] %vm825, %v9356
      %9389 = vst.msk [vmem:[#allocation4 + $0x88] sm:$0xff] %vm825, %v9357
      %9390 = vst.msk [vmem:[#allocation4 + $0x90] sm:$0xff] %vm825, %v9358
      %9391 = vst.msk [vmem:[#allocation4 + $0x98] sm:$0xff] %vm825, %v9359
      %9392 = vst.msk [vmem:[#allocation4 + $0xa0] sm:$0xff] %vm825, %v9360
      %9393 = vst.msk [vmem:[#allocation4 + $0xa8] sm:$0xff] %vm825, %v9361
      %9394 = vst.msk [vmem:[#allocation4 + $0xb0] sm:$0xff] %vm825, %v9362
      %9395 = vst.msk [vmem:[#allocation4 + $0xb8] sm:$0xff] %vm825, %v9363
      %9396 = vst.msk [vmem:[#allocation4 + $0xc0] sm:$0xff] %vm825, %v9364
      %9397 = vst.msk [vmem:[#allocation4 + $0xc8] sm:$0xff] %vm825, %v9365
      %9398 = vst.msk [vmem:[#allocation4 + $0xd0] sm:$0xff] %vm825, %v9366
      %9399 = vst.msk [vmem:[#allocation4 + $0xd8] sm:$0xff] %vm825, %v9367
      %9400 = vst.msk [vmem:[#allocation4 + $0xe0] sm:$0xff] %vm825, %v9368
      %9401 = vst.msk [vmem:[#allocation4 + $0xe8] sm:$0xff] %vm825, %v9369
      %9402 = vst.msk [vmem:[#allocation4 + $0xf0] sm:$0xff] %vm825, %v9370
      %9403 = vst.msk [vmem:[#allocation4 + $0xf8] sm:$0xff] %vm825, %v9371
      %v9404 = vld [vmem:[#allocation3 + $0x10] sm:$0xf0]
      %v9405 = vld [vmem:[#allocation3 + $0x18] sm:$0xff]
      %v9406 = vld [vmem:[#allocation3 + $0x20] sm:$0xff]
      %v9407 = vld [vmem:[#allocation3 + $0x28] sm:$0xff]
      %v9408 = vld [vmem:[#allocation3 + $0x30] sm:$0xff]
      %v9409 = vld [vmem:[#allocation3 + $0x38] sm:$0xff]
      %v9410 = vld [vmem:[#allocation3 + $0x40] sm:$0xff]
      %v9411 = vld [vmem:[#allocation3 + $0x48] sm:$0xff]
      %v9412 = vld [vmem:[#allocation3 + $0x50] sm:$0xff]
      %v9413 = vld [vmem:[#allocation3 + $0x58] sm:$0xff]
      %v9414 = vld [vmem:[#allocation3 + $0x60] sm:$0xff]
      %v9415 = vld [vmem:[#allocation3 + $0x68] sm:$0xff]
      %v9416 = vld [vmem:[#allocation3 + $0x70] sm:$0xff]
      %v9417 = vld [vmem:[#allocation3 + $0x78] sm:$0xff]
      %v9418 = vld [vmem:[#allocation3 + $0x80] sm:$0xff]
      %v9419 = vld [vmem:[#allocation3 + $0x88] sm:$0xff]
      %v9420 = vld [vmem:[#allocation3 + $0x90] sm:$0x1f]
      %s9421 = scalar_lea.vmem %s4, 128
      %v9422 = vld [vmem:[%s9421] sm:$0xf]
      %v9423 = vld [vmem:[%s9421 + $0x4] sm:$0xf]
      %v9424 = vld [vmem:[%s9421 + $0x8] sm:$0xf]
      %v9425 = vld [vmem:[%s9421 + $0xc] sm:$0xf]
      %v9427 = vshrl.u32 %v9404, 16
      %v9429 = vrot.slane %v9427, 4
      %v9430 = vshll.u32 %v9404, 16
      %v9432 = vrot.slane %v9430, 5
      %v9433 = vor.u32 %v9429, %v9432
      %v9435 = vshrl.u32 %v9405, 16
      %v9437 = vrot.slane %v9435, 4
      %v9438 = vshll.u32 %v9405, 16
      %v9440 = vrot.slane %v9438, 5
      %v9441 = vor.u32 %v9437, %v9440
      %v9442 = vsel %vm1980, %v9433, %v9441
      %v9444 = vshrl.u32 %v9406, 16
      %v9446 = vrot.slane %v9444, 4
      %v9447 = vshll.u32 %v9406, 16
      %v9449 = vrot.slane %v9447, 5
      %v9450 = vor.u32 %v9446, %v9449
      %v9451 = vsel %vm1980, %v9441, %v9450
      %v9453 = vshrl.u32 %v9407, 16
      %v9455 = vrot.slane %v9453, 4
      %v9456 = vshll.u32 %v9407, 16
      %v9458 = vrot.slane %v9456, 5
      %v9459 = vor.u32 %v9455, %v9458
      %v9460 = vsel %vm1980, %v9450, %v9459
      %v9462 = vshrl.u32 %v9408, 16
      %v9464 = vrot.slane %v9462, 4
      %v9465 = vshll.u32 %v9408, 16
      %v9467 = vrot.slane %v9465, 5
      %v9468 = vor.u32 %v9464, %v9467
      %v9469 = vsel %vm1980, %v9459, %v9468
      %v9471 = vshrl.u32 %v9409, 16
      %v9473 = vrot.slane %v9471, 4
      %v9474 = vshll.u32 %v9409, 16
      %v9476 = vrot.slane %v9474, 5
      %v9477 = vor.u32 %v9473, %v9476
      %v9478 = vsel %vm1980, %v9468, %v9477
      %v9480 = vshrl.u32 %v9410, 16
      %v9482 = vrot.slane %v9480, 4
      %v9483 = vshll.u32 %v9410, 16
      %v9485 = vrot.slane %v9483, 5
      %v9486 = vor.u32 %v9482, %v9485
      %v9487 = vsel %vm1980, %v9477, %v9486
      %v9489 = vshrl.u32 %v9411, 16
      %v9491 = vrot.slane %v9489, 4
      %v9492 = vshll.u32 %v9411, 16
      %v9494 = vrot.slane %v9492, 5
      %v9495 = vor.u32 %v9491, %v9494
      %v9496 = vsel %vm1980, %v9486, %v9495
      %v9498 = vshrl.u32 %v9412, 16
      %v9500 = vrot.slane %v9498, 4
      %v9501 = vshll.u32 %v9412, 16
      %v9503 = vrot.slane %v9501, 5
      %v9504 = vor.u32 %v9500, %v9503
      %v9505 = vsel %vm1980, %v9495, %v9504
      %v9507 = vshrl.u32 %v9413, 16
      %v9509 = vrot.slane %v9507, 4
      %v9510 = vshll.u32 %v9413, 16
      %v9512 = vrot.slane %v9510, 5
      %v9513 = vor.u32 %v9509, %v9512
      %v9514 = vsel %vm1980, %v9504, %v9513
      %v9516 = vshrl.u32 %v9414, 16
      %v9518 = vrot.slane %v9516, 4
      %v9519 = vshll.u32 %v9414, 16
      %v9521 = vrot.slane %v9519, 5
      %v9522 = vor.u32 %v9518, %v9521
      %v9523 = vsel %vm1980, %v9513, %v9522
      %v9525 = vshrl.u32 %v9415, 16
      %v9527 = vrot.slane %v9525, 4
      %v9528 = vshll.u32 %v9415, 16
      %v9530 = vrot.slane %v9528, 5
      %v9531 = vor.u32 %v9527, %v9530
      %v9532 = vsel %vm1980, %v9522, %v9531
      %v9534 = vshrl.u32 %v9416, 16
      %v9536 = vrot.slane %v9534, 4
      %v9537 = vshll.u32 %v9416, 16
      %v9539 = vrot.slane %v9537, 5
      %v9540 = vor.u32 %v9536, %v9539
      %v9541 = vsel %vm1980, %v9531, %v9540
      %v9543 = vshrl.u32 %v9417, 16
      %v9545 = vrot.slane %v9543, 4
      %v9546 = vshll.u32 %v9417, 16
      %v9548 = vrot.slane %v9546, 5
      %v9549 = vor.u32 %v9545, %v9548
      %v9550 = vsel %vm1980, %v9540, %v9549
      %v9552 = vshrl.u32 %v9418, 16
      %v9554 = vrot.slane %v9552, 4
      %v9555 = vshll.u32 %v9418, 16
      %v9557 = vrot.slane %v9555, 5
      %v9558 = vor.u32 %v9554, %v9557
      %v9559 = vsel %vm1980, %v9549, %v9558
      %v9561 = vshrl.u32 %v9419, 16
      %v9563 = vrot.slane %v9561, 4
      %v9564 = vshll.u32 %v9419, 16
      %v9566 = vrot.slane %v9564, 5
      %v9567 = vor.u32 %v9563, %v9566
      %v9568 = vsel %vm1980, %v9558, %v9567
      %v9570 = vshrl.u32 %v9420, 16
      %v9572 = vrot.slane %v9570, 4
      %v9573 = vshll.u32 %v9420, 16
      %v9575 = vrot.slane %v9573, 5
      %v9576 = vor.u32 %v9572, %v9575
      %v9577 = vsel %vm1980, %v9567, %v9576
      %v9582 = vunpack.c.l.b16 %v9422
      %v9583 = vunpack.c.l.b16 %v9423
      %v9584 = vunpack.c.l.b16 %v9424
      %v9585 = vunpack.c.l.b16 %v9425
      %v9586 = vpack.c.b16 %v9583, %v9582
      %v9587 = vpack.c.b16 %v9585, %v9584
      %v9591 = vsel %vm825, %v9442, 0
      %v9594 = vsel %vm825, %v9451, 0
      %v9597 = vsel %vm825, %v9460, 0
      %v9600 = vsel %vm825, %v9469, 0
      %v9603 = vsel %vm825, %v9478, 0
      %v9606 = vsel %vm825, %v9487, 0
      %v9609 = vsel %vm825, %v9496, 0
      %v9612 = vsel %vm825, %v9505, 0
      %v9615 = vsel %vm825, %v9514, 0
      %v9618 = vsel %vm825, %v9523, 0
      %v9621 = vsel %vm825, %v9532, 0
      %v9624 = vsel %vm825, %v9541, 0
      %v9627 = vsel %vm825, %v9550, 0
      %v9630 = vsel %vm825, %v9559, 0
      %v9633 = vsel %vm825, %v9568, 0
      %v9636 = vsel %vm825, %v9577, 0
      %9638 = vmatprep.subr.bf16.mxu0 0
      %9639 = vmatpush1.bf16.msra.mxu0 %v9586
      %9640 = vmatprep.subr.bf16.mxu0 0
      %9641 = vmatpush1.bf16.msra.mxu0 %v9587
      %9642 = vmatprep.subr.bf16.mxu0 0
      %9643 = vmatpush1.bf16.msra.mxu0 0
      %9644 = vmatprep.subr.bf16.mxu0 0
      %9645 = vmatpush1.bf16.msra.mxu0 0
      %9646 = vmatprep.subr.bf16.mxu0 0
      %9647 = vmatpush1.bf16.msra.mxu0 0
      %9648 = vmatprep.subr.bf16.mxu0 0
      %9649 = vmatpush1.bf16.msra.mxu0 0
      %9650 = vmatprep.subr.bf16.mxu0 0
      %9651 = vmatpush1.bf16.msra.mxu0 0
      %9652 = vmatprep.subr.bf16.mxu0 0
      %9653 = vmatpush1.bf16.msra.mxu0 0
      %9654 = vmatprep.subr.bf16.mxu0 0
      %9655 = vmatpush1.bf16.msra.mxu0 0
      %9656 = vmatprep.subr.bf16.mxu0 0
      %9657 = vmatpush1.bf16.msra.mxu0 0
      %9658 = vmatprep.subr.bf16.mxu0 0
      %9659 = vmatpush1.bf16.msra.mxu0 0
      %9660 = vmatprep.subr.bf16.mxu0 0
      %9661 = vmatpush1.bf16.msra.mxu0 0
      %9662 = vmatprep.subr.bf16.mxu0 0
      %9663 = vmatpush1.bf16.msra.mxu0 0
      %9664 = vmatprep.subr.bf16.mxu0 0
      %9665 = vmatpush1.bf16.msra.mxu0 0
      %9666 = vmatprep.subr.bf16.mxu0 0
      %9667 = vmatpush1.bf16.msra.mxu0 0
      %9668 = vmatprep.subr.bf16.mxu0 0
      %9669 = vmatpush1.bf16.msra.mxu0 0
      %9670 = vmatprep.mubr.bf16.mxu0 0
      %9671 = vmatmul.mubr.bf16.gmra.mrb[0].mxu0 %v9591
      %v9672 = vpop.f32.mrb[0].mxu0
      %v9673 = vadd.f32 0.0, %v9672
      %v9674 = vpop.f32.mrb[0].mxu0
      %v9675 = vpop.f32.mrb[0].mxu0
      %v9676 = vadd.f32 0.0, %v9675
      %v9677 = vpop.f32.mrb[0].mxu0
      %9678 = vmatprep.mubr.bf16.mxu0 0
      %9679 = vmatmul.mubr.bf16.gmra.mrb[0].mxu0 %v9594
      %v9680 = vpop.f32.mrb[0].mxu0
      %v9681 = vadd.f32 0.0, %v9680
      %v9682 = vpop.f32.mrb[0].mxu0
      %v9683 = vpop.f32.mrb[0].mxu0
      %v9684 = vadd.f32 0.0, %v9683
      %v9685 = vpop.f32.mrb[0].mxu0
      %9686 = vmatprep.mubr.bf16.mxu0 0
      %9687 = vmatmul.mubr.bf16.gmra.mrb[0].mxu0 %v9597
      %v9688 = vpop.f32.mrb[0].mxu0
      %v9689 = vadd.f32 0.0, %v9688
      %v9690 = vpop.f32.mrb[0].mxu0
      %v9691 = vpop.f32.mrb[0].mxu0
      %v9692 = vadd.f32 0.0, %v9691
      %v9693 = vpop.f32.mrb[0].mxu0
      %9694 = vmatprep.mubr.bf16.mxu0 0
      %9695 = vmatmul.mubr.bf16.gmra.mrb[0].mxu0 %v9600
      %v9696 = vpop.f32.mrb[0].mxu0
      %v9697 = vadd.f32 0.0, %v9696
      %v9698 = vpop.f32.mrb[0].mxu0
      %v9699 = vpop.f32.mrb[0].mxu0
      %v9700 = vadd.f32 0.0, %v9699
      %v9701 = vpop.f32.mrb[0].mxu0
      %9702 = vmatprep.mubr.bf16.mxu0 0
      %9703 = vmatmul.mubr.bf16.gmra.mrb[0].mxu0 %v9603
      %v9704 = vpop.f32.mrb[0].mxu0
      %v9705 = vadd.f32 0.0, %v9704
      %v9706 = vpop.f32.mrb[0].mxu0
      %v9707 = vpop.f32.mrb[0].mxu0
      %v9708 = vadd.f32 0.0, %v9707
      %v9709 = vpop.f32.mrb[0].mxu0
      %9710 = vmatprep.mubr.bf16.mxu0 0
      %9711 = vmatmul.mubr.bf16.gmra.mrb[0].mxu0 %v9606
      %v9712 = vpop.f32.mrb[0].mxu0
      %v9713 = vadd.f32 0.0, %v9712
      %v9714 = vpop.f32.mrb[0].mxu0
      %v9715 = vpop.f32.mrb[0].mxu0
      %v9716 = vadd.f32 0.0, %v9715
      %v9717 = vpop.f32.mrb[0].mxu0
      %9718 = vmatprep.mubr.bf16.mxu0 0
      %9719 = vmatmul.mubr.bf16.gmra.mrb[0].mxu0 %v9609
      %v9720 = vpop.f32.mrb[0].mxu0
      %v9721 = vadd.f32 0.0, %v9720
      %v9722 = vpop.f32.mrb[0].mxu0
      %v9723 = vpop.f32.mrb[0].mxu0
      %v9724 = vadd.f32 0.0, %v9723
      %v9725 = vpop.f32.mrb[0].mxu0
      %9726 = vmatprep.mubr.bf16.mxu0 0
      %9727 = vmatmul.mubr.bf16.gmra.mrb[0].mxu0 %v9612
      %v9728 = vpop.f32.mrb[0].mxu0
      %v9729 = vadd.f32 0.0, %v9728
      %v9730 = vpop.f32.mrb[0].mxu0
      %v9731 = vpop.f32.mrb[0].mxu0
      %v9732 = vadd.f32 0.0, %v9731
      %v9733 = vpop.f32.mrb[0].mxu0
      %9734 = vmatprep.mubr.bf16.mxu0 0
      %9735 = vmatmul.mubr.bf16.gmra.mrb[0].mxu0 %v9615
      %v9736 = vpop.f32.mrb[0].mxu0
      %v9737 = vadd.f32 0.0, %v9736
      %v9738 = vpop.f32.mrb[0].mxu0
      %v9739 = vpop.f32.mrb[0].mxu0
      %v9740 = vadd.f32 0.0, %v9739
      %v9741 = vpop.f32.mrb[0].mxu0
      %9742 = vmatprep.mubr.bf16.mxu0 0
      %9743 = vmatmul.mubr.bf16.gmra.mrb[0].mxu0 %v9618
      %v9744 = vpop.f32.mrb[0].mxu0
      %v9745 = vadd.f32 0.0, %v9744
      %v9746 = vpop.f32.mrb[0].mxu0
      %v9747 = vpop.f32.mrb[0].mxu0
      %v9748 = vadd.f32 0.0, %v9747
      %v9749 = vpop.f32.mrb[0].mxu0
      %9750 = vmatprep.mubr.bf16.mxu0 0
      %9751 = vmatmul.mubr.bf16.gmra.mrb[0].mxu0 %v9621
      %v9752 = vpop.f32.mrb[0].mxu0
      %v9753 = vadd.f32 0.0, %v9752
      %v9754 = vpop.f32.mrb[0].mxu0
      %v9755 = vpop.f32.mrb[0].mxu0
      %v9756 = vadd.f32 0.0, %v9755
      %v9757 = vpop.f32.mrb[0].mxu0
      %9758 = vmatprep.mubr.bf16.mxu0 0
      %9759 = vmatmul.mubr.bf16.gmra.mrb[0].mxu0 %v9624
      %v9760 = vpop.f32.mrb[0].mxu0
      %v9761 = vadd.f32 0.0, %v9760
      %v9762 = vpop.f32.mrb[0].mxu0
      %v9763 = vpop.f32.mrb[0].mxu0
      %v9764 = vadd.f32 0.0, %v9763
      %v9765 = vpop.f32.mrb[0].mxu0
      %9766 = vmatprep.mubr.bf16.mxu0 0
      %9767 = vmatmul.mubr.bf16.gmra.mrb[0].mxu0 %v9627
      %v9768 = vpop.f32.mrb[0].mxu0
      %v9769 = vadd.f32 0.0, %v9768
      %v9770 = vpop.f32.mrb[0].mxu0
      %v9771 = vpop.f32.mrb[0].mxu0
      %v9772 = vadd.f32 0.0, %v9771
      %v9773 = vpop.f32.mrb[0].mxu0
      %9774 = vmatprep.mubr.bf16.mxu0 0
      %9775 = vmatmul.mubr.bf16.gmra.mrb[0].mxu0 %v9630
      %v9776 = vpop.f32.mrb[0].mxu0
      %v9777 = vadd.f32 0.0, %v9776
      %v9778 = vpop.f32.mrb[0].mxu0
      %v9779 = vpop.f32.mrb[0].mxu0
      %v9780 = vadd.f32 0.0, %v9779
      %v9781 = vpop.f32.mrb[0].mxu0
      %9782 = vmatprep.mubr.bf16.mxu0 0
      %9783 = vmatmul.mubr.bf16.gmra.mrb[0].mxu0 %v9633
      %v9784 = vpop.f32.mrb[0].mxu0
      %v9785 = vadd.f32 0.0, %v9784
      %v9786 = vpop.f32.mrb[0].mxu0
      %v9787 = vpop.f32.mrb[0].mxu0
      %v9788 = vadd.f32 0.0, %v9787
      %v9789 = vpop.f32.mrb[0].mxu0
      %9790 = vmatprep.mubr.bf16.mxu0 0
      %9791 = vmatmul.mubr.bf16.gmra.mrb[0].mxu0 %v9636
      %v9792 = vpop.f32.mrb[0].mxu0
      %v9793 = vadd.f32 0.0, %v9792
      %v9794 = vpop.f32.mrb[0].mxu0
      %v9795 = vpop.f32.mrb[0].mxu0
      %v9796 = vadd.f32 0.0, %v9795
      %v9797 = vpop.f32.mrb[0].mxu0
      %9798 = vdwg.mxu0
      %v9799 = vmul.f32 %v9673, %v793
      %v9800 = vmul.f32 %v9676, %v794
      %v9801 = vmul.f32 %v9681, %v795
      %v9802 = vmul.f32 %v9684, %v796
      %v9803 = vmul.f32 %v9689, %v797
      %v9804 = vmul.f32 %v9692, %v798
      %v9805 = vmul.f32 %v9697, %v799
      %v9806 = vmul.f32 %v9700, %v800
      %v9807 = vmul.f32 %v9705, %v801
      %v9808 = vmul.f32 %v9708, %v802
      %v9809 = vmul.f32 %v9713, %v803
      %v9810 = vmul.f32 %v9716, %v804
      %v9811 = vmul.f32 %v9721, %v805
      %v9812 = vmul.f32 %v9724, %v806
      %v9813 = vmul.f32 %v9729, %v807
      %v9814 = vmul.f32 %v9732, %v808
      %v9815 = vmul.f32 %v9737, %v809
      %v9816 = vmul.f32 %v9740, %v810
      %v9817 = vmul.f32 %v9745, %v811
      %v9818 = vmul.f32 %v9748, %v812
      %v9819 = vmul.f32 %v9753, %v813
      %v9820 = vmul.f32 %v9756, %v814
      %v9821 = vmul.f32 %v9761, %v815
      %v9822 = vmul.f32 %v9764, %v816
      %v9823 = vmul.f32 %v9769, %v817
      %v9824 = vmul.f32 %v9772, %v818
      %v9825 = vmul.f32 %v9777, %v819
      %v9826 = vmul.f32 %v9780, %v820
      %v9827 = vmul.f32 %v9785, %v821
      %v9828 = vmul.f32 %v9788, %v822
      %v9829 = vmul.f32 %v9793, %v823
      %v9830 = vmul.f32 %v9796, %v824
      %v9831 = vld [vmem:[#allocation4] sm:$0xff]
      %v9832 = vld [vmem:[#allocation4 + $0x8] sm:$0xff]
      %v9833 = vld [vmem:[#allocation4 + $0x10] sm:$0xff]
      %v9834 = vld [vmem:[#allocation4 + $0x18] sm:$0xff]
      %v9835 = vld [vmem:[#allocation4 + $0x20] sm:$0xff]
      %v9836 = vld [vmem:[#allocation4 + $0x28] sm:$0xff]
      %v9837 = vld [vmem:[#allocation4 + $0x30] sm:$0xff]
      %v9838 = vld [vmem:[#allocation4 + $0x38] sm:$0xff]
      %v9839 = vld [vmem:[#allocation4 + $0x40] sm:$0xff]
      %v9840 = vld [vmem:[#allocation4 + $0x48] sm:$0xff]
      %v9841 = vld [vmem:[#allocation4 + $0x50] sm:$0xff]
      %v9842 = vld [vmem:[#allocation4 + $0x58] sm:$0xff]
      %v9843 = vld [vmem:[#allocation4 + $0x60] sm:$0xff]
      %v9844 = vld [vmem:[#allocation4 + $0x68] sm:$0xff]
      %v9845 = vld [vmem:[#allocation4 + $0x70] sm:$0xff]
      %v9846 = vld [vmem:[#allocation4 + $0x78] sm:$0xff]
      %v9847 = vld [vmem:[#allocation4 + $0x80] sm:$0xff]
      %v9848 = vld [vmem:[#allocation4 + $0x88] sm:$0xff]
      %v9849 = vld [vmem:[#allocation4 + $0x90] sm:$0xff]
      %v9850 = vld [vmem:[#allocation4 + $0x98] sm:$0xff]
      %v9851 = vld [vmem:[#allocation4 + $0xa0] sm:$0xff]
      %v9852 = vld [vmem:[#allocation4 + $0xa8] sm:$0xff]
      %v9853 = vld [vmem:[#allocation4 + $0xb0] sm:$0xff]
      %v9854 = vld [vmem:[#allocation4 + $0xb8] sm:$0xff]
      %v9855 = vld [vmem:[#allocation4 + $0xc0] sm:$0xff]
      %v9856 = vld [vmem:[#allocation4 + $0xc8] sm:$0xff]
      %v9857 = vld [vmem:[#allocation4 + $0xd0] sm:$0xff]
      %v9858 = vld [vmem:[#allocation4 + $0xd8] sm:$0xff]
      %v9859 = vld [vmem:[#allocation4 + $0xe0] sm:$0xff]
      %v9860 = vld [vmem:[#allocation4 + $0xe8] sm:$0xff]
      %v9861 = vld [vmem:[#allocation4 + $0xf0] sm:$0xff]
      %v9862 = vld [vmem:[#allocation4 + $0xf8] sm:$0xff]
      %v9863 = vadd.f32 %v9831, %v9799
      %v9864 = vadd.f32 %v9832, %v9800
      %v9865 = vadd.f32 %v9833, %v9801
      %v9866 = vadd.f32 %v9834, %v9802
      %v9867 = vadd.f32 %v9835, %v9803
      %v9868 = vadd.f32 %v9836, %v9804
      %v9869 = vadd.f32 %v9837, %v9805
      %v9870 = vadd.f32 %v9838, %v9806
      %v9871 = vadd.f32 %v9839, %v9807
      %v9872 = vadd.f32 %v9840, %v9808
      %v9873 = vadd.f32 %v9841, %v9809
      %v9874 = vadd.f32 %v9842, %v9810
      %v9875 = vadd.f32 %v9843, %v9811
      %v9876 = vadd.f32 %v9844, %v9812
      %v9877 = vadd.f32 %v9845, %v9813
      %v9878 = vadd.f32 %v9846, %v9814
      %v9879 = vadd.f32 %v9847, %v9815
      %v9880 = vadd.f32 %v9848, %v9816
      %v9881 = vadd.f32 %v9849, %v9817
      %v9882 = vadd.f32 %v9850, %v9818
      %v9883 = vadd.f32 %v9851, %v9819
      %v9884 = vadd.f32 %v9852, %v9820
      %v9885 = vadd.f32 %v9853, %v9821
      %v9886 = vadd.f32 %v9854, %v9822
      %v9887 = vadd.f32 %v9855, %v9823
      %v9888 = vadd.f32 %v9856, %v9824
      %v9889 = vadd.f32 %v9857, %v9825
      %v9890 = vadd.f32 %v9858, %v9826
      %v9891 = vadd.f32 %v9859, %v9827
      %v9892 = vadd.f32 %v9860, %v9828
      %v9893 = vadd.f32 %v9861, %v9829
      %v9894 = vadd.f32 %v9862, %v9830
      %9895 = vst.msk [vmem:[#allocation4] sm:$0xff] %vm825, %v9863
      %9896 = vst.msk [vmem:[#allocation4 + $0x8] sm:$0xff] %vm825, %v9864
      %9897 = vst.msk [vmem:[#allocation4 + $0x10] sm:$0xff] %vm825, %v9865
      %9898 = vst.msk [vmem:[#allocation4 + $0x18] sm:$0xff] %vm825, %v9866
      %9899 = vst.msk [vmem:[#allocation4 + $0x20] sm:$0xff] %vm825, %v9867
      %9900 = vst.msk [vmem:[#allocation4 + $0x28] sm:$0xff] %vm825, %v9868
      %9901 = vst.msk [vmem:[#allocation4 + $0x30] sm:$0xff] %vm825, %v9869
      %9902 = vst.msk [vmem:[#allocation4 + $0x38] sm:$0xff] %vm825, %v9870
      %9903 = vst.msk [vmem:[#allocation4 + $0x40] sm:$0xff] %vm825, %v9871
      %9904 = vst.msk [vmem:[#allocation4 + $0x48] sm:$0xff] %vm825, %v9872
      %9905 = vst.msk [vmem:[#allocation4 + $0x50] sm:$0xff] %vm825, %v9873
      %9906 = vst.msk [vmem:[#allocation4 + $0x58] sm:$0xff] %vm825, %v9874
      %9907 = vst.msk [vmem:[#allocation4 + $0x60] sm:$0xff] %vm825, %v9875
      %9908 = vst.msk [vmem:[#allocation4 + $0x68] sm:$0xff] %vm825, %v9876
      %9909 = vst.msk [vmem:[#allocation4 + $0x70] sm:$0xff] %vm825, %v9877
      %9910 = vst.msk [vmem:[#allocation4 + $0x78] sm:$0xff] %vm825, %v9878
      %9911 = vst.msk [vmem:[#allocation4 + $0x80] sm:$0xff] %vm825, %v9879
      %9912 = vst.msk [vmem:[#allocation4 + $0x88] sm:$0xff] %vm825, %v9880
      %9913 = vst.msk [vmem:[#allocation4 + $0x90] sm:$0xff] %vm825, %v9881
      %9914 = vst.msk [vmem:[#allocation4 + $0x98] sm:$0xff] %vm825, %v9882
      %9915 = vst.msk [vmem:[#allocation4 + $0xa0] sm:$0xff] %vm825, %v9883
      %9916 = vst.msk [vmem:[#allocation4 + $0xa8] sm:$0xff] %vm825, %v9884
      %9917 = vst.msk [vmem:[#allocation4 + $0xb0] sm:$0xff] %vm825, %v9885
      %9918 = vst.msk [vmem:[#allocation4 + $0xb8] sm:$0xff] %vm825, %v9886
      %9919 = vst.msk [vmem:[#allocation4 + $0xc0] sm:$0xff] %vm825, %v9887
      %9920 = vst.msk [vmem:[#allocation4 + $0xc8] sm:$0xff] %vm825, %v9888
      %9921 = vst.msk [vmem:[#allocation4 + $0xd0] sm:$0xff] %vm825, %v9889
      %9922 = vst.msk [vmem:[#allocation4 + $0xd8] sm:$0xff] %vm825, %v9890
      %9923 = vst.msk [vmem:[#allocation4 + $0xe0] sm:$0xff] %vm825, %v9891
      %9924 = vst.msk [vmem:[#allocation4 + $0xe8] sm:$0xff] %vm825, %v9892
      %9925 = vst.msk [vmem:[#allocation4 + $0xf0] sm:$0xff] %vm825, %v9893
      %9926 = vst.msk [vmem:[#allocation4 + $0xf8] sm:$0xff] %vm825, %v9894
      %v9927 = vld [vmem:[#allocation4] sm:$0xff]
      %v9928 = vld [vmem:[#allocation4 + $0x8] sm:$0xff]
      %v9929 = vld [vmem:[#allocation4 + $0x10] sm:$0xff]
      %v9930 = vld [vmem:[#allocation4 + $0x18] sm:$0xff]
      %v9931 = vld [vmem:[#allocation4 + $0x20] sm:$0xff]
      %v9932 = vld [vmem:[#allocation4 + $0x28] sm:$0xff]
      %v9933 = vld [vmem:[#allocation4 + $0x30] sm:$0xff]
      %v9934 = vld [vmem:[#allocation4 + $0x38] sm:$0xff]
      %v9935 = vld [vmem:[#allocation4 + $0x40] sm:$0xff]
      %v9936 = vld [vmem:[#allocation4 + $0x48] sm:$0xff]
      %v9937 = vld [vmem:[#allocation4 + $0x50] sm:$0xff]
      %v9938 = vld [vmem:[#allocation4 + $0x58] sm:$0xff]
      %v9939 = vld [vmem:[#allocation4 + $0x60] sm:$0xff]
      %v9940 = vld [vmem:[#allocation4 + $0x68] sm:$0xff]
      %v9941 = vld [vmem:[#allocation4 + $0x70] sm:$0xff]
      %v9942 = vld [vmem:[#allocation4 + $0x78] sm:$0xff]
      %v9943 = vld [vmem:[#allocation4 + $0x80] sm:$0xff]
      %v9944 = vld [vmem:[#allocation4 + $0x88] sm:$0xff]
      %v9945 = vld [vmem:[#allocation4 + $0x90] sm:$0xff]
      %v9946 = vld [vmem:[#allocation4 + $0x98] sm:$0xff]
      %v9947 = vld [vmem:[#allocation4 + $0xa0] sm:$0xff]
      %v9948 = vld [vmem:[#allocation4 + $0xa8] sm:$0xff]
      %v9949 = vld [vmem:[#allocation4 + $0xb0] sm:$0xff]
      %v9950 = vld [vmem:[#allocation4 + $0xb8] sm:$0xff]
      %v9951 = vld [vmem:[#allocation4 + $0xc0] sm:$0xff]
      %v9952 = vld [vmem:[#allocation4 + $0xc8] sm:$0xff]
      %v9953 = vld [vmem:[#allocation4 + $0xd0] sm:$0xff]
      %v9954 = vld [vmem:[#allocation4 + $0xd8] sm:$0xff]
      %v9955 = vld [vmem:[#allocation4 + $0xe0] sm:$0xff]
      %v9956 = vld [vmem:[#allocation4 + $0xe8] sm:$0xff]
      %v9957 = vld [vmem:[#allocation4 + $0xf0] sm:$0xff]
      %v9958 = vld [vmem:[#allocation4 + $0xf8] sm:$0xff]
      %v9959 = vld [vmem:[%s5] sm:$0x1]
      %v9961 = vlaneseq
      %v9962 = vshrl.u32 %v9961, 7
      %v9963 = vsub.s32 0, %v9962
      %v9964 = vrot.slane %v9959, %v9963
      %v9966 = vmul.f32 %v9927, %v9964
      %v9967 = vmul.f32 %v9928, %v9964
      %v9968 = vmul.f32 %v9929, %v9964
      %v9969 = vmul.f32 %v9930, %v9964
      %v9970 = vmul.f32 %v9931, %v9964
      %v9971 = vmul.f32 %v9932, %v9964
      %v9972 = vmul.f32 %v9933, %v9964
      %v9973 = vmul.f32 %v9934, %v9964
      %v9974 = vmul.f32 %v9935, %v9964
      %v9975 = vmul.f32 %v9936, %v9964
      %v9976 = vmul.f32 %v9937, %v9964
      %v9977 = vmul.f32 %v9938, %v9964
      %v9978 = vmul.f32 %v9939, %v9964
      %v9979 = vmul.f32 %v9940, %v9964
      %v9980 = vmul.f32 %v9941, %v9964
      %v9981 = vmul.f32 %v9942, %v9964
      %v9982 = vmul.f32 %v9943, %v9964
      %v9983 = vmul.f32 %v9944, %v9964
      %v9984 = vmul.f32 %v9945, %v9964
      %v9985 = vmul.f32 %v9946, %v9964
      %v9986 = vmul.f32 %v9947, %v9964
      %v9987 = vmul.f32 %v9948, %v9964
      %v9988 = vmul.f32 %v9949, %v9964
      %v9989 = vmul.f32 %v9950, %v9964
      %v9990 = vmul.f32 %v9951, %v9964
      %v9991 = vmul.f32 %v9952, %v9964
      %v9992 = vmul.f32 %v9953, %v9964
      %v9993 = vmul.f32 %v9954, %v9964
      %v9994 = vmul.f32 %v9955, %v9964
      %v9995 = vmul.f32 %v9956, %v9964
      %v9996 = vmul.f32 %v9957, %v9964
      %v9997 = vmul.f32 %v9958, %v9964
      %v9998 = vld [vmem:[%s6] sm:$0x1]
      %v10000 = vlaneseq
      %v10001 = vshrl.u32 %v10000, 7
      %v10002 = vsub.s32 0, %v10001
      %v10003 = vrot.slane %v9998, %v10002
      %v10005 = vadd.f32 %v9966, %v10003
      %v10006 = vadd.f32 %v9967, %v10003
      %v10007 = vadd.f32 %v9968, %v10003
      %v10008 = vadd.f32 %v9969, %v10003
      %v10009 = vadd.f32 %v9970, %v10003
      %v10010 = vadd.f32 %v9971, %v10003
      %v10011 = vadd.f32 %v9972, %v10003
      %v10012 = vadd.f32 %v9973, %v10003
      %v10013 = vadd.f32 %v9974, %v10003
      %v10014 = vadd.f32 %v9975, %v10003
      %v10015 = vadd.f32 %v9976, %v10003
      %v10016 = vadd.f32 %v9977, %v10003
      %v10017 = vadd.f32 %v9978, %v10003
      %v10018 = vadd.f32 %v9979, %v10003
      %v10019 = vadd.f32 %v9980, %v10003
      %v10020 = vadd.f32 %v9981, %v10003
      %v10021 = vadd.f32 %v9982, %v10003
      %v10022 = vadd.f32 %v9983, %v10003
      %v10023 = vadd.f32 %v9984, %v10003
      %v10024 = vadd.f32 %v9985, %v10003
      %v10025 = vadd.f32 %v9986, %v10003
      %v10026 = vadd.f32 %v9987, %v10003
      %v10027 = vadd.f32 %v9988, %v10003
      %v10028 = vadd.f32 %v9989, %v10003
      %v10029 = vadd.f32 %v9990, %v10003
      %v10030 = vadd.f32 %v9991, %v10003
      %v10031 = vadd.f32 %v9992, %v10003
      %v10032 = vadd.f32 %v9993, %v10003
      %v10033 = vadd.f32 %v9994, %v10003
      %v10034 = vadd.f32 %v9995, %v10003
      %v10035 = vadd.f32 %v9996, %v10003
      %v10036 = vadd.f32 %v9997, %v10003
      %v10037 = vld [vmem:[%s273] sm:$0xf]
      %v10038 = vld [vmem:[%s273 + $0x4] sm:$0xf]
      %v10039 = vld [vmem:[%s273 + $0x8] sm:$0xf]
      %v10040 = vld [vmem:[%s273 + $0xc] sm:$0xf]
      %v10041 = vld [vmem:[%s273 + $0x10] sm:$0xf]
      %v10042 = vld [vmem:[%s273 + $0x14] sm:$0xf]
      %v10043 = vld [vmem:[%s273 + $0x18] sm:$0xf]
      %v10044 = vld [vmem:[%s273 + $0x1c] sm:$0xf]
      %v10045 = vld [vmem:[%s273 + $0x20] sm:$0xf]
      %v10046 = vld [vmem:[%s273 + $0x24] sm:$0xf]
      %v10047 = vld [vmem:[%s273 + $0x28] sm:$0xf]
      %v10048 = vld [vmem:[%s273 + $0x2c] sm:$0xf]
      %v10049 = vld [vmem:[%s273 + $0x30] sm:$0xf]
      %v10050 = vld [vmem:[%s273 + $0x34] sm:$0xf]
      %v10051 = vld [vmem:[%s273 + $0x38] sm:$0xf]
      %v10052 = vld [vmem:[%s273 + $0x3c] sm:$0xf]
      %v10053 = vld [vmem:[%s273 + $0x40] sm:$0xf]
      %v10054 = vld [vmem:[%s273 + $0x44] sm:$0xf]
      %v10055 = vld [vmem:[%s273 + $0x48] sm:$0xf]
      %v10056 = vld [vmem:[%s273 + $0x4c] sm:$0xf]
      %v10057 = vld [vmem:[%s273 + $0x50] sm:$0xf]
      %v10058 = vld [vmem:[%s273 + $0x54] sm:$0xf]
      %v10059 = vld [vmem:[%s273 + $0x58] sm:$0xf]
      %v10060 = vld [vmem:[%s273 + $0x5c] sm:$0xf]
      %v10061 = vld [vmem:[%s273 + $0x60] sm:$0xf]
      %v10062 = vld [vmem:[%s273 + $0x64] sm:$0xf]
      %v10063 = vld [vmem:[%s273 + $0x68] sm:$0xf]
      %v10064 = vld [vmem:[%s273 + $0x6c] sm:$0xf]
      %v10065 = vld [vmem:[%s273 + $0x70] sm:$0xf]
      %v10066 = vld [vmem:[%s273 + $0x74] sm:$0xf]
      %v10067 = vld [vmem:[%s273 + $0x78] sm:$0xf]
      %v10068 = vld [vmem:[%s273 + $0x7c] sm:$0xf]
      %v10069 = vunpack.c.l.bf16 %v10037
      %v10070 = vunpack.c.l.bf16 %v10038
      %v10071 = vunpack.c.l.bf16 %v10039
      %v10072 = vunpack.c.l.bf16 %v10040
      %v10073 = vunpack.c.l.bf16 %v10041
      %v10074 = vunpack.c.l.bf16 %v10042
      %v10075 = vunpack.c.l.bf16 %v10043
      %v10076 = vunpack.c.l.bf16 %v10044
      %v10077 = vunpack.c.l.bf16 %v10045
      %v10078 = vunpack.c.l.bf16 %v10046
      %v10079 = vunpack.c.l.bf16 %v10047
      %v10080 = vunpack.c.l.bf16 %v10048
      %v10081 = vunpack.c.l.bf16 %v10049
      %v10082 = vunpack.c.l.bf16 %v10050
      %v10083 = vunpack.c.l.bf16 %v10051
      %v10084 = vunpack.c.l.bf16 %v10052
      %v10085 = vunpack.c.l.bf16 %v10053
      %v10086 = vunpack.c.l.bf16 %v10054
      %v10087 = vunpack.c.l.bf16 %v10055
      %v10088 = vunpack.c.l.bf16 %v10056
      %v10089 = vunpack.c.l.bf16 %v10057
      %v10090 = vunpack.c.l.bf16 %v10058
      %v10091 = vunpack.c.l.bf16 %v10059
      %v10092 = vunpack.c.l.bf16 %v10060
      %v10093 = vunpack.c.l.bf16 %v10061
      %v10094 = vunpack.c.l.bf16 %v10062
      %v10095 = vunpack.c.l.bf16 %v10063
      %v10096 = vunpack.c.l.bf16 %v10064
      %v10097 = vunpack.c.l.bf16 %v10065
      %v10098 = vunpack.c.l.bf16 %v10066
      %v10099 = vunpack.c.l.bf16 %v10067
      %v10100 = vunpack.c.l.bf16 %v10068
      %v10101 = vadd.f32 %v10005, %v10069
      %v10102 = vadd.f32 %v10006, %v10070
      %v10103 = vadd.f32 %v10007, %v10071
      %v10104 = vadd.f32 %v10008, %v10072
      %v10105 = vadd.f32 %v10009, %v10073
      %v10106 = vadd.f32 %v10010, %v10074
      %v10107 = vadd.f32 %v10011, %v10075
      %v10108 = vadd.f32 %v10012, %v10076
      %v10109 = vadd.f32 %v10013, %v10077
      %v10110 = vadd.f32 %v10014, %v10078
      %v10111 = vadd.f32 %v10015, %v10079
      %v10112 = vadd.f32 %v10016, %v10080
      %v10113 = vadd.f32 %v10017, %v10081
      %v10114 = vadd.f32 %v10018, %v10082
      %v10115 = vadd.f32 %v10019, %v10083
      %v10116 = vadd.f32 %v10020, %v10084
      %v10117 = vadd.f32 %v10021, %v10085
      %v10118 = vadd.f32 %v10022, %v10086
      %v10119 = vadd.f32 %v10023, %v10087
      %v10120 = vadd.f32 %v10024, %v10088
      %v10121 = vadd.f32 %v10025, %v10089
      %v10122 = vadd.f32 %v10026, %v10090
      %v10123 = vadd.f32 %v10027, %v10091
      %v10124 = vadd.f32 %v10028, %v10092
      %v10125 = vadd.f32 %v10029, %v10093
      %v10126 = vadd.f32 %v10030, %v10094
      %v10127 = vadd.f32 %v10031, %v10095
      %v10128 = vadd.f32 %v10032, %v10096
      %v10129 = vadd.f32 %v10033, %v10097
      %v10130 = vadd.f32 %v10034, %v10098
      %v10131 = vadd.f32 %v10035, %v10099
      %v10132 = vadd.f32 %v10036, %v10100
      %v10133 = vmax.f32 %v10101, 0.0
      %v10134 = vmax.f32 %v10102, 0.0
      %v10135 = vmax.f32 %v10103, 0.0
      %v10136 = vmax.f32 %v10104, 0.0
      %v10137 = vmax.f32 %v10105, 0.0
      %v10138 = vmax.f32 %v10106, 0.0
      %v10139 = vmax.f32 %v10107, 0.0
      %v10140 = vmax.f32 %v10108, 0.0
      %v10141 = vmax.f32 %v10109, 0.0
      %v10142 = vmax.f32 %v10110, 0.0
      %v10143 = vmax.f32 %v10111, 0.0
      %v10144 = vmax.f32 %v10112, 0.0
      %v10145 = vmax.f32 %v10113, 0.0
      %v10146 = vmax.f32 %v10114, 0.0
      %v10147 = vmax.f32 %v10115, 0.0
      %v10148 = vmax.f32 %v10116, 0.0
      %v10149 = vmax.f32 %v10117, 0.0
      %v10150 = vmax.f32 %v10118, 0.0
      %v10151 = vmax.f32 %v10119, 0.0
      %v10152 = vmax.f32 %v10120, 0.0
      %v10153 = vmax.f32 %v10121, 0.0
      %v10154 = vmax.f32 %v10122, 0.0
      %v10155 = vmax.f32 %v10123, 0.0
      %v10156 = vmax.f32 %v10124, 0.0
      %v10157 = vmax.f32 %v10125, 0.0
      %v10158 = vmax.f32 %v10126, 0.0
      %v10159 = vmax.f32 %v10127, 0.0
      %v10160 = vmax.f32 %v10128, 0.0
      %v10161 = vmax.f32 %v10129, 0.0
      %v10162 = vmax.f32 %v10130, 0.0
      %v10163 = vmax.f32 %v10131, 0.0
      %v10164 = vmax.f32 %v10132, 0.0
      %10165 = vst.msk [vmem:[%s278] sm:$0xff] %vm825, %v10133
      %10166 = vst.msk [vmem:[%s278 + $0x8] sm:$0xff] %vm825, %v10134
      %10167 = vst.msk [vmem:[%s278 + $0x10] sm:$0xff] %vm825, %v10135
      %10168 = vst.msk [vmem:[%s278 + $0x18] sm:$0xff] %vm825, %v10136
      %10169 = vst.msk [vmem:[%s278 + $0x20] sm:$0xff] %vm825, %v10137
      %10170 = vst.msk [vmem:[%s278 + $0x28] sm:$0xff] %vm825, %v10138
      %10171 = vst.msk [vmem:[%s278 + $0x30] sm:$0xff] %vm825, %v10139
      %10172 = vst.msk [vmem:[%s278 + $0x38] sm:$0xff] %vm825, %v10140
      %10173 = vst.msk [vmem:[%s278 + $0x40] sm:$0xff] %vm825, %v10141
      %10174 = vst.msk [vmem:[%s278 + $0x48] sm:$0xff] %vm825, %v10142
      %10175 = vst.msk [vmem:[%s278 + $0x50] sm:$0xff] %vm825, %v10143
      %10176 = vst.msk [vmem:[%s278 + $0x58] sm:$0xff] %vm825, %v10144
      %10177 = vst.msk [vmem:[%s278 + $0x60] sm:$0xff] %vm825, %v10145
      %10178 = vst.msk [vmem:[%s278 + $0x68] sm:$0xff] %vm825, %v10146
      %10179 = vst.msk [vmem:[%s278 + $0x70] sm:$0xff] %vm825, %v10147
      %10180 = vst.msk [vmem:[%s278 + $0x78] sm:$0xff] %vm825, %v10148
      %10181 = vst.msk [vmem:[%s278 + $0x80] sm:$0xff] %vm825, %v10149
      %10182 = vst.msk [vmem:[%s278 + $0x88] sm:$0xff] %vm825, %v10150
      %10183 = vst.msk [vmem:[%s278 + $0x90] sm:$0xff] %vm825, %v10151
      %10184 = vst.msk [vmem:[%s278 + $0x98] sm:$0xff] %vm825, %v10152
      %10185 = vst.msk [vmem:[%s278 + $0xa0] sm:$0xff] %vm825, %v10153
      %10186 = vst.msk [vmem:[%s278 + $0xa8] sm:$0xff] %vm825, %v10154
      %10187 = vst.msk [vmem:[%s278 + $0xb0] sm:$0xff] %vm825, %v10155
      %10188 = vst.msk [vmem:[%s278 + $0xb8] sm:$0xff] %vm825, %v10156
      %10189 = vst.msk [vmem:[%s278 + $0xc0] sm:$0xff] %vm825, %v10157
      %10190 = vst.msk [vmem:[%s278 + $0xc8] sm:$0xff] %vm825, %v10158
      %10191 = vst.msk [vmem:[%s278 + $0xd0] sm:$0xff] %vm825, %v10159
      %10192 = vst.msk [vmem:[%s278 + $0xd8] sm:$0xff] %vm825, %v10160
      %10193 = vst.msk [vmem:[%s278 + $0xe0] sm:$0xff] %vm825, %v10161
      %10194 = vst.msk [vmem:[%s278 + $0xe8] sm:$0xff] %vm825, %v10162
      %10195 = vst.msk [vmem:[%s278 + $0xf0] sm:$0xff] %vm825, %v10163
      %10196 = vst.msk [vmem:[%s278 + $0xf8] sm:$0xff] %vm825, %v10164
      %p10197 = scmp.lt.s32.totalorder %s18, 1
      %s10198 = scalar_select %p10197, %s18, 1
      %s10199 = smul.addr %s10198, 32
      %s10200 = smul.addr %s10199, 8
      %s10201 = scalar_lea.vmem %s7, %s10200
      // Predicated region
      $region49: #{tpu_custom_call.1} parent=47 // pred_check
        %p10202 = pneg %p188
      $region50: #{tpu_custom_call.1} parent=47 // pred_check_branch
        %10204 = sbr.rel (%p10202) target = $region52
      $region51: #{tpu_custom_call.1} parent=47 // pred_region
        _
      $region52: #{tpu_custom_call.1} parent=47 // pred_fallthru
        _
    $region48: #{tpu_custom_call.1} parent=5 // pred_fallthru
      _
    %p10205 = scmp.le.s32.totalorder 2, %s13
    // Predicated region
    $region53: #{tpu_custom_call.1} parent=5 // pred_check
      %p10206 = pneg %p10205
    $region54: #{tpu_custom_call.1} parent=5 // pred_check_branch
      %10208 = sbr.rel (%p10206) target = $region56
    $region55: #{tpu_custom_call.1} parent=5 // pred_region
      %s10209 = ssub.s32 %s13, 2
      // Predicated region
      $region57: #{tpu_custom_call.1} parent=55 // pred_check
        %p10210 = pneg %p194
      $region58: #{tpu_custom_call.1} parent=55 // pred_check_branch
        %10212 = sbr.rel (%p10210) target = $region60
      $region59: #{tpu_custom_call.1} parent=55 // pred_region
        %p10213 = scmp.lt.s32.totalorder %s19, 1
        %s10214 = scalar_select %p10213, %s19, 1
        %s10215 = smul.addr %s10214, 32
        %s10216 = smul.addr %s10215, 8
        %s10217 = scalar_lea.vmem %s7, %s10216
      $region60: #{tpu_custom_call.1} parent=55 // pred_fallthru
        _
    $region56: #{tpu_custom_call.1} parent=5 // pred_fallthru
      _
  $region6: #{tpu_custom_call.1} parent=0 // loop_footer
    %s17 = sadd.s32 1, %s13
  $region7: #{tpu_custom_call.1} parent=0 // loop_footer_branch
    %12 = sbr.rel target = $region3
  $region8: #{tpu_custom_call.1} parent=0 // loop_exit
    _

</llo_original>
